<compile_context>
chip_gen: v5e
topology: v5e:2x2
jax: 0.10.0
libtpu: 0.0.40
codegen_flags: <defaults>
</compile_context>

<pallas_src>
import functools

import jax
import jax.numpy as jnp
from jax import lax
from jax.experimental import pallas as pl
from jax.experimental.pallas import tpu as pltpu

CP = 128  # lane-dense channel / hidden padding (one full lane tile)


# ----------------------------------------------------------------------------
# Pallas kernels
# ----------------------------------------------------------------------------
def conv_relu_pool_kernel(x_ref, w_ref, b_ref, o_ref):
    """Fused valid 2D conv (stride 1) + ReLU + 2x2/2 max-pool for one image.

    x_ref: (H, W, CP)         input feature map (channels zero-padded to CP)
    w_ref: (KH, KW*CP, OCP)   weights laid out as [kh, kw*CP + ci, co]
    b_ref: (1, OCP)           bias (zero-padded)
    o_ref: (OH//2, OW//2, OCP) pooled output
    """
    H, W, Cp = x_ref.shape
    KH = w_ref.shape[0]
    KW = w_ref.shape[1] // Cp
    OCp = w_ref.shape[2]
    OW = W - KW + 1
    OHp, OWp, _ = o_ref.shape

    bias = b_ref[...]                                        # (1, OCp)

    # 0/1 selection matrices picking even / odd conv columns (width step of the
    # 2x2 pool).  Built once per invocation, applied on the MXU so no strided
    # sublane slicing is needed.
    ri = lax.broadcasted_iota(jnp.int32, (OWp, OW), 0)
    ci = lax.broadcasted_iota(jnp.int32, (OWp, OW), 1)
    sel_even = (ci == 2 * ri).astype(jnp.float32)            # (OWp, OW)
    sel_odd = (ci == 2 * ri + 1).astype(jnp.float32)

    def conv_row(r):
        # One conv output row r -> (OW, OCp); accumulation stays on-chip.
        acc = jnp.zeros((OW, OCp), jnp.float32)
        for kh in range(KH):
            xrow = x_ref[r + kh]                             # (W, Cp)
            patch = jnp.concatenate(
                [xrow[kw:kw + OW, :] for kw in range(KW)], axis=1)  # (OW, KW*Cp)
            acc = acc + jnp.dot(patch, w_ref[kh],
                                preferred_element_type=jnp.float32)
        return jnp.maximum(acc + bias, 0.0)                  # bias + ReLU

    def body(po, carry):
        r0 = 2 * po
        row_max = jnp.maximum(conv_row(r0), conv_row(r0 + 1))      # pool height
        pooled = jnp.maximum(                                      # pool width
            jnp.dot(sel_even, row_max, preferred_element_type=jnp.float32),
            jnp.dot(sel_odd, row_max, preferred_element_type=jnp.float32))
        o_ref[po] = pooled.astype(o_ref.dtype)
        return carry

    lax.fori_loop(0, OHp, body, 0)


def classifier_kernel(x_ref, w1_ref, b1_ref, w2_ref, b2_ref, w3_ref, b3_ref,
                      o_ref):
    """fc1+ReLU+fc2+ReLU+fc3 fused; intermediates never leave VMEM/vregs."""
    h = jnp.dot(x_ref[...], w1_ref[...], preferred_element_type=jnp.float32)
    h = jnp.maximum(h + b1_ref[...], 0.0)
    h = jnp.dot(h, w2_ref[...], preferred_element_type=jnp.float32)
    h = jnp.maximum(h + b2_ref[...], 0.0)
    h = jnp.dot(h, w3_ref[...], preferred_element_type=jnp.float32)
    o_ref[...] = (h + b3_ref[...]).astype(o_ref.dtype)


# ----------------------------------------------------------------------------
# Pallas wrappers
# ----------------------------------------------------------------------------
def conv_relu_pool(x, w, b):
    """x:(N,H,W,CP), w:(KH,KW*CP,OCP), b:(1,OCP) -> (N,(H-KH+1)//2,(W-KW+1)//2,OCP)."""
    N, H, W, Cp = x.shape
    KH = w.shape[0]
    KW = w.shape[1] // Cp
    OCp = w.shape[2]
    OH, OW = H - KH + 1, W - KW + 1
    OHp, OWp = OH // 2, OW // 2

    flops = 2 * N * OH * OW * (KH * KW * Cp) * OCp
    bytes_accessed = 4 * (x.size + w.size + b.size + N * OHp * OWp * OCp)

    return pl.pallas_call(
        conv_relu_pool_kernel,
        out_shape=jax.ShapeDtypeStruct((N, OHp, OWp, OCp), jnp.float32),
        grid=(N,),
        in_specs=[
            pl.BlockSpec((None, H, W, Cp), lambda n: (n, 0, 0, 0)),
            pl.BlockSpec((KH, KW * Cp, OCp), lambda n: (0, 0, 0)),
            pl.BlockSpec((1, OCp), lambda n: (0, 0)),
        ],
        out_specs=pl.BlockSpec((None, OHp, OWp, OCp), lambda n: (n, 0, 0, 0)),
        compiler_params=pltpu.CompilerParams(
            dimension_semantics=("parallel",)),
        cost_estimate=pl.CostEstimate(flops=flops, transcendentals=0,
                                      bytes_accessed=bytes_accessed),
    )(x, w, b)


def classifier(xf, w1, b1, w2, b2, w3, b3):
    """Fused 3-layer MLP head: (N, 5*5*CP) -> (N, CP) (valid logits in [:classes])."""
    N = xf.shape[0]
    flops = 2 * N * (w1.shape[0] * w1.shape[1] + w2.shape[0] * w2.shape[1]
                     + w3.shape[0] * w3.shape[1])
    bytes_accessed = 4 * (xf.size + w1.size + w2.size + w3.size
                          + b1.size + b2.size + b3.size + N * CP)
    return pl.pallas_call(
        classifier_kernel,
        out_shape=jax.ShapeDtypeStruct((N, CP), jnp.float32),
        cost_estimate=pl.CostEstimate(flops=flops, transcendentals=0,
                                      bytes_accessed=bytes_accessed),
    )(xf, w1, b1, w2, b2, w3, b3)


# ----------------------------------------------------------------------------
# Parameter construction (pre-transposed / pre-padded once, zero-padded lanes)
# ----------------------------------------------------------------------------
def init_params(key, classes):
    """Mirrors LeNetSequentialOrderDict.initialize_weights():
       Conv2d: xavier_normal_ weights, zero bias; Linear: N(0, 0.1), zero bias.
       Weights are stored directly in the padded kernel layouts."""
    assert classes <= CP
    ks = jax.random.split(key, 5)

    def xavier_conv(k, oc, ic, kh, kw):
        fan_in, fan_out = ic * kh * kw, oc * kh * kw
        std = (2.0 / (fan_in + fan_out)) ** 0.5
        return std * jax.random.normal(k, (oc, ic, kh, kw), jnp.float32)

    def pack_conv(w):                       # (OC,IC,KH,KW) -> (KH, KW*CP, CP)
        oc, ic, kh, kw = w.shape
        wt = jnp.transpose(w, (2, 3, 1, 0))                    # (KH,KW,IC,OC)
        wt = jnp.pad(wt, ((0, 0), (0, 0), (0, CP - ic), (0, CP - oc)))
        return wt.reshape(kh, kw * CP, CP)

    def pack_fc(w):                         # torch (out,in) -> padded (CP, CP)
        out_f, in_f = w.shape
        return jnp.pad(w.T, ((0, CP - in_f), (0, CP - out_f)))

    def pack_fc1(w):                        # (120, 16*5*5) -> (5*5*CP, CP)
        out_f = w.shape[0]
        w4 = w.reshape(out_f, 16, 5, 5)                        # (out, c, h, w)
        w4 = jnp.transpose(w4, (2, 3, 1, 0))                   # (h, w, c, out)
        w4 = jnp.pad(w4, ((0, 0), (0, 0), (0, CP - 16), (0, CP - out_f)))
        return w4.reshape(5 * 5 * CP, CP)   # matches NHWC-padded flatten order

    zero_bias = jnp.zeros((1, CP), jnp.float32)  # all torch biases init to zero

    conv1_w = xavier_conv(ks[0], 6, 3, 5, 5)
    conv2_w = xavier_conv(ks[1], 16, 6, 5, 5)
    fc1_w = 0.1 * jax.random.normal(ks[2], (120, 16 * 5 * 5), jnp.float32)
    fc2_w = 0.1 * jax.random.normal(ks[3], (84, 120), jnp.float32)
    fc3_w = 0.1 * jax.random.normal(ks[4], (classes, 84), jnp.float32)

    return {
        "conv1_w": pack_conv(conv1_w), "conv1_b": zero_bias,
        "conv2_w": pack_conv(conv2_w), "conv2_b": zero_bias,
        "fc1_w": pack_fc1(fc1_w), "fc1_b": zero_bias,
        "fc2_w": pack_fc(fc2_w), "fc2_b": zero_bias,
        "fc3_w": pack_fc(fc3_w), "fc3_b": zero_bias,
    }


# ----------------------------------------------------------------------------
# Forward pass (mirrors LeNetSequentialOrderDict.forward)
# ----------------------------------------------------------------------------
def lenet_forward(params, x, num_classes):
    # x: (N, 3, 32, 32) NCHW, like the PyTorch module.
    N, IC, _, _ = x.shape
    # One-time layout glue: NCHW -> NHWC, zero-pad channels to CP lanes.
    xp = jnp.transpose(x, (0, 2, 3, 1))
    xp = jnp.pad(xp, ((0, 0), (0, 0), (0, 0), (0, CP - IC)))

    f1 = conv_relu_pool(xp, params["conv1_w"], params["conv1_b"])   # (N,14,14,CP)
    f2 = conv_relu_pool(f1, params["conv2_w"], params["conv2_b"])   # (N, 5, 5,CP)

    xf = f2.reshape(N, -1)                                          # (N, 5*5*CP)
    logits = classifier(xf, params["fc1_w"], params["fc1_b"],
                        params["fc2_w"], params["fc2_b"],
                        params["fc3_w"], params["fc3_b"])           # (N, CP)
    return logits[:, :num_classes]


if __name__ == "__main__":
    classes = 10
    key = jax.random.PRNGKey(0)
    k_params, k_x = jax.random.split(key)

    # LeNet's classifier requires 32x32 spatial input (16*5*5 flatten).
    x = jax.random.normal(k_x, (2, 3, 32, 32), jnp.float32)
    params = init_params(k_params, classes)

    fwd = jax.jit(functools.partial(lenet_forward, num_classes=classes))
    out = fwd(params, x)
    out = jax.block_until_ready(out)
    assert out.shape == (2, classes), out.shape
    print("KERNEL_OK")
</pallas_src>

<mosaic_0001>
module attributes {stable_mosaic.version = 11 : i64} {
  func.func @conv_relu_pool_kernel(%arg0: i32, %arg1: memref<1x32x32x128xf32, #tpu.memory_space<vmem>>, %arg2: memref<5x640x128xf32, #tpu.memory_space<vmem>>, %arg3: memref<1x128xf32, #tpu.memory_space<vmem>>, %arg4: memref<1x14x14x128xf32, #tpu.memory_space<vmem>>) attributes {dimension_semantics = [#tpu.dimension_semantics<parallel>], iteration_bounds = array<i64: 2>, scalar_prefetch = 0 : i64, scratch_operands = 0 : i64, tpu.core_type = #tpu.core_type<tc>, window_params = [{transform_indices = @transform_0, window_bounds = array<i64: 1, 32, 32, 128>}, {pipeline_mode = #tpu.pipeline_mode<synchronous>, transform_indices = @transform_1, window_bounds = array<i64: 5, 640, 128>}, {pipeline_mode = #tpu.pipeline_mode<synchronous>, transform_indices = @transform_2, window_bounds = array<i64: 1, 128>}, {transform_indices = @transform_3, window_bounds = array<i64: 1, 14, 14, 128>}]} {
    %c0 = arith.constant 0 : index
    %c0_0 = arith.constant 0 : index
    %0 = vector.load %arg3[%c0, %c0_0] : memref<1x128xf32, #tpu.memory_space<vmem>>, vector<1x128xf32>
    %1 = tpu.iota {dimensions = array<i32: 0>} : vector<14x28xi32>
    %2 = tpu.iota {dimensions = array<i32: 1>} : vector<14x28xi32>
    %c2_i32 = arith.constant 2 : i32
    %3 = vector.broadcast %c2_i32 : i32 to vector<14x28xi32>
    %4 = arith.muli %3, %1 : vector<14x28xi32>
    %5 = arith.cmpi eq, %2, %4 : vector<14x28xi32>
    %6 = arith.extui %5 : vector<14x28xi1> to vector<14x28xi32>
    %7 = arith.sitofp %6 : vector<14x28xi32> to vector<14x28xf32>
    %c2_i32_1 = arith.constant 2 : i32
    %8 = vector.broadcast %c2_i32_1 : i32 to vector<14x28xi32>
    %9 = arith.muli %8, %1 : vector<14x28xi32>
    %c1_i32 = arith.constant 1 : i32
    %10 = vector.broadcast %c1_i32 : i32 to vector<14x28xi32>
    %11 = arith.addi %9, %10 : vector<14x28xi32>
    %12 = arith.cmpi eq, %2, %11 : vector<14x28xi32>
    %13 = arith.extui %12 : vector<14x28xi1> to vector<14x28xi32>
    %14 = arith.sitofp %13 : vector<14x28xi32> to vector<14x28xf32>
    %c0_i32 = arith.constant 0 : i32
    %c14_i32 = arith.constant 14 : i32
    %15 = arith.addi %c0_i32, %c14_i32 : i32
    %c1_i32_2 = arith.constant 1 : i32
    scf.for %arg5 = %c0_i32 to %15 step %c1_i32_2  : i32 {
      %c2_i32_4 = arith.constant 2 : i32
      %16 = arith.muli %c2_i32_4, %arg5 : i32
      %cst = arith.constant 0.000000e+00 : f32
      %17 = vector.broadcast %cst : f32 to vector<28x128xf32>
      %c0_i32_5 = arith.constant 0 : i32
      %18 = arith.addi %16, %c0_i32_5 : i32
      %c0_6 = arith.constant 0 : index
      %19 = arith.index_cast %18 : i32 to index
      %c0_7 = arith.constant 0 : index
      %c0_8 = arith.constant 0 : index
      %20 = vector.load %arg1[%c0_6, %19, %c0_7, %c0_8] : memref<1x32x32x128xf32, #tpu.memory_space<vmem>>, vector<1x1x32x128xf32>
      %21 = vector.shape_cast %20 : vector<1x1x32x128xf32> to vector<32x128xf32>
      %22 = vector.extract_strided_slice %21 {offsets = [0, 0], sizes = [28, 128], strides = [1, 1]} : vector<32x128xf32> to vector<28x128xf32>
      %23 = vector.extract_strided_slice %21 {offsets = [1, 0], sizes = [28, 128], strides = [1, 1]} : vector<32x128xf32> to vector<28x128xf32>
      %24 = vector.extract_strided_slice %21 {offsets = [2, 0], sizes = [28, 128], strides = [1, 1]} : vector<32x128xf32> to vector<28x128xf32>
      %25 = vector.extract_strided_slice %21 {offsets = [3, 0], sizes = [28, 128], strides = [1, 1]} : vector<32x128xf32> to vector<28x128xf32>
      %26 = vector.extract_strided_slice %21 {offsets = [4, 0], sizes = [28, 128], strides = [1, 1]} : vector<32x128xf32> to vector<28x128xf32>
      %27 = tpu.concatenate %22, %23, %24, %25, %26 in 1 : vector<28x128xf32>, vector<28x128xf32>, vector<28x128xf32>, vector<28x128xf32>, vector<28x128xf32> -> vector<28x640xf32>
      %c0_9 = arith.constant 0 : index
      %c0_10 = arith.constant 0 : index
      %c0_11 = arith.constant 0 : index
      %28 = vector.load %arg2[%c0_9, %c0_10, %c0_11] : memref<5x640x128xf32, #tpu.memory_space<vmem>>, vector<1x640x128xf32>
      %29 = vector.shape_cast %28 : vector<1x640x128xf32> to vector<640x128xf32>
      %cst_12 = arith.constant dense<0.000000e+00> : vector<28x128xf32>
      %30 = tpu.matmul %27, %29, %cst_12 {dimension_numbers = #tpu.dot_dimension_numbers<[1], [0], [0], [1], [0, 0, 1, 1], [], []>} : vector<28x640xf32>, vector<640x128xf32>, vector<28x128xf32> -> vector<28x128xf32>
      %31 = arith.addf %17, %30 : vector<28x128xf32>
      %c1_i32_13 = arith.constant 1 : i32
      %32 = arith.addi %16, %c1_i32_13 : i32
      %c0_14 = arith.constant 0 : index
      %33 = arith.index_cast %32 : i32 to index
      %c0_15 = arith.constant 0 : index
      %c0_16 = arith.constant 0 : index
      %34 = vector.load %arg1[%c0_14, %33, %c0_15, %c0_16] : memref<1x32x32x128xf32, #tpu.memory_space<vmem>>, vector<1x1x32x128xf32>
      %35 = vector.shape_cast %34 : vector<1x1x32x128xf32> to vector<32x128xf32>
      %36 = vector.extract_strided_slice %35 {offsets = [0, 0], sizes = [28, 128], strides = [1, 1]} : vector<32x128xf32> to vector<28x128xf32>
      %37 = vector.extract_strided_slice %35 {offsets = [1, 0], sizes = [28, 128], strides = [1, 1]} : vector<32x128xf32> to vector<28x128xf32>
      %38 = vector.extract_strided_slice %35 {offsets = [2, 0], sizes = [28, 128], strides = [1, 1]} : vector<32x128xf32> to vector<28x128xf32>
      %39 = vector.extract_strided_slice %35 {offsets = [3, 0], sizes = [28, 128], strides = [1, 1]} : vector<32x128xf32> to vector<28x128xf32>
      %40 = vector.extract_strided_slice %35 {offsets = [4, 0], sizes = [28, 128], strides = [1, 1]} : vector<32x128xf32> to vector<28x128xf32>
      %41 = tpu.concatenate %36, %37, %38, %39, %40 in 1 : vector<28x128xf32>, vector<28x128xf32>, vector<28x128xf32>, vector<28x128xf32>, vector<28x128xf32> -> vector<28x640xf32>
      %c1 = arith.constant 1 : index
      %c0_17 = arith.constant 0 : index
      %c0_18 = arith.constant 0 : index
      %42 = vector.load %arg2[%c1, %c0_17, %c0_18] : memref<5x640x128xf32, #tpu.memory_space<vmem>>, vector<1x640x128xf32>
      %43 = vector.shape_cast %42 : vector<1x640x128xf32> to vector<640x128xf32>
      %cst_19 = arith.constant dense<0.000000e+00> : vector<28x128xf32>
      %44 = tpu.matmul %41, %43, %cst_19 {dimension_numbers = #tpu.dot_dimension_numbers<[1], [0], [0], [1], [0, 0, 1, 1], [], []>} : vector<28x640xf32>, vector<640x128xf32>, vector<28x128xf32> -> vector<28x128xf32>
      %45 = arith.addf %31, %44 : vector<28x128xf32>
      %c2_i32_20 = arith.constant 2 : i32
      %46 = arith.addi %16, %c2_i32_20 : i32
      %c0_21 = arith.constant 0 : index
      %47 = arith.index_cast %46 : i32 to index
      %c0_22 = arith.constant 0 : index
      %c0_23 = arith.constant 0 : index
      %48 = vector.load %arg1[%c0_21, %47, %c0_22, %c0_23] : memref<1x32x32x128xf32, #tpu.memory_space<vmem>>, vector<1x1x32x128xf32>
      %49 = vector.shape_cast %48 : vector<1x1x32x128xf32> to vector<32x128xf32>
      %50 = vector.extract_strided_slice %49 {offsets = [0, 0], sizes = [28, 128], strides = [1, 1]} : vector<32x128xf32> to vector<28x128xf32>
      %51 = vector.extract_strided_slice %49 {offsets = [1, 0], sizes = [28, 128], strides = [1, 1]} : vector<32x128xf32> to vector<28x128xf32>
      %52 = vector.extract_strided_slice %49 {offsets = [2, 0], sizes = [28, 128], strides = [1, 1]} : vector<32x128xf32> to vector<28x128xf32>
      %53 = vector.extract_strided_slice %49 {offsets = [3, 0], sizes = [28, 128], strides = [1, 1]} : vector<32x128xf32> to vector<28x128xf32>
      %54 = vector.extract_strided_slice %49 {offsets = [4, 0], sizes = [28, 128], strides = [1, 1]} : vector<32x128xf32> to vector<28x128xf32>
      %55 = tpu.concatenate %50, %51, %52, %53, %54 in 1 : vector<28x128xf32>, vector<28x128xf32>, vector<28x128xf32>, vector<28x128xf32>, vector<28x128xf32> -> vector<28x640xf32>
      %c2 = arith.constant 2 : index
      %c0_24 = arith.constant 0 : index
      %c0_25 = arith.constant 0 : index
      %56 = vector.load %arg2[%c2, %c0_24, %c0_25] : memref<5x640x128xf32, #tpu.memory_space<vmem>>, vector<1x640x128xf32>
      %57 = vector.shape_cast %56 : vector<1x640x128xf32> to vector<640x128xf32>
      %cst_26 = arith.constant dense<0.000000e+00> : vector<28x128xf32>
      %58 = tpu.matmul %55, %57, %cst_26 {dimension_numbers = #tpu.dot_dimension_numbers<[1], [0], [0], [1], [0, 0, 1, 1], [], []>} : vector<28x640xf32>, vector<640x128xf32>, vector<28x128xf32> -> vector<28x128xf32>
      %59 = arith.addf %45, %58 : vector<28x128xf32>
      %c3_i32 = arith.constant 3 : i32
      %60 = arith.addi %16, %c3_i32 : i32
      %c0_27 = arith.constant 0 : index
      %61 = arith.index_cast %60 : i32 to index
      %c0_28 = arith.constant 0 : index
      %c0_29 = arith.constant 0 : index
      %62 = vector.load %arg1[%c0_27, %61, %c0_28, %c0_29] : memref<1x32x32x128xf32, #tpu.memory_space<vmem>>, vector<1x1x32x128xf32>
      %63 = vector.shape_cast %62 : vector<1x1x32x128xf32> to vector<32x128xf32>
      %64 = vector.extract_strided_slice %63 {offsets = [0, 0], sizes = [28, 128], strides = [1, 1]} : vector<32x128xf32> to vector<28x128xf32>
      %65 = vector.extract_strided_slice %63 {offsets = [1, 0], sizes = [28, 128], strides = [1, 1]} : vector<32x128xf32> to vector<28x128xf32>
      %66 = vector.extract_strided_slice %63 {offsets = [2, 0], sizes = [28, 128], strides = [1, 1]} : vector<32x128xf32> to vector<28x128xf32>
      %67 = vector.extract_strided_slice %63 {offsets = [3, 0], sizes = [28, 128], strides = [1, 1]} : vector<32x128xf32> to vector<28x128xf32>
      %68 = vector.extract_strided_slice %63 {offsets = [4, 0], sizes = [28, 128], strides = [1, 1]} : vector<32x128xf32> to vector<28x128xf32>
      %69 = tpu.concatenate %64, %65, %66, %67, %68 in 1 : vector<28x128xf32>, vector<28x128xf32>, vector<28x128xf32>, vector<28x128xf32>, vector<28x128xf32> -> vector<28x640xf32>
      %c3 = arith.constant 3 : index
      %c0_30 = arith.constant 0 : index
      %c0_31 = arith.constant 0 : index
      %70 = vector.load %arg2[%c3, %c0_30, %c0_31] : memref<5x640x128xf32, #tpu.memory_space<vmem>>, vector<1x640x128xf32>
      %71 = vector.shape_cast %70 : vector<1x640x128xf32> to vector<640x128xf32>
      %cst_32 = arith.constant dense<0.000000e+00> : vector<28x128xf32>
      %72 = tpu.matmul %69, %71, %cst_32 {dimension_numbers = #tpu.dot_dimension_numbers<[1], [0], [0], [1], [0, 0, 1, 1], [], []>} : vector<28x640xf32>, vector<640x128xf32>, vector<28x128xf32> -> vector<28x128xf32>
      %73 = arith.addf %59, %72 : vector<28x128xf32>
      %c4_i32 = arith.constant 4 : i32
      %74 = arith.addi %16, %c4_i32 : i32
      %c0_33 = arith.constant 0 : index
      %75 = arith.index_cast %74 : i32 to index
      %c0_34 = arith.constant 0 : index
      %c0_35 = arith.constant 0 : index
      %76 = vector.load %arg1[%c0_33, %75, %c0_34, %c0_35] : memref<1x32x32x128xf32, #tpu.memory_space<vmem>>, vector<1x1x32x128xf32>
      %77 = vector.shape_cast %76 : vector<1x1x32x128xf32> to vector<32x128xf32>
      %78 = vector.extract_strided_slice %77 {offsets = [0, 0], sizes = [28, 128], strides = [1, 1]} : vector<32x128xf32> to vector<28x128xf32>
      %79 = vector.extract_strided_slice %77 {offsets = [1, 0], sizes = [28, 128], strides = [1, 1]} : vector<32x128xf32> to vector<28x128xf32>
      %80 = vector.extract_strided_slice %77 {offsets = [2, 0], sizes = [28, 128], strides = [1, 1]} : vector<32x128xf32> to vector<28x128xf32>
      %81 = vector.extract_strided_slice %77 {offsets = [3, 0], sizes = [28, 128], strides = [1, 1]} : vector<32x128xf32> to vector<28x128xf32>
      %82 = vector.extract_strided_slice %77 {offsets = [4, 0], sizes = [28, 128], strides = [1, 1]} : vector<32x128xf32> to vector<28x128xf32>
      %83 = tpu.concatenate %78, %79, %80, %81, %82 in 1 : vector<28x128xf32>, vector<28x128xf32>, vector<28x128xf32>, vector<28x128xf32>, vector<28x128xf32> -> vector<28x640xf32>
      %c4 = arith.constant 4 : index
      %c0_36 = arith.constant 0 : index
      %c0_37 = arith.constant 0 : index
      %84 = vector.load %arg2[%c4, %c0_36, %c0_37] : memref<5x640x128xf32, #tpu.memory_space<vmem>>, vector<1x640x128xf32>
      %85 = vector.shape_cast %84 : vector<1x640x128xf32> to vector<640x128xf32>
      %cst_38 = arith.constant dense<0.000000e+00> : vector<28x128xf32>
      %86 = tpu.matmul %83, %85, %cst_38 {dimension_numbers = #tpu.dot_dimension_numbers<[1], [0], [0], [1], [0, 0, 1, 1], [], []>} : vector<28x640xf32>, vector<640x128xf32>, vector<28x128xf32> -> vector<28x128xf32>
      %87 = arith.addf %73, %86 : vector<28x128xf32>
      %88 = vector.broadcast %0 : vector<1x128xf32> to vector<28x128xf32>
      %89 = arith.addf %87, %88 : vector<28x128xf32>
      %cst_39 = arith.constant 0.000000e+00 : f32
      %90 = vector.broadcast %cst_39 : f32 to vector<28x128xf32>
      %91 = arith.maximumf %89, %90 : vector<28x128xf32>
      %c1_i32_40 = arith.constant 1 : i32
      %92 = arith.addi %16, %c1_i32_40 : i32
      %cst_41 = arith.constant 0.000000e+00 : f32
      %93 = vector.broadcast %cst_41 : f32 to vector<28x128xf32>
      %c0_i32_42 = arith.constant 0 : i32
      %94 = arith.addi %92, %c0_i32_42 : i32
      %c0_43 = arith.constant 0 : index
      %95 = arith.index_cast %94 : i32 to index
      %c0_44 = arith.constant 0 : index
      %c0_45 = arith.constant 0 : index
      %96 = vector.load %arg1[%c0_43, %95, %c0_44, %c0_45] : memref<1x32x32x128xf32, #tpu.memory_space<vmem>>, vector<1x1x32x128xf32>
      %97 = vector.shape_cast %96 : vector<1x1x32x128xf32> to vector<32x128xf32>
      %98 = vector.extract_strided_slice %97 {offsets = [0, 0], sizes = [28, 128], strides = [1, 1]} : vector<32x128xf32> to vector<28x128xf32>
      %99 = vector.extract_strided_slice %97 {offsets = [1, 0], sizes = [28, 128], strides = [1, 1]} : vector<32x128xf32> to vector<28x128xf32>
      %100 = vector.extract_strided_slice %97 {offsets = [2, 0], sizes = [28, 128], strides = [1, 1]} : vector<32x128xf32> to vector<28x128xf32>
      %101 = vector.extract_strided_slice %97 {offsets = [3, 0], sizes = [28, 128], strides = [1, 1]} : vector<32x128xf32> to vector<28x128xf32>
      %102 = vector.extract_strided_slice %97 {offsets = [4, 0], sizes = [28, 128], strides = [1, 1]} : vector<32x128xf32> to vector<28x128xf32>
      %103 = tpu.concatenate %98, %99, %100, %101, %102 in 1 : vector<28x128xf32>, vector<28x128xf32>, vector<28x128xf32>, vector<28x128xf32>, vector<28x128xf32> -> vector<28x640xf32>
      %c0_46 = arith.constant 0 : index
      %c0_47 = arith.constant 0 : index
      %c0_48 = arith.constant 0 : index
      %104 = vector.load %arg2[%c0_46, %c0_47, %c0_48] : memref<5x640x128xf32, #tpu.memory_space<vmem>>, vector<1x640x128xf32>
      %105 = vector.shape_cast %104 : vector<1x640x128xf32> to vector<640x128xf32>
      %cst_49 = arith.constant dense<0.000000e+00> : vector<28x128xf32>
      %106 = tpu.matmul %103, %105, %cst_49 {dimension_numbers = #tpu.dot_dimension_numbers<[1], [0], [0], [1], [0, 0, 1, 1], [], []>} : vector<28x640xf32>, vector<640x128xf32>, vector<28x128xf32> -> vector<28x128xf32>
      %107 = arith.addf %93, %106 : vector<28x128xf32>
      %c1_i32_50 = arith.constant 1 : i32
      %108 = arith.addi %92, %c1_i32_50 : i32
      %c0_51 = arith.constant 0 : index
      %109 = arith.index_cast %108 : i32 to index
      %c0_52 = arith.constant 0 : index
      %c0_53 = arith.constant 0 : index
      %110 = vector.load %arg1[%c0_51, %109, %c0_52, %c0_53] : memref<1x32x32x128xf32, #tpu.memory_space<vmem>>, vector<1x1x32x128xf32>
      %111 = vector.shape_cast %110 : vector<1x1x32x128xf32> to vector<32x128xf32>
      %112 = vector.extract_strided_slice %111 {offsets = [0, 0], sizes = [28, 128], strides = [1, 1]} : vector<32x128xf32> to vector<28x128xf32>
      %113 = vector.extract_strided_slice %111 {offsets = [1, 0], sizes = [28, 128], strides = [1, 1]} : vector<32x128xf32> to vector<28x128xf32>
      %114 = vector.extract_strided_slice %111 {offsets = [2, 0], sizes = [28, 128], strides = [1, 1]} : vector<32x128xf32> to vector<28x128xf32>
      %115 = vector.extract_strided_slice %111 {offsets = [3, 0], sizes = [28, 128], strides = [1, 1]} : vector<32x128xf32> to vector<28x128xf32>
      %116 = vector.extract_strided_slice %111 {offsets = [4, 0], sizes = [28, 128], strides = [1, 1]} : vector<32x128xf32> to vector<28x128xf32>
      %117 = tpu.concatenate %112, %113, %114, %115, %116 in 1 : vector<28x128xf32>, vector<28x128xf32>, vector<28x128xf32>, vector<28x128xf32>, vector<28x128xf32> -> vector<28x640xf32>
      %c1_54 = arith.constant 1 : index
      %c0_55 = arith.constant 0 : index
      %c0_56 = arith.constant 0 : index
      %118 = vector.load %arg2[%c1_54, %c0_55, %c0_56] : memref<5x640x128xf32, #tpu.memory_space<vmem>>, vector<1x640x128xf32>
      %119 = vector.shape_cast %118 : vector<1x640x128xf32> to vector<640x128xf32>
      %cst_57 = arith.constant dense<0.000000e+00> : vector<28x128xf32>
      %120 = tpu.matmul %117, %119, %cst_57 {dimension_numbers = #tpu.dot_dimension_numbers<[1], [0], [0], [1], [0, 0, 1, 1], [], []>} : vector<28x640xf32>, vector<640x128xf32>, vector<28x128xf32> -> vector<28x128xf32>
      %121 = arith.addf %107, %120 : vector<28x128xf32>
      %c2_i32_58 = arith.constant 2 : i32
      %122 = arith.addi %92, %c2_i32_58 : i32
      %c0_59 = arith.constant 0 : index
      %123 = arith.index_cast %122 : i32 to index
      %c0_60 = arith.constant 0 : index
      %c0_61 = arith.constant 0 : index
      %124 = vector.load %arg1[%c0_59, %123, %c0_60, %c0_61] : memref<1x32x32x128xf32, #tpu.memory_space<vmem>>, vector<1x1x32x128xf32>
      %125 = vector.shape_cast %124 : vector<1x1x32x128xf32> to vector<32x128xf32>
      %126 = vector.extract_strided_slice %125 {offsets = [0, 0], sizes = [28, 128], strides = [1, 1]} : vector<32x128xf32> to vector<28x128xf32>
      %127 = vector.extract_strided_slice %125 {offsets = [1, 0], sizes = [28, 128], strides = [1, 1]} : vector<32x128xf32> to vector<28x128xf32>
      %128 = vector.extract_strided_slice %125 {offsets = [2, 0], sizes = [28, 128], strides = [1, 1]} : vector<32x128xf32> to vector<28x128xf32>
      %129 = vector.extract_strided_slice %125 {offsets = [3, 0], sizes = [28, 128], strides = [1, 1]} : vector<32x128xf32> to vector<28x128xf32>
      %130 = vector.extract_strided_slice %125 {offsets = [4, 0], sizes = [28, 128], strides = [1, 1]} : vector<32x128xf32> to vector<28x128xf32>
      %131 = tpu.concatenate %126, %127, %128, %129, %130 in 1 : vector<28x128xf32>, vector<28x128xf32>, vector<28x128xf32>, vector<28x128xf32>, vector<28x128xf32> -> vector<28x640xf32>
      %c2_62 = arith.constant 2 : index
      %c0_63 = arith.constant 0 : index
      %c0_64 = arith.constant 0 : index
      %132 = vector.load %arg2[%c2_62, %c0_63, %c0_64] : memref<5x640x128xf32, #tpu.memory_space<vmem>>, vector<1x640x128xf32>
      %133 = vector.shape_cast %132 : vector<1x640x128xf32> to vector<640x128xf32>
      %cst_65 = arith.constant dense<0.000000e+00> : vector<28x128xf32>
      %134 = tpu.matmul %131, %133, %cst_65 {dimension_numbers = #tpu.dot_dimension_numbers<[1], [0], [0], [1], [0, 0, 1, 1], [], []>} : vector<28x640xf32>, vector<640x128xf32>, vector<28x128xf32> -> vector<28x128xf32>
      %135 = arith.addf %121, %134 : vector<28x128xf32>
      %c3_i32_66 = arith.constant 3 : i32
      %136 = arith.addi %92, %c3_i32_66 : i32
      %c0_67 = arith.constant 0 : index
      %137 = arith.index_cast %136 : i32 to index
      %c0_68 = arith.constant 0 : index
      %c0_69 = arith.constant 0 : index
      %138 = vector.load %arg1[%c0_67, %137, %c0_68, %c0_69] : memref<1x32x32x128xf32, #tpu.memory_space<vmem>>, vector<1x1x32x128xf32>
      %139 = vector.shape_cast %138 : vector<1x1x32x128xf32> to vector<32x128xf32>
      %140 = vector.extract_strided_slice %139 {offsets = [0, 0], sizes = [28, 128], strides = [1, 1]} : vector<32x128xf32> to vector<28x128xf32>
      %141 = vector.extract_strided_slice %139 {offsets = [1, 0], sizes = [28, 128], strides = [1, 1]} : vector<32x128xf32> to vector<28x128xf32>
      %142 = vector.extract_strided_slice %139 {offsets = [2, 0], sizes = [28, 128], strides = [1, 1]} : vector<32x128xf32> to vector<28x128xf32>
      %143 = vector.extract_strided_slice %139 {offsets = [3, 0], sizes = [28, 128], strides = [1, 1]} : vector<32x128xf32> to vector<28x128xf32>
      %144 = vector.extract_strided_slice %139 {offsets = [4, 0], sizes = [28, 128], strides = [1, 1]} : vector<32x128xf32> to vector<28x128xf32>
      %145 = tpu.concatenate %140, %141, %142, %143, %144 in 1 : vector<28x128xf32>, vector<28x128xf32>, vector<28x128xf32>, vector<28x128xf32>, vector<28x128xf32> -> vector<28x640xf32>
      %c3_70 = arith.constant 3 : index
      %c0_71 = arith.constant 0 : index
      %c0_72 = arith.constant 0 : index
      %146 = vector.load %arg2[%c3_70, %c0_71, %c0_72] : memref<5x640x128xf32, #tpu.memory_space<vmem>>, vector<1x640x128xf32>
      %147 = vector.shape_cast %146 : vector<1x640x128xf32> to vector<640x128xf32>
      %cst_73 = arith.constant dense<0.000000e+00> : vector<28x128xf32>
      %148 = tpu.matmul %145, %147, %cst_73 {dimension_numbers = #tpu.dot_dimension_numbers<[1], [0], [0], [1], [0, 0, 1, 1], [], []>} : vector<28x640xf32>, vector<640x128xf32>, vector<28x128xf32> -> vector<28x128xf32>
      %149 = arith.addf %135, %148 : vector<28x128xf32>
      %c4_i32_74 = arith.constant 4 : i32
      %150 = arith.addi %92, %c4_i32_74 : i32
      %c0_75 = arith.constant 0 : index
      %151 = arith.index_cast %150 : i32 to index
      %c0_76 = arith.constant 0 : index
      %c0_77 = arith.constant 0 : index
      %152 = vector.load %arg1[%c0_75, %151, %c0_76, %c0_77] : memref<1x32x32x128xf32, #tpu.memory_space<vmem>>, vector<1x1x32x128xf32>
      %153 = vector.shape_cast %152 : vector<1x1x32x128xf32> to vector<32x128xf32>
      %154 = vector.extract_strided_slice %153 {offsets = [0, 0], sizes = [28, 128], strides = [1, 1]} : vector<32x128xf32> to vector<28x128xf32>
      %155 = vector.extract_strided_slice %153 {offsets = [1, 0], sizes = [28, 128], strides = [1, 1]} : vector<32x128xf32> to vector<28x128xf32>
      %156 = vector.extract_strided_slice %153 {offsets = [2, 0], sizes = [28, 128], strides = [1, 1]} : vector<32x128xf32> to vector<28x128xf32>
      %157 = vector.extract_strided_slice %153 {offsets = [3, 0], sizes = [28, 128], strides = [1, 1]} : vector<32x128xf32> to vector<28x128xf32>
      %158 = vector.extract_strided_slice %153 {offsets = [4, 0], sizes = [28, 128], strides = [1, 1]} : vector<32x128xf32> to vector<28x128xf32>
      %159 = tpu.concatenate %154, %155, %156, %157, %158 in 1 : vector<28x128xf32>, vector<28x128xf32>, vector<28x128xf32>, vector<28x128xf32>, vector<28x128xf32> -> vector<28x640xf32>
      %c4_78 = arith.constant 4 : index
      %c0_79 = arith.constant 0 : index
      %c0_80 = arith.constant 0 : index
      %160 = vector.load %arg2[%c4_78, %c0_79, %c0_80] : memref<5x640x128xf32, #tpu.memory_space<vmem>>, vector<1x640x128xf32>
      %161 = vector.shape_cast %160 : vector<1x640x128xf32> to vector<640x128xf32>
      %cst_81 = arith.constant dense<0.000000e+00> : vector<28x128xf32>
      %162 = tpu.matmul %159, %161, %cst_81 {dimension_numbers = #tpu.dot_dimension_numbers<[1], [0], [0], [1], [0, 0, 1, 1], [], []>} : vector<28x640xf32>, vector<640x128xf32>, vector<28x128xf32> -> vector<28x128xf32>
      %163 = arith.addf %149, %162 : vector<28x128xf32>
      %164 = vector.broadcast %0 : vector<1x128xf32> to vector<28x128xf32>
      %165 = arith.addf %163, %164 : vector<28x128xf32>
      %cst_82 = arith.constant 0.000000e+00 : f32
      %166 = vector.broadcast %cst_82 : f32 to vector<28x128xf32>
      %167 = arith.maximumf %165, %166 : vector<28x128xf32>
      %168 = arith.maximumf %91, %167 : vector<28x128xf32>
      %cst_83 = arith.constant dense<0.000000e+00> : vector<14x128xf32>
      %169 = tpu.matmul %7, %168, %cst_83 {dimension_numbers = #tpu.dot_dimension_numbers<[1], [0], [0], [1], [0, 0, 1, 1], [], []>} : vector<14x28xf32>, vector<28x128xf32>, vector<14x128xf32> -> vector<14x128xf32>
      %cst_84 = arith.constant dense<0.000000e+00> : vector<14x128xf32>
      %170 = tpu.matmul %14, %168, %cst_84 {dimension_numbers = #tpu.dot_dimension_numbers<[1], [0], [0], [1], [0, 0, 1, 1], [], []>} : vector<14x28xf32>, vector<28x128xf32>, vector<14x128xf32> -> vector<14x128xf32>
      %171 = arith.maximumf %169, %170 : vector<14x128xf32>
      %c0_85 = arith.constant 0 : index
      %172 = arith.index_cast %arg5 : i32 to index
      %c0_86 = arith.constant 0 : index
      %c0_87 = arith.constant 0 : index
      %173 = vector.load %arg4[%c0_85, %172, %c0_86, %c0_87] : memref<1x14x14x128xf32, #tpu.memory_space<vmem>>, vector<1x1x14x128xf32>
      %174 = vector.shape_cast %173 : vector<1x1x14x128xf32> to vector<14x128xf32>
      %175 = vector.shape_cast %171 : vector<14x128xf32> to vector<1x1x14x128xf32>
      tpu.vector_store %arg4[%c0_85, %172, %c0_86, %c0_87], %175 {strides = array<i32>} : memref<1x14x14x128xf32, #tpu.memory_space<vmem>>, vector<1x1x14x128xf32>,
    }
    %c14_i32_3 = arith.constant 14 : i32
    return
  }
  func.func @transform_0(%arg0: i32) -> (i32, i32, i32, i32) {
    %c0_i32 = arith.constant 0 : i32
    %c0_i32_0 = arith.constant 0 : i32
    %c0_i32_1 = arith.constant 0 : i32
    %c0_i32_2 = arith.constant 0 : i32
    return %arg0, %c0_i32, %c0_i32_0, %c0_i32_1 : i32, i32, i32, i32
  }
  func.func @transform_1(%arg0: i32) -> (i32, i32, i32) {
    %c0_i32 = arith.constant 0 : i32
    %c0_i32_0 = arith.constant 0 : i32
    %c0_i32_1 = arith.constant 0 : i32
    %c0_i32_2 = arith.constant 0 : i32
    return %c0_i32, %c0_i32_0, %c0_i32_1 : i32, i32, i32
  }
  func.func @transform_2(%arg0: i32) -> (i32, i32) {
    %c0_i32 = arith.constant 0 : i32
    %c0_i32_0 = arith.constant 0 : i32
    %c0_i32_1 = arith.constant 0 : i32
    return %c0_i32, %c0_i32_0 : i32, i32
  }
  func.func @transform_3(%arg0: i32) -> (i32, i32, i32, i32) {
    %c0_i32 = arith.constant 0 : i32
    %c0_i32_0 = arith.constant 0 : i32
    %c0_i32_1 = arith.constant 0 : i32
    %c0_i32_2 = arith.constant 0 : i32
    return %arg0, %c0_i32, %c0_i32_0, %c0_i32_1 : i32, i32, i32, i32
  }
}

module attributes {stable_mosaic.version = 11 : i64} {
  func.func @conv_relu_pool_kernel(%arg0: i32, %arg1: memref<1x14x14x128xf32, #tpu.memory_space<vmem>>, %arg2: memref<5x640x128xf32, #tpu.memory_space<vmem>>, %arg3: memref<1x128xf32, #tpu.memory_space<vmem>>, %arg4: memref<1x5x5x128xf32, #tpu.memory_space<vmem>>) attributes {dimension_semantics = [#tpu.dimension_semantics<parallel>], iteration_bounds = array<i64: 2>, scalar_prefetch = 0 : i64, scratch_operands = 0 : i64, tpu.core_type = #tpu.core_type<tc>, window_params = [{transform_indices = @transform_0, window_bounds = array<i64: 1, 14, 14, 128>}, {pipeline_mode = #tpu.pipeline_mode<synchronous>, transform_indices = @transform_1, window_bounds = array<i64: 5, 640, 128>}, {pipeline_mode = #tpu.pipeline_mode<synchronous>, transform_indices = @transform_2, window_bounds = array<i64: 1, 128>}, {transform_indices = @transform_3, window_bounds = array<i64: 1, 5, 5, 128>}]} {
    %c0 = arith.constant 0 : index
    %c0_0 = arith.constant 0 : index
    %0 = vector.load %arg3[%c0, %c0_0] : memref<1x128xf32, #tpu.memory_space<vmem>>, vector<1x128xf32>
    %1 = tpu.iota {dimensions = array<i32: 0>} : vector<5x10xi32>
    %2 = tpu.iota {dimensions = array<i32: 1>} : vector<5x10xi32>
    %c2_i32 = arith.constant 2 : i32
    %3 = vector.broadcast %c2_i32 : i32 to vector<5x10xi32>
    %4 = arith.muli %3, %1 : vector<5x10xi32>
    %5 = arith.cmpi eq, %2, %4 : vector<5x10xi32>
    %6 = arith.extui %5 : vector<5x10xi1> to vector<5x10xi32>
    %7 = arith.sitofp %6 : vector<5x10xi32> to vector<5x10xf32>
    %c2_i32_1 = arith.constant 2 : i32
    %8 = vector.broadcast %c2_i32_1 : i32 to vector<5x10xi32>
    %9 = arith.muli %8, %1 : vector<5x10xi32>
    %c1_i32 = arith.constant 1 : i32
    %10 = vector.broadcast %c1_i32 : i32 to vector<5x10xi32>
    %11 = arith.addi %9, %10 : vector<5x10xi32>
    %12 = arith.cmpi eq, %2, %11 : vector<5x10xi32>
    %13 = arith.extui %12 : vector<5x10xi1> to vector<5x10xi32>
    %14 = arith.sitofp %13 : vector<5x10xi32> to vector<5x10xf32>
    %c0_i32 = arith.constant 0 : i32
    %c5_i32 = arith.constant 5 : i32
    %15 = arith.addi %c0_i32, %c5_i32 : i32
    %c1_i32_2 = arith.constant 1 : i32
    scf.for %arg5 = %c0_i32 to %15 step %c1_i32_2  : i32 {
      %c2_i32_4 = arith.constant 2 : i32
      %16 = arith.muli %c2_i32_4, %arg5 : i32
      %cst = arith.constant 0.000000e+00 : f32
      %17 = vector.broadcast %cst : f32 to vector<10x128xf32>
      %c0_i32_5 = arith.constant 0 : i32
      %18 = arith.addi %16, %c0_i32_5 : i32
      %c0_6 = arith.constant 0 : index
      %19 = arith.index_cast %18 : i32 to index
      %c0_7 = arith.constant 0 : index
      %c0_8 = arith.constant 0 : index
      %20 = vector.load %arg1[%c0_6, %19, %c0_7, %c0_8] : memref<1x14x14x128xf32, #tpu.memory_space<vmem>>, vector<1x1x14x128xf32>
      %21 = vector.shape_cast %20 : vector<1x1x14x128xf32> to vector<14x128xf32>
      %22 = vector.extract_strided_slice %21 {offsets = [0, 0], sizes = [10, 128], strides = [1, 1]} : vector<14x128xf32> to vector<10x128xf32>
      %23 = vector.extract_strided_slice %21 {offsets = [1, 0], sizes = [10, 128], strides = [1, 1]} : vector<14x128xf32> to vector<10x128xf32>
      %24 = vector.extract_strided_slice %21 {offsets = [2, 0], sizes = [10, 128], strides = [1, 1]} : vector<14x128xf32> to vector<10x128xf32>
      %25 = vector.extract_strided_slice %21 {offsets = [3, 0], sizes = [10, 128], strides = [1, 1]} : vector<14x128xf32> to vector<10x128xf32>
      %26 = vector.extract_strided_slice %21 {offsets = [4, 0], sizes = [10, 128], strides = [1, 1]} : vector<14x128xf32> to vector<10x128xf32>
      %27 = tpu.concatenate %22, %23, %24, %25, %26 in 1 : vector<10x128xf32>, vector<10x128xf32>, vector<10x128xf32>, vector<10x128xf32>, vector<10x128xf32> -> vector<10x640xf32>
      %c0_9 = arith.constant 0 : index
      %c0_10 = arith.constant 0 : index
      %c0_11 = arith.constant 0 : index
      %28 = vector.load %arg2[%c0_9, %c0_10, %c0_11] : memref<5x640x128xf32, #tpu.memory_space<vmem>>, vector<1x640x128xf32>
      %29 = vector.shape_cast %28 : vector<1x640x128xf32> to vector<640x128xf32>
      %cst_12 = arith.constant dense<0.000000e+00> : vector<10x128xf32>
      %30 = tpu.matmul %27, %29, %cst_12 {dimension_numbers = #tpu.dot_dimension_numbers<[1], [0], [0], [1], [0, 0, 1, 1], [], []>} : vector<10x640xf32>, vector<640x128xf32>, vector<10x128xf32> -> vector<10x128xf32>
      %31 = arith.addf %17, %30 : vector<10x128xf32>
      %c1_i32_13 = arith.constant 1 : i32
      %32 = arith.addi %16, %c1_i32_13 : i32
      %c0_14 = arith.constant 0 : index
      %33 = arith.index_cast %32 : i32 to index
      %c0_15 = arith.constant 0 : index
      %c0_16 = arith.constant 0 : index
      %34 = vector.load %arg1[%c0_14, %33, %c0_15, %c0_16] : memref<1x14x14x128xf32, #tpu.memory_space<vmem>>, vector<1x1x14x128xf32>
      %35 = vector.shape_cast %34 : vector<1x1x14x128xf32> to vector<14x128xf32>
      %36 = vector.extract_strided_slice %35 {offsets = [0, 0], sizes = [10, 128], strides = [1, 1]} : vector<14x128xf32> to vector<10x128xf32>
      %37 = vector.extract_strided_slice %35 {offsets = [1, 0], sizes = [10, 128], strides = [1, 1]} : vector<14x128xf32> to vector<10x128xf32>
      %38 = vector.extract_strided_slice %35 {offsets = [2, 0], sizes = [10, 128], strides = [1, 1]} : vector<14x128xf32> to vector<10x128xf32>
      %39 = vector.extract_strided_slice %35 {offsets = [3, 0], sizes = [10, 128], strides = [1, 1]} : vector<14x128xf32> to vector<10x128xf32>
      %40 = vector.extract_strided_slice %35 {offsets = [4, 0], sizes = [10, 128], strides = [1, 1]} : vector<14x128xf32> to vector<10x128xf32>
      %41 = tpu.concatenate %36, %37, %38, %39, %40 in 1 : vector<10x128xf32>, vector<10x128xf32>, vector<10x128xf32>, vector<10x128xf32>, vector<10x128xf32> -> vector<10x640xf32>
      %c1 = arith.constant 1 : index
      %c0_17 = arith.constant 0 : index
      %c0_18 = arith.constant 0 : index
      %42 = vector.load %arg2[%c1, %c0_17, %c0_18] : memref<5x640x128xf32, #tpu.memory_space<vmem>>, vector<1x640x128xf32>
      %43 = vector.shape_cast %42 : vector<1x640x128xf32> to vector<640x128xf32>
      %cst_19 = arith.constant dense<0.000000e+00> : vector<10x128xf32>
      %44 = tpu.matmul %41, %43, %cst_19 {dimension_numbers = #tpu.dot_dimension_numbers<[1], [0], [0], [1], [0, 0, 1, 1], [], []>} : vector<10x640xf32>, vector<640x128xf32>, vector<10x128xf32> -> vector<10x128xf32>
      %45 = arith.addf %31, %44 : vector<10x128xf32>
      %c2_i32_20 = arith.constant 2 : i32
      %46 = arith.addi %16, %c2_i32_20 : i32
      %c0_21 = arith.constant 0 : index
      %47 = arith.index_cast %46 : i32 to index
      %c0_22 = arith.constant 0 : index
      %c0_23 = arith.constant 0 : index
      %48 = vector.load %arg1[%c0_21, %47, %c0_22, %c0_23] : memref<1x14x14x128xf32, #tpu.memory_space<vmem>>, vector<1x1x14x128xf32>
      %49 = vector.shape_cast %48 : vector<1x1x14x128xf32> to vector<14x128xf32>
      %50 = vector.extract_strided_slice %49 {offsets = [0, 0], sizes = [10, 128], strides = [1, 1]} : vector<14x128xf32> to vector<10x128xf32>
      %51 = vector.extract_strided_slice %49 {offsets = [1, 0], sizes = [10, 128], strides = [1, 1]} : vector<14x128xf32> to vector<10x128xf32>
      %52 = vector.extract_strided_slice %49 {offsets = [2, 0], sizes = [10, 128], strides = [1, 1]} : vector<14x128xf32> to vector<10x128xf32>
      %53 = vector.extract_strided_slice %49 {offsets = [3, 0], sizes = [10, 128], strides = [1, 1]} : vector<14x128xf32> to vector<10x128xf32>
      %54 = vector.extract_strided_slice %49 {offsets = [4, 0], sizes = [10, 128], strides = [1, 1]} : vector<14x128xf32> to vector<10x128xf32>
      %55 = tpu.concatenate %50, %51, %52, %53, %54 in 1 : vector<10x128xf32>, vector<10x128xf32>, vector<10x128xf32>, vector<10x128xf32>, vector<10x128xf32> -> vector<10x640xf32>
      %c2 = arith.constant 2 : index
      %c0_24 = arith.constant 0 : index
      %c0_25 = arith.constant 0 : index
      %56 = vector.load %arg2[%c2, %c0_24, %c0_25] : memref<5x640x128xf32, #tpu.memory_space<vmem>>, vector<1x640x128xf32>
      %57 = vector.shape_cast %56 : vector<1x640x128xf32> to vector<640x128xf32>
      %cst_26 = arith.constant dense<0.000000e+00> : vector<10x128xf32>
      %58 = tpu.matmul %55, %57, %cst_26 {dimension_numbers = #tpu.dot_dimension_numbers<[1], [0], [0], [1], [0, 0, 1, 1], [], []>} : vector<10x640xf32>, vector<640x128xf32>, vector<10x128xf32> -> vector<10x128xf32>
      %59 = arith.addf %45, %58 : vector<10x128xf32>
      %c3_i32 = arith.constant 3 : i32
      %60 = arith.addi %16, %c3_i32 : i32
      %c0_27 = arith.constant 0 : index
      %61 = arith.index_cast %60 : i32 to index
      %c0_28 = arith.constant 0 : index
      %c0_29 = arith.constant 0 : index
      %62 = vector.load %arg1[%c0_27, %61, %c0_28, %c0_29] : memref<1x14x14x128xf32, #tpu.memory_space<vmem>>, vector<1x1x14x128xf32>
      %63 = vector.shape_cast %62 : vector<1x1x14x128xf32> to vector<14x128xf32>
      %64 = vector.extract_strided_slice %63 {offsets = [0, 0], sizes = [10, 128], strides = [1, 1]} : vector<14x128xf32> to vector<10x128xf32>
      %65 = vector.extract_strided_slice %63 {offsets = [1, 0], sizes = [10, 128], strides = [1, 1]} : vector<14x128xf32> to vector<10x128xf32>
      %66 = vector.extract_strided_slice %63 {offsets = [2, 0], sizes = [10, 128], strides = [1, 1]} : vector<14x128xf32> to vector<10x128xf32>
      %67 = vector.extract_strided_slice %63 {offsets = [3, 0], sizes = [10, 128], strides = [1, 1]} : vector<14x128xf32> to vector<10x128xf32>
      %68 = vector.extract_strided_slice %63 {offsets = [4, 0], sizes = [10, 128], strides = [1, 1]} : vector<14x128xf32> to vector<10x128xf32>
      %69 = tpu.concatenate %64, %65, %66, %67, %68 in 1 : vector<10x128xf32>, vector<10x128xf32>, vector<10x128xf32>, vector<10x128xf32>, vector<10x128xf32> -> vector<10x640xf32>
      %c3 = arith.constant 3 : index
      %c0_30 = arith.constant 0 : index
      %c0_31 = arith.constant 0 : index
      %70 = vector.load %arg2[%c3, %c0_30, %c0_31] : memref<5x640x128xf32, #tpu.memory_space<vmem>>, vector<1x640x128xf32>
      %71 = vector.shape_cast %70 : vector<1x640x128xf32> to vector<640x128xf32>
      %cst_32 = arith.constant dense<0.000000e+00> : vector<10x128xf32>
      %72 = tpu.matmul %69, %71, %cst_32 {dimension_numbers = #tpu.dot_dimension_numbers<[1], [0], [0], [1], [0, 0, 1, 1], [], []>} : vector<10x640xf32>, vector<640x128xf32>, vector<10x128xf32> -> vector<10x128xf32>
      %73 = arith.addf %59, %72 : vector<10x128xf32>
      %c4_i32 = arith.constant 4 : i32
      %74 = arith.addi %16, %c4_i32 : i32
      %c0_33 = arith.constant 0 : index
      %75 = arith.index_cast %74 : i32 to index
      %c0_34 = arith.constant 0 : index
      %c0_35 = arith.constant 0 : index
      %76 = vector.load %arg1[%c0_33, %75, %c0_34, %c0_35] : memref<1x14x14x128xf32, #tpu.memory_space<vmem>>, vector<1x1x14x128xf32>
      %77 = vector.shape_cast %76 : vector<1x1x14x128xf32> to vector<14x128xf32>
      %78 = vector.extract_strided_slice %77 {offsets = [0, 0], sizes = [10, 128], strides = [1, 1]} : vector<14x128xf32> to vector<10x128xf32>
      %79 = vector.extract_strided_slice %77 {offsets = [1, 0], sizes = [10, 128], strides = [1, 1]} : vector<14x128xf32> to vector<10x128xf32>
      %80 = vector.extract_strided_slice %77 {offsets = [2, 0], sizes = [10, 128], strides = [1, 1]} : vector<14x128xf32> to vector<10x128xf32>
      %81 = vector.extract_strided_slice %77 {offsets = [3, 0], sizes = [10, 128], strides = [1, 1]} : vector<14x128xf32> to vector<10x128xf32>
      %82 = vector.extract_strided_slice %77 {offsets = [4, 0], sizes = [10, 128], strides = [1, 1]} : vector<14x128xf32> to vector<10x128xf32>
      %83 = tpu.concatenate %78, %79, %80, %81, %82 in 1 : vector<10x128xf32>, vector<10x128xf32>, vector<10x128xf32>, vector<10x128xf32>, vector<10x128xf32> -> vector<10x640xf32>
      %c4 = arith.constant 4 : index
      %c0_36 = arith.constant 0 : index
      %c0_37 = arith.constant 0 : index
      %84 = vector.load %arg2[%c4, %c0_36, %c0_37] : memref<5x640x128xf32, #tpu.memory_space<vmem>>, vector<1x640x128xf32>
      %85 = vector.shape_cast %84 : vector<1x640x128xf32> to vector<640x128xf32>
      %cst_38 = arith.constant dense<0.000000e+00> : vector<10x128xf32>
      %86 = tpu.matmul %83, %85, %cst_38 {dimension_numbers = #tpu.dot_dimension_numbers<[1], [0], [0], [1], [0, 0, 1, 1], [], []>} : vector<10x640xf32>, vector<640x128xf32>, vector<10x128xf32> -> vector<10x128xf32>
      %87 = arith.addf %73, %86 : vector<10x128xf32>
      %88 = vector.broadcast %0 : vector<1x128xf32> to vector<10x128xf32>
      %89 = arith.addf %87, %88 : vector<10x128xf32>
      %cst_39 = arith.constant 0.000000e+00 : f32
      %90 = vector.broadcast %cst_39 : f32 to vector<10x128xf32>
      %91 = arith.maximumf %89, %90 : vector<10x128xf32>
      %c1_i32_40 = arith.constant 1 : i32
      %92 = arith.addi %16, %c1_i32_40 : i32
      %cst_41 = arith.constant 0.000000e+00 : f32
      %93 = vector.broadcast %cst_41 : f32 to vector<10x128xf32>
      %c0_i32_42 = arith.constant 0 : i32
      %94 = arith.addi %92, %c0_i32_42 : i32
      %c0_43 = arith.constant 0 : index
      %95 = arith.index_cast %94 : i32 to index
      %c0_44 = arith.constant 0 : index
      %c0_45 = arith.constant 0 : index
      %96 = vector.load %arg1[%c0_43, %95, %c0_44, %c0_45] : memref<1x14x14x128xf32, #tpu.memory_space<vmem>>, vector<1x1x14x128xf32>
      %97 = vector.shape_cast %96 : vector<1x1x14x128xf32> to vector<14x128xf32>
      %98 = vector.extract_strided_slice %97 {offsets = [0, 0], sizes = [10, 128], strides = [1, 1]} : vector<14x128xf32> to vector<10x128xf32>
      %99 = vector.extract_strided_slice %97 {offsets = [1, 0], sizes = [10, 128], strides = [1, 1]} : vector<14x128xf32> to vector<10x128xf32>
      %100 = vector.extract_strided_slice %97 {offsets = [2, 0], sizes = [10, 128], strides = [1, 1]} : vector<14x128xf32> to vector<10x128xf32>
      %101 = vector.extract_strided_slice %97 {offsets = [3, 0], sizes = [10, 128], strides = [1, 1]} : vector<14x128xf32> to vector<10x128xf32>
      %102 = vector.extract_strided_slice %97 {offsets = [4, 0], sizes = [10, 128], strides = [1, 1]} : vector<14x128xf32> to vector<10x128xf32>
      %103 = tpu.concatenate %98, %99, %100, %101, %102 in 1 : vector<10x128xf32>, vector<10x128xf32>, vector<10x128xf32>, vector<10x128xf32>, vector<10x128xf32> -> vector<10x640xf32>
      %c0_46 = arith.constant 0 : index
      %c0_47 = arith.constant 0 : index
      %c0_48 = arith.constant 0 : index
      %104 = vector.load %arg2[%c0_46, %c0_47, %c0_48] : memref<5x640x128xf32, #tpu.memory_space<vmem>>, vector<1x640x128xf32>
      %105 = vector.shape_cast %104 : vector<1x640x128xf32> to vector<640x128xf32>
      %cst_49 = arith.constant dense<0.000000e+00> : vector<10x128xf32>
      %106 = tpu.matmul %103, %105, %cst_49 {dimension_numbers = #tpu.dot_dimension_numbers<[1], [0], [0], [1], [0, 0, 1, 1], [], []>} : vector<10x640xf32>, vector<640x128xf32>, vector<10x128xf32> -> vector<10x128xf32>
      %107 = arith.addf %93, %106 : vector<10x128xf32>
      %c1_i32_50 = arith.constant 1 : i32
      %108 = arith.addi %92, %c1_i32_50 : i32
      %c0_51 = arith.constant 0 : index
      %109 = arith.index_cast %108 : i32 to index
      %c0_52 = arith.constant 0 : index
      %c0_53 = arith.constant 0 : index
      %110 = vector.load %arg1[%c0_51, %109, %c0_52, %c0_53] : memref<1x14x14x128xf32, #tpu.memory_space<vmem>>, vector<1x1x14x128xf32>
      %111 = vector.shape_cast %110 : vector<1x1x14x128xf32> to vector<14x128xf32>
      %112 = vector.extract_strided_slice %111 {offsets = [0, 0], sizes = [10, 128], strides = [1, 1]} : vector<14x128xf32> to vector<10x128xf32>
      %113 = vector.extract_strided_slice %111 {offsets = [1, 0], sizes = [10, 128], strides = [1, 1]} : vector<14x128xf32> to vector<10x128xf32>
      %114 = vector.extract_strided_slice %111 {offsets = [2, 0], sizes = [10, 128], strides = [1, 1]} : vector<14x128xf32> to vector<10x128xf32>
      %115 = vector.extract_strided_slice %111 {offsets = [3, 0], sizes = [10, 128], strides = [1, 1]} : vector<14x128xf32> to vector<10x128xf32>
      %116 = vector.extract_strided_slice %111 {offsets = [4, 0], sizes = [10, 128], strides = [1, 1]} : vector<14x128xf32> to vector<10x128xf32>
      %117 = tpu.concatenate %112, %113, %114, %115, %116 in 1 : vector<10x128xf32>, vector<10x128xf32>, vector<10x128xf32>, vector<10x128xf32>, vector<10x128xf32> -> vector<10x640xf32>
      %c1_54 = arith.constant 1 : index
      %c0_55 = arith.constant 0 : index
      %c0_56 = arith.constant 0 : index
      %118 = vector.load %arg2[%c1_54, %c0_55, %c0_56] : memref<5x640x128xf32, #tpu.memory_space<vmem>>, vector<1x640x128xf32>
      %119 = vector.shape_cast %118 : vector<1x640x128xf32> to vector<640x128xf32>
      %cst_57 = arith.constant dense<0.000000e+00> : vector<10x128xf32>
      %120 = tpu.matmul %117, %119, %cst_57 {dimension_numbers = #tpu.dot_dimension_numbers<[1], [0], [0], [1], [0, 0, 1, 1], [], []>} : vector<10x640xf32>, vector<640x128xf32>, vector<10x128xf32> -> vector<10x128xf32>
      %121 = arith.addf %107, %120 : vector<10x128xf32>
      %c2_i32_58 = arith.constant 2 : i32
      %122 = arith.addi %92, %c2_i32_58 : i32
      %c0_59 = arith.constant 0 : index
      %123 = arith.index_cast %122 : i32 to index
      %c0_60 = arith.constant 0 : index
      %c0_61 = arith.constant 0 : index
      %124 = vector.load %arg1[%c0_59, %123, %c0_60, %c0_61] : memref<1x14x14x128xf32, #tpu.memory_space<vmem>>, vector<1x1x14x128xf32>
      %125 = vector.shape_cast %124 : vector<1x1x14x128xf32> to vector<14x128xf32>
      %126 = vector.extract_strided_slice %125 {offsets = [0, 0], sizes = [10, 128], strides = [1, 1]} : vector<14x128xf32> to vector<10x128xf32>
      %127 = vector.extract_strided_slice %125 {offsets = [1, 0], sizes = [10, 128], strides = [1, 1]} : vector<14x128xf32> to vector<10x128xf32>
      %128 = vector.extract_strided_slice %125 {offsets = [2, 0], sizes = [10, 128], strides = [1, 1]} : vector<14x128xf32> to vector<10x128xf32>
      %129 = vector.extract_strided_slice %125 {offsets = [3, 0], sizes = [10, 128], strides = [1, 1]} : vector<14x128xf32> to vector<10x128xf32>
      %130 = vector.extract_strided_slice %125 {offsets = [4, 0], sizes = [10, 128], strides = [1, 1]} : vector<14x128xf32> to vector<10x128xf32>
      %131 = tpu.concatenate %126, %127, %128, %129, %130 in 1 : vector<10x128xf32>, vector<10x128xf32>, vector<10x128xf32>, vector<10x128xf32>, vector<10x128xf32> -> vector<10x640xf32>
      %c2_62 = arith.constant 2 : index
      %c0_63 = arith.constant 0 : index
      %c0_64 = arith.constant 0 : index
      %132 = vector.load %arg2[%c2_62, %c0_63, %c0_64] : memref<5x640x128xf32, #tpu.memory_space<vmem>>, vector<1x640x128xf32>
      %133 = vector.shape_cast %132 : vector<1x640x128xf32> to vector<640x128xf32>
      %cst_65 = arith.constant dense<0.000000e+00> : vector<10x128xf32>
      %134 = tpu.matmul %131, %133, %cst_65 {dimension_numbers = #tpu.dot_dimension_numbers<[1], [0], [0], [1], [0, 0, 1, 1], [], []>} : vector<10x640xf32>, vector<640x128xf32>, vector<10x128xf32> -> vector<10x128xf32>
      %135 = arith.addf %121, %134 : vector<10x128xf32>
      %c3_i32_66 = arith.constant 3 : i32
      %136 = arith.addi %92, %c3_i32_66 : i32
      %c0_67 = arith.constant 0 : index
      %137 = arith.index_cast %136 : i32 to index
      %c0_68 = arith.constant 0 : index
      %c0_69 = arith.constant 0 : index
      %138 = vector.load %arg1[%c0_67, %137, %c0_68, %c0_69] : memref<1x14x14x128xf32, #tpu.memory_space<vmem>>, vector<1x1x14x128xf32>
      %139 = vector.shape_cast %138 : vector<1x1x14x128xf32> to vector<14x128xf32>
      %140 = vector.extract_strided_slice %139 {offsets = [0, 0], sizes = [10, 128], strides = [1, 1]} : vector<14x128xf32> to vector<10x128xf32>
      %141 = vector.extract_strided_slice %139 {offsets = [1, 0], sizes = [10, 128], strides = [1, 1]} : vector<14x128xf32> to vector<10x128xf32>
      %142 = vector.extract_strided_slice %139 {offsets = [2, 0], sizes = [10, 128], strides = [1, 1]} : vector<14x128xf32> to vector<10x128xf32>
      %143 = vector.extract_strided_slice %139 {offsets = [3, 0], sizes = [10, 128], strides = [1, 1]} : vector<14x128xf32> to vector<10x128xf32>
      %144 = vector.extract_strided_slice %139 {offsets = [4, 0], sizes = [10, 128], strides = [1, 1]} : vector<14x128xf32> to vector<10x128xf32>
      %145 = tpu.concatenate %140, %141, %142, %143, %144 in 1 : vector<10x128xf32>, vector<10x128xf32>, vector<10x128xf32>, vector<10x128xf32>, vector<10x128xf32> -> vector<10x640xf32>
      %c3_70 = arith.constant 3 : index
      %c0_71 = arith.constant 0 : index
      %c0_72 = arith.constant 0 : index
      %146 = vector.load %arg2[%c3_70, %c0_71, %c0_72] : memref<5x640x128xf32, #tpu.memory_space<vmem>>, vector<1x640x128xf32>
      %147 = vector.shape_cast %146 : vector<1x640x128xf32> to vector<640x128xf32>
      %cst_73 = arith.constant dense<0.000000e+00> : vector<10x128xf32>
      %148 = tpu.matmul %145, %147, %cst_73 {dimension_numbers = #tpu.dot_dimension_numbers<[1], [0], [0], [1], [0, 0, 1, 1], [], []>} : vector<10x640xf32>, vector<640x128xf32>, vector<10x128xf32> -> vector<10x128xf32>
      %149 = arith.addf %135, %148 : vector<10x128xf32>
      %c4_i32_74 = arith.constant 4 : i32
      %150 = arith.addi %92, %c4_i32_74 : i32
      %c0_75 = arith.constant 0 : index
      %151 = arith.index_cast %150 : i32 to index
      %c0_76 = arith.constant 0 : index
      %c0_77 = arith.constant 0 : index
      %152 = vector.load %arg1[%c0_75, %151, %c0_76, %c0_77] : memref<1x14x14x128xf32, #tpu.memory_space<vmem>>, vector<1x1x14x128xf32>
      %153 = vector.shape_cast %152 : vector<1x1x14x128xf32> to vector<14x128xf32>
      %154 = vector.extract_strided_slice %153 {offsets = [0, 0], sizes = [10, 128], strides = [1, 1]} : vector<14x128xf32> to vector<10x128xf32>
      %155 = vector.extract_strided_slice %153 {offsets = [1, 0], sizes = [10, 128], strides = [1, 1]} : vector<14x128xf32> to vector<10x128xf32>
      %156 = vector.extract_strided_slice %153 {offsets = [2, 0], sizes = [10, 128], strides = [1, 1]} : vector<14x128xf32> to vector<10x128xf32>
      %157 = vector.extract_strided_slice %153 {offsets = [3, 0], sizes = [10, 128], strides = [1, 1]} : vector<14x128xf32> to vector<10x128xf32>
      %158 = vector.extract_strided_slice %153 {offsets = [4, 0], sizes = [10, 128], strides = [1, 1]} : vector<14x128xf32> to vector<10x128xf32>
      %159 = tpu.concatenate %154, %155, %156, %157, %158 in 1 : vector<10x128xf32>, vector<10x128xf32>, vector<10x128xf32>, vector<10x128xf32>, vector<10x128xf32> -> vector<10x640xf32>
      %c4_78 = arith.constant 4 : index
      %c0_79 = arith.constant 0 : index
      %c0_80 = arith.constant 0 : index
      %160 = vector.load %arg2[%c4_78, %c0_79, %c0_80] : memref<5x640x128xf32, #tpu.memory_space<vmem>>, vector<1x640x128xf32>
      %161 = vector.shape_cast %160 : vector<1x640x128xf32> to vector<640x128xf32>
      %cst_81 = arith.constant dense<0.000000e+00> : vector<10x128xf32>
      %162 = tpu.matmul %159, %161, %cst_81 {dimension_numbers = #tpu.dot_dimension_numbers<[1], [0], [0], [1], [0, 0, 1, 1], [], []>} : vector<10x640xf32>, vector<640x128xf32>, vector<10x128xf32> -> vector<10x128xf32>
      %163 = arith.addf %149, %162 : vector<10x128xf32>
      %164 = vector.broadcast %0 : vector<1x128xf32> to vector<10x128xf32>
      %165 = arith.addf %163, %164 : vector<10x128xf32>
      %cst_82 = arith.constant 0.000000e+00 : f32
      %166 = vector.broadcast %cst_82 : f32 to vector<10x128xf32>
      %167 = arith.maximumf %165, %166 : vector<10x128xf32>
      %168 = arith.maximumf %91, %167 : vector<10x128xf32>
      %cst_83 = arith.constant dense<0.000000e+00> : vector<5x128xf32>
      %169 = tpu.matmul %7, %168, %cst_83 {dimension_numbers = #tpu.dot_dimension_numbers<[1], [0], [0], [1], [0, 0, 1, 1], [], []>} : vector<5x10xf32>, vector<10x128xf32>, vector<5x128xf32> -> vector<5x128xf32>
      %cst_84 = arith.constant dense<0.000000e+00> : vector<5x128xf32>
      %170 = tpu.matmul %14, %168, %cst_84 {dimension_numbers = #tpu.dot_dimension_numbers<[1], [0], [0], [1], [0, 0, 1, 1], [], []>} : vector<5x10xf32>, vector<10x128xf32>, vector<5x128xf32> -> vector<5x128xf32>
      %171 = arith.maximumf %169, %170 : vector<5x128xf32>
      %c0_85 = arith.constant 0 : index
      %172 = arith.index_cast %arg5 : i32 to index
      %c0_86 = arith.constant 0 : index
      %c0_87 = arith.constant 0 : index
      %173 = vector.load %arg4[%c0_85, %172, %c0_86, %c0_87] : memref<1x5x5x128xf32, #tpu.memory_space<vmem>>, vector<1x1x5x128xf32>
      %174 = vector.shape_cast %173 : vector<1x1x5x128xf32> to vector<5x128xf32>
      %175 = vector.shape_cast %171 : vector<5x128xf32> to vector<1x1x5x128xf32>
      tpu.vector_store %arg4[%c0_85, %172, %c0_86, %c0_87], %175 {strides = array<i32>} : memref<1x5x5x128xf32, #tpu.memory_space<vmem>>, vector<1x1x5x128xf32>,
    }
    %c5_i32_3 = arith.constant 5 : i32
    return
  }
  func.func @transform_0(%arg0: i32) -> (i32, i32, i32, i32) {
    %c0_i32 = arith.constant 0 : i32
    %c0_i32_0 = arith.constant 0 : i32
    %c0_i32_1 = arith.constant 0 : i32
    %c0_i32_2 = arith.constant 0 : i32
    return %arg0, %c0_i32, %c0_i32_0, %c0_i32_1 : i32, i32, i32, i32
  }
  func.func @transform_1(%arg0: i32) -> (i32, i32, i32) {
    %c0_i32 = arith.constant 0 : i32
    %c0_i32_0 = arith.constant 0 : i32
    %c0_i32_1 = arith.constant 0 : i32
    %c0_i32_2 = arith.constant 0 : i32
    return %c0_i32, %c0_i32_0, %c0_i32_1 : i32, i32, i32
  }
  func.func @transform_2(%arg0: i32) -> (i32, i32) {
    %c0_i32 = arith.constant 0 : i32
    %c0_i32_0 = arith.constant 0 : i32
    %c0_i32_1 = arith.constant 0 : i32
    return %c0_i32, %c0_i32_0 : i32, i32
  }
  func.func @transform_3(%arg0: i32) -> (i32, i32, i32, i32) {
    %c0_i32 = arith.constant 0 : i32
    %c0_i32_0 = arith.constant 0 : i32
    %c0_i32_1 = arith.constant 0 : i32
    %c0_i32_2 = arith.constant 0 : i32
    return %arg0, %c0_i32, %c0_i32_0, %c0_i32_1 : i32, i32, i32, i32
  }
}

module attributes {stable_mosaic.version = 11 : i64} {
  func.func @classifier_kernel(%arg0: memref<2x3200xf32, #tpu.memory_space<vmem>>, %arg1: memref<3200x128xf32, #tpu.memory_space<vmem>>, %arg2: memref<1x128xf32, #tpu.memory_space<vmem>>, %arg3: memref<128x128xf32, #tpu.memory_space<vmem>>, %arg4: memref<1x128xf32, #tpu.memory_space<vmem>>, %arg5: memref<128x128xf32, #tpu.memory_space<vmem>>, %arg6: memref<1x128xf32, #tpu.memory_space<vmem>>, %arg7: memref<2x128xf32, #tpu.memory_space<vmem>>) attributes {dimension_semantics = [], scalar_prefetch = 0 : i64, scratch_operands = 0 : i64, tpu.core_type = #tpu.core_type<tc>} {
    %c0 = arith.constant 0 : index
    %c0_0 = arith.constant 0 : index
    %0 = vector.load %arg0[%c0, %c0_0] : memref<2x3200xf32, #tpu.memory_space<vmem>>, vector<2x3200xf32>
    %c0_1 = arith.constant 0 : index
    %c0_2 = arith.constant 0 : index
    %1 = vector.load %arg1[%c0_1, %c0_2] : memref<3200x128xf32, #tpu.memory_space<vmem>>, vector<3200x128xf32>
    %cst = arith.constant dense<0.000000e+00> : vector<2x128xf32>
    %2 = tpu.matmul %0, %1, %cst {dimension_numbers = #tpu.dot_dimension_numbers<[1], [0], [0], [1], [0, 0, 1, 1], [], []>} : vector<2x3200xf32>, vector<3200x128xf32>, vector<2x128xf32> -> vector<2x128xf32>
    %c0_3 = arith.constant 0 : index
    %c0_4 = arith.constant 0 : index
    %3 = vector.load %arg2[%c0_3, %c0_4] : memref<1x128xf32, #tpu.memory_space<vmem>>, vector<1x128xf32>
    %4 = vector.broadcast %3 : vector<1x128xf32> to vector<2x128xf32>
    %5 = arith.addf %2, %4 : vector<2x128xf32>
    %cst_5 = arith.constant 0.000000e+00 : f32
    %6 = vector.broadcast %cst_5 : f32 to vector<2x128xf32>
    %7 = arith.maximumf %5, %6 : vector<2x128xf32>
    %c0_6 = arith.constant 0 : index
    %c0_7 = arith.constant 0 : index
    %8 = vector.load %arg3[%c0_6, %c0_7] : memref<128x128xf32, #tpu.memory_space<vmem>>, vector<128x128xf32>
    %cst_8 = arith.constant dense<0.000000e+00> : vector<2x128xf32>
    %9 = tpu.matmul %7, %8, %cst_8 {dimension_numbers = #tpu.dot_dimension_numbers<[1], [0], [0], [1], [0, 0, 1, 1], [], []>} : vector<2x128xf32>, vector<128x128xf32>, vector<2x128xf32> -> vector<2x128xf32>
    %c0_9 = arith.constant 0 : index
    %c0_10 = arith.constant 0 : index
    %10 = vector.load %arg4[%c0_9, %c0_10] : memref<1x128xf32, #tpu.memory_space<vmem>>, vector<1x128xf32>
    %11 = vector.broadcast %10 : vector<1x128xf32> to vector<2x128xf32>
    %12 = arith.addf %9, %11 : vector<2x128xf32>
    %cst_11 = arith.constant 0.000000e+00 : f32
    %13 = vector.broadcast %cst_11 : f32 to vector<2x128xf32>
    %14 = arith.maximumf %12, %13 : vector<2x128xf32>
    %c0_12 = arith.constant 0 : index
    %c0_13 = arith.constant 0 : index
    %15 = vector.load %arg5[%c0_12, %c0_13] : memref<128x128xf32, #tpu.memory_space<vmem>>, vector<128x128xf32>
    %cst_14 = arith.constant dense<0.000000e+00> : vector<2x128xf32>
    %16 = tpu.matmul %14, %15, %cst_14 {dimension_numbers = #tpu.dot_dimension_numbers<[1], [0], [0], [1], [0, 0, 1, 1], [], []>} : vector<2x128xf32>, vector<128x128xf32>, vector<2x128xf32> -> vector<2x128xf32>
    %c0_15 = arith.constant 0 : index
    %c0_16 = arith.constant 0 : index
    %17 = vector.load %arg6[%c0_15, %c0_16] : memref<1x128xf32, #tpu.memory_space<vmem>>, vector<1x128xf32>
    %18 = vector.broadcast %17 : vector<1x128xf32> to vector<2x128xf32>
    %19 = arith.addf %16, %18 : vector<2x128xf32>
    %c0_17 = arith.constant 0 : index
    %c0_18 = arith.constant 0 : index
    %20 = vector.load %arg7[%c0_17, %c0_18] : memref<2x128xf32, #tpu.memory_space<vmem>>, vector<2x128xf32>
    tpu.vector_store %arg7[%c0_17, %c0_18], %19 {strides = array<i32>} : memref<2x128xf32, #tpu.memory_space<vmem>>, vector<2x128xf32>,
    return
  }
}

</mosaic_0001>

<llo_original>
// kernel: lenet_forward.4
$region0: #{lenet_forward.4}
  #allocation0 [shape = 'u32[]', space=smem, size = 0x4, offset = 0x4, fixed_abs, tag = 'smem constant byte address 0x4 - core index']
  #allocation1 [shape = 'u32[72,128]{1,0:T(1,128)}', space=vmem, size = 0x9000, scoped, tag = 'internal scratch']
  %s0 = inlined_call_operand.vmem [shape: f32[2,14,14,128], index: 0, kind: input, shape index: {}]
  %s1 = inlined_call_operand.vmem [shape: f32[5,640,128], index: 1, kind: input, shape index: {}]
  %s2 = inlined_call_operand.vmem [shape: f32[1,128], index: 2, kind: input, shape index: {}]
  %s3 = inlined_call_operand.vmem [shape: f32[2,5,5,128], index: 3, kind: output, shape index: {}]
  %s4 = sld [smem:[#allocation0]]
  $region52: #{lenet_forward.4} parent=0
    _
  %s6 = ssub.s32 1, %s4
  %s7 = scalar_select 0, %s6, %s4
  loop: start=0, step=1, limit=4
  $region2: #{lenet_forward.4} parent=0 // loop_pre_header
    _
  $region3: #{lenet_forward.4} parent=0 // loop_header
    %s9 = sphi 0, %s13
    %p10 = scmp.ge.s32.totalorder %s9, 4
    %s19 = sphi 0, %s21
    %s22 = sphi 0, %s19
    %s23 = sphi 0, %s22
    %s39 = sphi 0, %s23
    %s43 = sphi 0, %s43
    %s45 = sphi 0, %s43
    %s46 = sphi 0, %s45
    %s60 = sphi 0, %s46
    %s64 = sphi 0, %s64
    %s66 = sphi 0, %s64
    %s67 = sphi 0, %s66
    %s81 = sphi 0, %s67
    %s87 = sphi 0, %s89
    %s90 = sphi 0, %s87
    %s91 = sphi 0, %s90
    %s107 = sphi 0, %s91
  $region4: #{lenet_forward.4} parent=0 // loop_header_branch
    %12 = sbr.rel (%p10) target = $region8
  $region5: #{lenet_forward.4} parent=0 // loop_body
    %s14 = ssub.s32 %s9, 1
    %s15 = ssub.s32 %s9, 2
    %s16 = sadd.s32 %s9, 1
    %s17 = ssub.s32 %s9, %s16
    %p18 = scmp.eq.s32.totalorder %s17, 0
    %s20 = sadd.s32 %s19, 1
    %s21 = scalar_select %p18, %s19, %s20
    %p24 = pneg %p18
    %p25 = scmp.eq.s32.totalorder %s9, 1
    %p26 = por %p24, %p25
    %p27 = scmp.ne.s32.totalorder %s19, %s22
    %p28 = scmp.eq.s32.totalorder %s9, 0
    %p29 = por %p27, %p28
    %p30 = scmp.ne.s32.totalorder %s19, %s22
    %p31 = scmp.eq.s32.totalorder %s14, 1
    %p32 = por %p30, %p31
    %p33 = scmp.ne.s32.totalorder %s22, %s23
    %p34 = scmp.eq.s32.totalorder %s14, 0
    %p35 = por %p33, %p34
    %p36 = scmp.ne.s32.totalorder %s22, %s23
    %p37 = scmp.eq.s32.totalorder %s15, 1
    %p38 = por %p36, %p37
    %p40 = scmp.ne.s32.totalorder %s23, %s39
    %p41 = scmp.eq.s32.totalorder %s15, 0
    %p42 = por %p40, %p41
    %s44 = sadd.s32 %s43, 1
    %p47 = scmp.eq.s32.totalorder %s9, 1
    %p48 = scmp.ne.s32.totalorder %s43, %s45
    %p49 = scmp.eq.s32.totalorder %s9, 0
    %p50 = por %p48, %p49
    %p51 = scmp.ne.s32.totalorder %s43, %s45
    %p52 = scmp.eq.s32.totalorder %s14, 1
    %p53 = por %p51, %p52
    %p54 = scmp.ne.s32.totalorder %s45, %s46
    %p55 = scmp.eq.s32.totalorder %s14, 0
    %p56 = por %p54, %p55
    %p57 = scmp.ne.s32.totalorder %s45, %s46
    %p58 = scmp.eq.s32.totalorder %s15, 1
    %p59 = por %p57, %p58
    %p61 = scmp.ne.s32.totalorder %s46, %s60
    %p62 = scmp.eq.s32.totalorder %s15, 0
    %p63 = por %p61, %p62
    %s65 = sadd.s32 %s64, 1
    %p68 = scmp.eq.s32.totalorder %s9, 1
    %p69 = scmp.ne.s32.totalorder %s64, %s66
    %p70 = scmp.eq.s32.totalorder %s9, 0
    %p71 = por %p69, %p70
    %p72 = scmp.ne.s32.totalorder %s64, %s66
    %p73 = scmp.eq.s32.totalorder %s14, 1
    %p74 = por %p72, %p73
    %p75 = scmp.ne.s32.totalorder %s66, %s67
    %p76 = scmp.eq.s32.totalorder %s14, 0
    %p77 = por %p75, %p76
    %p78 = scmp.ne.s32.totalorder %s66, %s67
    %p79 = scmp.eq.s32.totalorder %s15, 1
    %p80 = por %p78, %p79
    %p82 = scmp.ne.s32.totalorder %s67, %s81
    %p83 = scmp.eq.s32.totalorder %s15, 0
    %p84 = por %p82, %p83
    %s85 = ssub.s32 %s9, %s16
    %p86 = scmp.eq.s32.totalorder %s85, 0
    %s88 = sadd.s32 %s87, 1
    %s89 = scalar_select %p86, %s87, %s88
    %p92 = pneg %p86
    %p93 = scmp.eq.s32.totalorder %s9, 1
    %p94 = por %p92, %p93
    %p95 = scmp.ne.s32.totalorder %s87, %s90
    %p96 = scmp.eq.s32.totalorder %s9, 0
    %p97 = por %p95, %p96
    %p98 = scmp.ne.s32.totalorder %s87, %s90
    %p99 = scmp.eq.s32.totalorder %s14, 1
    %p100 = por %p98, %p99
    %p101 = scmp.ne.s32.totalorder %s90, %s91
    %p102 = scmp.eq.s32.totalorder %s14, 0
    %p103 = por %p101, %p102
    %p104 = scmp.ne.s32.totalorder %s90, %s91
    %p105 = scmp.eq.s32.totalorder %s15, 1
    %p106 = por %p104, %p105
    %p108 = scmp.ne.s32.totalorder %s91, %s107
    %p109 = scmp.eq.s32.totalorder %s15, 0
    %p110 = por %p108, %p109
    %p111 = scmp.le.s32.totalorder 1, %s9
    %p112 = scmp.lt.s32.totalorder %s9, 3
    %p113 = pnand %p111, %p112
    %p114 = pneg %p113
    // Predicated region
    $region9: #{lenet_forward.4} parent=5 // pred_check
      _
    $region10: #{lenet_forward.4} parent=5 // pred_check_branch
      %116 = sbr.rel (%p113) target = $region12
    $region11: #{lenet_forward.4} parent=5 // pred_region
      %s117 = ssub.s32 %s9, 1
      // Predicated region
      $region13: #{lenet_forward.4} parent=11 // pred_check
        %p118 = pneg %p56
      $region14: #{lenet_forward.4} parent=11 // pred_check_branch
        %120 = sbr.rel (%p118) target = $region16
      $region15: #{lenet_forward.4} parent=11 // pred_region
        _
      $region16: #{lenet_forward.4} parent=11 // pred_fallthru
        _
      // Predicated region
      $region17: #{lenet_forward.4} parent=11 // pred_check
        %p121 = pneg %p77
      $region18: #{lenet_forward.4} parent=11 // pred_check_branch
        %123 = sbr.rel (%p121) target = $region20
      $region19: #{lenet_forward.4} parent=11 // pred_region
        _
      $region20: #{lenet_forward.4} parent=11 // pred_fallthru
        _
    $region12: #{lenet_forward.4} parent=5 // pred_fallthru
      _
    %p124 = scmp.lt.s32.totalorder %s9, 2
    // Predicated region
    $region21: #{lenet_forward.4} parent=5 // pred_check
      %p125 = pneg %p124
    $region22: #{lenet_forward.4} parent=5 // pred_check_branch
      %127 = sbr.rel (%p125) target = $region24
    $region23: #{lenet_forward.4} parent=5 // pred_region
      // Predicated region
      $region25: #{lenet_forward.4} parent=23 // pred_check
        %p128 = pneg %p29
      $region26: #{lenet_forward.4} parent=23 // pred_check_branch
        %130 = sbr.rel (%p128) target = $region28
      $region27: #{lenet_forward.4} parent=23 // pred_region
        %p131 = scmp.lt.s32.totalorder %s9, 1
        %s132 = scalar_select %p131, %s9, 1
        %s133 = smul.addr %s132, 28
        %s134 = smul.addr %s133, 8
        %s135 = scalar_lea.vmem %s0, %s134
      $region28: #{lenet_forward.4} parent=23 // pred_fallthru
        _
    $region24: #{lenet_forward.4} parent=5 // pred_fallthru
      _
    %p136 = scmp.le.s32.totalorder 1, %s9
    %p137 = scmp.lt.s32.totalorder %s9, 3
    %p138 = pnand %p136, %p137
    %p139 = pneg %p138
    // Predicated region
    $region29: #{lenet_forward.4} parent=5 // pred_check
      _
    $region30: #{lenet_forward.4} parent=5 // pred_check_branch
      %141 = sbr.rel (%p138) target = $region32
    $region31: #{lenet_forward.4} parent=5 // pred_region
      %s142 = ssub.s32 %s9, 1
      %p143 = scmp.lt.s32.totalorder %s14, 1
      %s144 = scalar_select %p143, %s14, 1
      %s145 = smul.addr %s144, 28
      %s146 = smul.addr %s145, 8
      %s147 = scalar_lea.vmem %s0, %s146
      %p148 = pneg %p35
      %p149 = pneg %p32
      %p150 = pneg %p56
      %p151 = pneg %p53
      %p152 = pneg %p77
      %p153 = pneg %p74
      %p154 = pneg %p103
      %p155 = pneg %p100
      %p156 = scmp.lt.s32.totalorder %s14, 1
      %s157 = scalar_select %p156, %s14, 1
      %s158 = smul.addr %s157, 5
      %s159 = smul.addr %s158, 8
      %s160 = scalar_lea.vmem %s3, %s159
      %p161 = scmp.lt.s32.totalorder %s14, 1
      %s162 = scalar_select %p161, %s14, 1
      %s163 = smul.addr %s162, 28
      %s164 = smul.addr %s163, 8
      %s165 = scalar_lea.vmem %s0, %s164
      %p166 = scmp.lt.s32.totalorder %s14, 1
      %s167 = scalar_select %p166, %s14, 1
      %s168 = smul.addr %s167, 5
      %s169 = smul.addr %s168, 8
      %s170 = scalar_lea.vmem %s3, %s169
      %v171 = vld [vmem:[%s2] sm:$0x1]
      %v172 = vlaneseq
      %v173 = vshrl.u32 %v172, 7
      %v174 = vlaneseq
      %v175 = vand.u32 %v174, 127
      %v176 = vmul.u32 %v173, 2
      %vm177 = vcmp.eq.s32.totalorder %v175, %v176
      %v178 = vsel %vm177, 1, 0
      %v179 = vcvt.s32.f32 %v178
      %v180 = vadd.s32 %v176, 1
      %vm181 = vcmp.eq.s32.totalorder %v175, %v180
      %v182 = vsel %vm181, 1, 0
      %v183 = vcvt.s32.f32 %v182
      loop: start=0, step=1, limit=5
      $region33: #{lenet_forward.4} parent=31 // loop_pre_header
        _
      $region34: #{lenet_forward.4} parent=31 // loop_header
        %s185 = sphi 0, %s189
        %p186 = scmp.ge.s32.totalorder %s185, 5
      $region35: #{lenet_forward.4} parent=31 // loop_header_branch
        %188 = sbr.rel (%p186) target = $region39
      $region36: #{lenet_forward.4} parent=31 // loop_body
        %s190 = smul.u32 %s185, 2
        %s191 = smul.u32 %s190, 16
        %s192 = scalar_lea.vmem %s165, %s191
        %v193 = vld [vmem:[%s192] sm:$0xff]
        %v194 = vld [vmem:[%s192 + $0x8] sm:$0x3f]
        %vm197 = vcmask 1046528
        %v198 = vrot.slane %v193, 1
        %v199 = vrot.slane %v194, 1
        %v200 = vsel %vm197, %v198, %v199
        %vm203 = vcmask 1045504
        %v204 = vrot.slane %v193, 2
        %v205 = vrot.slane %v194, 2
        %v206 = vsel %vm203, %v204, %v205
        %vm209 = vcmask 1044480
        %v210 = vrot.slane %v193, 3
        %v211 = vrot.slane %v194, 3
        %v212 = vsel %vm209, %v210, %v211
        %vm215 = vcmask 1043456
        %v216 = vrot.slane %v193, 4
        %v217 = vrot.slane %v194, 4
        %v218 = vsel %vm215, %v216, %v217
        %v221 = vld [vmem:[%s1] sm:$0xff]
        %v222 = vld [vmem:[%s1 + $0x8] sm:$0xff]
        %v223 = vld [vmem:[%s1 + $0x10] sm:$0xff]
        %v224 = vld [vmem:[%s1 + $0x18] sm:$0xff]
        %v225 = vld [vmem:[%s1 + $0x20] sm:$0xff]
        %v226 = vld [vmem:[%s1 + $0x28] sm:$0xff]
        %v227 = vld [vmem:[%s1 + $0x30] sm:$0xff]
        %v228 = vld [vmem:[%s1 + $0x38] sm:$0xff]
        %v229 = vld [vmem:[%s1 + $0x40] sm:$0xff]
        %v230 = vld [vmem:[%s1 + $0x48] sm:$0xff]
        %v231 = vld [vmem:[%s1 + $0x50] sm:$0xff]
        %v232 = vld [vmem:[%s1 + $0x58] sm:$0xff]
        %v233 = vld [vmem:[%s1 + $0x60] sm:$0xff]
        %v234 = vld [vmem:[%s1 + $0x68] sm:$0xff]
        %v235 = vld [vmem:[%s1 + $0x70] sm:$0xff]
        %v236 = vld [vmem:[%s1 + $0x78] sm:$0xff]
        %v237 = vld [vmem:[%s1 + $0x80] sm:$0xff]
        %v238 = vld [vmem:[%s1 + $0x88] sm:$0xff]
        %v239 = vld [vmem:[%s1 + $0x90] sm:$0xff]
        %v240 = vld [vmem:[%s1 + $0x98] sm:$0xff]
        %v241 = vld [vmem:[%s1 + $0xa0] sm:$0xff]
        %v242 = vld [vmem:[%s1 + $0xa8] sm:$0xff]
        %v243 = vld [vmem:[%s1 + $0xb0] sm:$0xff]
        %v244 = vld [vmem:[%s1 + $0xb8] sm:$0xff]
        %v245 = vld [vmem:[%s1 + $0xc0] sm:$0xff]
        %v246 = vld [vmem:[%s1 + $0xc8] sm:$0xff]
        %v247 = vld [vmem:[%s1 + $0xd0] sm:$0xff]
        %v248 = vld [vmem:[%s1 + $0xd8] sm:$0xff]
        %v249 = vld [vmem:[%s1 + $0xe0] sm:$0xff]
        %v250 = vld [vmem:[%s1 + $0xe8] sm:$0xff]
        %v251 = vld [vmem:[%s1 + $0xf0] sm:$0xff]
        %v252 = vld [vmem:[%s1 + $0xf8] sm:$0xff]
        %v253 = vld [vmem:[%s1 + $0x100] sm:$0xff]
        %v254 = vld [vmem:[%s1 + $0x108] sm:$0xff]
        %v255 = vld [vmem:[%s1 + $0x110] sm:$0xff]
        %v256 = vld [vmem:[%s1 + $0x118] sm:$0xff]
        %v257 = vld [vmem:[%s1 + $0x120] sm:$0xff]
        %v258 = vld [vmem:[%s1 + $0x128] sm:$0xff]
        %v259 = vld [vmem:[%s1 + $0x130] sm:$0xff]
        %v260 = vld [vmem:[%s1 + $0x138] sm:$0xff]
        %v261 = vld [vmem:[%s1 + $0x140] sm:$0xff]
        %v262 = vld [vmem:[%s1 + $0x148] sm:$0xff]
        %v263 = vld [vmem:[%s1 + $0x150] sm:$0xff]
        %v264 = vld [vmem:[%s1 + $0x158] sm:$0xff]
        %v265 = vld [vmem:[%s1 + $0x160] sm:$0xff]
        %v266 = vld [vmem:[%s1 + $0x168] sm:$0xff]
        %v267 = vld [vmem:[%s1 + $0x170] sm:$0xff]
        %v268 = vld [vmem:[%s1 + $0x178] sm:$0xff]
        %v269 = vld [vmem:[%s1 + $0x180] sm:$0xff]
        %v270 = vld [vmem:[%s1 + $0x188] sm:$0xff]
        %v271 = vld [vmem:[%s1 + $0x190] sm:$0xff]
        %v272 = vld [vmem:[%s1 + $0x198] sm:$0xff]
        %v273 = vld [vmem:[%s1 + $0x1a0] sm:$0xff]
        %v274 = vld [vmem:[%s1 + $0x1a8] sm:$0xff]
        %v275 = vld [vmem:[%s1 + $0x1b0] sm:$0xff]
        %v276 = vld [vmem:[%s1 + $0x1b8] sm:$0xff]
        %v277 = vld [vmem:[%s1 + $0x1c0] sm:$0xff]
        %v278 = vld [vmem:[%s1 + $0x1c8] sm:$0xff]
        %v279 = vld [vmem:[%s1 + $0x1d0] sm:$0xff]
        %v280 = vld [vmem:[%s1 + $0x1d8] sm:$0xff]
        %v281 = vld [vmem:[%s1 + $0x1e0] sm:$0xff]
        %v282 = vld [vmem:[%s1 + $0x1e8] sm:$0xff]
        %v283 = vld [vmem:[%s1 + $0x1f0] sm:$0xff]
        %v284 = vld [vmem:[%s1 + $0x1f8] sm:$0xff]
        %v285 = vld [vmem:[%s1 + $0x200] sm:$0xff]
        %v286 = vld [vmem:[%s1 + $0x208] sm:$0xff]
        %v287 = vld [vmem:[%s1 + $0x210] sm:$0xff]
        %v288 = vld [vmem:[%s1 + $0x218] sm:$0xff]
        %v289 = vld [vmem:[%s1 + $0x220] sm:$0xff]
        %v290 = vld [vmem:[%s1 + $0x228] sm:$0xff]
        %v291 = vld [vmem:[%s1 + $0x230] sm:$0xff]
        %v292 = vld [vmem:[%s1 + $0x238] sm:$0xff]
        %v293 = vld [vmem:[%s1 + $0x240] sm:$0xff]
        %v294 = vld [vmem:[%s1 + $0x248] sm:$0xff]
        %v295 = vld [vmem:[%s1 + $0x250] sm:$0xff]
        %v296 = vld [vmem:[%s1 + $0x258] sm:$0xff]
        %v297 = vld [vmem:[%s1 + $0x260] sm:$0xff]
        %v298 = vld [vmem:[%s1 + $0x268] sm:$0xff]
        %v299 = vld [vmem:[%s1 + $0x270] sm:$0xff]
        %v300 = vld [vmem:[%s1 + $0x278] sm:$0xff]
        %s301 = sadd.s32 %s190, 1
        %s302 = smul.u32 %s301, 16
        %s303 = scalar_lea.vmem %s165, %s302
        %v304 = vld [vmem:[%s303] sm:$0xff]
        %v305 = vld [vmem:[%s303 + $0x8] sm:$0x3f]
        %v308 = vrot.slane %v304, 1
        %v309 = vrot.slane %v305, 1
        %v310 = vsel %vm197, %v308, %v309
        %v313 = vrot.slane %v304, 2
        %v314 = vrot.slane %v305, 2
        %v315 = vsel %vm203, %v313, %v314
        %v318 = vrot.slane %v304, 3
        %v319 = vrot.slane %v305, 3
        %v320 = vsel %vm209, %v318, %v319
        %v323 = vrot.slane %v304, 4
        %v324 = vrot.slane %v305, 4
        %v325 = vsel %vm215, %v323, %v324
        %s328 = scalar_lea.vmem %s1, 640
        %v329 = vld [vmem:[%s328] sm:$0xff]
        %v330 = vld [vmem:[%s328 + $0x8] sm:$0xff]
        %v331 = vld [vmem:[%s328 + $0x10] sm:$0xff]
        %v332 = vld [vmem:[%s328 + $0x18] sm:$0xff]
        %v333 = vld [vmem:[%s328 + $0x20] sm:$0xff]
        %v334 = vld [vmem:[%s328 + $0x28] sm:$0xff]
        %v335 = vld [vmem:[%s328 + $0x30] sm:$0xff]
        %v336 = vld [vmem:[%s328 + $0x38] sm:$0xff]
        %v337 = vld [vmem:[%s328 + $0x40] sm:$0xff]
        %v338 = vld [vmem:[%s328 + $0x48] sm:$0xff]
        %v339 = vld [vmem:[%s328 + $0x50] sm:$0xff]
        %v340 = vld [vmem:[%s328 + $0x58] sm:$0xff]
        %v341 = vld [vmem:[%s328 + $0x60] sm:$0xff]
        %v342 = vld [vmem:[%s328 + $0x68] sm:$0xff]
        %v343 = vld [vmem:[%s328 + $0x70] sm:$0xff]
        %v344 = vld [vmem:[%s328 + $0x78] sm:$0xff]
        %v345 = vld [vmem:[%s328 + $0x80] sm:$0xff]
        %v346 = vld [vmem:[%s328 + $0x88] sm:$0xff]
        %v347 = vld [vmem:[%s328 + $0x90] sm:$0xff]
        %v348 = vld [vmem:[%s328 + $0x98] sm:$0xff]
        %v349 = vld [vmem:[%s328 + $0xa0] sm:$0xff]
        %v350 = vld [vmem:[%s328 + $0xa8] sm:$0xff]
        %v351 = vld [vmem:[%s328 + $0xb0] sm:$0xff]
        %v352 = vld [vmem:[%s328 + $0xb8] sm:$0xff]
        %v353 = vld [vmem:[%s328 + $0xc0] sm:$0xff]
        %v354 = vld [vmem:[%s328 + $0xc8] sm:$0xff]
        %v355 = vld [vmem:[%s328 + $0xd0] sm:$0xff]
        %v356 = vld [vmem:[%s328 + $0xd8] sm:$0xff]
        %v357 = vld [vmem:[%s328 + $0xe0] sm:$0xff]
        %v358 = vld [vmem:[%s328 + $0xe8] sm:$0xff]
        %v359 = vld [vmem:[%s328 + $0xf0] sm:$0xff]
        %v360 = vld [vmem:[%s328 + $0xf8] sm:$0xff]
        %v361 = vld [vmem:[%s328 + $0x100] sm:$0xff]
        %v362 = vld [vmem:[%s328 + $0x108] sm:$0xff]
        %v363 = vld [vmem:[%s328 + $0x110] sm:$0xff]
        %v364 = vld [vmem:[%s328 + $0x118] sm:$0xff]
        %v365 = vld [vmem:[%s328 + $0x120] sm:$0xff]
        %v366 = vld [vmem:[%s328 + $0x128] sm:$0xff]
        %v367 = vld [vmem:[%s328 + $0x130] sm:$0xff]
        %v368 = vld [vmem:[%s328 + $0x138] sm:$0xff]
        %v369 = vld [vmem:[%s328 + $0x140] sm:$0xff]
        %v370 = vld [vmem:[%s328 + $0x148] sm:$0xff]
        %v371 = vld [vmem:[%s328 + $0x150] sm:$0xff]
        %v372 = vld [vmem:[%s328 + $0x158] sm:$0xff]
        %v373 = vld [vmem:[%s328 + $0x160] sm:$0xff]
        %v374 = vld [vmem:[%s328 + $0x168] sm:$0xff]
        %v375 = vld [vmem:[%s328 + $0x170] sm:$0xff]
        %v376 = vld [vmem:[%s328 + $0x178] sm:$0xff]
        %v377 = vld [vmem:[%s328 + $0x180] sm:$0xff]
        %v378 = vld [vmem:[%s328 + $0x188] sm:$0xff]
        %v379 = vld [vmem:[%s328 + $0x190] sm:$0xff]
        %v380 = vld [vmem:[%s328 + $0x198] sm:$0xff]
        %v381 = vld [vmem:[%s328 + $0x1a0] sm:$0xff]
        %v382 = vld [vmem:[%s328 + $0x1a8] sm:$0xff]
        %v383 = vld [vmem:[%s328 + $0x1b0] sm:$0xff]
        %v384 = vld [vmem:[%s328 + $0x1b8] sm:$0xff]
        %v385 = vld [vmem:[%s328 + $0x1c0] sm:$0xff]
        %v386 = vld [vmem:[%s328 + $0x1c8] sm:$0xff]
        %v387 = vld [vmem:[%s328 + $0x1d0] sm:$0xff]
        %v388 = vld [vmem:[%s328 + $0x1d8] sm:$0xff]
        %v389 = vld [vmem:[%s328 + $0x1e0] sm:$0xff]
        %v390 = vld [vmem:[%s328 + $0x1e8] sm:$0xff]
        %v391 = vld [vmem:[%s328 + $0x1f0] sm:$0xff]
        %v392 = vld [vmem:[%s328 + $0x1f8] sm:$0xff]
        %v393 = vld [vmem:[%s328 + $0x200] sm:$0xff]
        %v394 = vld [vmem:[%s328 + $0x208] sm:$0xff]
        %v395 = vld [vmem:[%s328 + $0x210] sm:$0xff]
        %v396 = vld [vmem:[%s328 + $0x218] sm:$0xff]
        %v397 = vld [vmem:[%s328 + $0x220] sm:$0xff]
        %v398 = vld [vmem:[%s328 + $0x228] sm:$0xff]
        %v399 = vld [vmem:[%s328 + $0x230] sm:$0xff]
        %v400 = vld [vmem:[%s328 + $0x238] sm:$0xff]
        %v401 = vld [vmem:[%s328 + $0x240] sm:$0xff]
        %v402 = vld [vmem:[%s328 + $0x248] sm:$0xff]
        %v403 = vld [vmem:[%s328 + $0x250] sm:$0xff]
        %v404 = vld [vmem:[%s328 + $0x258] sm:$0xff]
        %v405 = vld [vmem:[%s328 + $0x260] sm:$0xff]
        %v406 = vld [vmem:[%s328 + $0x268] sm:$0xff]
        %v407 = vld [vmem:[%s328 + $0x270] sm:$0xff]
        %v408 = vld [vmem:[%s328 + $0x278] sm:$0xff]
        %409 = vmatpush.msra.mxu0 %v344
        %410 = vmatpush.msra.mxu0 %v343
        %411 = vmatpush.msra.mxu0 %v342
        %412 = vmatpush.msra.mxu0 %v341
        %413 = vmatpush.msra.mxu0 %v340
        %414 = vmatpush.msra.mxu0 %v339
        %415 = vmatpush.msra.mxu0 %v338
        %416 = vmatpush.msra.mxu0 %v337
        %417 = vmatpush.msra.mxu0 %v336
        %418 = vmatpush.msra.mxu0 %v335
        %419 = vmatpush.msra.mxu0 %v334
        %420 = vmatpush.msra.mxu0 %v333
        %421 = vmatpush.msra.mxu0 %v332
        %422 = vmatpush.msra.mxu0 %v331
        %423 = vmatpush.msra.mxu0 %v330
        %424 = vmatpush.msra.mxu0 %v329
        %425 = vmatmul.f32.gmra.mxu0 %v304
        %v426 = vpop.f32.mrf.mxu0
        %v427 = vadd.f32 0.0, %v426
        %428 = vmatmul.f32.gmra.mxu0 %v305
        %v429 = vpop.f32.mrf.mxu0
        %v430 = vadd.f32 0.0, %v429
        %431 = vdwg.mxu0
        %432 = vmatpush.msra.mxu0 %v360
        %433 = vmatpush.msra.mxu0 %v359
        %434 = vmatpush.msra.mxu0 %v358
        %435 = vmatpush.msra.mxu0 %v357
        %436 = vmatpush.msra.mxu0 %v356
        %437 = vmatpush.msra.mxu0 %v355
        %438 = vmatpush.msra.mxu0 %v354
        %439 = vmatpush.msra.mxu0 %v353
        %440 = vmatpush.msra.mxu0 %v352
        %441 = vmatpush.msra.mxu0 %v351
        %442 = vmatpush.msra.mxu0 %v350
        %443 = vmatpush.msra.mxu0 %v349
        %444 = vmatpush.msra.mxu0 %v348
        %445 = vmatpush.msra.mxu0 %v347
        %446 = vmatpush.msra.mxu0 %v346
        %447 = vmatpush.msra.mxu0 %v345
        %448 = vmatmul.f32.gmra.mxu0 %v310
        %v449 = vpop.f32.mrf.mxu0
        %v450 = vadd.f32 %v427, %v449
        %451 = vmatmul.f32.gmra.mxu0 %v309
        %v452 = vpop.f32.mrf.mxu0
        %v453 = vadd.f32 %v430, %v452
        %454 = vdwg.mxu0
        %455 = vmatpush.msra.mxu0 %v376
        %456 = vmatpush.msra.mxu0 %v375
        %457 = vmatpush.msra.mxu0 %v374
        %458 = vmatpush.msra.mxu0 %v373
        %459 = vmatpush.msra.mxu0 %v372
        %460 = vmatpush.msra.mxu0 %v371
        %461 = vmatpush.msra.mxu0 %v370
        %462 = vmatpush.msra.mxu0 %v369
        %463 = vmatpush.msra.mxu0 %v368
        %464 = vmatpush.msra.mxu0 %v367
        %465 = vmatpush.msra.mxu0 %v366
        %466 = vmatpush.msra.mxu0 %v365
        %467 = vmatpush.msra.mxu0 %v364
        %468 = vmatpush.msra.mxu0 %v363
        %469 = vmatpush.msra.mxu0 %v362
        %470 = vmatpush.msra.mxu0 %v361
        %471 = vmatmul.f32.gmra.mxu0 %v315
        %v472 = vpop.f32.mrf.mxu0
        %v473 = vadd.f32 %v450, %v472
        %474 = vmatmul.f32.gmra.mxu0 %v314
        %v475 = vpop.f32.mrf.mxu0
        %v476 = vadd.f32 %v453, %v475
        %477 = vdwg.mxu0
        %478 = vmatpush.msra.mxu0 %v392
        %479 = vmatpush.msra.mxu0 %v391
        %480 = vmatpush.msra.mxu0 %v390
        %481 = vmatpush.msra.mxu0 %v389
        %482 = vmatpush.msra.mxu0 %v388
        %483 = vmatpush.msra.mxu0 %v387
        %484 = vmatpush.msra.mxu0 %v386
        %485 = vmatpush.msra.mxu0 %v385
        %486 = vmatpush.msra.mxu0 %v384
        %487 = vmatpush.msra.mxu0 %v383
        %488 = vmatpush.msra.mxu0 %v382
        %489 = vmatpush.msra.mxu0 %v381
        %490 = vmatpush.msra.mxu0 %v380
        %491 = vmatpush.msra.mxu0 %v379
        %492 = vmatpush.msra.mxu0 %v378
        %493 = vmatpush.msra.mxu0 %v377
        %494 = vmatmul.f32.gmra.mxu0 %v320
        %v495 = vpop.f32.mrf.mxu0
        %v496 = vadd.f32 %v473, %v495
        %497 = vmatmul.f32.gmra.mxu0 %v319
        %v498 = vpop.f32.mrf.mxu0
        %v499 = vadd.f32 %v476, %v498
        %500 = vdwg.mxu0
        %501 = vmatpush.msra.mxu0 %v408
        %502 = vmatpush.msra.mxu0 %v407
        %503 = vmatpush.msra.mxu0 %v406
        %504 = vmatpush.msra.mxu0 %v405
        %505 = vmatpush.msra.mxu0 %v404
        %506 = vmatpush.msra.mxu0 %v403
        %507 = vmatpush.msra.mxu0 %v402
        %508 = vmatpush.msra.mxu0 %v401
        %509 = vmatpush.msra.mxu0 %v400
        %510 = vmatpush.msra.mxu0 %v399
        %511 = vmatpush.msra.mxu0 %v398
        %512 = vmatpush.msra.mxu0 %v397
        %513 = vmatpush.msra.mxu0 %v396
        %514 = vmatpush.msra.mxu0 %v395
        %515 = vmatpush.msra.mxu0 %v394
        %516 = vmatpush.msra.mxu0 %v393
        %517 = vmatmul.f32.gmra.mxu0 %v325
        %v518 = vpop.f32.mrf.mxu0
        %v519 = vadd.f32 %v496, %v518
        %520 = vmatmul.f32.gmra.mxu0 %v324
        %v521 = vpop.f32.mrf.mxu0
        %v522 = vadd.f32 %v499, %v521
        %523 = vdwg.mxu0
        %524 = vmatpush.msra.mxu0 %v236
        %525 = vmatpush.msra.mxu0 %v235
        %526 = vmatpush.msra.mxu0 %v234
        %527 = vmatpush.msra.mxu0 %v233
        %528 = vmatpush.msra.mxu0 %v232
        %529 = vmatpush.msra.mxu0 %v231
        %530 = vmatpush.msra.mxu0 %v230
        %531 = vmatpush.msra.mxu0 %v229
        %532 = vmatpush.msra.mxu0 %v228
        %533 = vmatpush.msra.mxu0 %v227
        %534 = vmatpush.msra.mxu0 %v226
        %535 = vmatpush.msra.mxu0 %v225
        %536 = vmatpush.msra.mxu0 %v224
        %537 = vmatpush.msra.mxu0 %v223
        %538 = vmatpush.msra.mxu0 %v222
        %539 = vmatpush.msra.mxu0 %v221
        %540 = vmatmul.f32.gmra.mxu0 %v193
        %v541 = vpop.f32.mrf.mxu0
        %v542 = vadd.f32 %v519, %v541
        %543 = vmatmul.f32.gmra.mxu0 %v194
        %v544 = vpop.f32.mrf.mxu0
        %v545 = vadd.f32 %v522, %v544
        %546 = vdwg.mxu0
        %547 = vmatpush.msra.mxu0 %v252
        %548 = vmatpush.msra.mxu0 %v251
        %549 = vmatpush.msra.mxu0 %v250
        %550 = vmatpush.msra.mxu0 %v249
        %551 = vmatpush.msra.mxu0 %v248
        %552 = vmatpush.msra.mxu0 %v247
        %553 = vmatpush.msra.mxu0 %v246
        %554 = vmatpush.msra.mxu0 %v245
        %555 = vmatpush.msra.mxu0 %v244
        %556 = vmatpush.msra.mxu0 %v243
        %557 = vmatpush.msra.mxu0 %v242
        %558 = vmatpush.msra.mxu0 %v241
        %559 = vmatpush.msra.mxu0 %v240
        %560 = vmatpush.msra.mxu0 %v239
        %561 = vmatpush.msra.mxu0 %v238
        %562 = vmatpush.msra.mxu0 %v237
        %563 = vmatmul.f32.gmra.mxu0 %v200
        %v564 = vpop.f32.mrf.mxu0
        %v565 = vadd.f32 %v542, %v564
        %566 = vmatmul.f32.gmra.mxu0 %v199
        %v567 = vpop.f32.mrf.mxu0
        %v568 = vadd.f32 %v545, %v567
        %569 = vdwg.mxu0
        %570 = vmatpush.msra.mxu0 %v268
        %571 = vmatpush.msra.mxu0 %v267
        %572 = vmatpush.msra.mxu0 %v266
        %573 = vmatpush.msra.mxu0 %v265
        %574 = vmatpush.msra.mxu0 %v264
        %575 = vmatpush.msra.mxu0 %v263
        %576 = vmatpush.msra.mxu0 %v262
        %577 = vmatpush.msra.mxu0 %v261
        %578 = vmatpush.msra.mxu0 %v260
        %579 = vmatpush.msra.mxu0 %v259
        %580 = vmatpush.msra.mxu0 %v258
        %581 = vmatpush.msra.mxu0 %v257
        %582 = vmatpush.msra.mxu0 %v256
        %583 = vmatpush.msra.mxu0 %v255
        %584 = vmatpush.msra.mxu0 %v254
        %585 = vmatpush.msra.mxu0 %v253
        %586 = vmatmul.f32.gmra.mxu0 %v206
        %v587 = vpop.f32.mrf.mxu0
        %v588 = vadd.f32 %v565, %v587
        %589 = vmatmul.f32.gmra.mxu0 %v205
        %v590 = vpop.f32.mrf.mxu0
        %v591 = vadd.f32 %v568, %v590
        %592 = vdwg.mxu0
        %593 = vmatpush.msra.mxu0 %v284
        %594 = vmatpush.msra.mxu0 %v283
        %595 = vmatpush.msra.mxu0 %v282
        %596 = vmatpush.msra.mxu0 %v281
        %597 = vmatpush.msra.mxu0 %v280
        %598 = vmatpush.msra.mxu0 %v279
        %599 = vmatpush.msra.mxu0 %v278
        %600 = vmatpush.msra.mxu0 %v277
        %601 = vmatpush.msra.mxu0 %v276
        %602 = vmatpush.msra.mxu0 %v275
        %603 = vmatpush.msra.mxu0 %v274
        %604 = vmatpush.msra.mxu0 %v273
        %605 = vmatpush.msra.mxu0 %v272
        %606 = vmatpush.msra.mxu0 %v271
        %607 = vmatpush.msra.mxu0 %v270
        %608 = vmatpush.msra.mxu0 %v269
        %609 = vmatmul.f32.gmra.mxu0 %v212
        %v610 = vpop.f32.mrf.mxu0
        %v611 = vadd.f32 %v588, %v610
        %612 = vmatmul.f32.gmra.mxu0 %v211
        %v613 = vpop.f32.mrf.mxu0
        %v614 = vadd.f32 %v591, %v613
        %615 = vdwg.mxu0
        %616 = vmatpush.msra.mxu0 %v300
        %617 = vmatpush.msra.mxu0 %v299
        %618 = vmatpush.msra.mxu0 %v298
        %619 = vmatpush.msra.mxu0 %v297
        %620 = vmatpush.msra.mxu0 %v296
        %621 = vmatpush.msra.mxu0 %v295
        %622 = vmatpush.msra.mxu0 %v294
        %623 = vmatpush.msra.mxu0 %v293
        %624 = vmatpush.msra.mxu0 %v292
        %625 = vmatpush.msra.mxu0 %v291
        %626 = vmatpush.msra.mxu0 %v290
        %627 = vmatpush.msra.mxu0 %v289
        %628 = vmatpush.msra.mxu0 %v288
        %629 = vmatpush.msra.mxu0 %v287
        %630 = vmatpush.msra.mxu0 %v286
        %631 = vmatpush.msra.mxu0 %v285
        %632 = vmatmul.f32.gmra.mxu0 %v218
        %v633 = vpop.f32.mrf.mxu0
        %v634 = vadd.f32 %v611, %v633
        %635 = vmatmul.f32.gmra.mxu0 %v217
        %v636 = vpop.f32.mrf.mxu0
        %v637 = vadd.f32 %v614, %v636
        %638 = vdwg.mxu0
        %s639 = sadd.s32 %s190, 2
        %s640 = smul.u32 %s639, 16
        %s641 = scalar_lea.vmem %s165, %s640
        %v642 = vld [vmem:[%s641] sm:$0xff]
        %v643 = vld [vmem:[%s641 + $0x8] sm:$0x3f]
        %v646 = vrot.slane %v642, 1
        %v647 = vrot.slane %v643, 1
        %v648 = vsel %vm197, %v646, %v647
        %v651 = vrot.slane %v642, 2
        %v652 = vrot.slane %v643, 2
        %v653 = vsel %vm203, %v651, %v652
        %v656 = vrot.slane %v642, 3
        %v657 = vrot.slane %v643, 3
        %v658 = vsel %vm209, %v656, %v657
        %v661 = vrot.slane %v642, 4
        %v662 = vrot.slane %v643, 4
        %v663 = vsel %vm215, %v661, %v662
        %s666 = scalar_lea.vmem %s1, 1280
        %v667 = vld [vmem:[%s666] sm:$0xff]
        %v668 = vld [vmem:[%s666 + $0x8] sm:$0xff]
        %v669 = vld [vmem:[%s666 + $0x10] sm:$0xff]
        %v670 = vld [vmem:[%s666 + $0x18] sm:$0xff]
        %v671 = vld [vmem:[%s666 + $0x20] sm:$0xff]
        %v672 = vld [vmem:[%s666 + $0x28] sm:$0xff]
        %v673 = vld [vmem:[%s666 + $0x30] sm:$0xff]
        %v674 = vld [vmem:[%s666 + $0x38] sm:$0xff]
        %v675 = vld [vmem:[%s666 + $0x40] sm:$0xff]
        %v676 = vld [vmem:[%s666 + $0x48] sm:$0xff]
        %v677 = vld [vmem:[%s666 + $0x50] sm:$0xff]
        %v678 = vld [vmem:[%s666 + $0x58] sm:$0xff]
        %v679 = vld [vmem:[%s666 + $0x60] sm:$0xff]
        %v680 = vld [vmem:[%s666 + $0x68] sm:$0xff]
        %v681 = vld [vmem:[%s666 + $0x70] sm:$0xff]
        %v682 = vld [vmem:[%s666 + $0x78] sm:$0xff]
        %v683 = vld [vmem:[%s666 + $0x80] sm:$0xff]
        %v684 = vld [vmem:[%s666 + $0x88] sm:$0xff]
        %v685 = vld [vmem:[%s666 + $0x90] sm:$0xff]
        %v686 = vld [vmem:[%s666 + $0x98] sm:$0xff]
        %v687 = vld [vmem:[%s666 + $0xa0] sm:$0xff]
        %v688 = vld [vmem:[%s666 + $0xa8] sm:$0xff]
        %v689 = vld [vmem:[%s666 + $0xb0] sm:$0xff]
        %v690 = vld [vmem:[%s666 + $0xb8] sm:$0xff]
        %v691 = vld [vmem:[%s666 + $0xc0] sm:$0xff]
        %v692 = vld [vmem:[%s666 + $0xc8] sm:$0xff]
        %v693 = vld [vmem:[%s666 + $0xd0] sm:$0xff]
        %v694 = vld [vmem:[%s666 + $0xd8] sm:$0xff]
        %v695 = vld [vmem:[%s666 + $0xe0] sm:$0xff]
        %v696 = vld [vmem:[%s666 + $0xe8] sm:$0xff]
        %v697 = vld [vmem:[%s666 + $0xf0] sm:$0xff]
        %v698 = vld [vmem:[%s666 + $0xf8] sm:$0xff]
        %v699 = vld [vmem:[%s666 + $0x100] sm:$0xff]
        %v700 = vld [vmem:[%s666 + $0x108] sm:$0xff]
        %v701 = vld [vmem:[%s666 + $0x110] sm:$0xff]
        %v702 = vld [vmem:[%s666 + $0x118] sm:$0xff]
        %v703 = vld [vmem:[%s666 + $0x120] sm:$0xff]
        %v704 = vld [vmem:[%s666 + $0x128] sm:$0xff]
        %v705 = vld [vmem:[%s666 + $0x130] sm:$0xff]
        %v706 = vld [vmem:[%s666 + $0x138] sm:$0xff]
        %v707 = vld [vmem:[%s666 + $0x140] sm:$0xff]
        %v708 = vld [vmem:[%s666 + $0x148] sm:$0xff]
        %v709 = vld [vmem:[%s666 + $0x150] sm:$0xff]
        %v710 = vld [vmem:[%s666 + $0x158] sm:$0xff]
        %v711 = vld [vmem:[%s666 + $0x160] sm:$0xff]
        %v712 = vld [vmem:[%s666 + $0x168] sm:$0xff]
        %v713 = vld [vmem:[%s666 + $0x170] sm:$0xff]
        %v714 = vld [vmem:[%s666 + $0x178] sm:$0xff]
        %v715 = vld [vmem:[%s666 + $0x180] sm:$0xff]
        %v716 = vld [vmem:[%s666 + $0x188] sm:$0xff]
        %v717 = vld [vmem:[%s666 + $0x190] sm:$0xff]
        %v718 = vld [vmem:[%s666 + $0x198] sm:$0xff]
        %v719 = vld [vmem:[%s666 + $0x1a0] sm:$0xff]
        %v720 = vld [vmem:[%s666 + $0x1a8] sm:$0xff]
        %v721 = vld [vmem:[%s666 + $0x1b0] sm:$0xff]
        %v722 = vld [vmem:[%s666 + $0x1b8] sm:$0xff]
        %v723 = vld [vmem:[%s666 + $0x1c0] sm:$0xff]
        %v724 = vld [vmem:[%s666 + $0x1c8] sm:$0xff]
        %v725 = vld [vmem:[%s666 + $0x1d0] sm:$0xff]
        %v726 = vld [vmem:[%s666 + $0x1d8] sm:$0xff]
        %v727 = vld [vmem:[%s666 + $0x1e0] sm:$0xff]
        %v728 = vld [vmem:[%s666 + $0x1e8] sm:$0xff]
        %v729 = vld [vmem:[%s666 + $0x1f0] sm:$0xff]
        %v730 = vld [vmem:[%s666 + $0x1f8] sm:$0xff]
        %v731 = vld [vmem:[%s666 + $0x200] sm:$0xff]
        %v732 = vld [vmem:[%s666 + $0x208] sm:$0xff]
        %v733 = vld [vmem:[%s666 + $0x210] sm:$0xff]
        %v734 = vld [vmem:[%s666 + $0x218] sm:$0xff]
        %v735 = vld [vmem:[%s666 + $0x220] sm:$0xff]
        %v736 = vld [vmem:[%s666 + $0x228] sm:$0xff]
        %v737 = vld [vmem:[%s666 + $0x230] sm:$0xff]
        %v738 = vld [vmem:[%s666 + $0x238] sm:$0xff]
        %v739 = vld [vmem:[%s666 + $0x240] sm:$0xff]
        %v740 = vld [vmem:[%s666 + $0x248] sm:$0xff]
        %v741 = vld [vmem:[%s666 + $0x250] sm:$0xff]
        %v742 = vld [vmem:[%s666 + $0x258] sm:$0xff]
        %v743 = vld [vmem:[%s666 + $0x260] sm:$0xff]
        %v744 = vld [vmem:[%s666 + $0x268] sm:$0xff]
        %v745 = vld [vmem:[%s666 + $0x270] sm:$0xff]
        %v746 = vld [vmem:[%s666 + $0x278] sm:$0xff]
        %747 = vmatpush.msra.mxu0 %v682
        %748 = vmatpush.msra.mxu0 %v681
        %749 = vmatpush.msra.mxu0 %v680
        %750 = vmatpush.msra.mxu0 %v679
        %751 = vmatpush.msra.mxu0 %v678
        %752 = vmatpush.msra.mxu0 %v677
        %753 = vmatpush.msra.mxu0 %v676
        %754 = vmatpush.msra.mxu0 %v675
        %755 = vmatpush.msra.mxu0 %v674
        %756 = vmatpush.msra.mxu0 %v673
        %757 = vmatpush.msra.mxu0 %v672
        %758 = vmatpush.msra.mxu0 %v671
        %759 = vmatpush.msra.mxu0 %v670
        %760 = vmatpush.msra.mxu0 %v669
        %761 = vmatpush.msra.mxu0 %v668
        %762 = vmatpush.msra.mxu0 %v667
        %763 = vmatmul.f32.gmra.mxu0 %v642
        %v764 = vpop.f32.mrf.mxu0
        %v765 = vadd.f32 0.0, %v764
        %766 = vmatmul.f32.gmra.mxu0 %v643
        %v767 = vpop.f32.mrf.mxu0
        %v768 = vadd.f32 0.0, %v767
        %769 = vdwg.mxu0
        %770 = vmatpush.msra.mxu0 %v698
        %771 = vmatpush.msra.mxu0 %v697
        %772 = vmatpush.msra.mxu0 %v696
        %773 = vmatpush.msra.mxu0 %v695
        %774 = vmatpush.msra.mxu0 %v694
        %775 = vmatpush.msra.mxu0 %v693
        %776 = vmatpush.msra.mxu0 %v692
        %777 = vmatpush.msra.mxu0 %v691
        %778 = vmatpush.msra.mxu0 %v690
        %779 = vmatpush.msra.mxu0 %v689
        %780 = vmatpush.msra.mxu0 %v688
        %781 = vmatpush.msra.mxu0 %v687
        %782 = vmatpush.msra.mxu0 %v686
        %783 = vmatpush.msra.mxu0 %v685
        %784 = vmatpush.msra.mxu0 %v684
        %785 = vmatpush.msra.mxu0 %v683
        %786 = vmatmul.f32.gmra.mxu0 %v648
        %v787 = vpop.f32.mrf.mxu0
        %v788 = vadd.f32 %v765, %v787
        %789 = vmatmul.f32.gmra.mxu0 %v647
        %v790 = vpop.f32.mrf.mxu0
        %v791 = vadd.f32 %v768, %v790
        %792 = vdwg.mxu0
        %793 = vmatpush.msra.mxu0 %v714
        %794 = vmatpush.msra.mxu0 %v713
        %795 = vmatpush.msra.mxu0 %v712
        %796 = vmatpush.msra.mxu0 %v711
        %797 = vmatpush.msra.mxu0 %v710
        %798 = vmatpush.msra.mxu0 %v709
        %799 = vmatpush.msra.mxu0 %v708
        %800 = vmatpush.msra.mxu0 %v707
        %801 = vmatpush.msra.mxu0 %v706
        %802 = vmatpush.msra.mxu0 %v705
        %803 = vmatpush.msra.mxu0 %v704
        %804 = vmatpush.msra.mxu0 %v703
        %805 = vmatpush.msra.mxu0 %v702
        %806 = vmatpush.msra.mxu0 %v701
        %807 = vmatpush.msra.mxu0 %v700
        %808 = vmatpush.msra.mxu0 %v699
        %809 = vmatmul.f32.gmra.mxu0 %v653
        %v810 = vpop.f32.mrf.mxu0
        %v811 = vadd.f32 %v788, %v810
        %812 = vmatmul.f32.gmra.mxu0 %v652
        %v813 = vpop.f32.mrf.mxu0
        %v814 = vadd.f32 %v791, %v813
        %815 = vdwg.mxu0
        %816 = vmatpush.msra.mxu0 %v730
        %817 = vmatpush.msra.mxu0 %v729
        %818 = vmatpush.msra.mxu0 %v728
        %819 = vmatpush.msra.mxu0 %v727
        %820 = vmatpush.msra.mxu0 %v726
        %821 = vmatpush.msra.mxu0 %v725
        %822 = vmatpush.msra.mxu0 %v724
        %823 = vmatpush.msra.mxu0 %v723
        %824 = vmatpush.msra.mxu0 %v722
        %825 = vmatpush.msra.mxu0 %v721
        %826 = vmatpush.msra.mxu0 %v720
        %827 = vmatpush.msra.mxu0 %v719
        %828 = vmatpush.msra.mxu0 %v718
        %829 = vmatpush.msra.mxu0 %v717
        %830 = vmatpush.msra.mxu0 %v716
        %831 = vmatpush.msra.mxu0 %v715
        %832 = vmatmul.f32.gmra.mxu0 %v658
        %v833 = vpop.f32.mrf.mxu0
        %v834 = vadd.f32 %v811, %v833
        %835 = vmatmul.f32.gmra.mxu0 %v657
        %v836 = vpop.f32.mrf.mxu0
        %v837 = vadd.f32 %v814, %v836
        %838 = vdwg.mxu0
        %839 = vmatpush.msra.mxu0 %v746
        %840 = vmatpush.msra.mxu0 %v745
        %841 = vmatpush.msra.mxu0 %v744
        %842 = vmatpush.msra.mxu0 %v743
        %843 = vmatpush.msra.mxu0 %v742
        %844 = vmatpush.msra.mxu0 %v741
        %845 = vmatpush.msra.mxu0 %v740
        %846 = vmatpush.msra.mxu0 %v739
        %847 = vmatpush.msra.mxu0 %v738
        %848 = vmatpush.msra.mxu0 %v737
        %849 = vmatpush.msra.mxu0 %v736
        %850 = vmatpush.msra.mxu0 %v735
        %851 = vmatpush.msra.mxu0 %v734
        %852 = vmatpush.msra.mxu0 %v733
        %853 = vmatpush.msra.mxu0 %v732
        %854 = vmatpush.msra.mxu0 %v731
        %855 = vmatmul.f32.gmra.mxu0 %v663
        %v856 = vpop.f32.mrf.mxu0
        %v857 = vadd.f32 %v834, %v856
        %858 = vmatmul.f32.gmra.mxu0 %v662
        %v859 = vpop.f32.mrf.mxu0
        %v860 = vadd.f32 %v837, %v859
        %861 = vdwg.mxu0
        %v862 = vadd.f32 %v634, %v857
        %v863 = vadd.f32 %v637, %v860
        %s864 = sadd.s32 %s190, 3
        %s865 = smul.u32 %s864, 16
        %s866 = scalar_lea.vmem %s165, %s865
        %v867 = vld [vmem:[%s866] sm:$0xff]
        %v868 = vld [vmem:[%s866 + $0x8] sm:$0x3f]
        %v871 = vrot.slane %v867, 1
        %v872 = vrot.slane %v868, 1
        %v873 = vsel %vm197, %v871, %v872
        %v876 = vrot.slane %v867, 2
        %v877 = vrot.slane %v868, 2
        %v878 = vsel %vm203, %v876, %v877
        %v881 = vrot.slane %v867, 3
        %v882 = vrot.slane %v868, 3
        %v883 = vsel %vm209, %v881, %v882
        %v886 = vrot.slane %v867, 4
        %v887 = vrot.slane %v868, 4
        %v888 = vsel %vm215, %v886, %v887
        %s891 = scalar_lea.vmem %s1, 1920
        %v892 = vld [vmem:[%s891] sm:$0xff]
        %v893 = vld [vmem:[%s891 + $0x8] sm:$0xff]
        %v894 = vld [vmem:[%s891 + $0x10] sm:$0xff]
        %v895 = vld [vmem:[%s891 + $0x18] sm:$0xff]
        %v896 = vld [vmem:[%s891 + $0x20] sm:$0xff]
        %v897 = vld [vmem:[%s891 + $0x28] sm:$0xff]
        %v898 = vld [vmem:[%s891 + $0x30] sm:$0xff]
        %v899 = vld [vmem:[%s891 + $0x38] sm:$0xff]
        %v900 = vld [vmem:[%s891 + $0x40] sm:$0xff]
        %v901 = vld [vmem:[%s891 + $0x48] sm:$0xff]
        %v902 = vld [vmem:[%s891 + $0x50] sm:$0xff]
        %v903 = vld [vmem:[%s891 + $0x58] sm:$0xff]
        %v904 = vld [vmem:[%s891 + $0x60] sm:$0xff]
        %v905 = vld [vmem:[%s891 + $0x68] sm:$0xff]
        %v906 = vld [vmem:[%s891 + $0x70] sm:$0xff]
        %v907 = vld [vmem:[%s891 + $0x78] sm:$0xff]
        %v908 = vld [vmem:[%s891 + $0x80] sm:$0xff]
        %v909 = vld [vmem:[%s891 + $0x88] sm:$0xff]
        %v910 = vld [vmem:[%s891 + $0x90] sm:$0xff]
        %v911 = vld [vmem:[%s891 + $0x98] sm:$0xff]
        %v912 = vld [vmem:[%s891 + $0xa0] sm:$0xff]
        %v913 = vld [vmem:[%s891 + $0xa8] sm:$0xff]
        %v914 = vld [vmem:[%s891 + $0xb0] sm:$0xff]
        %v915 = vld [vmem:[%s891 + $0xb8] sm:$0xff]
        %v916 = vld [vmem:[%s891 + $0xc0] sm:$0xff]
        %v917 = vld [vmem:[%s891 + $0xc8] sm:$0xff]
        %v918 = vld [vmem:[%s891 + $0xd0] sm:$0xff]
        %v919 = vld [vmem:[%s891 + $0xd8] sm:$0xff]
        %v920 = vld [vmem:[%s891 + $0xe0] sm:$0xff]
        %v921 = vld [vmem:[%s891 + $0xe8] sm:$0xff]
        %v922 = vld [vmem:[%s891 + $0xf0] sm:$0xff]
        %v923 = vld [vmem:[%s891 + $0xf8] sm:$0xff]
        %v924 = vld [vmem:[%s891 + $0x100] sm:$0xff]
        %v925 = vld [vmem:[%s891 + $0x108] sm:$0xff]
        %v926 = vld [vmem:[%s891 + $0x110] sm:$0xff]
        %v927 = vld [vmem:[%s891 + $0x118] sm:$0xff]
        %v928 = vld [vmem:[%s891 + $0x120] sm:$0xff]
        %v929 = vld [vmem:[%s891 + $0x128] sm:$0xff]
        %v930 = vld [vmem:[%s891 + $0x130] sm:$0xff]
        %v931 = vld [vmem:[%s891 + $0x138] sm:$0xff]
        %v932 = vld [vmem:[%s891 + $0x140] sm:$0xff]
        %v933 = vld [vmem:[%s891 + $0x148] sm:$0xff]
        %v934 = vld [vmem:[%s891 + $0x150] sm:$0xff]
        %v935 = vld [vmem:[%s891 + $0x158] sm:$0xff]
        %v936 = vld [vmem:[%s891 + $0x160] sm:$0xff]
        %v937 = vld [vmem:[%s891 + $0x168] sm:$0xff]
        %v938 = vld [vmem:[%s891 + $0x170] sm:$0xff]
        %v939 = vld [vmem:[%s891 + $0x178] sm:$0xff]
        %v940 = vld [vmem:[%s891 + $0x180] sm:$0xff]
        %v941 = vld [vmem:[%s891 + $0x188] sm:$0xff]
        %v942 = vld [vmem:[%s891 + $0x190] sm:$0xff]
        %v943 = vld [vmem:[%s891 + $0x198] sm:$0xff]
        %v944 = vld [vmem:[%s891 + $0x1a0] sm:$0xff]
        %v945 = vld [vmem:[%s891 + $0x1a8] sm:$0xff]
        %v946 = vld [vmem:[%s891 + $0x1b0] sm:$0xff]
        %v947 = vld [vmem:[%s891 + $0x1b8] sm:$0xff]
        %v948 = vld [vmem:[%s891 + $0x1c0] sm:$0xff]
        %v949 = vld [vmem:[%s891 + $0x1c8] sm:$0xff]
        %v950 = vld [vmem:[%s891 + $0x1d0] sm:$0xff]
        %v951 = vld [vmem:[%s891 + $0x1d8] sm:$0xff]
        %v952 = vld [vmem:[%s891 + $0x1e0] sm:$0xff]
        %v953 = vld [vmem:[%s891 + $0x1e8] sm:$0xff]
        %v954 = vld [vmem:[%s891 + $0x1f0] sm:$0xff]
        %v955 = vld [vmem:[%s891 + $0x1f8] sm:$0xff]
        %v956 = vld [vmem:[%s891 + $0x200] sm:$0xff]
        %v957 = vld [vmem:[%s891 + $0x208] sm:$0xff]
        %v958 = vld [vmem:[%s891 + $0x210] sm:$0xff]
        %v959 = vld [vmem:[%s891 + $0x218] sm:$0xff]
        %v960 = vld [vmem:[%s891 + $0x220] sm:$0xff]
        %v961 = vld [vmem:[%s891 + $0x228] sm:$0xff]
        %v962 = vld [vmem:[%s891 + $0x230] sm:$0xff]
        %v963 = vld [vmem:[%s891 + $0x238] sm:$0xff]
        %v964 = vld [vmem:[%s891 + $0x240] sm:$0xff]
        %v965 = vld [vmem:[%s891 + $0x248] sm:$0xff]
        %v966 = vld [vmem:[%s891 + $0x250] sm:$0xff]
        %v967 = vld [vmem:[%s891 + $0x258] sm:$0xff]
        %v968 = vld [vmem:[%s891 + $0x260] sm:$0xff]
        %v969 = vld [vmem:[%s891 + $0x268] sm:$0xff]
        %v970 = vld [vmem:[%s891 + $0x270] sm:$0xff]
        %v971 = vld [vmem:[%s891 + $0x278] sm:$0xff]
        %972 = vmatpush.msra.mxu0 %v907
        %973 = vmatpush.msra.mxu0 %v906
        %974 = vmatpush.msra.mxu0 %v905
        %975 = vmatpush.msra.mxu0 %v904
        %976 = vmatpush.msra.mxu0 %v903
        %977 = vmatpush.msra.mxu0 %v902
        %978 = vmatpush.msra.mxu0 %v901
        %979 = vmatpush.msra.mxu0 %v900
        %980 = vmatpush.msra.mxu0 %v899
        %981 = vmatpush.msra.mxu0 %v898
        %982 = vmatpush.msra.mxu0 %v897
        %983 = vmatpush.msra.mxu0 %v896
        %984 = vmatpush.msra.mxu0 %v895
        %985 = vmatpush.msra.mxu0 %v894
        %986 = vmatpush.msra.mxu0 %v893
        %987 = vmatpush.msra.mxu0 %v892
        %988 = vmatmul.f32.gmra.mxu0 %v867
        %v989 = vpop.f32.mrf.mxu0
        %v990 = vadd.f32 0.0, %v989
        %991 = vmatmul.f32.gmra.mxu0 %v868
        %v992 = vpop.f32.mrf.mxu0
        %v993 = vadd.f32 0.0, %v992
        %994 = vdwg.mxu0
        %995 = vmatpush.msra.mxu0 %v923
        %996 = vmatpush.msra.mxu0 %v922
        %997 = vmatpush.msra.mxu0 %v921
        %998 = vmatpush.msra.mxu0 %v920
        %999 = vmatpush.msra.mxu0 %v919
        %1000 = vmatpush.msra.mxu0 %v918
        %1001 = vmatpush.msra.mxu0 %v917
        %1002 = vmatpush.msra.mxu0 %v916
        %1003 = vmatpush.msra.mxu0 %v915
        %1004 = vmatpush.msra.mxu0 %v914
        %1005 = vmatpush.msra.mxu0 %v913
        %1006 = vmatpush.msra.mxu0 %v912
        %1007 = vmatpush.msra.mxu0 %v911
        %1008 = vmatpush.msra.mxu0 %v910
        %1009 = vmatpush.msra.mxu0 %v909
        %1010 = vmatpush.msra.mxu0 %v908
        %1011 = vmatmul.f32.gmra.mxu0 %v873
        %v1012 = vpop.f32.mrf.mxu0
        %v1013 = vadd.f32 %v990, %v1012
        %1014 = vmatmul.f32.gmra.mxu0 %v872
        %v1015 = vpop.f32.mrf.mxu0
        %v1016 = vadd.f32 %v993, %v1015
        %1017 = vdwg.mxu0
        %1018 = vmatpush.msra.mxu0 %v939
        %1019 = vmatpush.msra.mxu0 %v938
        %1020 = vmatpush.msra.mxu0 %v937
        %1021 = vmatpush.msra.mxu0 %v936
        %1022 = vmatpush.msra.mxu0 %v935
        %1023 = vmatpush.msra.mxu0 %v934
        %1024 = vmatpush.msra.mxu0 %v933
        %1025 = vmatpush.msra.mxu0 %v932
        %1026 = vmatpush.msra.mxu0 %v931
        %1027 = vmatpush.msra.mxu0 %v930
        %1028 = vmatpush.msra.mxu0 %v929
        %1029 = vmatpush.msra.mxu0 %v928
        %1030 = vmatpush.msra.mxu0 %v927
        %1031 = vmatpush.msra.mxu0 %v926
        %1032 = vmatpush.msra.mxu0 %v925
        %1033 = vmatpush.msra.mxu0 %v924
        %1034 = vmatmul.f32.gmra.mxu0 %v878
        %v1035 = vpop.f32.mrf.mxu0
        %v1036 = vadd.f32 %v1013, %v1035
        %1037 = vmatmul.f32.gmra.mxu0 %v877
        %v1038 = vpop.f32.mrf.mxu0
        %v1039 = vadd.f32 %v1016, %v1038
        %1040 = vdwg.mxu0
        %1041 = vmatpush.msra.mxu0 %v955
        %1042 = vmatpush.msra.mxu0 %v954
        %1043 = vmatpush.msra.mxu0 %v953
        %1044 = vmatpush.msra.mxu0 %v952
        %1045 = vmatpush.msra.mxu0 %v951
        %1046 = vmatpush.msra.mxu0 %v950
        %1047 = vmatpush.msra.mxu0 %v949
        %1048 = vmatpush.msra.mxu0 %v948
        %1049 = vmatpush.msra.mxu0 %v947
        %1050 = vmatpush.msra.mxu0 %v946
        %1051 = vmatpush.msra.mxu0 %v945
        %1052 = vmatpush.msra.mxu0 %v944
        %1053 = vmatpush.msra.mxu0 %v943
        %1054 = vmatpush.msra.mxu0 %v942
        %1055 = vmatpush.msra.mxu0 %v941
        %1056 = vmatpush.msra.mxu0 %v940
        %1057 = vmatmul.f32.gmra.mxu0 %v883
        %v1058 = vpop.f32.mrf.mxu0
        %v1059 = vadd.f32 %v1036, %v1058
        %1060 = vmatmul.f32.gmra.mxu0 %v882
        %v1061 = vpop.f32.mrf.mxu0
        %v1062 = vadd.f32 %v1039, %v1061
        %1063 = vdwg.mxu0
        %1064 = vmatpush.msra.mxu0 %v971
        %1065 = vmatpush.msra.mxu0 %v970
        %1066 = vmatpush.msra.mxu0 %v969
        %1067 = vmatpush.msra.mxu0 %v968
        %1068 = vmatpush.msra.mxu0 %v967
        %1069 = vmatpush.msra.mxu0 %v966
        %1070 = vmatpush.msra.mxu0 %v965
        %1071 = vmatpush.msra.mxu0 %v964
        %1072 = vmatpush.msra.mxu0 %v963
        %1073 = vmatpush.msra.mxu0 %v962
        %1074 = vmatpush.msra.mxu0 %v961
        %1075 = vmatpush.msra.mxu0 %v960
        %1076 = vmatpush.msra.mxu0 %v959
        %1077 = vmatpush.msra.mxu0 %v958
        %1078 = vmatpush.msra.mxu0 %v957
        %1079 = vmatpush.msra.mxu0 %v956
        %1080 = vmatmul.f32.gmra.mxu0 %v888
        %v1081 = vpop.f32.mrf.mxu0
        %v1082 = vadd.f32 %v1059, %v1081
        %1083 = vmatmul.f32.gmra.mxu0 %v887
        %v1084 = vpop.f32.mrf.mxu0
        %v1085 = vadd.f32 %v1062, %v1084
        %1086 = vdwg.mxu0
        %v1087 = vadd.f32 %v862, %v1082
        %v1088 = vadd.f32 %v863, %v1085
        %s1089 = sadd.s32 %s190, 4
        %s1090 = smul.u32 %s1089, 16
        %s1091 = scalar_lea.vmem %s165, %s1090
        %v1092 = vld [vmem:[%s1091] sm:$0xff]
        %v1093 = vld [vmem:[%s1091 + $0x8] sm:$0x3f]
        %v1096 = vrot.slane %v1092, 1
        %v1097 = vrot.slane %v1093, 1
        %v1098 = vsel %vm197, %v1096, %v1097
        %v1101 = vrot.slane %v1092, 2
        %v1102 = vrot.slane %v1093, 2
        %v1103 = vsel %vm203, %v1101, %v1102
        %v1106 = vrot.slane %v1092, 3
        %v1107 = vrot.slane %v1093, 3
        %v1108 = vsel %vm209, %v1106, %v1107
        %v1111 = vrot.slane %v1092, 4
        %v1112 = vrot.slane %v1093, 4
        %v1113 = vsel %vm215, %v1111, %v1112
        %s1116 = scalar_lea.vmem %s1, 2560
        %v1117 = vld [vmem:[%s1116] sm:$0xff]
        %v1118 = vld [vmem:[%s1116 + $0x8] sm:$0xff]
        %v1119 = vld [vmem:[%s1116 + $0x10] sm:$0xff]
        %v1120 = vld [vmem:[%s1116 + $0x18] sm:$0xff]
        %v1121 = vld [vmem:[%s1116 + $0x20] sm:$0xff]
        %v1122 = vld [vmem:[%s1116 + $0x28] sm:$0xff]
        %v1123 = vld [vmem:[%s1116 + $0x30] sm:$0xff]
        %v1124 = vld [vmem:[%s1116 + $0x38] sm:$0xff]
        %v1125 = vld [vmem:[%s1116 + $0x40] sm:$0xff]
        %v1126 = vld [vmem:[%s1116 + $0x48] sm:$0xff]
        %v1127 = vld [vmem:[%s1116 + $0x50] sm:$0xff]
        %v1128 = vld [vmem:[%s1116 + $0x58] sm:$0xff]
        %v1129 = vld [vmem:[%s1116 + $0x60] sm:$0xff]
        %v1130 = vld [vmem:[%s1116 + $0x68] sm:$0xff]
        %v1131 = vld [vmem:[%s1116 + $0x70] sm:$0xff]
        %v1132 = vld [vmem:[%s1116 + $0x78] sm:$0xff]
        %v1133 = vld [vmem:[%s1116 + $0x80] sm:$0xff]
        %v1134 = vld [vmem:[%s1116 + $0x88] sm:$0xff]
        %v1135 = vld [vmem:[%s1116 + $0x90] sm:$0xff]
        %v1136 = vld [vmem:[%s1116 + $0x98] sm:$0xff]
        %v1137 = vld [vmem:[%s1116 + $0xa0] sm:$0xff]
        %v1138 = vld [vmem:[%s1116 + $0xa8] sm:$0xff]
        %v1139 = vld [vmem:[%s1116 + $0xb0] sm:$0xff]
        %v1140 = vld [vmem:[%s1116 + $0xb8] sm:$0xff]
        %v1141 = vld [vmem:[%s1116 + $0xc0] sm:$0xff]
        %v1142 = vld [vmem:[%s1116 + $0xc8] sm:$0xff]
        %v1143 = vld [vmem:[%s1116 + $0xd0] sm:$0xff]
        %v1144 = vld [vmem:[%s1116 + $0xd8] sm:$0xff]
        %v1145 = vld [vmem:[%s1116 + $0xe0] sm:$0xff]
        %v1146 = vld [vmem:[%s1116 + $0xe8] sm:$0xff]
        %v1147 = vld [vmem:[%s1116 + $0xf0] sm:$0xff]
        %v1148 = vld [vmem:[%s1116 + $0xf8] sm:$0xff]
        %v1149 = vld [vmem:[%s1116 + $0x100] sm:$0xff]
        %v1150 = vld [vmem:[%s1116 + $0x108] sm:$0xff]
        %v1151 = vld [vmem:[%s1116 + $0x110] sm:$0xff]
        %v1152 = vld [vmem:[%s1116 + $0x118] sm:$0xff]
        %v1153 = vld [vmem:[%s1116 + $0x120] sm:$0xff]
        %v1154 = vld [vmem:[%s1116 + $0x128] sm:$0xff]
        %v1155 = vld [vmem:[%s1116 + $0x130] sm:$0xff]
        %v1156 = vld [vmem:[%s1116 + $0x138] sm:$0xff]
        %v1157 = vld [vmem:[%s1116 + $0x140] sm:$0xff]
        %v1158 = vld [vmem:[%s1116 + $0x148] sm:$0xff]
        %v1159 = vld [vmem:[%s1116 + $0x150] sm:$0xff]
        %v1160 = vld [vmem:[%s1116 + $0x158] sm:$0xff]
        %v1161 = vld [vmem:[%s1116 + $0x160] sm:$0xff]
        %v1162 = vld [vmem:[%s1116 + $0x168] sm:$0xff]
        %v1163 = vld [vmem:[%s1116 + $0x170] sm:$0xff]
        %v1164 = vld [vmem:[%s1116 + $0x178] sm:$0xff]
        %v1165 = vld [vmem:[%s1116 + $0x180] sm:$0xff]
        %v1166 = vld [vmem:[%s1116 + $0x188] sm:$0xff]
        %v1167 = vld [vmem:[%s1116 + $0x190] sm:$0xff]
        %v1168 = vld [vmem:[%s1116 + $0x198] sm:$0xff]
        %v1169 = vld [vmem:[%s1116 + $0x1a0] sm:$0xff]
        %v1170 = vld [vmem:[%s1116 + $0x1a8] sm:$0xff]
        %v1171 = vld [vmem:[%s1116 + $0x1b0] sm:$0xff]
        %v1172 = vld [vmem:[%s1116 + $0x1b8] sm:$0xff]
        %v1173 = vld [vmem:[%s1116 + $0x1c0] sm:$0xff]
        %v1174 = vld [vmem:[%s1116 + $0x1c8] sm:$0xff]
        %v1175 = vld [vmem:[%s1116 + $0x1d0] sm:$0xff]
        %v1176 = vld [vmem:[%s1116 + $0x1d8] sm:$0xff]
        %v1177 = vld [vmem:[%s1116 + $0x1e0] sm:$0xff]
        %v1178 = vld [vmem:[%s1116 + $0x1e8] sm:$0xff]
        %v1179 = vld [vmem:[%s1116 + $0x1f0] sm:$0xff]
        %v1180 = vld [vmem:[%s1116 + $0x1f8] sm:$0xff]
        %v1181 = vld [vmem:[%s1116 + $0x200] sm:$0xff]
        %v1182 = vld [vmem:[%s1116 + $0x208] sm:$0xff]
        %v1183 = vld [vmem:[%s1116 + $0x210] sm:$0xff]
        %v1184 = vld [vmem:[%s1116 + $0x218] sm:$0xff]
        %v1185 = vld [vmem:[%s1116 + $0x220] sm:$0xff]
        %v1186 = vld [vmem:[%s1116 + $0x228] sm:$0xff]
        %v1187 = vld [vmem:[%s1116 + $0x230] sm:$0xff]
        %v1188 = vld [vmem:[%s1116 + $0x238] sm:$0xff]
        %v1189 = vld [vmem:[%s1116 + $0x240] sm:$0xff]
        %v1190 = vld [vmem:[%s1116 + $0x248] sm:$0xff]
        %v1191 = vld [vmem:[%s1116 + $0x250] sm:$0xff]
        %v1192 = vld [vmem:[%s1116 + $0x258] sm:$0xff]
        %v1193 = vld [vmem:[%s1116 + $0x260] sm:$0xff]
        %v1194 = vld [vmem:[%s1116 + $0x268] sm:$0xff]
        %v1195 = vld [vmem:[%s1116 + $0x270] sm:$0xff]
        %v1196 = vld [vmem:[%s1116 + $0x278] sm:$0xff]
        %1197 = vmatpush.msra.mxu0 %v1132
        %1198 = vmatpush.msra.mxu0 %v1131
        %1199 = vmatpush.msra.mxu0 %v1130
        %1200 = vmatpush.msra.mxu0 %v1129
        %1201 = vmatpush.msra.mxu0 %v1128
        %1202 = vmatpush.msra.mxu0 %v1127
        %1203 = vmatpush.msra.mxu0 %v1126
        %1204 = vmatpush.msra.mxu0 %v1125
        %1205 = vmatpush.msra.mxu0 %v1124
        %1206 = vmatpush.msra.mxu0 %v1123
        %1207 = vmatpush.msra.mxu0 %v1122
        %1208 = vmatpush.msra.mxu0 %v1121
        %1209 = vmatpush.msra.mxu0 %v1120
        %1210 = vmatpush.msra.mxu0 %v1119
        %1211 = vmatpush.msra.mxu0 %v1118
        %1212 = vmatpush.msra.mxu0 %v1117
        %1213 = vmatmul.f32.gmra.mxu0 %v1092
        %v1214 = vpop.f32.mrf.mxu0
        %v1215 = vadd.f32 0.0, %v1214
        %1216 = vmatmul.f32.gmra.mxu0 %v1093
        %v1217 = vpop.f32.mrf.mxu0
        %v1218 = vadd.f32 0.0, %v1217
        %1219 = vdwg.mxu0
        %1220 = vmatpush.msra.mxu0 %v1148
        %1221 = vmatpush.msra.mxu0 %v1147
        %1222 = vmatpush.msra.mxu0 %v1146
        %1223 = vmatpush.msra.mxu0 %v1145
        %1224 = vmatpush.msra.mxu0 %v1144
        %1225 = vmatpush.msra.mxu0 %v1143
        %1226 = vmatpush.msra.mxu0 %v1142
        %1227 = vmatpush.msra.mxu0 %v1141
        %1228 = vmatpush.msra.mxu0 %v1140
        %1229 = vmatpush.msra.mxu0 %v1139
        %1230 = vmatpush.msra.mxu0 %v1138
        %1231 = vmatpush.msra.mxu0 %v1137
        %1232 = vmatpush.msra.mxu0 %v1136
        %1233 = vmatpush.msra.mxu0 %v1135
        %1234 = vmatpush.msra.mxu0 %v1134
        %1235 = vmatpush.msra.mxu0 %v1133
        %1236 = vmatmul.f32.gmra.mxu0 %v1098
        %v1237 = vpop.f32.mrf.mxu0
        %v1238 = vadd.f32 %v1215, %v1237
        %1239 = vmatmul.f32.gmra.mxu0 %v1097
        %v1240 = vpop.f32.mrf.mxu0
        %v1241 = vadd.f32 %v1218, %v1240
        %1242 = vdwg.mxu0
        %1243 = vmatpush.msra.mxu0 %v1164
        %1244 = vmatpush.msra.mxu0 %v1163
        %1245 = vmatpush.msra.mxu0 %v1162
        %1246 = vmatpush.msra.mxu0 %v1161
        %1247 = vmatpush.msra.mxu0 %v1160
        %1248 = vmatpush.msra.mxu0 %v1159
        %1249 = vmatpush.msra.mxu0 %v1158
        %1250 = vmatpush.msra.mxu0 %v1157
        %1251 = vmatpush.msra.mxu0 %v1156
        %1252 = vmatpush.msra.mxu0 %v1155
        %1253 = vmatpush.msra.mxu0 %v1154
        %1254 = vmatpush.msra.mxu0 %v1153
        %1255 = vmatpush.msra.mxu0 %v1152
        %1256 = vmatpush.msra.mxu0 %v1151
        %1257 = vmatpush.msra.mxu0 %v1150
        %1258 = vmatpush.msra.mxu0 %v1149
        %1259 = vmatmul.f32.gmra.mxu0 %v1103
        %v1260 = vpop.f32.mrf.mxu0
        %v1261 = vadd.f32 %v1238, %v1260
        %1262 = vmatmul.f32.gmra.mxu0 %v1102
        %v1263 = vpop.f32.mrf.mxu0
        %v1264 = vadd.f32 %v1241, %v1263
        %1265 = vdwg.mxu0
        %1266 = vmatpush.msra.mxu0 %v1180
        %1267 = vmatpush.msra.mxu0 %v1179
        %1268 = vmatpush.msra.mxu0 %v1178
        %1269 = vmatpush.msra.mxu0 %v1177
        %1270 = vmatpush.msra.mxu0 %v1176
        %1271 = vmatpush.msra.mxu0 %v1175
        %1272 = vmatpush.msra.mxu0 %v1174
        %1273 = vmatpush.msra.mxu0 %v1173
        %1274 = vmatpush.msra.mxu0 %v1172
        %1275 = vmatpush.msra.mxu0 %v1171
        %1276 = vmatpush.msra.mxu0 %v1170
        %1277 = vmatpush.msra.mxu0 %v1169
        %1278 = vmatpush.msra.mxu0 %v1168
        %1279 = vmatpush.msra.mxu0 %v1167
        %1280 = vmatpush.msra.mxu0 %v1166
        %1281 = vmatpush.msra.mxu0 %v1165
        %1282 = vmatmul.f32.gmra.mxu0 %v1108
        %v1283 = vpop.f32.mrf.mxu0
        %v1284 = vadd.f32 %v1261, %v1283
        %1285 = vmatmul.f32.gmra.mxu0 %v1107
        %v1286 = vpop.f32.mrf.mxu0
        %v1287 = vadd.f32 %v1264, %v1286
        %1288 = vdwg.mxu0
        %1289 = vmatpush.msra.mxu0 %v1196
        %1290 = vmatpush.msra.mxu0 %v1195
        %1291 = vmatpush.msra.mxu0 %v1194
        %1292 = vmatpush.msra.mxu0 %v1193
        %1293 = vmatpush.msra.mxu0 %v1192
        %1294 = vmatpush.msra.mxu0 %v1191
        %1295 = vmatpush.msra.mxu0 %v1190
        %1296 = vmatpush.msra.mxu0 %v1189
        %1297 = vmatpush.msra.mxu0 %v1188
        %1298 = vmatpush.msra.mxu0 %v1187
        %1299 = vmatpush.msra.mxu0 %v1186
        %1300 = vmatpush.msra.mxu0 %v1185
        %1301 = vmatpush.msra.mxu0 %v1184
        %1302 = vmatpush.msra.mxu0 %v1183
        %1303 = vmatpush.msra.mxu0 %v1182
        %1304 = vmatpush.msra.mxu0 %v1181
        %1305 = vmatmul.f32.gmra.mxu0 %v1113
        %v1306 = vpop.f32.mrf.mxu0
        %v1307 = vadd.f32 %v1284, %v1306
        %1308 = vmatmul.f32.gmra.mxu0 %v1112
        %v1309 = vpop.f32.mrf.mxu0
        %v1310 = vadd.f32 %v1287, %v1309
        %1311 = vdwg.mxu0
        %v1312 = vadd.f32 %v1087, %v1307
        %v1313 = vadd.f32 %v1088, %v1310
        %v1315 = vperm.slane %v171, 0
        %v1317 = vadd.f32 %v1312, %v1315
        %v1318 = vadd.f32 %v1313, %v1315
        %v1319 = vmax.f32 %v1317, 0.0
        %v1320 = vmax.f32 %v1318, 0.0
        %1321 = vmatpush.msra.mxu0 %v344
        %1322 = vmatpush.msra.mxu0 %v343
        %1323 = vmatpush.msra.mxu0 %v342
        %1324 = vmatpush.msra.mxu0 %v341
        %1325 = vmatpush.msra.mxu0 %v340
        %1326 = vmatpush.msra.mxu0 %v339
        %1327 = vmatpush.msra.mxu0 %v338
        %1328 = vmatpush.msra.mxu0 %v337
        %1329 = vmatpush.msra.mxu0 %v336
        %1330 = vmatpush.msra.mxu0 %v335
        %1331 = vmatpush.msra.mxu0 %v334
        %1332 = vmatpush.msra.mxu0 %v333
        %1333 = vmatpush.msra.mxu0 %v332
        %1334 = vmatpush.msra.mxu0 %v331
        %1335 = vmatpush.msra.mxu0 %v330
        %1336 = vmatpush.msra.mxu0 %v329
        %1337 = vmatmul.f32.gmra.mxu0 %v642
        %v1338 = vpop.f32.mrf.mxu0
        %v1339 = vadd.f32 0.0, %v1338
        %1340 = vmatmul.f32.gmra.mxu0 %v643
        %v1341 = vpop.f32.mrf.mxu0
        %v1342 = vadd.f32 0.0, %v1341
        %1343 = vdwg.mxu0
        %1344 = vmatpush.msra.mxu0 %v360
        %1345 = vmatpush.msra.mxu0 %v359
        %1346 = vmatpush.msra.mxu0 %v358
        %1347 = vmatpush.msra.mxu0 %v357
        %1348 = vmatpush.msra.mxu0 %v356
        %1349 = vmatpush.msra.mxu0 %v355
        %1350 = vmatpush.msra.mxu0 %v354
        %1351 = vmatpush.msra.mxu0 %v353
        %1352 = vmatpush.msra.mxu0 %v352
        %1353 = vmatpush.msra.mxu0 %v351
        %1354 = vmatpush.msra.mxu0 %v350
        %1355 = vmatpush.msra.mxu0 %v349
        %1356 = vmatpush.msra.mxu0 %v348
        %1357 = vmatpush.msra.mxu0 %v347
        %1358 = vmatpush.msra.mxu0 %v346
        %1359 = vmatpush.msra.mxu0 %v345
        %1360 = vmatmul.f32.gmra.mxu0 %v648
        %v1361 = vpop.f32.mrf.mxu0
        %v1362 = vadd.f32 %v1339, %v1361
        %1363 = vmatmul.f32.gmra.mxu0 %v647
        %v1364 = vpop.f32.mrf.mxu0
        %v1365 = vadd.f32 %v1342, %v1364
        %1366 = vdwg.mxu0
        %1367 = vmatpush.msra.mxu0 %v376
        %1368 = vmatpush.msra.mxu0 %v375
        %1369 = vmatpush.msra.mxu0 %v374
        %1370 = vmatpush.msra.mxu0 %v373
        %1371 = vmatpush.msra.mxu0 %v372
        %1372 = vmatpush.msra.mxu0 %v371
        %1373 = vmatpush.msra.mxu0 %v370
        %1374 = vmatpush.msra.mxu0 %v369
        %1375 = vmatpush.msra.mxu0 %v368
        %1376 = vmatpush.msra.mxu0 %v367
        %1377 = vmatpush.msra.mxu0 %v366
        %1378 = vmatpush.msra.mxu0 %v365
        %1379 = vmatpush.msra.mxu0 %v364
        %1380 = vmatpush.msra.mxu0 %v363
        %1381 = vmatpush.msra.mxu0 %v362
        %1382 = vmatpush.msra.mxu0 %v361
        %1383 = vmatmul.f32.gmra.mxu0 %v653
        %v1384 = vpop.f32.mrf.mxu0
        %v1385 = vadd.f32 %v1362, %v1384
        %1386 = vmatmul.f32.gmra.mxu0 %v652
        %v1387 = vpop.f32.mrf.mxu0
        %v1388 = vadd.f32 %v1365, %v1387
        %1389 = vdwg.mxu0
        %1390 = vmatpush.msra.mxu0 %v392
        %1391 = vmatpush.msra.mxu0 %v391
        %1392 = vmatpush.msra.mxu0 %v390
        %1393 = vmatpush.msra.mxu0 %v389
        %1394 = vmatpush.msra.mxu0 %v388
        %1395 = vmatpush.msra.mxu0 %v387
        %1396 = vmatpush.msra.mxu0 %v386
        %1397 = vmatpush.msra.mxu0 %v385
        %1398 = vmatpush.msra.mxu0 %v384
        %1399 = vmatpush.msra.mxu0 %v383
        %1400 = vmatpush.msra.mxu0 %v382
        %1401 = vmatpush.msra.mxu0 %v381
        %1402 = vmatpush.msra.mxu0 %v380
        %1403 = vmatpush.msra.mxu0 %v379
        %1404 = vmatpush.msra.mxu0 %v378
        %1405 = vmatpush.msra.mxu0 %v377
        %1406 = vmatmul.f32.gmra.mxu0 %v658
        %v1407 = vpop.f32.mrf.mxu0
        %v1408 = vadd.f32 %v1385, %v1407
        %1409 = vmatmul.f32.gmra.mxu0 %v657
        %v1410 = vpop.f32.mrf.mxu0
        %v1411 = vadd.f32 %v1388, %v1410
        %1412 = vdwg.mxu0
        %1413 = vmatpush.msra.mxu0 %v408
        %1414 = vmatpush.msra.mxu0 %v407
        %1415 = vmatpush.msra.mxu0 %v406
        %1416 = vmatpush.msra.mxu0 %v405
        %1417 = vmatpush.msra.mxu0 %v404
        %1418 = vmatpush.msra.mxu0 %v403
        %1419 = vmatpush.msra.mxu0 %v402
        %1420 = vmatpush.msra.mxu0 %v401
        %1421 = vmatpush.msra.mxu0 %v400
        %1422 = vmatpush.msra.mxu0 %v399
        %1423 = vmatpush.msra.mxu0 %v398
        %1424 = vmatpush.msra.mxu0 %v397
        %1425 = vmatpush.msra.mxu0 %v396
        %1426 = vmatpush.msra.mxu0 %v395
        %1427 = vmatpush.msra.mxu0 %v394
        %1428 = vmatpush.msra.mxu0 %v393
        %1429 = vmatmul.f32.gmra.mxu0 %v663
        %v1430 = vpop.f32.mrf.mxu0
        %v1431 = vadd.f32 %v1408, %v1430
        %1432 = vmatmul.f32.gmra.mxu0 %v662
        %v1433 = vpop.f32.mrf.mxu0
        %v1434 = vadd.f32 %v1411, %v1433
        %1435 = vdwg.mxu0
        %1436 = vmatpush.msra.mxu0 %v236
        %1437 = vmatpush.msra.mxu0 %v235
        %1438 = vmatpush.msra.mxu0 %v234
        %1439 = vmatpush.msra.mxu0 %v233
        %1440 = vmatpush.msra.mxu0 %v232
        %1441 = vmatpush.msra.mxu0 %v231
        %1442 = vmatpush.msra.mxu0 %v230
        %1443 = vmatpush.msra.mxu0 %v229
        %1444 = vmatpush.msra.mxu0 %v228
        %1445 = vmatpush.msra.mxu0 %v227
        %1446 = vmatpush.msra.mxu0 %v226
        %1447 = vmatpush.msra.mxu0 %v225
        %1448 = vmatpush.msra.mxu0 %v224
        %1449 = vmatpush.msra.mxu0 %v223
        %1450 = vmatpush.msra.mxu0 %v222
        %1451 = vmatpush.msra.mxu0 %v221
        %1452 = vmatmul.f32.gmra.mxu0 %v304
        %v1453 = vpop.f32.mrf.mxu0
        %v1454 = vadd.f32 %v1431, %v1453
        %1455 = vmatmul.f32.gmra.mxu0 %v305
        %v1456 = vpop.f32.mrf.mxu0
        %v1457 = vadd.f32 %v1434, %v1456
        %1458 = vdwg.mxu0
        %1459 = vmatpush.msra.mxu0 %v252
        %1460 = vmatpush.msra.mxu0 %v251
        %1461 = vmatpush.msra.mxu0 %v250
        %1462 = vmatpush.msra.mxu0 %v249
        %1463 = vmatpush.msra.mxu0 %v248
        %1464 = vmatpush.msra.mxu0 %v247
        %1465 = vmatpush.msra.mxu0 %v246
        %1466 = vmatpush.msra.mxu0 %v245
        %1467 = vmatpush.msra.mxu0 %v244
        %1468 = vmatpush.msra.mxu0 %v243
        %1469 = vmatpush.msra.mxu0 %v242
        %1470 = vmatpush.msra.mxu0 %v241
        %1471 = vmatpush.msra.mxu0 %v240
        %1472 = vmatpush.msra.mxu0 %v239
        %1473 = vmatpush.msra.mxu0 %v238
        %1474 = vmatpush.msra.mxu0 %v237
        %1475 = vmatmul.f32.gmra.mxu0 %v310
        %v1476 = vpop.f32.mrf.mxu0
        %v1477 = vadd.f32 %v1454, %v1476
        %1478 = vmatmul.f32.gmra.mxu0 %v309
        %v1479 = vpop.f32.mrf.mxu0
        %v1480 = vadd.f32 %v1457, %v1479
        %1481 = vdwg.mxu0
        %1482 = vmatpush.msra.mxu0 %v268
        %1483 = vmatpush.msra.mxu0 %v267
        %1484 = vmatpush.msra.mxu0 %v266
        %1485 = vmatpush.msra.mxu0 %v265
        %1486 = vmatpush.msra.mxu0 %v264
        %1487 = vmatpush.msra.mxu0 %v263
        %1488 = vmatpush.msra.mxu0 %v262
        %1489 = vmatpush.msra.mxu0 %v261
        %1490 = vmatpush.msra.mxu0 %v260
        %1491 = vmatpush.msra.mxu0 %v259
        %1492 = vmatpush.msra.mxu0 %v258
        %1493 = vmatpush.msra.mxu0 %v257
        %1494 = vmatpush.msra.mxu0 %v256
        %1495 = vmatpush.msra.mxu0 %v255
        %1496 = vmatpush.msra.mxu0 %v254
        %1497 = vmatpush.msra.mxu0 %v253
        %1498 = vmatmul.f32.gmra.mxu0 %v315
        %v1499 = vpop.f32.mrf.mxu0
        %v1500 = vadd.f32 %v1477, %v1499
        %1501 = vmatmul.f32.gmra.mxu0 %v314
        %v1502 = vpop.f32.mrf.mxu0
        %v1503 = vadd.f32 %v1480, %v1502
        %1504 = vdwg.mxu0
        %1505 = vmatpush.msra.mxu0 %v284
        %1506 = vmatpush.msra.mxu0 %v283
        %1507 = vmatpush.msra.mxu0 %v282
        %1508 = vmatpush.msra.mxu0 %v281
        %1509 = vmatpush.msra.mxu0 %v280
        %1510 = vmatpush.msra.mxu0 %v279
        %1511 = vmatpush.msra.mxu0 %v278
        %1512 = vmatpush.msra.mxu0 %v277
        %1513 = vmatpush.msra.mxu0 %v276
        %1514 = vmatpush.msra.mxu0 %v275
        %1515 = vmatpush.msra.mxu0 %v274
        %1516 = vmatpush.msra.mxu0 %v273
        %1517 = vmatpush.msra.mxu0 %v272
        %1518 = vmatpush.msra.mxu0 %v271
        %1519 = vmatpush.msra.mxu0 %v270
        %1520 = vmatpush.msra.mxu0 %v269
        %1521 = vmatmul.f32.gmra.mxu0 %v320
        %v1522 = vpop.f32.mrf.mxu0
        %v1523 = vadd.f32 %v1500, %v1522
        %1524 = vmatmul.f32.gmra.mxu0 %v319
        %v1525 = vpop.f32.mrf.mxu0
        %v1526 = vadd.f32 %v1503, %v1525
        %1527 = vdwg.mxu0
        %1528 = vmatpush.msra.mxu0 %v300
        %1529 = vmatpush.msra.mxu0 %v299
        %1530 = vmatpush.msra.mxu0 %v298
        %1531 = vmatpush.msra.mxu0 %v297
        %1532 = vmatpush.msra.mxu0 %v296
        %1533 = vmatpush.msra.mxu0 %v295
        %1534 = vmatpush.msra.mxu0 %v294
        %1535 = vmatpush.msra.mxu0 %v293
        %1536 = vmatpush.msra.mxu0 %v292
        %1537 = vmatpush.msra.mxu0 %v291
        %1538 = vmatpush.msra.mxu0 %v290
        %1539 = vmatpush.msra.mxu0 %v289
        %1540 = vmatpush.msra.mxu0 %v288
        %1541 = vmatpush.msra.mxu0 %v287
        %1542 = vmatpush.msra.mxu0 %v286
        %1543 = vmatpush.msra.mxu0 %v285
        %1544 = vmatmul.f32.gmra.mxu0 %v325
        %v1545 = vpop.f32.mrf.mxu0
        %v1546 = vadd.f32 %v1523, %v1545
        %1547 = vmatmul.f32.gmra.mxu0 %v324
        %v1548 = vpop.f32.mrf.mxu0
        %v1549 = vadd.f32 %v1526, %v1548
        %1550 = vdwg.mxu0
        %1551 = vmatpush.msra.mxu0 %v682
        %1552 = vmatpush.msra.mxu0 %v681
        %1553 = vmatpush.msra.mxu0 %v680
        %1554 = vmatpush.msra.mxu0 %v679
        %1555 = vmatpush.msra.mxu0 %v678
        %1556 = vmatpush.msra.mxu0 %v677
        %1557 = vmatpush.msra.mxu0 %v676
        %1558 = vmatpush.msra.mxu0 %v675
        %1559 = vmatpush.msra.mxu0 %v674
        %1560 = vmatpush.msra.mxu0 %v673
        %1561 = vmatpush.msra.mxu0 %v672
        %1562 = vmatpush.msra.mxu0 %v671
        %1563 = vmatpush.msra.mxu0 %v670
        %1564 = vmatpush.msra.mxu0 %v669
        %1565 = vmatpush.msra.mxu0 %v668
        %1566 = vmatpush.msra.mxu0 %v667
        %1567 = vmatmul.f32.gmra.mxu0 %v867
        %v1568 = vpop.f32.mrf.mxu0
        %v1569 = vadd.f32 0.0, %v1568
        %1570 = vmatmul.f32.gmra.mxu0 %v868
        %v1571 = vpop.f32.mrf.mxu0
        %v1572 = vadd.f32 0.0, %v1571
        %1573 = vdwg.mxu0
        %1574 = vmatpush.msra.mxu0 %v698
        %1575 = vmatpush.msra.mxu0 %v697
        %1576 = vmatpush.msra.mxu0 %v696
        %1577 = vmatpush.msra.mxu0 %v695
        %1578 = vmatpush.msra.mxu0 %v694
        %1579 = vmatpush.msra.mxu0 %v693
        %1580 = vmatpush.msra.mxu0 %v692
        %1581 = vmatpush.msra.mxu0 %v691
        %1582 = vmatpush.msra.mxu0 %v690
        %1583 = vmatpush.msra.mxu0 %v689
        %1584 = vmatpush.msra.mxu0 %v688
        %1585 = vmatpush.msra.mxu0 %v687
        %1586 = vmatpush.msra.mxu0 %v686
        %1587 = vmatpush.msra.mxu0 %v685
        %1588 = vmatpush.msra.mxu0 %v684
        %1589 = vmatpush.msra.mxu0 %v683
        %1590 = vmatmul.f32.gmra.mxu0 %v873
        %v1591 = vpop.f32.mrf.mxu0
        %v1592 = vadd.f32 %v1569, %v1591
        %1593 = vmatmul.f32.gmra.mxu0 %v872
        %v1594 = vpop.f32.mrf.mxu0
        %v1595 = vadd.f32 %v1572, %v1594
        %1596 = vdwg.mxu0
        %1597 = vmatpush.msra.mxu0 %v714
        %1598 = vmatpush.msra.mxu0 %v713
        %1599 = vmatpush.msra.mxu0 %v712
        %1600 = vmatpush.msra.mxu0 %v711
        %1601 = vmatpush.msra.mxu0 %v710
        %1602 = vmatpush.msra.mxu0 %v709
        %1603 = vmatpush.msra.mxu0 %v708
        %1604 = vmatpush.msra.mxu0 %v707
        %1605 = vmatpush.msra.mxu0 %v706
        %1606 = vmatpush.msra.mxu0 %v705
        %1607 = vmatpush.msra.mxu0 %v704
        %1608 = vmatpush.msra.mxu0 %v703
        %1609 = vmatpush.msra.mxu0 %v702
        %1610 = vmatpush.msra.mxu0 %v701
        %1611 = vmatpush.msra.mxu0 %v700
        %1612 = vmatpush.msra.mxu0 %v699
        %1613 = vmatmul.f32.gmra.mxu0 %v878
        %v1614 = vpop.f32.mrf.mxu0
        %v1615 = vadd.f32 %v1592, %v1614
        %1616 = vmatmul.f32.gmra.mxu0 %v877
        %v1617 = vpop.f32.mrf.mxu0
        %v1618 = vadd.f32 %v1595, %v1617
        %1619 = vdwg.mxu0
        %1620 = vmatpush.msra.mxu0 %v730
        %1621 = vmatpush.msra.mxu0 %v729
        %1622 = vmatpush.msra.mxu0 %v728
        %1623 = vmatpush.msra.mxu0 %v727
        %1624 = vmatpush.msra.mxu0 %v726
        %1625 = vmatpush.msra.mxu0 %v725
        %1626 = vmatpush.msra.mxu0 %v724
        %1627 = vmatpush.msra.mxu0 %v723
        %1628 = vmatpush.msra.mxu0 %v722
        %1629 = vmatpush.msra.mxu0 %v721
        %1630 = vmatpush.msra.mxu0 %v720
        %1631 = vmatpush.msra.mxu0 %v719
        %1632 = vmatpush.msra.mxu0 %v718
        %1633 = vmatpush.msra.mxu0 %v717
        %1634 = vmatpush.msra.mxu0 %v716
        %1635 = vmatpush.msra.mxu0 %v715
        %1636 = vmatmul.f32.gmra.mxu0 %v883
        %v1637 = vpop.f32.mrf.mxu0
        %v1638 = vadd.f32 %v1615, %v1637
        %1639 = vmatmul.f32.gmra.mxu0 %v882
        %v1640 = vpop.f32.mrf.mxu0
        %v1641 = vadd.f32 %v1618, %v1640
        %1642 = vdwg.mxu0
        %1643 = vmatpush.msra.mxu0 %v746
        %1644 = vmatpush.msra.mxu0 %v745
        %1645 = vmatpush.msra.mxu0 %v744
        %1646 = vmatpush.msra.mxu0 %v743
        %1647 = vmatpush.msra.mxu0 %v742
        %1648 = vmatpush.msra.mxu0 %v741
        %1649 = vmatpush.msra.mxu0 %v740
        %1650 = vmatpush.msra.mxu0 %v739
        %1651 = vmatpush.msra.mxu0 %v738
        %1652 = vmatpush.msra.mxu0 %v737
        %1653 = vmatpush.msra.mxu0 %v736
        %1654 = vmatpush.msra.mxu0 %v735
        %1655 = vmatpush.msra.mxu0 %v734
        %1656 = vmatpush.msra.mxu0 %v733
        %1657 = vmatpush.msra.mxu0 %v732
        %1658 = vmatpush.msra.mxu0 %v731
        %1659 = vmatmul.f32.gmra.mxu0 %v888
        %v1660 = vpop.f32.mrf.mxu0
        %v1661 = vadd.f32 %v1638, %v1660
        %1662 = vmatmul.f32.gmra.mxu0 %v887
        %v1663 = vpop.f32.mrf.mxu0
        %v1664 = vadd.f32 %v1641, %v1663
        %1665 = vdwg.mxu0
        %v1666 = vadd.f32 %v1546, %v1661
        %v1667 = vadd.f32 %v1549, %v1664
        %1668 = vmatpush.msra.mxu0 %v907
        %1669 = vmatpush.msra.mxu0 %v906
        %1670 = vmatpush.msra.mxu0 %v905
        %1671 = vmatpush.msra.mxu0 %v904
        %1672 = vmatpush.msra.mxu0 %v903
        %1673 = vmatpush.msra.mxu0 %v902
        %1674 = vmatpush.msra.mxu0 %v901
        %1675 = vmatpush.msra.mxu0 %v900
        %1676 = vmatpush.msra.mxu0 %v899
        %1677 = vmatpush.msra.mxu0 %v898
        %1678 = vmatpush.msra.mxu0 %v897
        %1679 = vmatpush.msra.mxu0 %v896
        %1680 = vmatpush.msra.mxu0 %v895
        %1681 = vmatpush.msra.mxu0 %v894
        %1682 = vmatpush.msra.mxu0 %v893
        %1683 = vmatpush.msra.mxu0 %v892
        %1684 = vmatmul.f32.gmra.mxu0 %v1092
        %v1685 = vpop.f32.mrf.mxu0
        %v1686 = vadd.f32 0.0, %v1685
        %1687 = vmatmul.f32.gmra.mxu0 %v1093
        %v1688 = vpop.f32.mrf.mxu0
        %v1689 = vadd.f32 0.0, %v1688
        %1690 = vdwg.mxu0
        %1691 = vmatpush.msra.mxu0 %v923
        %1692 = vmatpush.msra.mxu0 %v922
        %1693 = vmatpush.msra.mxu0 %v921
        %1694 = vmatpush.msra.mxu0 %v920
        %1695 = vmatpush.msra.mxu0 %v919
        %1696 = vmatpush.msra.mxu0 %v918
        %1697 = vmatpush.msra.mxu0 %v917
        %1698 = vmatpush.msra.mxu0 %v916
        %1699 = vmatpush.msra.mxu0 %v915
        %1700 = vmatpush.msra.mxu0 %v914
        %1701 = vmatpush.msra.mxu0 %v913
        %1702 = vmatpush.msra.mxu0 %v912
        %1703 = vmatpush.msra.mxu0 %v911
        %1704 = vmatpush.msra.mxu0 %v910
        %1705 = vmatpush.msra.mxu0 %v909
        %1706 = vmatpush.msra.mxu0 %v908
        %1707 = vmatmul.f32.gmra.mxu0 %v1098
        %v1708 = vpop.f32.mrf.mxu0
        %v1709 = vadd.f32 %v1686, %v1708
        %1710 = vmatmul.f32.gmra.mxu0 %v1097
        %v1711 = vpop.f32.mrf.mxu0
        %v1712 = vadd.f32 %v1689, %v1711
        %1713 = vdwg.mxu0
        %1714 = vmatpush.msra.mxu0 %v939
        %1715 = vmatpush.msra.mxu0 %v938
        %1716 = vmatpush.msra.mxu0 %v937
        %1717 = vmatpush.msra.mxu0 %v936
        %1718 = vmatpush.msra.mxu0 %v935
        %1719 = vmatpush.msra.mxu0 %v934
        %1720 = vmatpush.msra.mxu0 %v933
        %1721 = vmatpush.msra.mxu0 %v932
        %1722 = vmatpush.msra.mxu0 %v931
        %1723 = vmatpush.msra.mxu0 %v930
        %1724 = vmatpush.msra.mxu0 %v929
        %1725 = vmatpush.msra.mxu0 %v928
        %1726 = vmatpush.msra.mxu0 %v927
        %1727 = vmatpush.msra.mxu0 %v926
        %1728 = vmatpush.msra.mxu0 %v925
        %1729 = vmatpush.msra.mxu0 %v924
        %1730 = vmatmul.f32.gmra.mxu0 %v1103
        %v1731 = vpop.f32.mrf.mxu0
        %v1732 = vadd.f32 %v1709, %v1731
        %1733 = vmatmul.f32.gmra.mxu0 %v1102
        %v1734 = vpop.f32.mrf.mxu0
        %v1735 = vadd.f32 %v1712, %v1734
        %1736 = vdwg.mxu0
        %1737 = vmatpush.msra.mxu0 %v955
        %1738 = vmatpush.msra.mxu0 %v954
        %1739 = vmatpush.msra.mxu0 %v953
        %1740 = vmatpush.msra.mxu0 %v952
        %1741 = vmatpush.msra.mxu0 %v951
        %1742 = vmatpush.msra.mxu0 %v950
        %1743 = vmatpush.msra.mxu0 %v949
        %1744 = vmatpush.msra.mxu0 %v948
        %1745 = vmatpush.msra.mxu0 %v947
        %1746 = vmatpush.msra.mxu0 %v946
        %1747 = vmatpush.msra.mxu0 %v945
        %1748 = vmatpush.msra.mxu0 %v944
        %1749 = vmatpush.msra.mxu0 %v943
        %1750 = vmatpush.msra.mxu0 %v942
        %1751 = vmatpush.msra.mxu0 %v941
        %1752 = vmatpush.msra.mxu0 %v940
        %1753 = vmatmul.f32.gmra.mxu0 %v1108
        %v1754 = vpop.f32.mrf.mxu0
        %v1755 = vadd.f32 %v1732, %v1754
        %1756 = vmatmul.f32.gmra.mxu0 %v1107
        %v1757 = vpop.f32.mrf.mxu0
        %v1758 = vadd.f32 %v1735, %v1757
        %1759 = vdwg.mxu0
        %1760 = vmatpush.msra.mxu0 %v971
        %1761 = vmatpush.msra.mxu0 %v970
        %1762 = vmatpush.msra.mxu0 %v969
        %1763 = vmatpush.msra.mxu0 %v968
        %1764 = vmatpush.msra.mxu0 %v967
        %1765 = vmatpush.msra.mxu0 %v966
        %1766 = vmatpush.msra.mxu0 %v965
        %1767 = vmatpush.msra.mxu0 %v964
        %1768 = vmatpush.msra.mxu0 %v963
        %1769 = vmatpush.msra.mxu0 %v962
        %1770 = vmatpush.msra.mxu0 %v961
        %1771 = vmatpush.msra.mxu0 %v960
        %1772 = vmatpush.msra.mxu0 %v959
        %1773 = vmatpush.msra.mxu0 %v958
        %1774 = vmatpush.msra.mxu0 %v957
        %1775 = vmatpush.msra.mxu0 %v956
        %1776 = vmatmul.f32.gmra.mxu0 %v1113
        %v1777 = vpop.f32.mrf.mxu0
        %v1778 = vadd.f32 %v1755, %v1777
        %1779 = vmatmul.f32.gmra.mxu0 %v1112
        %v1780 = vpop.f32.mrf.mxu0
        %v1781 = vadd.f32 %v1758, %v1780
        %1782 = vdwg.mxu0
        %v1783 = vadd.f32 %v1666, %v1778
        %v1784 = vadd.f32 %v1667, %v1781
        %s1785 = sadd.s32 %s190, 5
        %s1786 = smul.u32 %s1785, 16
        %s1787 = scalar_lea.vmem %s165, %s1786
        %v1788 = vld [vmem:[%s1787] sm:$0xff]
        %v1789 = vld [vmem:[%s1787 + $0x8] sm:$0x3f]
        %v1792 = vrot.slane %v1788, 1
        %v1793 = vrot.slane %v1789, 1
        %v1794 = vsel %vm197, %v1792, %v1793
        %v1797 = vrot.slane %v1788, 2
        %v1798 = vrot.slane %v1789, 2
        %v1799 = vsel %vm203, %v1797, %v1798
        %v1802 = vrot.slane %v1788, 3
        %v1803 = vrot.slane %v1789, 3
        %v1804 = vsel %vm209, %v1802, %v1803
        %v1807 = vrot.slane %v1788, 4
        %v1808 = vrot.slane %v1789, 4
        %v1809 = vsel %vm215, %v1807, %v1808
        %1812 = vmatpush.msra.mxu0 %v1132
        %1813 = vmatpush.msra.mxu0 %v1131
        %1814 = vmatpush.msra.mxu0 %v1130
        %1815 = vmatpush.msra.mxu0 %v1129
        %1816 = vmatpush.msra.mxu0 %v1128
        %1817 = vmatpush.msra.mxu0 %v1127
        %1818 = vmatpush.msra.mxu0 %v1126
        %1819 = vmatpush.msra.mxu0 %v1125
        %1820 = vmatpush.msra.mxu0 %v1124
        %1821 = vmatpush.msra.mxu0 %v1123
        %1822 = vmatpush.msra.mxu0 %v1122
        %1823 = vmatpush.msra.mxu0 %v1121
        %1824 = vmatpush.msra.mxu0 %v1120
        %1825 = vmatpush.msra.mxu0 %v1119
        %1826 = vmatpush.msra.mxu0 %v1118
        %1827 = vmatpush.msra.mxu0 %v1117
        %1828 = vmatmul.f32.gmra.mxu0 %v1788
        %v1829 = vpop.f32.mrf.mxu0
        %v1830 = vadd.f32 0.0, %v1829
        %1831 = vmatmul.f32.gmra.mxu0 %v1789
        %v1832 = vpop.f32.mrf.mxu0
        %v1833 = vadd.f32 0.0, %v1832
        %1834 = vdwg.mxu0
        %1835 = vmatpush.msra.mxu0 %v1148
        %1836 = vmatpush.msra.mxu0 %v1147
        %1837 = vmatpush.msra.mxu0 %v1146
        %1838 = vmatpush.msra.mxu0 %v1145
        %1839 = vmatpush.msra.mxu0 %v1144
        %1840 = vmatpush.msra.mxu0 %v1143
        %1841 = vmatpush.msra.mxu0 %v1142
        %1842 = vmatpush.msra.mxu0 %v1141
        %1843 = vmatpush.msra.mxu0 %v1140
        %1844 = vmatpush.msra.mxu0 %v1139
        %1845 = vmatpush.msra.mxu0 %v1138
        %1846 = vmatpush.msra.mxu0 %v1137
        %1847 = vmatpush.msra.mxu0 %v1136
        %1848 = vmatpush.msra.mxu0 %v1135
        %1849 = vmatpush.msra.mxu0 %v1134
        %1850 = vmatpush.msra.mxu0 %v1133
        %1851 = vmatmul.f32.gmra.mxu0 %v1794
        %v1852 = vpop.f32.mrf.mxu0
        %v1853 = vadd.f32 %v1830, %v1852
        %1854 = vmatmul.f32.gmra.mxu0 %v1793
        %v1855 = vpop.f32.mrf.mxu0
        %v1856 = vadd.f32 %v1833, %v1855
        %1857 = vdwg.mxu0
        %1858 = vmatpush.msra.mxu0 %v1164
        %1859 = vmatpush.msra.mxu0 %v1163
        %1860 = vmatpush.msra.mxu0 %v1162
        %1861 = vmatpush.msra.mxu0 %v1161
        %1862 = vmatpush.msra.mxu0 %v1160
        %1863 = vmatpush.msra.mxu0 %v1159
        %1864 = vmatpush.msra.mxu0 %v1158
        %1865 = vmatpush.msra.mxu0 %v1157
        %1866 = vmatpush.msra.mxu0 %v1156
        %1867 = vmatpush.msra.mxu0 %v1155
        %1868 = vmatpush.msra.mxu0 %v1154
        %1869 = vmatpush.msra.mxu0 %v1153
        %1870 = vmatpush.msra.mxu0 %v1152
        %1871 = vmatpush.msra.mxu0 %v1151
        %1872 = vmatpush.msra.mxu0 %v1150
        %1873 = vmatpush.msra.mxu0 %v1149
        %1874 = vmatmul.f32.gmra.mxu0 %v1799
        %v1875 = vpop.f32.mrf.mxu0
        %v1876 = vadd.f32 %v1853, %v1875
        %1877 = vmatmul.f32.gmra.mxu0 %v1798
        %v1878 = vpop.f32.mrf.mxu0
        %v1879 = vadd.f32 %v1856, %v1878
        %1880 = vdwg.mxu0
        %1881 = vmatpush.msra.mxu0 %v1180
        %1882 = vmatpush.msra.mxu0 %v1179
        %1883 = vmatpush.msra.mxu0 %v1178
        %1884 = vmatpush.msra.mxu0 %v1177
        %1885 = vmatpush.msra.mxu0 %v1176
        %1886 = vmatpush.msra.mxu0 %v1175
        %1887 = vmatpush.msra.mxu0 %v1174
        %1888 = vmatpush.msra.mxu0 %v1173
        %1889 = vmatpush.msra.mxu0 %v1172
        %1890 = vmatpush.msra.mxu0 %v1171
        %1891 = vmatpush.msra.mxu0 %v1170
        %1892 = vmatpush.msra.mxu0 %v1169
        %1893 = vmatpush.msra.mxu0 %v1168
        %1894 = vmatpush.msra.mxu0 %v1167
        %1895 = vmatpush.msra.mxu0 %v1166
        %1896 = vmatpush.msra.mxu0 %v1165
        %1897 = vmatmul.f32.gmra.mxu0 %v1804
        %v1898 = vpop.f32.mrf.mxu0
        %v1899 = vadd.f32 %v1876, %v1898
        %1900 = vmatmul.f32.gmra.mxu0 %v1803
        %v1901 = vpop.f32.mrf.mxu0
        %v1902 = vadd.f32 %v1879, %v1901
        %1903 = vdwg.mxu0
        %1904 = vmatpush.msra.mxu0 %v1196
        %1905 = vmatpush.msra.mxu0 %v1195
        %1906 = vmatpush.msra.mxu0 %v1194
        %1907 = vmatpush.msra.mxu0 %v1193
        %1908 = vmatpush.msra.mxu0 %v1192
        %1909 = vmatpush.msra.mxu0 %v1191
        %1910 = vmatpush.msra.mxu0 %v1190
        %1911 = vmatpush.msra.mxu0 %v1189
        %1912 = vmatpush.msra.mxu0 %v1188
        %1913 = vmatpush.msra.mxu0 %v1187
        %1914 = vmatpush.msra.mxu0 %v1186
        %1915 = vmatpush.msra.mxu0 %v1185
        %1916 = vmatpush.msra.mxu0 %v1184
        %1917 = vmatpush.msra.mxu0 %v1183
        %1918 = vmatpush.msra.mxu0 %v1182
        %1919 = vmatpush.msra.mxu0 %v1181
        %1920 = vmatmul.f32.gmra.mxu0 %v1809
        %v1921 = vpop.f32.mrf.mxu0
        %v1922 = vadd.f32 %v1899, %v1921
        %1923 = vmatmul.f32.gmra.mxu0 %v1808
        %v1924 = vpop.f32.mrf.mxu0
        %v1925 = vadd.f32 %v1902, %v1924
        %1926 = vdwg.mxu0
        %v1927 = vadd.f32 %v1783, %v1922
        %v1928 = vadd.f32 %v1784, %v1925
        %v1929 = vadd.f32 %v1927, %v1315
        %v1930 = vadd.f32 %v1928, %v1315
        %v1931 = vmax.f32 %v1929, 0.0
        %v1932 = vmax.f32 %v1930, 0.0
        %v1933 = vmax.f32 %v1319, %v1931
        %v1934 = vmax.f32 %v1320, %v1932
        %vm1935 = vcmask 80896
        %v1937 = vsel %vm1935, %v179, 0
        %vm1939 = vcmask 1041408
        %v1941 = vsel %vm1939, %v1934, 0
        %1943 = vmatpush.msra.mxu0 0.0
        %1944 = vmatpush.msra.mxu0 0.0
        %1945 = vmatpush.msra.mxu0 0.0
        %1946 = vmatpush.msra.mxu0 0.0
        %1947 = vmatpush.msra.mxu0 0.0
        %1948 = vmatpush.msra.mxu0 0.0
        %1949 = vmatpush.msra.mxu0 0.0
        %1950 = vmatpush.msra.mxu0 0.0
        %1951 = vmatpush.msra.mxu0 0.0
        %1952 = vmatpush.msra.mxu0 0.0
        %1953 = vmatpush.msra.mxu0 0.0
        %1954 = vmatpush.msra.mxu0 0.0
        %1955 = vmatpush.msra.mxu0 0.0
        %1956 = vmatpush.msra.mxu0 0.0
        %1957 = vmatpush.msra.mxu0 %v1941
        %1958 = vmatpush.msra.mxu0 %v1933
        %1959 = vmatmul.f32.gmra.mxu0 %v1937
        %v1960 = vpop.f32.mrf.mxu0
        %v1961 = vadd.f32 0.0, %v1960
        %1962 = vdwg.mxu0
        %v1964 = vsel %vm1935, %v183, 0
        %1966 = vmatpush.msra.mxu0 0.0
        %1967 = vmatpush.msra.mxu0 0.0
        %1968 = vmatpush.msra.mxu0 0.0
        %1969 = vmatpush.msra.mxu0 0.0
        %1970 = vmatpush.msra.mxu0 0.0
        %1971 = vmatpush.msra.mxu0 0.0
        %1972 = vmatpush.msra.mxu0 0.0
        %1973 = vmatpush.msra.mxu0 0.0
        %1974 = vmatpush.msra.mxu0 0.0
        %1975 = vmatpush.msra.mxu0 0.0
        %1976 = vmatpush.msra.mxu0 0.0
        %1977 = vmatpush.msra.mxu0 0.0
        %1978 = vmatpush.msra.mxu0 0.0
        %1979 = vmatpush.msra.mxu0 0.0
        %1980 = vmatpush.msra.mxu0 %v1941
        %1981 = vmatpush.msra.mxu0 %v1933
        %1982 = vmatmul.f32.gmra.mxu0 %v1964
        %v1983 = vpop.f32.mrf.mxu0
        %v1984 = vadd.f32 0.0, %v1983
        %1985 = vdwg.mxu0
        %v1986 = vmax.f32 %v1961, %v1984
        %s1987 = smul.u32 %s185, 8
        %s1988 = scalar_lea.vmem %s170, %s1987
        %1989 = vst [vmem:[%s1988] sm:$0x1f] %v1986
      $region37: #{lenet_forward.4} parent=31 // loop_footer
        %s189 = sadd.s32 1, %s185
      $region38: #{lenet_forward.4} parent=31 // loop_footer_branch
        %184 = sbr.rel target = $region34
      $region39: #{lenet_forward.4} parent=31 // loop_exit
        _
      %p1990 = scmp.lt.s32.totalorder %s14, 1
      %s1991 = scalar_select %p1990, %s14, 1
      %s1992 = smul.addr %s1991, 5
      %s1993 = smul.addr %s1992, 8
      %s1994 = scalar_lea.vmem %s3, %s1993
      // Predicated region
      $region40: #{lenet_forward.4} parent=31 // pred_check
        %p1995 = pneg %p100
      $region41: #{lenet_forward.4} parent=31 // pred_check_branch
        %1997 = sbr.rel (%p1995) target = $region43
      $region42: #{lenet_forward.4} parent=31 // pred_region
        _
      $region43: #{lenet_forward.4} parent=31 // pred_fallthru
        _
    $region32: #{lenet_forward.4} parent=5 // pred_fallthru
      _
    %p1998 = scmp.le.s32.totalorder 2, %s9
    // Predicated region
    $region44: #{lenet_forward.4} parent=5 // pred_check
      %p1999 = pneg %p1998
    $region45: #{lenet_forward.4} parent=5 // pred_check_branch
      %2001 = sbr.rel (%p1999) target = $region47
    $region46: #{lenet_forward.4} parent=5 // pred_region
      %s2002 = ssub.s32 %s9, 2
      // Predicated region
      $region48: #{lenet_forward.4} parent=46 // pred_check
        %p2003 = pneg %p106
      $region49: #{lenet_forward.4} parent=46 // pred_check_branch
        %2005 = sbr.rel (%p2003) target = $region51
      $region50: #{lenet_forward.4} parent=46 // pred_region
        %p2006 = scmp.lt.s32.totalorder %s15, 1
        %s2007 = scalar_select %p2006, %s15, 1
        %s2008 = smul.addr %s2007, 5
        %s2009 = smul.addr %s2008, 8
        %s2010 = scalar_lea.vmem %s3, %s2009
      $region51: #{lenet_forward.4} parent=46 // pred_fallthru
        _
    $region47: #{lenet_forward.4} parent=5 // pred_fallthru
      _
  $region6: #{lenet_forward.4} parent=0 // loop_footer
    %s13 = sadd.s32 1, %s9
  $region7: #{lenet_forward.4} parent=0 // loop_footer_branch
    %8 = sbr.rel target = $region3
  $region8: #{lenet_forward.4} parent=0 // loop_exit
    _

// kernel: lenet_forward.3
$region0: #{lenet_forward.3}
  #allocation0 [shape = 'u32[]', space=smem, size = 0x4, offset = 0x4, fixed_abs, tag = 'smem constant byte address 0x4 - core index']
  #allocation1 [shape = 'u32[72,128]{1,0:T(1,128)}', space=vmem, size = 0x9000, scoped, tag = 'internal scratch']
  %s0 = inlined_call_operand.vmem [shape: f32[2,32,32,128], index: 0, kind: input, shape index: {}]
  %s1 = inlined_call_operand.vmem [shape: f32[5,640,128], index: 1, kind: input, shape index: {}]
  %s2 = inlined_call_operand.vmem [shape: f32[1,128], index: 2, kind: input, shape index: {}]
  %s3 = inlined_call_operand.vmem [shape: f32[2,14,14,128], index: 3, kind: output, shape index: {}]
  %s4 = sld [smem:[#allocation0]]
  $region52: #{lenet_forward.3} parent=0
    _
  %s6 = ssub.s32 1, %s4
  %s7 = scalar_select 0, %s6, %s4
  loop: start=0, step=1, limit=4
  $region2: #{lenet_forward.3} parent=0 // loop_pre_header
    _
  $region3: #{lenet_forward.3} parent=0 // loop_header
    %s9 = sphi 0, %s13
    %p10 = scmp.ge.s32.totalorder %s9, 4
    %s19 = sphi 0, %s21
    %s22 = sphi 0, %s19
    %s23 = sphi 0, %s22
    %s39 = sphi 0, %s23
    %s43 = sphi 0, %s43
    %s45 = sphi 0, %s43
    %s46 = sphi 0, %s45
    %s60 = sphi 0, %s46
    %s64 = sphi 0, %s64
    %s66 = sphi 0, %s64
    %s67 = sphi 0, %s66
    %s81 = sphi 0, %s67
    %s87 = sphi 0, %s89
    %s90 = sphi 0, %s87
    %s91 = sphi 0, %s90
    %s107 = sphi 0, %s91
  $region4: #{lenet_forward.3} parent=0 // loop_header_branch
    %12 = sbr.rel (%p10) target = $region8
  $region5: #{lenet_forward.3} parent=0 // loop_body
    %s14 = ssub.s32 %s9, 1
    %s15 = ssub.s32 %s9, 2
    %s16 = sadd.s32 %s9, 1
    %s17 = ssub.s32 %s9, %s16
    %p18 = scmp.eq.s32.totalorder %s17, 0
    %s20 = sadd.s32 %s19, 1
    %s21 = scalar_select %p18, %s19, %s20
    %p24 = pneg %p18
    %p25 = scmp.eq.s32.totalorder %s9, 1
    %p26 = por %p24, %p25
    %p27 = scmp.ne.s32.totalorder %s19, %s22
    %p28 = scmp.eq.s32.totalorder %s9, 0
    %p29 = por %p27, %p28
    %p30 = scmp.ne.s32.totalorder %s19, %s22
    %p31 = scmp.eq.s32.totalorder %s14, 1
    %p32 = por %p30, %p31
    %p33 = scmp.ne.s32.totalorder %s22, %s23
    %p34 = scmp.eq.s32.totalorder %s14, 0
    %p35 = por %p33, %p34
    %p36 = scmp.ne.s32.totalorder %s22, %s23
    %p37 = scmp.eq.s32.totalorder %s15, 1
    %p38 = por %p36, %p37
    %p40 = scmp.ne.s32.totalorder %s23, %s39
    %p41 = scmp.eq.s32.totalorder %s15, 0
    %p42 = por %p40, %p41
    %s44 = sadd.s32 %s43, 1
    %p47 = scmp.eq.s32.totalorder %s9, 1
    %p48 = scmp.ne.s32.totalorder %s43, %s45
    %p49 = scmp.eq.s32.totalorder %s9, 0
    %p50 = por %p48, %p49
    %p51 = scmp.ne.s32.totalorder %s43, %s45
    %p52 = scmp.eq.s32.totalorder %s14, 1
    %p53 = por %p51, %p52
    %p54 = scmp.ne.s32.totalorder %s45, %s46
    %p55 = scmp.eq.s32.totalorder %s14, 0
    %p56 = por %p54, %p55
    %p57 = scmp.ne.s32.totalorder %s45, %s46
    %p58 = scmp.eq.s32.totalorder %s15, 1
    %p59 = por %p57, %p58
    %p61 = scmp.ne.s32.totalorder %s46, %s60
    %p62 = scmp.eq.s32.totalorder %s15, 0
    %p63 = por %p61, %p62
    %s65 = sadd.s32 %s64, 1
    %p68 = scmp.eq.s32.totalorder %s9, 1
    %p69 = scmp.ne.s32.totalorder %s64, %s66
    %p70 = scmp.eq.s32.totalorder %s9, 0
    %p71 = por %p69, %p70
    %p72 = scmp.ne.s32.totalorder %s64, %s66
    %p73 = scmp.eq.s32.totalorder %s14, 1
    %p74 = por %p72, %p73
    %p75 = scmp.ne.s32.totalorder %s66, %s67
    %p76 = scmp.eq.s32.totalorder %s14, 0
    %p77 = por %p75, %p76
    %p78 = scmp.ne.s32.totalorder %s66, %s67
    %p79 = scmp.eq.s32.totalorder %s15, 1
    %p80 = por %p78, %p79
    %p82 = scmp.ne.s32.totalorder %s67, %s81
    %p83 = scmp.eq.s32.totalorder %s15, 0
    %p84 = por %p82, %p83
    %s85 = ssub.s32 %s9, %s16
    %p86 = scmp.eq.s32.totalorder %s85, 0
    %s88 = sadd.s32 %s87, 1
    %s89 = scalar_select %p86, %s87, %s88
    %p92 = pneg %p86
    %p93 = scmp.eq.s32.totalorder %s9, 1
    %p94 = por %p92, %p93
    %p95 = scmp.ne.s32.totalorder %s87, %s90
    %p96 = scmp.eq.s32.totalorder %s9, 0
    %p97 = por %p95, %p96
    %p98 = scmp.ne.s32.totalorder %s87, %s90
    %p99 = scmp.eq.s32.totalorder %s14, 1
    %p100 = por %p98, %p99
    %p101 = scmp.ne.s32.totalorder %s90, %s91
    %p102 = scmp.eq.s32.totalorder %s14, 0
    %p103 = por %p101, %p102
    %p104 = scmp.ne.s32.totalorder %s90, %s91
    %p105 = scmp.eq.s32.totalorder %s15, 1
    %p106 = por %p104, %p105
    %p108 = scmp.ne.s32.totalorder %s91, %s107
    %p109 = scmp.eq.s32.totalorder %s15, 0
    %p110 = por %p108, %p109
    %p111 = scmp.le.s32.totalorder 1, %s9
    %p112 = scmp.lt.s32.totalorder %s9, 3
    %p113 = pnand %p111, %p112
    %p114 = pneg %p113
    // Predicated region
    $region9: #{lenet_forward.3} parent=5 // pred_check
      _
    $region10: #{lenet_forward.3} parent=5 // pred_check_branch
      %116 = sbr.rel (%p113) target = $region12
    $region11: #{lenet_forward.3} parent=5 // pred_region
      %s117 = ssub.s32 %s9, 1
      // Predicated region
      $region13: #{lenet_forward.3} parent=11 // pred_check
        %p118 = pneg %p56
      $region14: #{lenet_forward.3} parent=11 // pred_check_branch
        %120 = sbr.rel (%p118) target = $region16
      $region15: #{lenet_forward.3} parent=11 // pred_region
        _
      $region16: #{lenet_forward.3} parent=11 // pred_fallthru
        _
      // Predicated region
      $region17: #{lenet_forward.3} parent=11 // pred_check
        %p121 = pneg %p77
      $region18: #{lenet_forward.3} parent=11 // pred_check_branch
        %123 = sbr.rel (%p121) target = $region20
      $region19: #{lenet_forward.3} parent=11 // pred_region
        _
      $region20: #{lenet_forward.3} parent=11 // pred_fallthru
        _
    $region12: #{lenet_forward.3} parent=5 // pred_fallthru
      _
    %p124 = scmp.lt.s32.totalorder %s9, 2
    // Predicated region
    $region21: #{lenet_forward.3} parent=5 // pred_check
      %p125 = pneg %p124
    $region22: #{lenet_forward.3} parent=5 // pred_check_branch
      %127 = sbr.rel (%p125) target = $region24
    $region23: #{lenet_forward.3} parent=5 // pred_region
      // Predicated region
      $region25: #{lenet_forward.3} parent=23 // pred_check
        %p128 = pneg %p29
      $region26: #{lenet_forward.3} parent=23 // pred_check_branch
        %130 = sbr.rel (%p128) target = $region28
      $region27: #{lenet_forward.3} parent=23 // pred_region
        %p131 = scmp.lt.s32.totalorder %s9, 1
        %s132 = scalar_select %p131, %s9, 1
        %s133 = smul.addr %s132, 128
        %s134 = smul.addr %s133, 8
        %s135 = scalar_lea.vmem %s0, %s134
      $region28: #{lenet_forward.3} parent=23 // pred_fallthru
        _
    $region24: #{lenet_forward.3} parent=5 // pred_fallthru
      _
    %p136 = scmp.le.s32.totalorder 1, %s9
    %p137 = scmp.lt.s32.totalorder %s9, 3
    %p138 = pnand %p136, %p137
    %p139 = pneg %p138
    // Predicated region
    $region29: #{lenet_forward.3} parent=5 // pred_check
      _
    $region30: #{lenet_forward.3} parent=5 // pred_check_branch
      %141 = sbr.rel (%p138) target = $region32
    $region31: #{lenet_forward.3} parent=5 // pred_region
      %s142 = ssub.s32 %s9, 1
      %p143 = scmp.lt.s32.totalorder %s14, 1
      %s144 = scalar_select %p143, %s14, 1
      %s145 = smul.addr %s144, 128
      %s146 = smul.addr %s145, 8
      %s147 = scalar_lea.vmem %s0, %s146
      %p148 = pneg %p35
      %p149 = pneg %p32
      %p150 = pneg %p56
      %p151 = pneg %p53
      %p152 = pneg %p77
      %p153 = pneg %p74
      %p154 = pneg %p103
      %p155 = pneg %p100
      %p156 = scmp.lt.s32.totalorder %s14, 1
      %s157 = scalar_select %p156, %s14, 1
      %s158 = smul.addr %s157, 28
      %s159 = smul.addr %s158, 8
      %s160 = scalar_lea.vmem %s3, %s159
      %p161 = scmp.lt.s32.totalorder %s14, 1
      %s162 = scalar_select %p161, %s14, 1
      %s163 = smul.addr %s162, 128
      %s164 = smul.addr %s163, 8
      %s165 = scalar_lea.vmem %s0, %s164
      %p166 = scmp.lt.s32.totalorder %s14, 1
      %s167 = scalar_select %p166, %s14, 1
      %s168 = smul.addr %s167, 28
      %s169 = smul.addr %s168, 8
      %s170 = scalar_lea.vmem %s3, %s169
      %v171 = vld [vmem:[%s2] sm:$0x1]
      %v172 = vlaneseq
      %v173 = vshrl.u32 %v172, 7
      %v174 = vadd.s32 %v173, 8
      %v175 = vlaneseq
      %v176 = vand.u32 %v175, 127
      %v177 = vmul.u32 %v173, 2
      %v178 = vmul.u32 %v174, 2
      %vm179 = vcmp.eq.s32.totalorder %v176, %v177
      %vm180 = vcmp.eq.s32.totalorder %v176, %v178
      %v181 = vsel %vm179, 1, 0
      %v182 = vsel %vm180, 1, 0
      %v183 = vcvt.s32.f32 %v181
      %v184 = vcvt.s32.f32 %v182
      %v185 = vadd.s32 %v177, 1
      %v186 = vadd.s32 %v178, 1
      %vm187 = vcmp.eq.s32.totalorder %v176, %v185
      %vm188 = vcmp.eq.s32.totalorder %v176, %v186
      %v189 = vsel %vm187, 1, 0
      %v190 = vsel %vm188, 1, 0
      %v191 = vcvt.s32.f32 %v189
      %v192 = vcvt.s32.f32 %v190
      loop: start=0, step=1, limit=14
      $region33: #{lenet_forward.3} parent=31 // loop_pre_header
        _
      $region34: #{lenet_forward.3} parent=31 // loop_header
        %s194 = sphi 0, %s198
        %p195 = scmp.ge.s32.totalorder %s194, 14
      $region35: #{lenet_forward.3} parent=31 // loop_header_branch
        %197 = sbr.rel (%p195) target = $region39
      $region36: #{lenet_forward.3} parent=31 // loop_body
        %s199 = smul.u32 %s194, 2
        %s200 = smul.u32 %s199, 32
        %s201 = scalar_lea.vmem %s165, %s200
        %v202 = vld [vmem:[%s201] sm:$0xff]
        %v203 = vld [vmem:[%s201 + $0x8] sm:$0xff]
        %v204 = vld [vmem:[%s201 + $0x10] sm:$0xff]
        %v205 = vld [vmem:[%s201 + $0x18] sm:$0xff]
        %vm210 = vcmask 1046528
        %v211 = vrot.slane %v202, 1
        %v212 = vrot.slane %v203, 1
        %v213 = vsel %vm210, %v211, %v212
        %v214 = vrot.slane %v204, 1
        %v215 = vsel %vm210, %v212, %v214
        %v216 = vrot.slane %v205, 1
        %v217 = vsel %vm210, %v214, %v216
        %vm222 = vcmask 1045504
        %v223 = vrot.slane %v202, 2
        %v224 = vrot.slane %v203, 2
        %v225 = vsel %vm222, %v223, %v224
        %v226 = vrot.slane %v204, 2
        %v227 = vsel %vm222, %v224, %v226
        %v228 = vrot.slane %v205, 2
        %v229 = vsel %vm222, %v226, %v228
        %vm234 = vcmask 1044480
        %v235 = vrot.slane %v202, 3
        %v236 = vrot.slane %v203, 3
        %v237 = vsel %vm234, %v235, %v236
        %v238 = vrot.slane %v204, 3
        %v239 = vsel %vm234, %v236, %v238
        %v240 = vrot.slane %v205, 3
        %v241 = vsel %vm234, %v238, %v240
        %vm246 = vcmask 1043456
        %v247 = vrot.slane %v202, 4
        %v248 = vrot.slane %v203, 4
        %v249 = vsel %vm246, %v247, %v248
        %v250 = vrot.slane %v204, 4
        %v251 = vsel %vm246, %v248, %v250
        %v252 = vrot.slane %v205, 4
        %v253 = vsel %vm246, %v250, %v252
        %v258 = vld [vmem:[%s1] sm:$0xff]
        %v259 = vld [vmem:[%s1 + $0x8] sm:$0xff]
        %v260 = vld [vmem:[%s1 + $0x10] sm:$0xff]
        %v261 = vld [vmem:[%s1 + $0x18] sm:$0xff]
        %v262 = vld [vmem:[%s1 + $0x20] sm:$0xff]
        %v263 = vld [vmem:[%s1 + $0x28] sm:$0xff]
        %v264 = vld [vmem:[%s1 + $0x30] sm:$0xff]
        %v265 = vld [vmem:[%s1 + $0x38] sm:$0xff]
        %v266 = vld [vmem:[%s1 + $0x40] sm:$0xff]
        %v267 = vld [vmem:[%s1 + $0x48] sm:$0xff]
        %v268 = vld [vmem:[%s1 + $0x50] sm:$0xff]
        %v269 = vld [vmem:[%s1 + $0x58] sm:$0xff]
        %v270 = vld [vmem:[%s1 + $0x60] sm:$0xff]
        %v271 = vld [vmem:[%s1 + $0x68] sm:$0xff]
        %v272 = vld [vmem:[%s1 + $0x70] sm:$0xff]
        %v273 = vld [vmem:[%s1 + $0x78] sm:$0xff]
        %v274 = vld [vmem:[%s1 + $0x80] sm:$0xff]
        %v275 = vld [vmem:[%s1 + $0x88] sm:$0xff]
        %v276 = vld [vmem:[%s1 + $0x90] sm:$0xff]
        %v277 = vld [vmem:[%s1 + $0x98] sm:$0xff]
        %v278 = vld [vmem:[%s1 + $0xa0] sm:$0xff]
        %v279 = vld [vmem:[%s1 + $0xa8] sm:$0xff]
        %v280 = vld [vmem:[%s1 + $0xb0] sm:$0xff]
        %v281 = vld [vmem:[%s1 + $0xb8] sm:$0xff]
        %v282 = vld [vmem:[%s1 + $0xc0] sm:$0xff]
        %v283 = vld [vmem:[%s1 + $0xc8] sm:$0xff]
        %v284 = vld [vmem:[%s1 + $0xd0] sm:$0xff]
        %v285 = vld [vmem:[%s1 + $0xd8] sm:$0xff]
        %v286 = vld [vmem:[%s1 + $0xe0] sm:$0xff]
        %v287 = vld [vmem:[%s1 + $0xe8] sm:$0xff]
        %v288 = vld [vmem:[%s1 + $0xf0] sm:$0xff]
        %v289 = vld [vmem:[%s1 + $0xf8] sm:$0xff]
        %v290 = vld [vmem:[%s1 + $0x100] sm:$0xff]
        %v291 = vld [vmem:[%s1 + $0x108] sm:$0xff]
        %v292 = vld [vmem:[%s1 + $0x110] sm:$0xff]
        %v293 = vld [vmem:[%s1 + $0x118] sm:$0xff]
        %v294 = vld [vmem:[%s1 + $0x120] sm:$0xff]
        %v295 = vld [vmem:[%s1 + $0x128] sm:$0xff]
        %v296 = vld [vmem:[%s1 + $0x130] sm:$0xff]
        %v297 = vld [vmem:[%s1 + $0x138] sm:$0xff]
        %v298 = vld [vmem:[%s1 + $0x140] sm:$0xff]
        %v299 = vld [vmem:[%s1 + $0x148] sm:$0xff]
        %v300 = vld [vmem:[%s1 + $0x150] sm:$0xff]
        %v301 = vld [vmem:[%s1 + $0x158] sm:$0xff]
        %v302 = vld [vmem:[%s1 + $0x160] sm:$0xff]
        %v303 = vld [vmem:[%s1 + $0x168] sm:$0xff]
        %v304 = vld [vmem:[%s1 + $0x170] sm:$0xff]
        %v305 = vld [vmem:[%s1 + $0x178] sm:$0xff]
        %v306 = vld [vmem:[%s1 + $0x180] sm:$0xff]
        %v307 = vld [vmem:[%s1 + $0x188] sm:$0xff]
        %v308 = vld [vmem:[%s1 + $0x190] sm:$0xff]
        %v309 = vld [vmem:[%s1 + $0x198] sm:$0xff]
        %v310 = vld [vmem:[%s1 + $0x1a0] sm:$0xff]
        %v311 = vld [vmem:[%s1 + $0x1a8] sm:$0xff]
        %v312 = vld [vmem:[%s1 + $0x1b0] sm:$0xff]
        %v313 = vld [vmem:[%s1 + $0x1b8] sm:$0xff]
        %v314 = vld [vmem:[%s1 + $0x1c0] sm:$0xff]
        %v315 = vld [vmem:[%s1 + $0x1c8] sm:$0xff]
        %v316 = vld [vmem:[%s1 + $0x1d0] sm:$0xff]
        %v317 = vld [vmem:[%s1 + $0x1d8] sm:$0xff]
        %v318 = vld [vmem:[%s1 + $0x1e0] sm:$0xff]
        %v319 = vld [vmem:[%s1 + $0x1e8] sm:$0xff]
        %v320 = vld [vmem:[%s1 + $0x1f0] sm:$0xff]
        %v321 = vld [vmem:[%s1 + $0x1f8] sm:$0xff]
        %v322 = vld [vmem:[%s1 + $0x200] sm:$0xff]
        %v323 = vld [vmem:[%s1 + $0x208] sm:$0xff]
        %v324 = vld [vmem:[%s1 + $0x210] sm:$0xff]
        %v325 = vld [vmem:[%s1 + $0x218] sm:$0xff]
        %v326 = vld [vmem:[%s1 + $0x220] sm:$0xff]
        %v327 = vld [vmem:[%s1 + $0x228] sm:$0xff]
        %v328 = vld [vmem:[%s1 + $0x230] sm:$0xff]
        %v329 = vld [vmem:[%s1 + $0x238] sm:$0xff]
        %v330 = vld [vmem:[%s1 + $0x240] sm:$0xff]
        %v331 = vld [vmem:[%s1 + $0x248] sm:$0xff]
        %v332 = vld [vmem:[%s1 + $0x250] sm:$0xff]
        %v333 = vld [vmem:[%s1 + $0x258] sm:$0xff]
        %v334 = vld [vmem:[%s1 + $0x260] sm:$0xff]
        %v335 = vld [vmem:[%s1 + $0x268] sm:$0xff]
        %v336 = vld [vmem:[%s1 + $0x270] sm:$0xff]
        %v337 = vld [vmem:[%s1 + $0x278] sm:$0xff]
        %s338 = sadd.s32 %s199, 1
        %s339 = smul.u32 %s338, 32
        %s340 = scalar_lea.vmem %s165, %s339
        %v341 = vld [vmem:[%s340] sm:$0xff]
        %v342 = vld [vmem:[%s340 + $0x8] sm:$0xff]
        %v343 = vld [vmem:[%s340 + $0x10] sm:$0xff]
        %v344 = vld [vmem:[%s340 + $0x18] sm:$0xff]
        %v349 = vrot.slane %v341, 1
        %v350 = vrot.slane %v342, 1
        %v351 = vsel %vm210, %v349, %v350
        %v352 = vrot.slane %v343, 1
        %v353 = vsel %vm210, %v350, %v352
        %v354 = vrot.slane %v344, 1
        %v355 = vsel %vm210, %v352, %v354
        %v360 = vrot.slane %v341, 2
        %v361 = vrot.slane %v342, 2
        %v362 = vsel %vm222, %v360, %v361
        %v363 = vrot.slane %v343, 2
        %v364 = vsel %vm222, %v361, %v363
        %v365 = vrot.slane %v344, 2
        %v366 = vsel %vm222, %v363, %v365
        %v371 = vrot.slane %v341, 3
        %v372 = vrot.slane %v342, 3
        %v373 = vsel %vm234, %v371, %v372
        %v374 = vrot.slane %v343, 3
        %v375 = vsel %vm234, %v372, %v374
        %v376 = vrot.slane %v344, 3
        %v377 = vsel %vm234, %v374, %v376
        %v382 = vrot.slane %v341, 4
        %v383 = vrot.slane %v342, 4
        %v384 = vsel %vm246, %v382, %v383
        %v385 = vrot.slane %v343, 4
        %v386 = vsel %vm246, %v383, %v385
        %v387 = vrot.slane %v344, 4
        %v388 = vsel %vm246, %v385, %v387
        %s393 = scalar_lea.vmem %s1, 640
        %v394 = vld [vmem:[%s393] sm:$0xff]
        %v395 = vld [vmem:[%s393 + $0x8] sm:$0xff]
        %v396 = vld [vmem:[%s393 + $0x10] sm:$0xff]
        %v397 = vld [vmem:[%s393 + $0x18] sm:$0xff]
        %v398 = vld [vmem:[%s393 + $0x20] sm:$0xff]
        %v399 = vld [vmem:[%s393 + $0x28] sm:$0xff]
        %v400 = vld [vmem:[%s393 + $0x30] sm:$0xff]
        %v401 = vld [vmem:[%s393 + $0x38] sm:$0xff]
        %v402 = vld [vmem:[%s393 + $0x40] sm:$0xff]
        %v403 = vld [vmem:[%s393 + $0x48] sm:$0xff]
        %v404 = vld [vmem:[%s393 + $0x50] sm:$0xff]
        %v405 = vld [vmem:[%s393 + $0x58] sm:$0xff]
        %v406 = vld [vmem:[%s393 + $0x60] sm:$0xff]
        %v407 = vld [vmem:[%s393 + $0x68] sm:$0xff]
        %v408 = vld [vmem:[%s393 + $0x70] sm:$0xff]
        %v409 = vld [vmem:[%s393 + $0x78] sm:$0xff]
        %v410 = vld [vmem:[%s393 + $0x80] sm:$0xff]
        %v411 = vld [vmem:[%s393 + $0x88] sm:$0xff]
        %v412 = vld [vmem:[%s393 + $0x90] sm:$0xff]
        %v413 = vld [vmem:[%s393 + $0x98] sm:$0xff]
        %v414 = vld [vmem:[%s393 + $0xa0] sm:$0xff]
        %v415 = vld [vmem:[%s393 + $0xa8] sm:$0xff]
        %v416 = vld [vmem:[%s393 + $0xb0] sm:$0xff]
        %v417 = vld [vmem:[%s393 + $0xb8] sm:$0xff]
        %v418 = vld [vmem:[%s393 + $0xc0] sm:$0xff]
        %v419 = vld [vmem:[%s393 + $0xc8] sm:$0xff]
        %v420 = vld [vmem:[%s393 + $0xd0] sm:$0xff]
        %v421 = vld [vmem:[%s393 + $0xd8] sm:$0xff]
        %v422 = vld [vmem:[%s393 + $0xe0] sm:$0xff]
        %v423 = vld [vmem:[%s393 + $0xe8] sm:$0xff]
        %v424 = vld [vmem:[%s393 + $0xf0] sm:$0xff]
        %v425 = vld [vmem:[%s393 + $0xf8] sm:$0xff]
        %v426 = vld [vmem:[%s393 + $0x100] sm:$0xff]
        %v427 = vld [vmem:[%s393 + $0x108] sm:$0xff]
        %v428 = vld [vmem:[%s393 + $0x110] sm:$0xff]
        %v429 = vld [vmem:[%s393 + $0x118] sm:$0xff]
        %v430 = vld [vmem:[%s393 + $0x120] sm:$0xff]
        %v431 = vld [vmem:[%s393 + $0x128] sm:$0xff]
        %v432 = vld [vmem:[%s393 + $0x130] sm:$0xff]
        %v433 = vld [vmem:[%s393 + $0x138] sm:$0xff]
        %v434 = vld [vmem:[%s393 + $0x140] sm:$0xff]
        %v435 = vld [vmem:[%s393 + $0x148] sm:$0xff]
        %v436 = vld [vmem:[%s393 + $0x150] sm:$0xff]
        %v437 = vld [vmem:[%s393 + $0x158] sm:$0xff]
        %v438 = vld [vmem:[%s393 + $0x160] sm:$0xff]
        %v439 = vld [vmem:[%s393 + $0x168] sm:$0xff]
        %v440 = vld [vmem:[%s393 + $0x170] sm:$0xff]
        %v441 = vld [vmem:[%s393 + $0x178] sm:$0xff]
        %v442 = vld [vmem:[%s393 + $0x180] sm:$0xff]
        %v443 = vld [vmem:[%s393 + $0x188] sm:$0xff]
        %v444 = vld [vmem:[%s393 + $0x190] sm:$0xff]
        %v445 = vld [vmem:[%s393 + $0x198] sm:$0xff]
        %v446 = vld [vmem:[%s393 + $0x1a0] sm:$0xff]
        %v447 = vld [vmem:[%s393 + $0x1a8] sm:$0xff]
        %v448 = vld [vmem:[%s393 + $0x1b0] sm:$0xff]
        %v449 = vld [vmem:[%s393 + $0x1b8] sm:$0xff]
        %v450 = vld [vmem:[%s393 + $0x1c0] sm:$0xff]
        %v451 = vld [vmem:[%s393 + $0x1c8] sm:$0xff]
        %v452 = vld [vmem:[%s393 + $0x1d0] sm:$0xff]
        %v453 = vld [vmem:[%s393 + $0x1d8] sm:$0xff]
        %v454 = vld [vmem:[%s393 + $0x1e0] sm:$0xff]
        %v455 = vld [vmem:[%s393 + $0x1e8] sm:$0xff]
        %v456 = vld [vmem:[%s393 + $0x1f0] sm:$0xff]
        %v457 = vld [vmem:[%s393 + $0x1f8] sm:$0xff]
        %v458 = vld [vmem:[%s393 + $0x200] sm:$0xff]
        %v459 = vld [vmem:[%s393 + $0x208] sm:$0xff]
        %v460 = vld [vmem:[%s393 + $0x210] sm:$0xff]
        %v461 = vld [vmem:[%s393 + $0x218] sm:$0xff]
        %v462 = vld [vmem:[%s393 + $0x220] sm:$0xff]
        %v463 = vld [vmem:[%s393 + $0x228] sm:$0xff]
        %v464 = vld [vmem:[%s393 + $0x230] sm:$0xff]
        %v465 = vld [vmem:[%s393 + $0x238] sm:$0xff]
        %v466 = vld [vmem:[%s393 + $0x240] sm:$0xff]
        %v467 = vld [vmem:[%s393 + $0x248] sm:$0xff]
        %v468 = vld [vmem:[%s393 + $0x250] sm:$0xff]
        %v469 = vld [vmem:[%s393 + $0x258] sm:$0xff]
        %v470 = vld [vmem:[%s393 + $0x260] sm:$0xff]
        %v471 = vld [vmem:[%s393 + $0x268] sm:$0xff]
        %v472 = vld [vmem:[%s393 + $0x270] sm:$0xff]
        %v473 = vld [vmem:[%s393 + $0x278] sm:$0xff]
        %474 = vmatpush.msra.mxu0 %v409
        %475 = vmatpush.msra.mxu0 %v408
        %476 = vmatpush.msra.mxu0 %v407
        %477 = vmatpush.msra.mxu0 %v406
        %478 = vmatpush.msra.mxu0 %v405
        %479 = vmatpush.msra.mxu0 %v404
        %480 = vmatpush.msra.mxu0 %v403
        %481 = vmatpush.msra.mxu0 %v402
        %482 = vmatpush.msra.mxu0 %v401
        %483 = vmatpush.msra.mxu0 %v400
        %484 = vmatpush.msra.mxu0 %v399
        %485 = vmatpush.msra.mxu0 %v398
        %486 = vmatpush.msra.mxu0 %v397
        %487 = vmatpush.msra.mxu0 %v396
        %488 = vmatpush.msra.mxu0 %v395
        %489 = vmatpush.msra.mxu0 %v394
        %490 = vmatmul.f32.gmra.mxu0 %v341
        %v491 = vpop.f32.mrf.mxu0
        %v492 = vadd.f32 0.0, %v491
        %493 = vmatmul.f32.gmra.mxu0 %v342
        %v494 = vpop.f32.mrf.mxu0
        %v495 = vadd.f32 0.0, %v494
        %496 = vmatmul.f32.gmra.mxu0 %v343
        %v497 = vpop.f32.mrf.mxu0
        %v498 = vadd.f32 0.0, %v497
        %499 = vmatmul.f32.gmra.mxu0 %v344
        %v500 = vpop.f32.mrf.mxu0
        %v501 = vadd.f32 0.0, %v500
        %502 = vdwg.mxu0
        %503 = vmatpush.msra.mxu0 %v425
        %504 = vmatpush.msra.mxu0 %v424
        %505 = vmatpush.msra.mxu0 %v423
        %506 = vmatpush.msra.mxu0 %v422
        %507 = vmatpush.msra.mxu0 %v421
        %508 = vmatpush.msra.mxu0 %v420
        %509 = vmatpush.msra.mxu0 %v419
        %510 = vmatpush.msra.mxu0 %v418
        %511 = vmatpush.msra.mxu0 %v417
        %512 = vmatpush.msra.mxu0 %v416
        %513 = vmatpush.msra.mxu0 %v415
        %514 = vmatpush.msra.mxu0 %v414
        %515 = vmatpush.msra.mxu0 %v413
        %516 = vmatpush.msra.mxu0 %v412
        %517 = vmatpush.msra.mxu0 %v411
        %518 = vmatpush.msra.mxu0 %v410
        %519 = vmatmul.f32.gmra.mxu0 %v351
        %v520 = vpop.f32.mrf.mxu0
        %v521 = vadd.f32 %v492, %v520
        %522 = vmatmul.f32.gmra.mxu0 %v353
        %v523 = vpop.f32.mrf.mxu0
        %v524 = vadd.f32 %v495, %v523
        %525 = vmatmul.f32.gmra.mxu0 %v355
        %v526 = vpop.f32.mrf.mxu0
        %v527 = vadd.f32 %v498, %v526
        %528 = vmatmul.f32.gmra.mxu0 %v354
        %v529 = vpop.f32.mrf.mxu0
        %v530 = vadd.f32 %v501, %v529
        %531 = vdwg.mxu0
        %532 = vmatpush.msra.mxu0 %v441
        %533 = vmatpush.msra.mxu0 %v440
        %534 = vmatpush.msra.mxu0 %v439
        %535 = vmatpush.msra.mxu0 %v438
        %536 = vmatpush.msra.mxu0 %v437
        %537 = vmatpush.msra.mxu0 %v436
        %538 = vmatpush.msra.mxu0 %v435
        %539 = vmatpush.msra.mxu0 %v434
        %540 = vmatpush.msra.mxu0 %v433
        %541 = vmatpush.msra.mxu0 %v432
        %542 = vmatpush.msra.mxu0 %v431
        %543 = vmatpush.msra.mxu0 %v430
        %544 = vmatpush.msra.mxu0 %v429
        %545 = vmatpush.msra.mxu0 %v428
        %546 = vmatpush.msra.mxu0 %v427
        %547 = vmatpush.msra.mxu0 %v426
        %548 = vmatmul.f32.gmra.mxu0 %v362
        %v549 = vpop.f32.mrf.mxu0
        %v550 = vadd.f32 %v521, %v549
        %551 = vmatmul.f32.gmra.mxu0 %v364
        %v552 = vpop.f32.mrf.mxu0
        %v553 = vadd.f32 %v524, %v552
        %554 = vmatmul.f32.gmra.mxu0 %v366
        %v555 = vpop.f32.mrf.mxu0
        %v556 = vadd.f32 %v527, %v555
        %557 = vmatmul.f32.gmra.mxu0 %v365
        %v558 = vpop.f32.mrf.mxu0
        %v559 = vadd.f32 %v530, %v558
        %560 = vdwg.mxu0
        %561 = vmatpush.msra.mxu0 %v457
        %562 = vmatpush.msra.mxu0 %v456
        %563 = vmatpush.msra.mxu0 %v455
        %564 = vmatpush.msra.mxu0 %v454
        %565 = vmatpush.msra.mxu0 %v453
        %566 = vmatpush.msra.mxu0 %v452
        %567 = vmatpush.msra.mxu0 %v451
        %568 = vmatpush.msra.mxu0 %v450
        %569 = vmatpush.msra.mxu0 %v449
        %570 = vmatpush.msra.mxu0 %v448
        %571 = vmatpush.msra.mxu0 %v447
        %572 = vmatpush.msra.mxu0 %v446
        %573 = vmatpush.msra.mxu0 %v445
        %574 = vmatpush.msra.mxu0 %v444
        %575 = vmatpush.msra.mxu0 %v443
        %576 = vmatpush.msra.mxu0 %v442
        %577 = vmatmul.f32.gmra.mxu0 %v373
        %v578 = vpop.f32.mrf.mxu0
        %v579 = vadd.f32 %v550, %v578
        %580 = vmatmul.f32.gmra.mxu0 %v375
        %v581 = vpop.f32.mrf.mxu0
        %v582 = vadd.f32 %v553, %v581
        %583 = vmatmul.f32.gmra.mxu0 %v377
        %v584 = vpop.f32.mrf.mxu0
        %v585 = vadd.f32 %v556, %v584
        %586 = vmatmul.f32.gmra.mxu0 %v376
        %v587 = vpop.f32.mrf.mxu0
        %v588 = vadd.f32 %v559, %v587
        %589 = vdwg.mxu0
        %590 = vmatpush.msra.mxu0 %v473
        %591 = vmatpush.msra.mxu0 %v472
        %592 = vmatpush.msra.mxu0 %v471
        %593 = vmatpush.msra.mxu0 %v470
        %594 = vmatpush.msra.mxu0 %v469
        %595 = vmatpush.msra.mxu0 %v468
        %596 = vmatpush.msra.mxu0 %v467
        %597 = vmatpush.msra.mxu0 %v466
        %598 = vmatpush.msra.mxu0 %v465
        %599 = vmatpush.msra.mxu0 %v464
        %600 = vmatpush.msra.mxu0 %v463
        %601 = vmatpush.msra.mxu0 %v462
        %602 = vmatpush.msra.mxu0 %v461
        %603 = vmatpush.msra.mxu0 %v460
        %604 = vmatpush.msra.mxu0 %v459
        %605 = vmatpush.msra.mxu0 %v458
        %606 = vmatmul.f32.gmra.mxu0 %v384
        %v607 = vpop.f32.mrf.mxu0
        %v608 = vadd.f32 %v579, %v607
        %609 = vmatmul.f32.gmra.mxu0 %v386
        %v610 = vpop.f32.mrf.mxu0
        %v611 = vadd.f32 %v582, %v610
        %612 = vmatmul.f32.gmra.mxu0 %v388
        %v613 = vpop.f32.mrf.mxu0
        %v614 = vadd.f32 %v585, %v613
        %615 = vmatmul.f32.gmra.mxu0 %v387
        %v616 = vpop.f32.mrf.mxu0
        %v617 = vadd.f32 %v588, %v616
        %618 = vdwg.mxu0
        %619 = vmatpush.msra.mxu0 %v273
        %620 = vmatpush.msra.mxu0 %v272
        %621 = vmatpush.msra.mxu0 %v271
        %622 = vmatpush.msra.mxu0 %v270
        %623 = vmatpush.msra.mxu0 %v269
        %624 = vmatpush.msra.mxu0 %v268
        %625 = vmatpush.msra.mxu0 %v267
        %626 = vmatpush.msra.mxu0 %v266
        %627 = vmatpush.msra.mxu0 %v265
        %628 = vmatpush.msra.mxu0 %v264
        %629 = vmatpush.msra.mxu0 %v263
        %630 = vmatpush.msra.mxu0 %v262
        %631 = vmatpush.msra.mxu0 %v261
        %632 = vmatpush.msra.mxu0 %v260
        %633 = vmatpush.msra.mxu0 %v259
        %634 = vmatpush.msra.mxu0 %v258
        %635 = vmatmul.f32.gmra.mxu0 %v202
        %v636 = vpop.f32.mrf.mxu0
        %v637 = vadd.f32 %v608, %v636
        %638 = vmatmul.f32.gmra.mxu0 %v203
        %v639 = vpop.f32.mrf.mxu0
        %v640 = vadd.f32 %v611, %v639
        %641 = vmatmul.f32.gmra.mxu0 %v204
        %v642 = vpop.f32.mrf.mxu0
        %v643 = vadd.f32 %v614, %v642
        %644 = vmatmul.f32.gmra.mxu0 %v205
        %v645 = vpop.f32.mrf.mxu0
        %v646 = vadd.f32 %v617, %v645
        %647 = vdwg.mxu0
        %648 = vmatpush.msra.mxu0 %v289
        %649 = vmatpush.msra.mxu0 %v288
        %650 = vmatpush.msra.mxu0 %v287
        %651 = vmatpush.msra.mxu0 %v286
        %652 = vmatpush.msra.mxu0 %v285
        %653 = vmatpush.msra.mxu0 %v284
        %654 = vmatpush.msra.mxu0 %v283
        %655 = vmatpush.msra.mxu0 %v282
        %656 = vmatpush.msra.mxu0 %v281
        %657 = vmatpush.msra.mxu0 %v280
        %658 = vmatpush.msra.mxu0 %v279
        %659 = vmatpush.msra.mxu0 %v278
        %660 = vmatpush.msra.mxu0 %v277
        %661 = vmatpush.msra.mxu0 %v276
        %662 = vmatpush.msra.mxu0 %v275
        %663 = vmatpush.msra.mxu0 %v274
        %664 = vmatmul.f32.gmra.mxu0 %v213
        %v665 = vpop.f32.mrf.mxu0
        %v666 = vadd.f32 %v637, %v665
        %667 = vmatmul.f32.gmra.mxu0 %v215
        %v668 = vpop.f32.mrf.mxu0
        %v669 = vadd.f32 %v640, %v668
        %670 = vmatmul.f32.gmra.mxu0 %v217
        %v671 = vpop.f32.mrf.mxu0
        %v672 = vadd.f32 %v643, %v671
        %673 = vmatmul.f32.gmra.mxu0 %v216
        %v674 = vpop.f32.mrf.mxu0
        %v675 = vadd.f32 %v646, %v674
        %676 = vdwg.mxu0
        %677 = vmatpush.msra.mxu0 %v305
        %678 = vmatpush.msra.mxu0 %v304
        %679 = vmatpush.msra.mxu0 %v303
        %680 = vmatpush.msra.mxu0 %v302
        %681 = vmatpush.msra.mxu0 %v301
        %682 = vmatpush.msra.mxu0 %v300
        %683 = vmatpush.msra.mxu0 %v299
        %684 = vmatpush.msra.mxu0 %v298
        %685 = vmatpush.msra.mxu0 %v297
        %686 = vmatpush.msra.mxu0 %v296
        %687 = vmatpush.msra.mxu0 %v295
        %688 = vmatpush.msra.mxu0 %v294
        %689 = vmatpush.msra.mxu0 %v293
        %690 = vmatpush.msra.mxu0 %v292
        %691 = vmatpush.msra.mxu0 %v291
        %692 = vmatpush.msra.mxu0 %v290
        %693 = vmatmul.f32.gmra.mxu0 %v225
        %v694 = vpop.f32.mrf.mxu0
        %v695 = vadd.f32 %v666, %v694
        %696 = vmatmul.f32.gmra.mxu0 %v227
        %v697 = vpop.f32.mrf.mxu0
        %v698 = vadd.f32 %v669, %v697
        %699 = vmatmul.f32.gmra.mxu0 %v229
        %v700 = vpop.f32.mrf.mxu0
        %v701 = vadd.f32 %v672, %v700
        %702 = vmatmul.f32.gmra.mxu0 %v228
        %v703 = vpop.f32.mrf.mxu0
        %v704 = vadd.f32 %v675, %v703
        %705 = vdwg.mxu0
        %706 = vmatpush.msra.mxu0 %v321
        %707 = vmatpush.msra.mxu0 %v320
        %708 = vmatpush.msra.mxu0 %v319
        %709 = vmatpush.msra.mxu0 %v318
        %710 = vmatpush.msra.mxu0 %v317
        %711 = vmatpush.msra.mxu0 %v316
        %712 = vmatpush.msra.mxu0 %v315
        %713 = vmatpush.msra.mxu0 %v314
        %714 = vmatpush.msra.mxu0 %v313
        %715 = vmatpush.msra.mxu0 %v312
        %716 = vmatpush.msra.mxu0 %v311
        %717 = vmatpush.msra.mxu0 %v310
        %718 = vmatpush.msra.mxu0 %v309
        %719 = vmatpush.msra.mxu0 %v308
        %720 = vmatpush.msra.mxu0 %v307
        %721 = vmatpush.msra.mxu0 %v306
        %722 = vmatmul.f32.gmra.mxu0 %v237
        %v723 = vpop.f32.mrf.mxu0
        %v724 = vadd.f32 %v695, %v723
        %725 = vmatmul.f32.gmra.mxu0 %v239
        %v726 = vpop.f32.mrf.mxu0
        %v727 = vadd.f32 %v698, %v726
        %728 = vmatmul.f32.gmra.mxu0 %v241
        %v729 = vpop.f32.mrf.mxu0
        %v730 = vadd.f32 %v701, %v729
        %731 = vmatmul.f32.gmra.mxu0 %v240
        %v732 = vpop.f32.mrf.mxu0
        %v733 = vadd.f32 %v704, %v732
        %734 = vdwg.mxu0
        %735 = vmatpush.msra.mxu0 %v337
        %736 = vmatpush.msra.mxu0 %v336
        %737 = vmatpush.msra.mxu0 %v335
        %738 = vmatpush.msra.mxu0 %v334
        %739 = vmatpush.msra.mxu0 %v333
        %740 = vmatpush.msra.mxu0 %v332
        %741 = vmatpush.msra.mxu0 %v331
        %742 = vmatpush.msra.mxu0 %v330
        %743 = vmatpush.msra.mxu0 %v329
        %744 = vmatpush.msra.mxu0 %v328
        %745 = vmatpush.msra.mxu0 %v327
        %746 = vmatpush.msra.mxu0 %v326
        %747 = vmatpush.msra.mxu0 %v325
        %748 = vmatpush.msra.mxu0 %v324
        %749 = vmatpush.msra.mxu0 %v323
        %750 = vmatpush.msra.mxu0 %v322
        %751 = vmatmul.f32.gmra.mxu0 %v249
        %v752 = vpop.f32.mrf.mxu0
        %v753 = vadd.f32 %v724, %v752
        %754 = vmatmul.f32.gmra.mxu0 %v251
        %v755 = vpop.f32.mrf.mxu0
        %v756 = vadd.f32 %v727, %v755
        %757 = vmatmul.f32.gmra.mxu0 %v253
        %v758 = vpop.f32.mrf.mxu0
        %v759 = vadd.f32 %v730, %v758
        %760 = vmatmul.f32.gmra.mxu0 %v252
        %v761 = vpop.f32.mrf.mxu0
        %v762 = vadd.f32 %v733, %v761
        %763 = vdwg.mxu0
        %s764 = sadd.s32 %s199, 2
        %s765 = smul.u32 %s764, 32
        %s766 = scalar_lea.vmem %s165, %s765
        %v767 = vld [vmem:[%s766] sm:$0xff]
        %v768 = vld [vmem:[%s766 + $0x8] sm:$0xff]
        %v769 = vld [vmem:[%s766 + $0x10] sm:$0xff]
        %v770 = vld [vmem:[%s766 + $0x18] sm:$0xff]
        %v775 = vrot.slane %v767, 1
        %v776 = vrot.slane %v768, 1
        %v777 = vsel %vm210, %v775, %v776
        %v778 = vrot.slane %v769, 1
        %v779 = vsel %vm210, %v776, %v778
        %v780 = vrot.slane %v770, 1
        %v781 = vsel %vm210, %v778, %v780
        %v786 = vrot.slane %v767, 2
        %v787 = vrot.slane %v768, 2
        %v788 = vsel %vm222, %v786, %v787
        %v789 = vrot.slane %v769, 2
        %v790 = vsel %vm222, %v787, %v789
        %v791 = vrot.slane %v770, 2
        %v792 = vsel %vm222, %v789, %v791
        %v797 = vrot.slane %v767, 3
        %v798 = vrot.slane %v768, 3
        %v799 = vsel %vm234, %v797, %v798
        %v800 = vrot.slane %v769, 3
        %v801 = vsel %vm234, %v798, %v800
        %v802 = vrot.slane %v770, 3
        %v803 = vsel %vm234, %v800, %v802
        %v808 = vrot.slane %v767, 4
        %v809 = vrot.slane %v768, 4
        %v810 = vsel %vm246, %v808, %v809
        %v811 = vrot.slane %v769, 4
        %v812 = vsel %vm246, %v809, %v811
        %v813 = vrot.slane %v770, 4
        %v814 = vsel %vm246, %v811, %v813
        %s819 = scalar_lea.vmem %s1, 1280
        %v820 = vld [vmem:[%s819] sm:$0xff]
        %v821 = vld [vmem:[%s819 + $0x8] sm:$0xff]
        %v822 = vld [vmem:[%s819 + $0x10] sm:$0xff]
        %v823 = vld [vmem:[%s819 + $0x18] sm:$0xff]
        %v824 = vld [vmem:[%s819 + $0x20] sm:$0xff]
        %v825 = vld [vmem:[%s819 + $0x28] sm:$0xff]
        %v826 = vld [vmem:[%s819 + $0x30] sm:$0xff]
        %v827 = vld [vmem:[%s819 + $0x38] sm:$0xff]
        %v828 = vld [vmem:[%s819 + $0x40] sm:$0xff]
        %v829 = vld [vmem:[%s819 + $0x48] sm:$0xff]
        %v830 = vld [vmem:[%s819 + $0x50] sm:$0xff]
        %v831 = vld [vmem:[%s819 + $0x58] sm:$0xff]
        %v832 = vld [vmem:[%s819 + $0x60] sm:$0xff]
        %v833 = vld [vmem:[%s819 + $0x68] sm:$0xff]
        %v834 = vld [vmem:[%s819 + $0x70] sm:$0xff]
        %v835 = vld [vmem:[%s819 + $0x78] sm:$0xff]
        %v836 = vld [vmem:[%s819 + $0x80] sm:$0xff]
        %v837 = vld [vmem:[%s819 + $0x88] sm:$0xff]
        %v838 = vld [vmem:[%s819 + $0x90] sm:$0xff]
        %v839 = vld [vmem:[%s819 + $0x98] sm:$0xff]
        %v840 = vld [vmem:[%s819 + $0xa0] sm:$0xff]
        %v841 = vld [vmem:[%s819 + $0xa8] sm:$0xff]
        %v842 = vld [vmem:[%s819 + $0xb0] sm:$0xff]
        %v843 = vld [vmem:[%s819 + $0xb8] sm:$0xff]
        %v844 = vld [vmem:[%s819 + $0xc0] sm:$0xff]
        %v845 = vld [vmem:[%s819 + $0xc8] sm:$0xff]
        %v846 = vld [vmem:[%s819 + $0xd0] sm:$0xff]
        %v847 = vld [vmem:[%s819 + $0xd8] sm:$0xff]
        %v848 = vld [vmem:[%s819 + $0xe0] sm:$0xff]
        %v849 = vld [vmem:[%s819 + $0xe8] sm:$0xff]
        %v850 = vld [vmem:[%s819 + $0xf0] sm:$0xff]
        %v851 = vld [vmem:[%s819 + $0xf8] sm:$0xff]
        %v852 = vld [vmem:[%s819 + $0x100] sm:$0xff]
        %v853 = vld [vmem:[%s819 + $0x108] sm:$0xff]
        %v854 = vld [vmem:[%s819 + $0x110] sm:$0xff]
        %v855 = vld [vmem:[%s819 + $0x118] sm:$0xff]
        %v856 = vld [vmem:[%s819 + $0x120] sm:$0xff]
        %v857 = vld [vmem:[%s819 + $0x128] sm:$0xff]
        %v858 = vld [vmem:[%s819 + $0x130] sm:$0xff]
        %v859 = vld [vmem:[%s819 + $0x138] sm:$0xff]
        %v860 = vld [vmem:[%s819 + $0x140] sm:$0xff]
        %v861 = vld [vmem:[%s819 + $0x148] sm:$0xff]
        %v862 = vld [vmem:[%s819 + $0x150] sm:$0xff]
        %v863 = vld [vmem:[%s819 + $0x158] sm:$0xff]
        %v864 = vld [vmem:[%s819 + $0x160] sm:$0xff]
        %v865 = vld [vmem:[%s819 + $0x168] sm:$0xff]
        %v866 = vld [vmem:[%s819 + $0x170] sm:$0xff]
        %v867 = vld [vmem:[%s819 + $0x178] sm:$0xff]
        %v868 = vld [vmem:[%s819 + $0x180] sm:$0xff]
        %v869 = vld [vmem:[%s819 + $0x188] sm:$0xff]
        %v870 = vld [vmem:[%s819 + $0x190] sm:$0xff]
        %v871 = vld [vmem:[%s819 + $0x198] sm:$0xff]
        %v872 = vld [vmem:[%s819 + $0x1a0] sm:$0xff]
        %v873 = vld [vmem:[%s819 + $0x1a8] sm:$0xff]
        %v874 = vld [vmem:[%s819 + $0x1b0] sm:$0xff]
        %v875 = vld [vmem:[%s819 + $0x1b8] sm:$0xff]
        %v876 = vld [vmem:[%s819 + $0x1c0] sm:$0xff]
        %v877 = vld [vmem:[%s819 + $0x1c8] sm:$0xff]
        %v878 = vld [vmem:[%s819 + $0x1d0] sm:$0xff]
        %v879 = vld [vmem:[%s819 + $0x1d8] sm:$0xff]
        %v880 = vld [vmem:[%s819 + $0x1e0] sm:$0xff]
        %v881 = vld [vmem:[%s819 + $0x1e8] sm:$0xff]
        %v882 = vld [vmem:[%s819 + $0x1f0] sm:$0xff]
        %v883 = vld [vmem:[%s819 + $0x1f8] sm:$0xff]
        %v884 = vld [vmem:[%s819 + $0x200] sm:$0xff]
        %v885 = vld [vmem:[%s819 + $0x208] sm:$0xff]
        %v886 = vld [vmem:[%s819 + $0x210] sm:$0xff]
        %v887 = vld [vmem:[%s819 + $0x218] sm:$0xff]
        %v888 = vld [vmem:[%s819 + $0x220] sm:$0xff]
        %v889 = vld [vmem:[%s819 + $0x228] sm:$0xff]
        %v890 = vld [vmem:[%s819 + $0x230] sm:$0xff]
        %v891 = vld [vmem:[%s819 + $0x238] sm:$0xff]
        %v892 = vld [vmem:[%s819 + $0x240] sm:$0xff]
        %v893 = vld [vmem:[%s819 + $0x248] sm:$0xff]
        %v894 = vld [vmem:[%s819 + $0x250] sm:$0xff]
        %v895 = vld [vmem:[%s819 + $0x258] sm:$0xff]
        %v896 = vld [vmem:[%s819 + $0x260] sm:$0xff]
        %v897 = vld [vmem:[%s819 + $0x268] sm:$0xff]
        %v898 = vld [vmem:[%s819 + $0x270] sm:$0xff]
        %v899 = vld [vmem:[%s819 + $0x278] sm:$0xff]
        %900 = vmatpush.msra.mxu0 %v835
        %901 = vmatpush.msra.mxu0 %v834
        %902 = vmatpush.msra.mxu0 %v833
        %903 = vmatpush.msra.mxu0 %v832
        %904 = vmatpush.msra.mxu0 %v831
        %905 = vmatpush.msra.mxu0 %v830
        %906 = vmatpush.msra.mxu0 %v829
        %907 = vmatpush.msra.mxu0 %v828
        %908 = vmatpush.msra.mxu0 %v827
        %909 = vmatpush.msra.mxu0 %v826
        %910 = vmatpush.msra.mxu0 %v825
        %911 = vmatpush.msra.mxu0 %v824
        %912 = vmatpush.msra.mxu0 %v823
        %913 = vmatpush.msra.mxu0 %v822
        %914 = vmatpush.msra.mxu0 %v821
        %915 = vmatpush.msra.mxu0 %v820
        %916 = vmatmul.f32.gmra.mxu0 %v767
        %v917 = vpop.f32.mrf.mxu0
        %v918 = vadd.f32 0.0, %v917
        %919 = vmatmul.f32.gmra.mxu0 %v768
        %v920 = vpop.f32.mrf.mxu0
        %v921 = vadd.f32 0.0, %v920
        %922 = vmatmul.f32.gmra.mxu0 %v769
        %v923 = vpop.f32.mrf.mxu0
        %v924 = vadd.f32 0.0, %v923
        %925 = vmatmul.f32.gmra.mxu0 %v770
        %v926 = vpop.f32.mrf.mxu0
        %v927 = vadd.f32 0.0, %v926
        %928 = vdwg.mxu0
        %929 = vmatpush.msra.mxu0 %v851
        %930 = vmatpush.msra.mxu0 %v850
        %931 = vmatpush.msra.mxu0 %v849
        %932 = vmatpush.msra.mxu0 %v848
        %933 = vmatpush.msra.mxu0 %v847
        %934 = vmatpush.msra.mxu0 %v846
        %935 = vmatpush.msra.mxu0 %v845
        %936 = vmatpush.msra.mxu0 %v844
        %937 = vmatpush.msra.mxu0 %v843
        %938 = vmatpush.msra.mxu0 %v842
        %939 = vmatpush.msra.mxu0 %v841
        %940 = vmatpush.msra.mxu0 %v840
        %941 = vmatpush.msra.mxu0 %v839
        %942 = vmatpush.msra.mxu0 %v838
        %943 = vmatpush.msra.mxu0 %v837
        %944 = vmatpush.msra.mxu0 %v836
        %945 = vmatmul.f32.gmra.mxu0 %v777
        %v946 = vpop.f32.mrf.mxu0
        %v947 = vadd.f32 %v918, %v946
        %948 = vmatmul.f32.gmra.mxu0 %v779
        %v949 = vpop.f32.mrf.mxu0
        %v950 = vadd.f32 %v921, %v949
        %951 = vmatmul.f32.gmra.mxu0 %v781
        %v952 = vpop.f32.mrf.mxu0
        %v953 = vadd.f32 %v924, %v952
        %954 = vmatmul.f32.gmra.mxu0 %v780
        %v955 = vpop.f32.mrf.mxu0
        %v956 = vadd.f32 %v927, %v955
        %957 = vdwg.mxu0
        %958 = vmatpush.msra.mxu0 %v867
        %959 = vmatpush.msra.mxu0 %v866
        %960 = vmatpush.msra.mxu0 %v865
        %961 = vmatpush.msra.mxu0 %v864
        %962 = vmatpush.msra.mxu0 %v863
        %963 = vmatpush.msra.mxu0 %v862
        %964 = vmatpush.msra.mxu0 %v861
        %965 = vmatpush.msra.mxu0 %v860
        %966 = vmatpush.msra.mxu0 %v859
        %967 = vmatpush.msra.mxu0 %v858
        %968 = vmatpush.msra.mxu0 %v857
        %969 = vmatpush.msra.mxu0 %v856
        %970 = vmatpush.msra.mxu0 %v855
        %971 = vmatpush.msra.mxu0 %v854
        %972 = vmatpush.msra.mxu0 %v853
        %973 = vmatpush.msra.mxu0 %v852
        %974 = vmatmul.f32.gmra.mxu0 %v788
        %v975 = vpop.f32.mrf.mxu0
        %v976 = vadd.f32 %v947, %v975
        %977 = vmatmul.f32.gmra.mxu0 %v790
        %v978 = vpop.f32.mrf.mxu0
        %v979 = vadd.f32 %v950, %v978
        %980 = vmatmul.f32.gmra.mxu0 %v792
        %v981 = vpop.f32.mrf.mxu0
        %v982 = vadd.f32 %v953, %v981
        %983 = vmatmul.f32.gmra.mxu0 %v791
        %v984 = vpop.f32.mrf.mxu0
        %v985 = vadd.f32 %v956, %v984
        %986 = vdwg.mxu0
        %987 = vmatpush.msra.mxu0 %v883
        %988 = vmatpush.msra.mxu0 %v882
        %989 = vmatpush.msra.mxu0 %v881
        %990 = vmatpush.msra.mxu0 %v880
        %991 = vmatpush.msra.mxu0 %v879
        %992 = vmatpush.msra.mxu0 %v878
        %993 = vmatpush.msra.mxu0 %v877
        %994 = vmatpush.msra.mxu0 %v876
        %995 = vmatpush.msra.mxu0 %v875
        %996 = vmatpush.msra.mxu0 %v874
        %997 = vmatpush.msra.mxu0 %v873
        %998 = vmatpush.msra.mxu0 %v872
        %999 = vmatpush.msra.mxu0 %v871
        %1000 = vmatpush.msra.mxu0 %v870
        %1001 = vmatpush.msra.mxu0 %v869
        %1002 = vmatpush.msra.mxu0 %v868
        %1003 = vmatmul.f32.gmra.mxu0 %v799
        %v1004 = vpop.f32.mrf.mxu0
        %v1005 = vadd.f32 %v976, %v1004
        %1006 = vmatmul.f32.gmra.mxu0 %v801
        %v1007 = vpop.f32.mrf.mxu0
        %v1008 = vadd.f32 %v979, %v1007
        %1009 = vmatmul.f32.gmra.mxu0 %v803
        %v1010 = vpop.f32.mrf.mxu0
        %v1011 = vadd.f32 %v982, %v1010
        %1012 = vmatmul.f32.gmra.mxu0 %v802
        %v1013 = vpop.f32.mrf.mxu0
        %v1014 = vadd.f32 %v985, %v1013
        %1015 = vdwg.mxu0
        %1016 = vmatpush.msra.mxu0 %v899
        %1017 = vmatpush.msra.mxu0 %v898
        %1018 = vmatpush.msra.mxu0 %v897
        %1019 = vmatpush.msra.mxu0 %v896
        %1020 = vmatpush.msra.mxu0 %v895
        %1021 = vmatpush.msra.mxu0 %v894
        %1022 = vmatpush.msra.mxu0 %v893
        %1023 = vmatpush.msra.mxu0 %v892
        %1024 = vmatpush.msra.mxu0 %v891
        %1025 = vmatpush.msra.mxu0 %v890
        %1026 = vmatpush.msra.mxu0 %v889
        %1027 = vmatpush.msra.mxu0 %v888
        %1028 = vmatpush.msra.mxu0 %v887
        %1029 = vmatpush.msra.mxu0 %v886
        %1030 = vmatpush.msra.mxu0 %v885
        %1031 = vmatpush.msra.mxu0 %v884
        %1032 = vmatmul.f32.gmra.mxu0 %v810
        %v1033 = vpop.f32.mrf.mxu0
        %v1034 = vadd.f32 %v1005, %v1033
        %1035 = vmatmul.f32.gmra.mxu0 %v812
        %v1036 = vpop.f32.mrf.mxu0
        %v1037 = vadd.f32 %v1008, %v1036
        %1038 = vmatmul.f32.gmra.mxu0 %v814
        %v1039 = vpop.f32.mrf.mxu0
        %v1040 = vadd.f32 %v1011, %v1039
        %1041 = vmatmul.f32.gmra.mxu0 %v813
        %v1042 = vpop.f32.mrf.mxu0
        %v1043 = vadd.f32 %v1014, %v1042
        %1044 = vdwg.mxu0
        %v1045 = vadd.f32 %v753, %v1034
        %v1046 = vadd.f32 %v756, %v1037
        %v1047 = vadd.f32 %v759, %v1040
        %v1048 = vadd.f32 %v762, %v1043
        %s1049 = sadd.s32 %s199, 3
        %s1050 = smul.u32 %s1049, 32
        %s1051 = scalar_lea.vmem %s165, %s1050
        %v1052 = vld [vmem:[%s1051] sm:$0xff]
        %v1053 = vld [vmem:[%s1051 + $0x8] sm:$0xff]
        %v1054 = vld [vmem:[%s1051 + $0x10] sm:$0xff]
        %v1055 = vld [vmem:[%s1051 + $0x18] sm:$0xff]
        %v1060 = vrot.slane %v1052, 1
        %v1061 = vrot.slane %v1053, 1
        %v1062 = vsel %vm210, %v1060, %v1061
        %v1063 = vrot.slane %v1054, 1
        %v1064 = vsel %vm210, %v1061, %v1063
        %v1065 = vrot.slane %v1055, 1
        %v1066 = vsel %vm210, %v1063, %v1065
        %v1071 = vrot.slane %v1052, 2
        %v1072 = vrot.slane %v1053, 2
        %v1073 = vsel %vm222, %v1071, %v1072
        %v1074 = vrot.slane %v1054, 2
        %v1075 = vsel %vm222, %v1072, %v1074
        %v1076 = vrot.slane %v1055, 2
        %v1077 = vsel %vm222, %v1074, %v1076
        %v1082 = vrot.slane %v1052, 3
        %v1083 = vrot.slane %v1053, 3
        %v1084 = vsel %vm234, %v1082, %v1083
        %v1085 = vrot.slane %v1054, 3
        %v1086 = vsel %vm234, %v1083, %v1085
        %v1087 = vrot.slane %v1055, 3
        %v1088 = vsel %vm234, %v1085, %v1087
        %v1093 = vrot.slane %v1052, 4
        %v1094 = vrot.slane %v1053, 4
        %v1095 = vsel %vm246, %v1093, %v1094
        %v1096 = vrot.slane %v1054, 4
        %v1097 = vsel %vm246, %v1094, %v1096
        %v1098 = vrot.slane %v1055, 4
        %v1099 = vsel %vm246, %v1096, %v1098
        %s1104 = scalar_lea.vmem %s1, 1920
        %v1105 = vld [vmem:[%s1104] sm:$0xff]
        %v1106 = vld [vmem:[%s1104 + $0x8] sm:$0xff]
        %v1107 = vld [vmem:[%s1104 + $0x10] sm:$0xff]
        %v1108 = vld [vmem:[%s1104 + $0x18] sm:$0xff]
        %v1109 = vld [vmem:[%s1104 + $0x20] sm:$0xff]
        %v1110 = vld [vmem:[%s1104 + $0x28] sm:$0xff]
        %v1111 = vld [vmem:[%s1104 + $0x30] sm:$0xff]
        %v1112 = vld [vmem:[%s1104 + $0x38] sm:$0xff]
        %v1113 = vld [vmem:[%s1104 + $0x40] sm:$0xff]
        %v1114 = vld [vmem:[%s1104 + $0x48] sm:$0xff]
        %v1115 = vld [vmem:[%s1104 + $0x50] sm:$0xff]
        %v1116 = vld [vmem:[%s1104 + $0x58] sm:$0xff]
        %v1117 = vld [vmem:[%s1104 + $0x60] sm:$0xff]
        %v1118 = vld [vmem:[%s1104 + $0x68] sm:$0xff]
        %v1119 = vld [vmem:[%s1104 + $0x70] sm:$0xff]
        %v1120 = vld [vmem:[%s1104 + $0x78] sm:$0xff]
        %v1121 = vld [vmem:[%s1104 + $0x80] sm:$0xff]
        %v1122 = vld [vmem:[%s1104 + $0x88] sm:$0xff]
        %v1123 = vld [vmem:[%s1104 + $0x90] sm:$0xff]
        %v1124 = vld [vmem:[%s1104 + $0x98] sm:$0xff]
        %v1125 = vld [vmem:[%s1104 + $0xa0] sm:$0xff]
        %v1126 = vld [vmem:[%s1104 + $0xa8] sm:$0xff]
        %v1127 = vld [vmem:[%s1104 + $0xb0] sm:$0xff]
        %v1128 = vld [vmem:[%s1104 + $0xb8] sm:$0xff]
        %v1129 = vld [vmem:[%s1104 + $0xc0] sm:$0xff]
        %v1130 = vld [vmem:[%s1104 + $0xc8] sm:$0xff]
        %v1131 = vld [vmem:[%s1104 + $0xd0] sm:$0xff]
        %v1132 = vld [vmem:[%s1104 + $0xd8] sm:$0xff]
        %v1133 = vld [vmem:[%s1104 + $0xe0] sm:$0xff]
        %v1134 = vld [vmem:[%s1104 + $0xe8] sm:$0xff]
        %v1135 = vld [vmem:[%s1104 + $0xf0] sm:$0xff]
        %v1136 = vld [vmem:[%s1104 + $0xf8] sm:$0xff]
        %v1137 = vld [vmem:[%s1104 + $0x100] sm:$0xff]
        %v1138 = vld [vmem:[%s1104 + $0x108] sm:$0xff]
        %v1139 = vld [vmem:[%s1104 + $0x110] sm:$0xff]
        %v1140 = vld [vmem:[%s1104 + $0x118] sm:$0xff]
        %v1141 = vld [vmem:[%s1104 + $0x120] sm:$0xff]
        %v1142 = vld [vmem:[%s1104 + $0x128] sm:$0xff]
        %v1143 = vld [vmem:[%s1104 + $0x130] sm:$0xff]
        %v1144 = vld [vmem:[%s1104 + $0x138] sm:$0xff]
        %v1145 = vld [vmem:[%s1104 + $0x140] sm:$0xff]
        %v1146 = vld [vmem:[%s1104 + $0x148] sm:$0xff]
        %v1147 = vld [vmem:[%s1104 + $0x150] sm:$0xff]
        %v1148 = vld [vmem:[%s1104 + $0x158] sm:$0xff]
        %v1149 = vld [vmem:[%s1104 + $0x160] sm:$0xff]
        %v1150 = vld [vmem:[%s1104 + $0x168] sm:$0xff]
        %v1151 = vld [vmem:[%s1104 + $0x170] sm:$0xff]
        %v1152 = vld [vmem:[%s1104 + $0x178] sm:$0xff]
        %v1153 = vld [vmem:[%s1104 + $0x180] sm:$0xff]
        %v1154 = vld [vmem:[%s1104 + $0x188] sm:$0xff]
        %v1155 = vld [vmem:[%s1104 + $0x190] sm:$0xff]
        %v1156 = vld [vmem:[%s1104 + $0x198] sm:$0xff]
        %v1157 = vld [vmem:[%s1104 + $0x1a0] sm:$0xff]
        %v1158 = vld [vmem:[%s1104 + $0x1a8] sm:$0xff]
        %v1159 = vld [vmem:[%s1104 + $0x1b0] sm:$0xff]
        %v1160 = vld [vmem:[%s1104 + $0x1b8] sm:$0xff]
        %v1161 = vld [vmem:[%s1104 + $0x1c0] sm:$0xff]
        %v1162 = vld [vmem:[%s1104 + $0x1c8] sm:$0xff]
        %v1163 = vld [vmem:[%s1104 + $0x1d0] sm:$0xff]
        %v1164 = vld [vmem:[%s1104 + $0x1d8] sm:$0xff]
        %v1165 = vld [vmem:[%s1104 + $0x1e0] sm:$0xff]
        %v1166 = vld [vmem:[%s1104 + $0x1e8] sm:$0xff]
        %v1167 = vld [vmem:[%s1104 + $0x1f0] sm:$0xff]
        %v1168 = vld [vmem:[%s1104 + $0x1f8] sm:$0xff]
        %v1169 = vld [vmem:[%s1104 + $0x200] sm:$0xff]
        %v1170 = vld [vmem:[%s1104 + $0x208] sm:$0xff]
        %v1171 = vld [vmem:[%s1104 + $0x210] sm:$0xff]
        %v1172 = vld [vmem:[%s1104 + $0x218] sm:$0xff]
        %v1173 = vld [vmem:[%s1104 + $0x220] sm:$0xff]
        %v1174 = vld [vmem:[%s1104 + $0x228] sm:$0xff]
        %v1175 = vld [vmem:[%s1104 + $0x230] sm:$0xff]
        %v1176 = vld [vmem:[%s1104 + $0x238] sm:$0xff]
        %v1177 = vld [vmem:[%s1104 + $0x240] sm:$0xff]
        %v1178 = vld [vmem:[%s1104 + $0x248] sm:$0xff]
        %v1179 = vld [vmem:[%s1104 + $0x250] sm:$0xff]
        %v1180 = vld [vmem:[%s1104 + $0x258] sm:$0xff]
        %v1181 = vld [vmem:[%s1104 + $0x260] sm:$0xff]
        %v1182 = vld [vmem:[%s1104 + $0x268] sm:$0xff]
        %v1183 = vld [vmem:[%s1104 + $0x270] sm:$0xff]
        %v1184 = vld [vmem:[%s1104 + $0x278] sm:$0xff]
        %1185 = vmatpush.msra.mxu0 %v1120
        %1186 = vmatpush.msra.mxu0 %v1119
        %1187 = vmatpush.msra.mxu0 %v1118
        %1188 = vmatpush.msra.mxu0 %v1117
        %1189 = vmatpush.msra.mxu0 %v1116
        %1190 = vmatpush.msra.mxu0 %v1115
        %1191 = vmatpush.msra.mxu0 %v1114
        %1192 = vmatpush.msra.mxu0 %v1113
        %1193 = vmatpush.msra.mxu0 %v1112
        %1194 = vmatpush.msra.mxu0 %v1111
        %1195 = vmatpush.msra.mxu0 %v1110
        %1196 = vmatpush.msra.mxu0 %v1109
        %1197 = vmatpush.msra.mxu0 %v1108
        %1198 = vmatpush.msra.mxu0 %v1107
        %1199 = vmatpush.msra.mxu0 %v1106
        %1200 = vmatpush.msra.mxu0 %v1105
        %1201 = vmatmul.f32.gmra.mxu0 %v1052
        %v1202 = vpop.f32.mrf.mxu0
        %v1203 = vadd.f32 0.0, %v1202
        %1204 = vmatmul.f32.gmra.mxu0 %v1053
        %v1205 = vpop.f32.mrf.mxu0
        %v1206 = vadd.f32 0.0, %v1205
        %1207 = vmatmul.f32.gmra.mxu0 %v1054
        %v1208 = vpop.f32.mrf.mxu0
        %v1209 = vadd.f32 0.0, %v1208
        %1210 = vmatmul.f32.gmra.mxu0 %v1055
        %v1211 = vpop.f32.mrf.mxu0
        %v1212 = vadd.f32 0.0, %v1211
        %1213 = vdwg.mxu0
        %1214 = vmatpush.msra.mxu0 %v1136
        %1215 = vmatpush.msra.mxu0 %v1135
        %1216 = vmatpush.msra.mxu0 %v1134
        %1217 = vmatpush.msra.mxu0 %v1133
        %1218 = vmatpush.msra.mxu0 %v1132
        %1219 = vmatpush.msra.mxu0 %v1131
        %1220 = vmatpush.msra.mxu0 %v1130
        %1221 = vmatpush.msra.mxu0 %v1129
        %1222 = vmatpush.msra.mxu0 %v1128
        %1223 = vmatpush.msra.mxu0 %v1127
        %1224 = vmatpush.msra.mxu0 %v1126
        %1225 = vmatpush.msra.mxu0 %v1125
        %1226 = vmatpush.msra.mxu0 %v1124
        %1227 = vmatpush.msra.mxu0 %v1123
        %1228 = vmatpush.msra.mxu0 %v1122
        %1229 = vmatpush.msra.mxu0 %v1121
        %1230 = vmatmul.f32.gmra.mxu0 %v1062
        %v1231 = vpop.f32.mrf.mxu0
        %v1232 = vadd.f32 %v1203, %v1231
        %1233 = vmatmul.f32.gmra.mxu0 %v1064
        %v1234 = vpop.f32.mrf.mxu0
        %v1235 = vadd.f32 %v1206, %v1234
        %1236 = vmatmul.f32.gmra.mxu0 %v1066
        %v1237 = vpop.f32.mrf.mxu0
        %v1238 = vadd.f32 %v1209, %v1237
        %1239 = vmatmul.f32.gmra.mxu0 %v1065
        %v1240 = vpop.f32.mrf.mxu0
        %v1241 = vadd.f32 %v1212, %v1240
        %1242 = vdwg.mxu0
        %1243 = vmatpush.msra.mxu0 %v1152
        %1244 = vmatpush.msra.mxu0 %v1151
        %1245 = vmatpush.msra.mxu0 %v1150
        %1246 = vmatpush.msra.mxu0 %v1149
        %1247 = vmatpush.msra.mxu0 %v1148
        %1248 = vmatpush.msra.mxu0 %v1147
        %1249 = vmatpush.msra.mxu0 %v1146
        %1250 = vmatpush.msra.mxu0 %v1145
        %1251 = vmatpush.msra.mxu0 %v1144
        %1252 = vmatpush.msra.mxu0 %v1143
        %1253 = vmatpush.msra.mxu0 %v1142
        %1254 = vmatpush.msra.mxu0 %v1141
        %1255 = vmatpush.msra.mxu0 %v1140
        %1256 = vmatpush.msra.mxu0 %v1139
        %1257 = vmatpush.msra.mxu0 %v1138
        %1258 = vmatpush.msra.mxu0 %v1137
        %1259 = vmatmul.f32.gmra.mxu0 %v1073
        %v1260 = vpop.f32.mrf.mxu0
        %v1261 = vadd.f32 %v1232, %v1260
        %1262 = vmatmul.f32.gmra.mxu0 %v1075
        %v1263 = vpop.f32.mrf.mxu0
        %v1264 = vadd.f32 %v1235, %v1263
        %1265 = vmatmul.f32.gmra.mxu0 %v1077
        %v1266 = vpop.f32.mrf.mxu0
        %v1267 = vadd.f32 %v1238, %v1266
        %1268 = vmatmul.f32.gmra.mxu0 %v1076
        %v1269 = vpop.f32.mrf.mxu0
        %v1270 = vadd.f32 %v1241, %v1269
        %1271 = vdwg.mxu0
        %1272 = vmatpush.msra.mxu0 %v1168
        %1273 = vmatpush.msra.mxu0 %v1167
        %1274 = vmatpush.msra.mxu0 %v1166
        %1275 = vmatpush.msra.mxu0 %v1165
        %1276 = vmatpush.msra.mxu0 %v1164
        %1277 = vmatpush.msra.mxu0 %v1163
        %1278 = vmatpush.msra.mxu0 %v1162
        %1279 = vmatpush.msra.mxu0 %v1161
        %1280 = vmatpush.msra.mxu0 %v1160
        %1281 = vmatpush.msra.mxu0 %v1159
        %1282 = vmatpush.msra.mxu0 %v1158
        %1283 = vmatpush.msra.mxu0 %v1157
        %1284 = vmatpush.msra.mxu0 %v1156
        %1285 = vmatpush.msra.mxu0 %v1155
        %1286 = vmatpush.msra.mxu0 %v1154
        %1287 = vmatpush.msra.mxu0 %v1153
        %1288 = vmatmul.f32.gmra.mxu0 %v1084
        %v1289 = vpop.f32.mrf.mxu0
        %v1290 = vadd.f32 %v1261, %v1289
        %1291 = vmatmul.f32.gmra.mxu0 %v1086
        %v1292 = vpop.f32.mrf.mxu0
        %v1293 = vadd.f32 %v1264, %v1292
        %1294 = vmatmul.f32.gmra.mxu0 %v1088
        %v1295 = vpop.f32.mrf.mxu0
        %v1296 = vadd.f32 %v1267, %v1295
        %1297 = vmatmul.f32.gmra.mxu0 %v1087
        %v1298 = vpop.f32.mrf.mxu0
        %v1299 = vadd.f32 %v1270, %v1298
        %1300 = vdwg.mxu0
        %1301 = vmatpush.msra.mxu0 %v1184
        %1302 = vmatpush.msra.mxu0 %v1183
        %1303 = vmatpush.msra.mxu0 %v1182
        %1304 = vmatpush.msra.mxu0 %v1181
        %1305 = vmatpush.msra.mxu0 %v1180
        %1306 = vmatpush.msra.mxu0 %v1179
        %1307 = vmatpush.msra.mxu0 %v1178
        %1308 = vmatpush.msra.mxu0 %v1177
        %1309 = vmatpush.msra.mxu0 %v1176
        %1310 = vmatpush.msra.mxu0 %v1175
        %1311 = vmatpush.msra.mxu0 %v1174
        %1312 = vmatpush.msra.mxu0 %v1173
        %1313 = vmatpush.msra.mxu0 %v1172
        %1314 = vmatpush.msra.mxu0 %v1171
        %1315 = vmatpush.msra.mxu0 %v1170
        %1316 = vmatpush.msra.mxu0 %v1169
        %1317 = vmatmul.f32.gmra.mxu0 %v1095
        %v1318 = vpop.f32.mrf.mxu0
        %v1319 = vadd.f32 %v1290, %v1318
        %1320 = vmatmul.f32.gmra.mxu0 %v1097
        %v1321 = vpop.f32.mrf.mxu0
        %v1322 = vadd.f32 %v1293, %v1321
        %1323 = vmatmul.f32.gmra.mxu0 %v1099
        %v1324 = vpop.f32.mrf.mxu0
        %v1325 = vadd.f32 %v1296, %v1324
        %1326 = vmatmul.f32.gmra.mxu0 %v1098
        %v1327 = vpop.f32.mrf.mxu0
        %v1328 = vadd.f32 %v1299, %v1327
        %1329 = vdwg.mxu0
        %v1330 = vadd.f32 %v1045, %v1319
        %v1331 = vadd.f32 %v1046, %v1322
        %v1332 = vadd.f32 %v1047, %v1325
        %v1333 = vadd.f32 %v1048, %v1328
        %s1334 = sadd.s32 %s199, 4
        %s1335 = smul.u32 %s1334, 32
        %s1336 = scalar_lea.vmem %s165, %s1335
        %v1337 = vld [vmem:[%s1336] sm:$0xff]
        %v1338 = vld [vmem:[%s1336 + $0x8] sm:$0xff]
        %v1339 = vld [vmem:[%s1336 + $0x10] sm:$0xff]
        %v1340 = vld [vmem:[%s1336 + $0x18] sm:$0xff]
        %v1345 = vrot.slane %v1337, 1
        %v1346 = vrot.slane %v1338, 1
        %v1347 = vsel %vm210, %v1345, %v1346
        %v1348 = vrot.slane %v1339, 1
        %v1349 = vsel %vm210, %v1346, %v1348
        %v1350 = vrot.slane %v1340, 1
        %v1351 = vsel %vm210, %v1348, %v1350
        %v1356 = vrot.slane %v1337, 2
        %v1357 = vrot.slane %v1338, 2
        %v1358 = vsel %vm222, %v1356, %v1357
        %v1359 = vrot.slane %v1339, 2
        %v1360 = vsel %vm222, %v1357, %v1359
        %v1361 = vrot.slane %v1340, 2
        %v1362 = vsel %vm222, %v1359, %v1361
        %v1367 = vrot.slane %v1337, 3
        %v1368 = vrot.slane %v1338, 3
        %v1369 = vsel %vm234, %v1367, %v1368
        %v1370 = vrot.slane %v1339, 3
        %v1371 = vsel %vm234, %v1368, %v1370
        %v1372 = vrot.slane %v1340, 3
        %v1373 = vsel %vm234, %v1370, %v1372
        %v1378 = vrot.slane %v1337, 4
        %v1379 = vrot.slane %v1338, 4
        %v1380 = vsel %vm246, %v1378, %v1379
        %v1381 = vrot.slane %v1339, 4
        %v1382 = vsel %vm246, %v1379, %v1381
        %v1383 = vrot.slane %v1340, 4
        %v1384 = vsel %vm246, %v1381, %v1383
        %s1389 = scalar_lea.vmem %s1, 2560
        %v1390 = vld [vmem:[%s1389] sm:$0xff]
        %v1391 = vld [vmem:[%s1389 + $0x8] sm:$0xff]
        %v1392 = vld [vmem:[%s1389 + $0x10] sm:$0xff]
        %v1393 = vld [vmem:[%s1389 + $0x18] sm:$0xff]
        %v1394 = vld [vmem:[%s1389 + $0x20] sm:$0xff]
        %v1395 = vld [vmem:[%s1389 + $0x28] sm:$0xff]
        %v1396 = vld [vmem:[%s1389 + $0x30] sm:$0xff]
        %v1397 = vld [vmem:[%s1389 + $0x38] sm:$0xff]
        %v1398 = vld [vmem:[%s1389 + $0x40] sm:$0xff]
        %v1399 = vld [vmem:[%s1389 + $0x48] sm:$0xff]
        %v1400 = vld [vmem:[%s1389 + $0x50] sm:$0xff]
        %v1401 = vld [vmem:[%s1389 + $0x58] sm:$0xff]
        %v1402 = vld [vmem:[%s1389 + $0x60] sm:$0xff]
        %v1403 = vld [vmem:[%s1389 + $0x68] sm:$0xff]
        %v1404 = vld [vmem:[%s1389 + $0x70] sm:$0xff]
        %v1405 = vld [vmem:[%s1389 + $0x78] sm:$0xff]
        %v1406 = vld [vmem:[%s1389 + $0x80] sm:$0xff]
        %v1407 = vld [vmem:[%s1389 + $0x88] sm:$0xff]
        %v1408 = vld [vmem:[%s1389 + $0x90] sm:$0xff]
        %v1409 = vld [vmem:[%s1389 + $0x98] sm:$0xff]
        %v1410 = vld [vmem:[%s1389 + $0xa0] sm:$0xff]
        %v1411 = vld [vmem:[%s1389 + $0xa8] sm:$0xff]
        %v1412 = vld [vmem:[%s1389 + $0xb0] sm:$0xff]
        %v1413 = vld [vmem:[%s1389 + $0xb8] sm:$0xff]
        %v1414 = vld [vmem:[%s1389 + $0xc0] sm:$0xff]
        %v1415 = vld [vmem:[%s1389 + $0xc8] sm:$0xff]
        %v1416 = vld [vmem:[%s1389 + $0xd0] sm:$0xff]
        %v1417 = vld [vmem:[%s1389 + $0xd8] sm:$0xff]
        %v1418 = vld [vmem:[%s1389 + $0xe0] sm:$0xff]
        %v1419 = vld [vmem:[%s1389 + $0xe8] sm:$0xff]
        %v1420 = vld [vmem:[%s1389 + $0xf0] sm:$0xff]
        %v1421 = vld [vmem:[%s1389 + $0xf8] sm:$0xff]
        %v1422 = vld [vmem:[%s1389 + $0x100] sm:$0xff]
        %v1423 = vld [vmem:[%s1389 + $0x108] sm:$0xff]
        %v1424 = vld [vmem:[%s1389 + $0x110] sm:$0xff]
        %v1425 = vld [vmem:[%s1389 + $0x118] sm:$0xff]
        %v1426 = vld [vmem:[%s1389 + $0x120] sm:$0xff]
        %v1427 = vld [vmem:[%s1389 + $0x128] sm:$0xff]
        %v1428 = vld [vmem:[%s1389 + $0x130] sm:$0xff]
        %v1429 = vld [vmem:[%s1389 + $0x138] sm:$0xff]
        %v1430 = vld [vmem:[%s1389 + $0x140] sm:$0xff]
        %v1431 = vld [vmem:[%s1389 + $0x148] sm:$0xff]
        %v1432 = vld [vmem:[%s1389 + $0x150] sm:$0xff]
        %v1433 = vld [vmem:[%s1389 + $0x158] sm:$0xff]
        %v1434 = vld [vmem:[%s1389 + $0x160] sm:$0xff]
        %v1435 = vld [vmem:[%s1389 + $0x168] sm:$0xff]
        %v1436 = vld [vmem:[%s1389 + $0x170] sm:$0xff]
        %v1437 = vld [vmem:[%s1389 + $0x178] sm:$0xff]
        %v1438 = vld [vmem:[%s1389 + $0x180] sm:$0xff]
        %v1439 = vld [vmem:[%s1389 + $0x188] sm:$0xff]
        %v1440 = vld [vmem:[%s1389 + $0x190] sm:$0xff]
        %v1441 = vld [vmem:[%s1389 + $0x198] sm:$0xff]
        %v1442 = vld [vmem:[%s1389 + $0x1a0] sm:$0xff]
        %v1443 = vld [vmem:[%s1389 + $0x1a8] sm:$0xff]
        %v1444 = vld [vmem:[%s1389 + $0x1b0] sm:$0xff]
        %v1445 = vld [vmem:[%s1389 + $0x1b8] sm:$0xff]
        %v1446 = vld [vmem:[%s1389 + $0x1c0] sm:$0xff]
        %v1447 = vld [vmem:[%s1389 + $0x1c8] sm:$0xff]
        %v1448 = vld [vmem:[%s1389 + $0x1d0] sm:$0xff]
        %v1449 = vld [vmem:[%s1389 + $0x1d8] sm:$0xff]
        %v1450 = vld [vmem:[%s1389 + $0x1e0] sm:$0xff]
        %v1451 = vld [vmem:[%s1389 + $0x1e8] sm:$0xff]
        %v1452 = vld [vmem:[%s1389 + $0x1f0] sm:$0xff]
        %v1453 = vld [vmem:[%s1389 + $0x1f8] sm:$0xff]
        %v1454 = vld [vmem:[%s1389 + $0x200] sm:$0xff]
        %v1455 = vld [vmem:[%s1389 + $0x208] sm:$0xff]
        %v1456 = vld [vmem:[%s1389 + $0x210] sm:$0xff]
        %v1457 = vld [vmem:[%s1389 + $0x218] sm:$0xff]
        %v1458 = vld [vmem:[%s1389 + $0x220] sm:$0xff]
        %v1459 = vld [vmem:[%s1389 + $0x228] sm:$0xff]
        %v1460 = vld [vmem:[%s1389 + $0x230] sm:$0xff]
        %v1461 = vld [vmem:[%s1389 + $0x238] sm:$0xff]
        %v1462 = vld [vmem:[%s1389 + $0x240] sm:$0xff]
        %v1463 = vld [vmem:[%s1389 + $0x248] sm:$0xff]
        %v1464 = vld [vmem:[%s1389 + $0x250] sm:$0xff]
        %v1465 = vld [vmem:[%s1389 + $0x258] sm:$0xff]
        %v1466 = vld [vmem:[%s1389 + $0x260] sm:$0xff]
        %v1467 = vld [vmem:[%s1389 + $0x268] sm:$0xff]
        %v1468 = vld [vmem:[%s1389 + $0x270] sm:$0xff]
        %v1469 = vld [vmem:[%s1389 + $0x278] sm:$0xff]
        %1470 = vmatpush.msra.mxu0 %v1405
        %1471 = vmatpush.msra.mxu0 %v1404
        %1472 = vmatpush.msra.mxu0 %v1403
        %1473 = vmatpush.msra.mxu0 %v1402
        %1474 = vmatpush.msra.mxu0 %v1401
        %1475 = vmatpush.msra.mxu0 %v1400
        %1476 = vmatpush.msra.mxu0 %v1399
        %1477 = vmatpush.msra.mxu0 %v1398
        %1478 = vmatpush.msra.mxu0 %v1397
        %1479 = vmatpush.msra.mxu0 %v1396
        %1480 = vmatpush.msra.mxu0 %v1395
        %1481 = vmatpush.msra.mxu0 %v1394
        %1482 = vmatpush.msra.mxu0 %v1393
        %1483 = vmatpush.msra.mxu0 %v1392
        %1484 = vmatpush.msra.mxu0 %v1391
        %1485 = vmatpush.msra.mxu0 %v1390
        %1486 = vmatmul.f32.gmra.mxu0 %v1337
        %v1487 = vpop.f32.mrf.mxu0
        %v1488 = vadd.f32 0.0, %v1487
        %1489 = vmatmul.f32.gmra.mxu0 %v1338
        %v1490 = vpop.f32.mrf.mxu0
        %v1491 = vadd.f32 0.0, %v1490
        %1492 = vmatmul.f32.gmra.mxu0 %v1339
        %v1493 = vpop.f32.mrf.mxu0
        %v1494 = vadd.f32 0.0, %v1493
        %1495 = vmatmul.f32.gmra.mxu0 %v1340
        %v1496 = vpop.f32.mrf.mxu0
        %v1497 = vadd.f32 0.0, %v1496
        %1498 = vdwg.mxu0
        %1499 = vmatpush.msra.mxu0 %v1421
        %1500 = vmatpush.msra.mxu0 %v1420
        %1501 = vmatpush.msra.mxu0 %v1419
        %1502 = vmatpush.msra.mxu0 %v1418
        %1503 = vmatpush.msra.mxu0 %v1417
        %1504 = vmatpush.msra.mxu0 %v1416
        %1505 = vmatpush.msra.mxu0 %v1415
        %1506 = vmatpush.msra.mxu0 %v1414
        %1507 = vmatpush.msra.mxu0 %v1413
        %1508 = vmatpush.msra.mxu0 %v1412
        %1509 = vmatpush.msra.mxu0 %v1411
        %1510 = vmatpush.msra.mxu0 %v1410
        %1511 = vmatpush.msra.mxu0 %v1409
        %1512 = vmatpush.msra.mxu0 %v1408
        %1513 = vmatpush.msra.mxu0 %v1407
        %1514 = vmatpush.msra.mxu0 %v1406
        %1515 = vmatmul.f32.gmra.mxu0 %v1347
        %v1516 = vpop.f32.mrf.mxu0
        %v1517 = vadd.f32 %v1488, %v1516
        %1518 = vmatmul.f32.gmra.mxu0 %v1349
        %v1519 = vpop.f32.mrf.mxu0
        %v1520 = vadd.f32 %v1491, %v1519
        %1521 = vmatmul.f32.gmra.mxu0 %v1351
        %v1522 = vpop.f32.mrf.mxu0
        %v1523 = vadd.f32 %v1494, %v1522
        %1524 = vmatmul.f32.gmra.mxu0 %v1350
        %v1525 = vpop.f32.mrf.mxu0
        %v1526 = vadd.f32 %v1497, %v1525
        %1527 = vdwg.mxu0
        %1528 = vmatpush.msra.mxu0 %v1437
        %1529 = vmatpush.msra.mxu0 %v1436
        %1530 = vmatpush.msra.mxu0 %v1435
        %1531 = vmatpush.msra.mxu0 %v1434
        %1532 = vmatpush.msra.mxu0 %v1433
        %1533 = vmatpush.msra.mxu0 %v1432
        %1534 = vmatpush.msra.mxu0 %v1431
        %1535 = vmatpush.msra.mxu0 %v1430
        %1536 = vmatpush.msra.mxu0 %v1429
        %1537 = vmatpush.msra.mxu0 %v1428
        %1538 = vmatpush.msra.mxu0 %v1427
        %1539 = vmatpush.msra.mxu0 %v1426
        %1540 = vmatpush.msra.mxu0 %v1425
        %1541 = vmatpush.msra.mxu0 %v1424
        %1542 = vmatpush.msra.mxu0 %v1423
        %1543 = vmatpush.msra.mxu0 %v1422
        %1544 = vmatmul.f32.gmra.mxu0 %v1358
        %v1545 = vpop.f32.mrf.mxu0
        %v1546 = vadd.f32 %v1517, %v1545
        %1547 = vmatmul.f32.gmra.mxu0 %v1360
        %v1548 = vpop.f32.mrf.mxu0
        %v1549 = vadd.f32 %v1520, %v1548
        %1550 = vmatmul.f32.gmra.mxu0 %v1362
        %v1551 = vpop.f32.mrf.mxu0
        %v1552 = vadd.f32 %v1523, %v1551
        %1553 = vmatmul.f32.gmra.mxu0 %v1361
        %v1554 = vpop.f32.mrf.mxu0
        %v1555 = vadd.f32 %v1526, %v1554
        %1556 = vdwg.mxu0
        %1557 = vmatpush.msra.mxu0 %v1453
        %1558 = vmatpush.msra.mxu0 %v1452
        %1559 = vmatpush.msra.mxu0 %v1451
        %1560 = vmatpush.msra.mxu0 %v1450
        %1561 = vmatpush.msra.mxu0 %v1449
        %1562 = vmatpush.msra.mxu0 %v1448
        %1563 = vmatpush.msra.mxu0 %v1447
        %1564 = vmatpush.msra.mxu0 %v1446
        %1565 = vmatpush.msra.mxu0 %v1445
        %1566 = vmatpush.msra.mxu0 %v1444
        %1567 = vmatpush.msra.mxu0 %v1443
        %1568 = vmatpush.msra.mxu0 %v1442
        %1569 = vmatpush.msra.mxu0 %v1441
        %1570 = vmatpush.msra.mxu0 %v1440
        %1571 = vmatpush.msra.mxu0 %v1439
        %1572 = vmatpush.msra.mxu0 %v1438
        %1573 = vmatmul.f32.gmra.mxu0 %v1369
        %v1574 = vpop.f32.mrf.mxu0
        %v1575 = vadd.f32 %v1546, %v1574
        %1576 = vmatmul.f32.gmra.mxu0 %v1371
        %v1577 = vpop.f32.mrf.mxu0
        %v1578 = vadd.f32 %v1549, %v1577
        %1579 = vmatmul.f32.gmra.mxu0 %v1373
        %v1580 = vpop.f32.mrf.mxu0
        %v1581 = vadd.f32 %v1552, %v1580
        %1582 = vmatmul.f32.gmra.mxu0 %v1372
        %v1583 = vpop.f32.mrf.mxu0
        %v1584 = vadd.f32 %v1555, %v1583
        %1585 = vdwg.mxu0
        %1586 = vmatpush.msra.mxu0 %v1469
        %1587 = vmatpush.msra.mxu0 %v1468
        %1588 = vmatpush.msra.mxu0 %v1467
        %1589 = vmatpush.msra.mxu0 %v1466
        %1590 = vmatpush.msra.mxu0 %v1465
        %1591 = vmatpush.msra.mxu0 %v1464
        %1592 = vmatpush.msra.mxu0 %v1463
        %1593 = vmatpush.msra.mxu0 %v1462
        %1594 = vmatpush.msra.mxu0 %v1461
        %1595 = vmatpush.msra.mxu0 %v1460
        %1596 = vmatpush.msra.mxu0 %v1459
        %1597 = vmatpush.msra.mxu0 %v1458
        %1598 = vmatpush.msra.mxu0 %v1457
        %1599 = vmatpush.msra.mxu0 %v1456
        %1600 = vmatpush.msra.mxu0 %v1455
        %1601 = vmatpush.msra.mxu0 %v1454
        %1602 = vmatmul.f32.gmra.mxu0 %v1380
        %v1603 = vpop.f32.mrf.mxu0
        %v1604 = vadd.f32 %v1575, %v1603
        %1605 = vmatmul.f32.gmra.mxu0 %v1382
        %v1606 = vpop.f32.mrf.mxu0
        %v1607 = vadd.f32 %v1578, %v1606
        %1608 = vmatmul.f32.gmra.mxu0 %v1384
        %v1609 = vpop.f32.mrf.mxu0
        %v1610 = vadd.f32 %v1581, %v1609
        %1611 = vmatmul.f32.gmra.mxu0 %v1383
        %v1612 = vpop.f32.mrf.mxu0
        %v1613 = vadd.f32 %v1584, %v1612
        %1614 = vdwg.mxu0
        %v1615 = vadd.f32 %v1330, %v1604
        %v1616 = vadd.f32 %v1331, %v1607
        %v1617 = vadd.f32 %v1332, %v1610
        %v1618 = vadd.f32 %v1333, %v1613
        %v1620 = vperm.slane %v171, 0
        %v1622 = vadd.f32 %v1615, %v1620
        %v1623 = vadd.f32 %v1616, %v1620
        %v1624 = vadd.f32 %v1617, %v1620
        %v1625 = vadd.f32 %v1618, %v1620
        %v1626 = vmax.f32 %v1622, 0.0
        %v1627 = vmax.f32 %v1623, 0.0
        %v1628 = vmax.f32 %v1624, 0.0
        %v1629 = vmax.f32 %v1625, 0.0
        %1630 = vmatpush.msra.mxu0 %v409
        %1631 = vmatpush.msra.mxu0 %v408
        %1632 = vmatpush.msra.mxu0 %v407
        %1633 = vmatpush.msra.mxu0 %v406
        %1634 = vmatpush.msra.mxu0 %v405
        %1635 = vmatpush.msra.mxu0 %v404
        %1636 = vmatpush.msra.mxu0 %v403
        %1637 = vmatpush.msra.mxu0 %v402
        %1638 = vmatpush.msra.mxu0 %v401
        %1639 = vmatpush.msra.mxu0 %v400
        %1640 = vmatpush.msra.mxu0 %v399
        %1641 = vmatpush.msra.mxu0 %v398
        %1642 = vmatpush.msra.mxu0 %v397
        %1643 = vmatpush.msra.mxu0 %v396
        %1644 = vmatpush.msra.mxu0 %v395
        %1645 = vmatpush.msra.mxu0 %v394
        %1646 = vmatmul.f32.gmra.mxu0 %v767
        %v1647 = vpop.f32.mrf.mxu0
        %v1648 = vadd.f32 0.0, %v1647
        %1649 = vmatmul.f32.gmra.mxu0 %v768
        %v1650 = vpop.f32.mrf.mxu0
        %v1651 = vadd.f32 0.0, %v1650
        %1652 = vmatmul.f32.gmra.mxu0 %v769
        %v1653 = vpop.f32.mrf.mxu0
        %v1654 = vadd.f32 0.0, %v1653
        %1655 = vmatmul.f32.gmra.mxu0 %v770
        %v1656 = vpop.f32.mrf.mxu0
        %v1657 = vadd.f32 0.0, %v1656
        %1658 = vdwg.mxu0
        %1659 = vmatpush.msra.mxu0 %v425
        %1660 = vmatpush.msra.mxu0 %v424
        %1661 = vmatpush.msra.mxu0 %v423
        %1662 = vmatpush.msra.mxu0 %v422
        %1663 = vmatpush.msra.mxu0 %v421
        %1664 = vmatpush.msra.mxu0 %v420
        %1665 = vmatpush.msra.mxu0 %v419
        %1666 = vmatpush.msra.mxu0 %v418
        %1667 = vmatpush.msra.mxu0 %v417
        %1668 = vmatpush.msra.mxu0 %v416
        %1669 = vmatpush.msra.mxu0 %v415
        %1670 = vmatpush.msra.mxu0 %v414
        %1671 = vmatpush.msra.mxu0 %v413
        %1672 = vmatpush.msra.mxu0 %v412
        %1673 = vmatpush.msra.mxu0 %v411
        %1674 = vmatpush.msra.mxu0 %v410
        %1675 = vmatmul.f32.gmra.mxu0 %v777
        %v1676 = vpop.f32.mrf.mxu0
        %v1677 = vadd.f32 %v1648, %v1676
        %1678 = vmatmul.f32.gmra.mxu0 %v779
        %v1679 = vpop.f32.mrf.mxu0
        %v1680 = vadd.f32 %v1651, %v1679
        %1681 = vmatmul.f32.gmra.mxu0 %v781
        %v1682 = vpop.f32.mrf.mxu0
        %v1683 = vadd.f32 %v1654, %v1682
        %1684 = vmatmul.f32.gmra.mxu0 %v780
        %v1685 = vpop.f32.mrf.mxu0
        %v1686 = vadd.f32 %v1657, %v1685
        %1687 = vdwg.mxu0
        %1688 = vmatpush.msra.mxu0 %v441
        %1689 = vmatpush.msra.mxu0 %v440
        %1690 = vmatpush.msra.mxu0 %v439
        %1691 = vmatpush.msra.mxu0 %v438
        %1692 = vmatpush.msra.mxu0 %v437
        %1693 = vmatpush.msra.mxu0 %v436
        %1694 = vmatpush.msra.mxu0 %v435
        %1695 = vmatpush.msra.mxu0 %v434
        %1696 = vmatpush.msra.mxu0 %v433
        %1697 = vmatpush.msra.mxu0 %v432
        %1698 = vmatpush.msra.mxu0 %v431
        %1699 = vmatpush.msra.mxu0 %v430
        %1700 = vmatpush.msra.mxu0 %v429
        %1701 = vmatpush.msra.mxu0 %v428
        %1702 = vmatpush.msra.mxu0 %v427
        %1703 = vmatpush.msra.mxu0 %v426
        %1704 = vmatmul.f32.gmra.mxu0 %v788
        %v1705 = vpop.f32.mrf.mxu0
        %v1706 = vadd.f32 %v1677, %v1705
        %1707 = vmatmul.f32.gmra.mxu0 %v790
        %v1708 = vpop.f32.mrf.mxu0
        %v1709 = vadd.f32 %v1680, %v1708
        %1710 = vmatmul.f32.gmra.mxu0 %v792
        %v1711 = vpop.f32.mrf.mxu0
        %v1712 = vadd.f32 %v1683, %v1711
        %1713 = vmatmul.f32.gmra.mxu0 %v791
        %v1714 = vpop.f32.mrf.mxu0
        %v1715 = vadd.f32 %v1686, %v1714
        %1716 = vdwg.mxu0
        %1717 = vmatpush.msra.mxu0 %v457
        %1718 = vmatpush.msra.mxu0 %v456
        %1719 = vmatpush.msra.mxu0 %v455
        %1720 = vmatpush.msra.mxu0 %v454
        %1721 = vmatpush.msra.mxu0 %v453
        %1722 = vmatpush.msra.mxu0 %v452
        %1723 = vmatpush.msra.mxu0 %v451
        %1724 = vmatpush.msra.mxu0 %v450
        %1725 = vmatpush.msra.mxu0 %v449
        %1726 = vmatpush.msra.mxu0 %v448
        %1727 = vmatpush.msra.mxu0 %v447
        %1728 = vmatpush.msra.mxu0 %v446
        %1729 = vmatpush.msra.mxu0 %v445
        %1730 = vmatpush.msra.mxu0 %v444
        %1731 = vmatpush.msra.mxu0 %v443
        %1732 = vmatpush.msra.mxu0 %v442
        %1733 = vmatmul.f32.gmra.mxu0 %v799
        %v1734 = vpop.f32.mrf.mxu0
        %v1735 = vadd.f32 %v1706, %v1734
        %1736 = vmatmul.f32.gmra.mxu0 %v801
        %v1737 = vpop.f32.mrf.mxu0
        %v1738 = vadd.f32 %v1709, %v1737
        %1739 = vmatmul.f32.gmra.mxu0 %v803
        %v1740 = vpop.f32.mrf.mxu0
        %v1741 = vadd.f32 %v1712, %v1740
        %1742 = vmatmul.f32.gmra.mxu0 %v802
        %v1743 = vpop.f32.mrf.mxu0
        %v1744 = vadd.f32 %v1715, %v1743
        %1745 = vdwg.mxu0
        %1746 = vmatpush.msra.mxu0 %v473
        %1747 = vmatpush.msra.mxu0 %v472
        %1748 = vmatpush.msra.mxu0 %v471
        %1749 = vmatpush.msra.mxu0 %v470
        %1750 = vmatpush.msra.mxu0 %v469
        %1751 = vmatpush.msra.mxu0 %v468
        %1752 = vmatpush.msra.mxu0 %v467
        %1753 = vmatpush.msra.mxu0 %v466
        %1754 = vmatpush.msra.mxu0 %v465
        %1755 = vmatpush.msra.mxu0 %v464
        %1756 = vmatpush.msra.mxu0 %v463
        %1757 = vmatpush.msra.mxu0 %v462
        %1758 = vmatpush.msra.mxu0 %v461
        %1759 = vmatpush.msra.mxu0 %v460
        %1760 = vmatpush.msra.mxu0 %v459
        %1761 = vmatpush.msra.mxu0 %v458
        %1762 = vmatmul.f32.gmra.mxu0 %v810
        %v1763 = vpop.f32.mrf.mxu0
        %v1764 = vadd.f32 %v1735, %v1763
        %1765 = vmatmul.f32.gmra.mxu0 %v812
        %v1766 = vpop.f32.mrf.mxu0
        %v1767 = vadd.f32 %v1738, %v1766
        %1768 = vmatmul.f32.gmra.mxu0 %v814
        %v1769 = vpop.f32.mrf.mxu0
        %v1770 = vadd.f32 %v1741, %v1769
        %1771 = vmatmul.f32.gmra.mxu0 %v813
        %v1772 = vpop.f32.mrf.mxu0
        %v1773 = vadd.f32 %v1744, %v1772
        %1774 = vdwg.mxu0
        %1775 = vmatpush.msra.mxu0 %v273
        %1776 = vmatpush.msra.mxu0 %v272
        %1777 = vmatpush.msra.mxu0 %v271
        %1778 = vmatpush.msra.mxu0 %v270
        %1779 = vmatpush.msra.mxu0 %v269
        %1780 = vmatpush.msra.mxu0 %v268
        %1781 = vmatpush.msra.mxu0 %v267
        %1782 = vmatpush.msra.mxu0 %v266
        %1783 = vmatpush.msra.mxu0 %v265
        %1784 = vmatpush.msra.mxu0 %v264
        %1785 = vmatpush.msra.mxu0 %v263
        %1786 = vmatpush.msra.mxu0 %v262
        %1787 = vmatpush.msra.mxu0 %v261
        %1788 = vmatpush.msra.mxu0 %v260
        %1789 = vmatpush.msra.mxu0 %v259
        %1790 = vmatpush.msra.mxu0 %v258
        %1791 = vmatmul.f32.gmra.mxu0 %v341
        %v1792 = vpop.f32.mrf.mxu0
        %v1793 = vadd.f32 %v1764, %v1792
        %1794 = vmatmul.f32.gmra.mxu0 %v342
        %v1795 = vpop.f32.mrf.mxu0
        %v1796 = vadd.f32 %v1767, %v1795
        %1797 = vmatmul.f32.gmra.mxu0 %v343
        %v1798 = vpop.f32.mrf.mxu0
        %v1799 = vadd.f32 %v1770, %v1798
        %1800 = vmatmul.f32.gmra.mxu0 %v344
        %v1801 = vpop.f32.mrf.mxu0
        %v1802 = vadd.f32 %v1773, %v1801
        %1803 = vdwg.mxu0
        %1804 = vmatpush.msra.mxu0 %v289
        %1805 = vmatpush.msra.mxu0 %v288
        %1806 = vmatpush.msra.mxu0 %v287
        %1807 = vmatpush.msra.mxu0 %v286
        %1808 = vmatpush.msra.mxu0 %v285
        %1809 = vmatpush.msra.mxu0 %v284
        %1810 = vmatpush.msra.mxu0 %v283
        %1811 = vmatpush.msra.mxu0 %v282
        %1812 = vmatpush.msra.mxu0 %v281
        %1813 = vmatpush.msra.mxu0 %v280
        %1814 = vmatpush.msra.mxu0 %v279
        %1815 = vmatpush.msra.mxu0 %v278
        %1816 = vmatpush.msra.mxu0 %v277
        %1817 = vmatpush.msra.mxu0 %v276
        %1818 = vmatpush.msra.mxu0 %v275
        %1819 = vmatpush.msra.mxu0 %v274
        %1820 = vmatmul.f32.gmra.mxu0 %v351
        %v1821 = vpop.f32.mrf.mxu0
        %v1822 = vadd.f32 %v1793, %v1821
        %1823 = vmatmul.f32.gmra.mxu0 %v353
        %v1824 = vpop.f32.mrf.mxu0
        %v1825 = vadd.f32 %v1796, %v1824
        %1826 = vmatmul.f32.gmra.mxu0 %v355
        %v1827 = vpop.f32.mrf.mxu0
        %v1828 = vadd.f32 %v1799, %v1827
        %1829 = vmatmul.f32.gmra.mxu0 %v354
        %v1830 = vpop.f32.mrf.mxu0
        %v1831 = vadd.f32 %v1802, %v1830
        %1832 = vdwg.mxu0
        %1833 = vmatpush.msra.mxu0 %v305
        %1834 = vmatpush.msra.mxu0 %v304
        %1835 = vmatpush.msra.mxu0 %v303
        %1836 = vmatpush.msra.mxu0 %v302
        %1837 = vmatpush.msra.mxu0 %v301
        %1838 = vmatpush.msra.mxu0 %v300
        %1839 = vmatpush.msra.mxu0 %v299
        %1840 = vmatpush.msra.mxu0 %v298
        %1841 = vmatpush.msra.mxu0 %v297
        %1842 = vmatpush.msra.mxu0 %v296
        %1843 = vmatpush.msra.mxu0 %v295
        %1844 = vmatpush.msra.mxu0 %v294
        %1845 = vmatpush.msra.mxu0 %v293
        %1846 = vmatpush.msra.mxu0 %v292
        %1847 = vmatpush.msra.mxu0 %v291
        %1848 = vmatpush.msra.mxu0 %v290
        %1849 = vmatmul.f32.gmra.mxu0 %v362
        %v1850 = vpop.f32.mrf.mxu0
        %v1851 = vadd.f32 %v1822, %v1850
        %1852 = vmatmul.f32.gmra.mxu0 %v364
        %v1853 = vpop.f32.mrf.mxu0
        %v1854 = vadd.f32 %v1825, %v1853
        %1855 = vmatmul.f32.gmra.mxu0 %v366
        %v1856 = vpop.f32.mrf.mxu0
        %v1857 = vadd.f32 %v1828, %v1856
        %1858 = vmatmul.f32.gmra.mxu0 %v365
        %v1859 = vpop.f32.mrf.mxu0
        %v1860 = vadd.f32 %v1831, %v1859
        %1861 = vdwg.mxu0
        %1862 = vmatpush.msra.mxu0 %v321
        %1863 = vmatpush.msra.mxu0 %v320
        %1864 = vmatpush.msra.mxu0 %v319
        %1865 = vmatpush.msra.mxu0 %v318
        %1866 = vmatpush.msra.mxu0 %v317
        %1867 = vmatpush.msra.mxu0 %v316
        %1868 = vmatpush.msra.mxu0 %v315
        %1869 = vmatpush.msra.mxu0 %v314
        %1870 = vmatpush.msra.mxu0 %v313
        %1871 = vmatpush.msra.mxu0 %v312
        %1872 = vmatpush.msra.mxu0 %v311
        %1873 = vmatpush.msra.mxu0 %v310
        %1874 = vmatpush.msra.mxu0 %v309
        %1875 = vmatpush.msra.mxu0 %v308
        %1876 = vmatpush.msra.mxu0 %v307
        %1877 = vmatpush.msra.mxu0 %v306
        %1878 = vmatmul.f32.gmra.mxu0 %v373
        %v1879 = vpop.f32.mrf.mxu0
        %v1880 = vadd.f32 %v1851, %v1879
        %1881 = vmatmul.f32.gmra.mxu0 %v375
        %v1882 = vpop.f32.mrf.mxu0
        %v1883 = vadd.f32 %v1854, %v1882
        %1884 = vmatmul.f32.gmra.mxu0 %v377
        %v1885 = vpop.f32.mrf.mxu0
        %v1886 = vadd.f32 %v1857, %v1885
        %1887 = vmatmul.f32.gmra.mxu0 %v376
        %v1888 = vpop.f32.mrf.mxu0
        %v1889 = vadd.f32 %v1860, %v1888
        %1890 = vdwg.mxu0
        %1891 = vmatpush.msra.mxu0 %v337
        %1892 = vmatpush.msra.mxu0 %v336
        %1893 = vmatpush.msra.mxu0 %v335
        %1894 = vmatpush.msra.mxu0 %v334
        %1895 = vmatpush.msra.mxu0 %v333
        %1896 = vmatpush.msra.mxu0 %v332
        %1897 = vmatpush.msra.mxu0 %v331
        %1898 = vmatpush.msra.mxu0 %v330
        %1899 = vmatpush.msra.mxu0 %v329
        %1900 = vmatpush.msra.mxu0 %v328
        %1901 = vmatpush.msra.mxu0 %v327
        %1902 = vmatpush.msra.mxu0 %v326
        %1903 = vmatpush.msra.mxu0 %v325
        %1904 = vmatpush.msra.mxu0 %v324
        %1905 = vmatpush.msra.mxu0 %v323
        %1906 = vmatpush.msra.mxu0 %v322
        %1907 = vmatmul.f32.gmra.mxu0 %v384
        %v1908 = vpop.f32.mrf.mxu0
        %v1909 = vadd.f32 %v1880, %v1908
        %1910 = vmatmul.f32.gmra.mxu0 %v386
        %v1911 = vpop.f32.mrf.mxu0
        %v1912 = vadd.f32 %v1883, %v1911
        %1913 = vmatmul.f32.gmra.mxu0 %v388
        %v1914 = vpop.f32.mrf.mxu0
        %v1915 = vadd.f32 %v1886, %v1914
        %1916 = vmatmul.f32.gmra.mxu0 %v387
        %v1917 = vpop.f32.mrf.mxu0
        %v1918 = vadd.f32 %v1889, %v1917
        %1919 = vdwg.mxu0
        %1920 = vmatpush.msra.mxu0 %v835
        %1921 = vmatpush.msra.mxu0 %v834
        %1922 = vmatpush.msra.mxu0 %v833
        %1923 = vmatpush.msra.mxu0 %v832
        %1924 = vmatpush.msra.mxu0 %v831
        %1925 = vmatpush.msra.mxu0 %v830
        %1926 = vmatpush.msra.mxu0 %v829
        %1927 = vmatpush.msra.mxu0 %v828
        %1928 = vmatpush.msra.mxu0 %v827
        %1929 = vmatpush.msra.mxu0 %v826
        %1930 = vmatpush.msra.mxu0 %v825
        %1931 = vmatpush.msra.mxu0 %v824
        %1932 = vmatpush.msra.mxu0 %v823
        %1933 = vmatpush.msra.mxu0 %v822
        %1934 = vmatpush.msra.mxu0 %v821
        %1935 = vmatpush.msra.mxu0 %v820
        %1936 = vmatmul.f32.gmra.mxu0 %v1052
        %v1937 = vpop.f32.mrf.mxu0
        %v1938 = vadd.f32 0.0, %v1937
        %1939 = vmatmul.f32.gmra.mxu0 %v1053
        %v1940 = vpop.f32.mrf.mxu0
        %v1941 = vadd.f32 0.0, %v1940
        %1942 = vmatmul.f32.gmra.mxu0 %v1054
        %v1943 = vpop.f32.mrf.mxu0
        %v1944 = vadd.f32 0.0, %v1943
        %1945 = vmatmul.f32.gmra.mxu0 %v1055
        %v1946 = vpop.f32.mrf.mxu0
        %v1947 = vadd.f32 0.0, %v1946
        %1948 = vdwg.mxu0
        %1949 = vmatpush.msra.mxu0 %v851
        %1950 = vmatpush.msra.mxu0 %v850
        %1951 = vmatpush.msra.mxu0 %v849
        %1952 = vmatpush.msra.mxu0 %v848
        %1953 = vmatpush.msra.mxu0 %v847
        %1954 = vmatpush.msra.mxu0 %v846
        %1955 = vmatpush.msra.mxu0 %v845
        %1956 = vmatpush.msra.mxu0 %v844
        %1957 = vmatpush.msra.mxu0 %v843
        %1958 = vmatpush.msra.mxu0 %v842
        %1959 = vmatpush.msra.mxu0 %v841
        %1960 = vmatpush.msra.mxu0 %v840
        %1961 = vmatpush.msra.mxu0 %v839
        %1962 = vmatpush.msra.mxu0 %v838
        %1963 = vmatpush.msra.mxu0 %v837
        %1964 = vmatpush.msra.mxu0 %v836
        %1965 = vmatmul.f32.gmra.mxu0 %v1062
        %v1966 = vpop.f32.mrf.mxu0
        %v1967 = vadd.f32 %v1938, %v1966
        %1968 = vmatmul.f32.gmra.mxu0 %v1064
        %v1969 = vpop.f32.mrf.mxu0
        %v1970 = vadd.f32 %v1941, %v1969
        %1971 = vmatmul.f32.gmra.mxu0 %v1066
        %v1972 = vpop.f32.mrf.mxu0
        %v1973 = vadd.f32 %v1944, %v1972
        %1974 = vmatmul.f32.gmra.mxu0 %v1065
        %v1975 = vpop.f32.mrf.mxu0
        %v1976 = vadd.f32 %v1947, %v1975
        %1977 = vdwg.mxu0
        %1978 = vmatpush.msra.mxu0 %v867
        %1979 = vmatpush.msra.mxu0 %v866
        %1980 = vmatpush.msra.mxu0 %v865
        %1981 = vmatpush.msra.mxu0 %v864
        %1982 = vmatpush.msra.mxu0 %v863
        %1983 = vmatpush.msra.mxu0 %v862
        %1984 = vmatpush.msra.mxu0 %v861
        %1985 = vmatpush.msra.mxu0 %v860
        %1986 = vmatpush.msra.mxu0 %v859
        %1987 = vmatpush.msra.mxu0 %v858
        %1988 = vmatpush.msra.mxu0 %v857
        %1989 = vmatpush.msra.mxu0 %v856
        %1990 = vmatpush.msra.mxu0 %v855
        %1991 = vmatpush.msra.mxu0 %v854
        %1992 = vmatpush.msra.mxu0 %v853
        %1993 = vmatpush.msra.mxu0 %v852
        %1994 = vmatmul.f32.gmra.mxu0 %v1073
        %v1995 = vpop.f32.mrf.mxu0
        %v1996 = vadd.f32 %v1967, %v1995
        %1997 = vmatmul.f32.gmra.mxu0 %v1075
        %v1998 = vpop.f32.mrf.mxu0
        %v1999 = vadd.f32 %v1970, %v1998
        %2000 = vmatmul.f32.gmra.mxu0 %v1077
        %v2001 = vpop.f32.mrf.mxu0
        %v2002 = vadd.f32 %v1973, %v2001
        %2003 = vmatmul.f32.gmra.mxu0 %v1076
        %v2004 = vpop.f32.mrf.mxu0
        %v2005 = vadd.f32 %v1976, %v2004
        %2006 = vdwg.mxu0
        %2007 = vmatpush.msra.mxu0 %v883
        %2008 = vmatpush.msra.mxu0 %v882
        %2009 = vmatpush.msra.mxu0 %v881
        %2010 = vmatpush.msra.mxu0 %v880
        %2011 = vmatpush.msra.mxu0 %v879
        %2012 = vmatpush.msra.mxu0 %v878
        %2013 = vmatpush.msra.mxu0 %v877
        %2014 = vmatpush.msra.mxu0 %v876
        %2015 = vmatpush.msra.mxu0 %v875
        %2016 = vmatpush.msra.mxu0 %v874
        %2017 = vmatpush.msra.mxu0 %v873
        %2018 = vmatpush.msra.mxu0 %v872
        %2019 = vmatpush.msra.mxu0 %v871
        %2020 = vmatpush.msra.mxu0 %v870
        %2021 = vmatpush.msra.mxu0 %v869
        %2022 = vmatpush.msra.mxu0 %v868
        %2023 = vmatmul.f32.gmra.mxu0 %v1084
        %v2024 = vpop.f32.mrf.mxu0
        %v2025 = vadd.f32 %v1996, %v2024
        %2026 = vmatmul.f32.gmra.mxu0 %v1086
        %v2027 = vpop.f32.mrf.mxu0
        %v2028 = vadd.f32 %v1999, %v2027
        %2029 = vmatmul.f32.gmra.mxu0 %v1088
        %v2030 = vpop.f32.mrf.mxu0
        %v2031 = vadd.f32 %v2002, %v2030
        %2032 = vmatmul.f32.gmra.mxu0 %v1087
        %v2033 = vpop.f32.mrf.mxu0
        %v2034 = vadd.f32 %v2005, %v2033
        %2035 = vdwg.mxu0
        %2036 = vmatpush.msra.mxu0 %v899
        %2037 = vmatpush.msra.mxu0 %v898
        %2038 = vmatpush.msra.mxu0 %v897
        %2039 = vmatpush.msra.mxu0 %v896
        %2040 = vmatpush.msra.mxu0 %v895
        %2041 = vmatpush.msra.mxu0 %v894
        %2042 = vmatpush.msra.mxu0 %v893
        %2043 = vmatpush.msra.mxu0 %v892
        %2044 = vmatpush.msra.mxu0 %v891
        %2045 = vmatpush.msra.mxu0 %v890
        %2046 = vmatpush.msra.mxu0 %v889
        %2047 = vmatpush.msra.mxu0 %v888
        %2048 = vmatpush.msra.mxu0 %v887
        %2049 = vmatpush.msra.mxu0 %v886
        %2050 = vmatpush.msra.mxu0 %v885
        %2051 = vmatpush.msra.mxu0 %v884
        %2052 = vmatmul.f32.gmra.mxu0 %v1095
        %v2053 = vpop.f32.mrf.mxu0
        %v2054 = vadd.f32 %v2025, %v2053
        %2055 = vmatmul.f32.gmra.mxu0 %v1097
        %v2056 = vpop.f32.mrf.mxu0
        %v2057 = vadd.f32 %v2028, %v2056
        %2058 = vmatmul.f32.gmra.mxu0 %v1099
        %v2059 = vpop.f32.mrf.mxu0
        %v2060 = vadd.f32 %v2031, %v2059
        %2061 = vmatmul.f32.gmra.mxu0 %v1098
        %v2062 = vpop.f32.mrf.mxu0
        %v2063 = vadd.f32 %v2034, %v2062
        %2064 = vdwg.mxu0
        %v2065 = vadd.f32 %v1909, %v2054
        %v2066 = vadd.f32 %v1912, %v2057
        %v2067 = vadd.f32 %v1915, %v2060
        %v2068 = vadd.f32 %v1918, %v2063
        %2069 = vmatpush.msra.mxu0 %v1120
        %2070 = vmatpush.msra.mxu0 %v1119
        %2071 = vmatpush.msra.mxu0 %v1118
        %2072 = vmatpush.msra.mxu0 %v1117
        %2073 = vmatpush.msra.mxu0 %v1116
        %2074 = vmatpush.msra.mxu0 %v1115
        %2075 = vmatpush.msra.mxu0 %v1114
        %2076 = vmatpush.msra.mxu0 %v1113
        %2077 = vmatpush.msra.mxu0 %v1112
        %2078 = vmatpush.msra.mxu0 %v1111
        %2079 = vmatpush.msra.mxu0 %v1110
        %2080 = vmatpush.msra.mxu0 %v1109
        %2081 = vmatpush.msra.mxu0 %v1108
        %2082 = vmatpush.msra.mxu0 %v1107
        %2083 = vmatpush.msra.mxu0 %v1106
        %2084 = vmatpush.msra.mxu0 %v1105
        %2085 = vmatmul.f32.gmra.mxu0 %v1337
        %v2086 = vpop.f32.mrf.mxu0
        %v2087 = vadd.f32 0.0, %v2086
        %2088 = vmatmul.f32.gmra.mxu0 %v1338
        %v2089 = vpop.f32.mrf.mxu0
        %v2090 = vadd.f32 0.0, %v2089
        %2091 = vmatmul.f32.gmra.mxu0 %v1339
        %v2092 = vpop.f32.mrf.mxu0
        %v2093 = vadd.f32 0.0, %v2092
        %2094 = vmatmul.f32.gmra.mxu0 %v1340
        %v2095 = vpop.f32.mrf.mxu0
        %v2096 = vadd.f32 0.0, %v2095
        %2097 = vdwg.mxu0
        %2098 = vmatpush.msra.mxu0 %v1136
        %2099 = vmatpush.msra.mxu0 %v1135
        %2100 = vmatpush.msra.mxu0 %v1134
        %2101 = vmatpush.msra.mxu0 %v1133
        %2102 = vmatpush.msra.mxu0 %v1132
        %2103 = vmatpush.msra.mxu0 %v1131
        %2104 = vmatpush.msra.mxu0 %v1130
        %2105 = vmatpush.msra.mxu0 %v1129
        %2106 = vmatpush.msra.mxu0 %v1128
        %2107 = vmatpush.msra.mxu0 %v1127
        %2108 = vmatpush.msra.mxu0 %v1126
        %2109 = vmatpush.msra.mxu0 %v1125
        %2110 = vmatpush.msra.mxu0 %v1124
        %2111 = vmatpush.msra.mxu0 %v1123
        %2112 = vmatpush.msra.mxu0 %v1122
        %2113 = vmatpush.msra.mxu0 %v1121
        %2114 = vmatmul.f32.gmra.mxu0 %v1347
        %v2115 = vpop.f32.mrf.mxu0
        %v2116 = vadd.f32 %v2087, %v2115
        %2117 = vmatmul.f32.gmra.mxu0 %v1349
        %v2118 = vpop.f32.mrf.mxu0
        %v2119 = vadd.f32 %v2090, %v2118
        %2120 = vmatmul.f32.gmra.mxu0 %v1351
        %v2121 = vpop.f32.mrf.mxu0
        %v2122 = vadd.f32 %v2093, %v2121
        %2123 = vmatmul.f32.gmra.mxu0 %v1350
        %v2124 = vpop.f32.mrf.mxu0
        %v2125 = vadd.f32 %v2096, %v2124
        %2126 = vdwg.mxu0
        %2127 = vmatpush.msra.mxu0 %v1152
        %2128 = vmatpush.msra.mxu0 %v1151
        %2129 = vmatpush.msra.mxu0 %v1150
        %2130 = vmatpush.msra.mxu0 %v1149
        %2131 = vmatpush.msra.mxu0 %v1148
        %2132 = vmatpush.msra.mxu0 %v1147
        %2133 = vmatpush.msra.mxu0 %v1146
        %2134 = vmatpush.msra.mxu0 %v1145
        %2135 = vmatpush.msra.mxu0 %v1144
        %2136 = vmatpush.msra.mxu0 %v1143
        %2137 = vmatpush.msra.mxu0 %v1142
        %2138 = vmatpush.msra.mxu0 %v1141
        %2139 = vmatpush.msra.mxu0 %v1140
        %2140 = vmatpush.msra.mxu0 %v1139
        %2141 = vmatpush.msra.mxu0 %v1138
        %2142 = vmatpush.msra.mxu0 %v1137
        %2143 = vmatmul.f32.gmra.mxu0 %v1358
        %v2144 = vpop.f32.mrf.mxu0
        %v2145 = vadd.f32 %v2116, %v2144
        %2146 = vmatmul.f32.gmra.mxu0 %v1360
        %v2147 = vpop.f32.mrf.mxu0
        %v2148 = vadd.f32 %v2119, %v2147
        %2149 = vmatmul.f32.gmra.mxu0 %v1362
        %v2150 = vpop.f32.mrf.mxu0
        %v2151 = vadd.f32 %v2122, %v2150
        %2152 = vmatmul.f32.gmra.mxu0 %v1361
        %v2153 = vpop.f32.mrf.mxu0
        %v2154 = vadd.f32 %v2125, %v2153
        %2155 = vdwg.mxu0
        %2156 = vmatpush.msra.mxu0 %v1168
        %2157 = vmatpush.msra.mxu0 %v1167
        %2158 = vmatpush.msra.mxu0 %v1166
        %2159 = vmatpush.msra.mxu0 %v1165
        %2160 = vmatpush.msra.mxu0 %v1164
        %2161 = vmatpush.msra.mxu0 %v1163
        %2162 = vmatpush.msra.mxu0 %v1162
        %2163 = vmatpush.msra.mxu0 %v1161
        %2164 = vmatpush.msra.mxu0 %v1160
        %2165 = vmatpush.msra.mxu0 %v1159
        %2166 = vmatpush.msra.mxu0 %v1158
        %2167 = vmatpush.msra.mxu0 %v1157
        %2168 = vmatpush.msra.mxu0 %v1156
        %2169 = vmatpush.msra.mxu0 %v1155
        %2170 = vmatpush.msra.mxu0 %v1154
        %2171 = vmatpush.msra.mxu0 %v1153
        %2172 = vmatmul.f32.gmra.mxu0 %v1369
        %v2173 = vpop.f32.mrf.mxu0
        %v2174 = vadd.f32 %v2145, %v2173
        %2175 = vmatmul.f32.gmra.mxu0 %v1371
        %v2176 = vpop.f32.mrf.mxu0
        %v2177 = vadd.f32 %v2148, %v2176
        %2178 = vmatmul.f32.gmra.mxu0 %v1373
        %v2179 = vpop.f32.mrf.mxu0
        %v2180 = vadd.f32 %v2151, %v2179
        %2181 = vmatmul.f32.gmra.mxu0 %v1372
        %v2182 = vpop.f32.mrf.mxu0
        %v2183 = vadd.f32 %v2154, %v2182
        %2184 = vdwg.mxu0
        %2185 = vmatpush.msra.mxu0 %v1184
        %2186 = vmatpush.msra.mxu0 %v1183
        %2187 = vmatpush.msra.mxu0 %v1182
        %2188 = vmatpush.msra.mxu0 %v1181
        %2189 = vmatpush.msra.mxu0 %v1180
        %2190 = vmatpush.msra.mxu0 %v1179
        %2191 = vmatpush.msra.mxu0 %v1178
        %2192 = vmatpush.msra.mxu0 %v1177
        %2193 = vmatpush.msra.mxu0 %v1176
        %2194 = vmatpush.msra.mxu0 %v1175
        %2195 = vmatpush.msra.mxu0 %v1174
        %2196 = vmatpush.msra.mxu0 %v1173
        %2197 = vmatpush.msra.mxu0 %v1172
        %2198 = vmatpush.msra.mxu0 %v1171
        %2199 = vmatpush.msra.mxu0 %v1170
        %2200 = vmatpush.msra.mxu0 %v1169
        %2201 = vmatmul.f32.gmra.mxu0 %v1380
        %v2202 = vpop.f32.mrf.mxu0
        %v2203 = vadd.f32 %v2174, %v2202
        %2204 = vmatmul.f32.gmra.mxu0 %v1382
        %v2205 = vpop.f32.mrf.mxu0
        %v2206 = vadd.f32 %v2177, %v2205
        %2207 = vmatmul.f32.gmra.mxu0 %v1384
        %v2208 = vpop.f32.mrf.mxu0
        %v2209 = vadd.f32 %v2180, %v2208
        %2210 = vmatmul.f32.gmra.mxu0 %v1383
        %v2211 = vpop.f32.mrf.mxu0
        %v2212 = vadd.f32 %v2183, %v2211
        %2213 = vdwg.mxu0
        %v2214 = vadd.f32 %v2065, %v2203
        %v2215 = vadd.f32 %v2066, %v2206
        %v2216 = vadd.f32 %v2067, %v2209
        %v2217 = vadd.f32 %v2068, %v2212
        %s2218 = sadd.s32 %s199, 5
        %s2219 = smul.u32 %s2218, 32
        %s2220 = scalar_lea.vmem %s165, %s2219
        %v2221 = vld [vmem:[%s2220] sm:$0xff]
        %v2222 = vld [vmem:[%s2220 + $0x8] sm:$0xff]
        %v2223 = vld [vmem:[%s2220 + $0x10] sm:$0xff]
        %v2224 = vld [vmem:[%s2220 + $0x18] sm:$0xff]
        %v2229 = vrot.slane %v2221, 1
        %v2230 = vrot.slane %v2222, 1
        %v2231 = vsel %vm210, %v2229, %v2230
        %v2232 = vrot.slane %v2223, 1
        %v2233 = vsel %vm210, %v2230, %v2232
        %v2234 = vrot.slane %v2224, 1
        %v2235 = vsel %vm210, %v2232, %v2234
        %v2240 = vrot.slane %v2221, 2
        %v2241 = vrot.slane %v2222, 2
        %v2242 = vsel %vm222, %v2240, %v2241
        %v2243 = vrot.slane %v2223, 2
        %v2244 = vsel %vm222, %v2241, %v2243
        %v2245 = vrot.slane %v2224, 2
        %v2246 = vsel %vm222, %v2243, %v2245
        %v2251 = vrot.slane %v2221, 3
        %v2252 = vrot.slane %v2222, 3
        %v2253 = vsel %vm234, %v2251, %v2252
        %v2254 = vrot.slane %v2223, 3
        %v2255 = vsel %vm234, %v2252, %v2254
        %v2256 = vrot.slane %v2224, 3
        %v2257 = vsel %vm234, %v2254, %v2256
        %v2262 = vrot.slane %v2221, 4
        %v2263 = vrot.slane %v2222, 4
        %v2264 = vsel %vm246, %v2262, %v2263
        %v2265 = vrot.slane %v2223, 4
        %v2266 = vsel %vm246, %v2263, %v2265
        %v2267 = vrot.slane %v2224, 4
        %v2268 = vsel %vm246, %v2265, %v2267
        %2273 = vmatpush.msra.mxu0 %v1405
        %2274 = vmatpush.msra.mxu0 %v1404
        %2275 = vmatpush.msra.mxu0 %v1403
        %2276 = vmatpush.msra.mxu0 %v1402
        %2277 = vmatpush.msra.mxu0 %v1401
        %2278 = vmatpush.msra.mxu0 %v1400
        %2279 = vmatpush.msra.mxu0 %v1399
        %2280 = vmatpush.msra.mxu0 %v1398
        %2281 = vmatpush.msra.mxu0 %v1397
        %2282 = vmatpush.msra.mxu0 %v1396
        %2283 = vmatpush.msra.mxu0 %v1395
        %2284 = vmatpush.msra.mxu0 %v1394
        %2285 = vmatpush.msra.mxu0 %v1393
        %2286 = vmatpush.msra.mxu0 %v1392
        %2287 = vmatpush.msra.mxu0 %v1391
        %2288 = vmatpush.msra.mxu0 %v1390
        %2289 = vmatmul.f32.gmra.mxu0 %v2221
        %v2290 = vpop.f32.mrf.mxu0
        %v2291 = vadd.f32 0.0, %v2290
        %2292 = vmatmul.f32.gmra.mxu0 %v2222
        %v2293 = vpop.f32.mrf.mxu0
        %v2294 = vadd.f32 0.0, %v2293
        %2295 = vmatmul.f32.gmra.mxu0 %v2223
        %v2296 = vpop.f32.mrf.mxu0
        %v2297 = vadd.f32 0.0, %v2296
        %2298 = vmatmul.f32.gmra.mxu0 %v2224
        %v2299 = vpop.f32.mrf.mxu0
        %v2300 = vadd.f32 0.0, %v2299
        %2301 = vdwg.mxu0
        %2302 = vmatpush.msra.mxu0 %v1421
        %2303 = vmatpush.msra.mxu0 %v1420
        %2304 = vmatpush.msra.mxu0 %v1419
        %2305 = vmatpush.msra.mxu0 %v1418
        %2306 = vmatpush.msra.mxu0 %v1417
        %2307 = vmatpush.msra.mxu0 %v1416
        %2308 = vmatpush.msra.mxu0 %v1415
        %2309 = vmatpush.msra.mxu0 %v1414
        %2310 = vmatpush.msra.mxu0 %v1413
        %2311 = vmatpush.msra.mxu0 %v1412
        %2312 = vmatpush.msra.mxu0 %v1411
        %2313 = vmatpush.msra.mxu0 %v1410
        %2314 = vmatpush.msra.mxu0 %v1409
        %2315 = vmatpush.msra.mxu0 %v1408
        %2316 = vmatpush.msra.mxu0 %v1407
        %2317 = vmatpush.msra.mxu0 %v1406
        %2318 = vmatmul.f32.gmra.mxu0 %v2231
        %v2319 = vpop.f32.mrf.mxu0
        %v2320 = vadd.f32 %v2291, %v2319
        %2321 = vmatmul.f32.gmra.mxu0 %v2233
        %v2322 = vpop.f32.mrf.mxu0
        %v2323 = vadd.f32 %v2294, %v2322
        %2324 = vmatmul.f32.gmra.mxu0 %v2235
        %v2325 = vpop.f32.mrf.mxu0
        %v2326 = vadd.f32 %v2297, %v2325
        %2327 = vmatmul.f32.gmra.mxu0 %v2234
        %v2328 = vpop.f32.mrf.mxu0
        %v2329 = vadd.f32 %v2300, %v2328
        %2330 = vdwg.mxu0
        %2331 = vmatpush.msra.mxu0 %v1437
        %2332 = vmatpush.msra.mxu0 %v1436
        %2333 = vmatpush.msra.mxu0 %v1435
        %2334 = vmatpush.msra.mxu0 %v1434
        %2335 = vmatpush.msra.mxu0 %v1433
        %2336 = vmatpush.msra.mxu0 %v1432
        %2337 = vmatpush.msra.mxu0 %v1431
        %2338 = vmatpush.msra.mxu0 %v1430
        %2339 = vmatpush.msra.mxu0 %v1429
        %2340 = vmatpush.msra.mxu0 %v1428
        %2341 = vmatpush.msra.mxu0 %v1427
        %2342 = vmatpush.msra.mxu0 %v1426
        %2343 = vmatpush.msra.mxu0 %v1425
        %2344 = vmatpush.msra.mxu0 %v1424
        %2345 = vmatpush.msra.mxu0 %v1423
        %2346 = vmatpush.msra.mxu0 %v1422
        %2347 = vmatmul.f32.gmra.mxu0 %v2242
        %v2348 = vpop.f32.mrf.mxu0
        %v2349 = vadd.f32 %v2320, %v2348
        %2350 = vmatmul.f32.gmra.mxu0 %v2244
        %v2351 = vpop.f32.mrf.mxu0
        %v2352 = vadd.f32 %v2323, %v2351
        %2353 = vmatmul.f32.gmra.mxu0 %v2246
        %v2354 = vpop.f32.mrf.mxu0
        %v2355 = vadd.f32 %v2326, %v2354
        %2356 = vmatmul.f32.gmra.mxu0 %v2245
        %v2357 = vpop.f32.mrf.mxu0
        %v2358 = vadd.f32 %v2329, %v2357
        %2359 = vdwg.mxu0
        %2360 = vmatpush.msra.mxu0 %v1453
        %2361 = vmatpush.msra.mxu0 %v1452
        %2362 = vmatpush.msra.mxu0 %v1451
        %2363 = vmatpush.msra.mxu0 %v1450
        %2364 = vmatpush.msra.mxu0 %v1449
        %2365 = vmatpush.msra.mxu0 %v1448
        %2366 = vmatpush.msra.mxu0 %v1447
        %2367 = vmatpush.msra.mxu0 %v1446
        %2368 = vmatpush.msra.mxu0 %v1445
        %2369 = vmatpush.msra.mxu0 %v1444
        %2370 = vmatpush.msra.mxu0 %v1443
        %2371 = vmatpush.msra.mxu0 %v1442
        %2372 = vmatpush.msra.mxu0 %v1441
        %2373 = vmatpush.msra.mxu0 %v1440
        %2374 = vmatpush.msra.mxu0 %v1439
        %2375 = vmatpush.msra.mxu0 %v1438
        %2376 = vmatmul.f32.gmra.mxu0 %v2253
        %v2377 = vpop.f32.mrf.mxu0
        %v2378 = vadd.f32 %v2349, %v2377
        %2379 = vmatmul.f32.gmra.mxu0 %v2255
        %v2380 = vpop.f32.mrf.mxu0
        %v2381 = vadd.f32 %v2352, %v2380
        %2382 = vmatmul.f32.gmra.mxu0 %v2257
        %v2383 = vpop.f32.mrf.mxu0
        %v2384 = vadd.f32 %v2355, %v2383
        %2385 = vmatmul.f32.gmra.mxu0 %v2256
        %v2386 = vpop.f32.mrf.mxu0
        %v2387 = vadd.f32 %v2358, %v2386
        %2388 = vdwg.mxu0
        %2389 = vmatpush.msra.mxu0 %v1469
        %2390 = vmatpush.msra.mxu0 %v1468
        %2391 = vmatpush.msra.mxu0 %v1467
        %2392 = vmatpush.msra.mxu0 %v1466
        %2393 = vmatpush.msra.mxu0 %v1465
        %2394 = vmatpush.msra.mxu0 %v1464
        %2395 = vmatpush.msra.mxu0 %v1463
        %2396 = vmatpush.msra.mxu0 %v1462
        %2397 = vmatpush.msra.mxu0 %v1461
        %2398 = vmatpush.msra.mxu0 %v1460
        %2399 = vmatpush.msra.mxu0 %v1459
        %2400 = vmatpush.msra.mxu0 %v1458
        %2401 = vmatpush.msra.mxu0 %v1457
        %2402 = vmatpush.msra.mxu0 %v1456
        %2403 = vmatpush.msra.mxu0 %v1455
        %2404 = vmatpush.msra.mxu0 %v1454
        %2405 = vmatmul.f32.gmra.mxu0 %v2264
        %v2406 = vpop.f32.mrf.mxu0
        %v2407 = vadd.f32 %v2378, %v2406
        %2408 = vmatmul.f32.gmra.mxu0 %v2266
        %v2409 = vpop.f32.mrf.mxu0
        %v2410 = vadd.f32 %v2381, %v2409
        %2411 = vmatmul.f32.gmra.mxu0 %v2268
        %v2412 = vpop.f32.mrf.mxu0
        %v2413 = vadd.f32 %v2384, %v2412
        %2414 = vmatmul.f32.gmra.mxu0 %v2267
        %v2415 = vpop.f32.mrf.mxu0
        %v2416 = vadd.f32 %v2387, %v2415
        %2417 = vdwg.mxu0
        %v2418 = vadd.f32 %v2214, %v2407
        %v2419 = vadd.f32 %v2215, %v2410
        %v2420 = vadd.f32 %v2216, %v2413
        %v2421 = vadd.f32 %v2217, %v2416
        %v2422 = vadd.f32 %v2418, %v1620
        %v2423 = vadd.f32 %v2419, %v1620
        %v2424 = vadd.f32 %v2420, %v1620
        %v2425 = vadd.f32 %v2421, %v1620
        %v2426 = vmax.f32 %v2422, 0.0
        %v2427 = vmax.f32 %v2423, 0.0
        %v2428 = vmax.f32 %v2424, 0.0
        %v2429 = vmax.f32 %v2425, 0.0
        %v2430 = vmax.f32 %v1626, %v2426
        %v2431 = vmax.f32 %v1627, %v2427
        %v2432 = vmax.f32 %v1628, %v2428
        %v2433 = vmax.f32 %v1629, %v2429
        %vm2434 = vcmask 228352
        %v2436 = vsel %vm2434, %v183, 0
        %v2439 = vsel %vm2434, %v184, 0
        %v2442 = vsel %vm246, %v2433, 0
        %2444 = vmatpush.msra.mxu0 0.0
        %2445 = vmatpush.msra.mxu0 0.0
        %2446 = vmatpush.msra.mxu0 0.0
        %2447 = vmatpush.msra.mxu0 0.0
        %2448 = vmatpush.msra.mxu0 0.0
        %2449 = vmatpush.msra.mxu0 0.0
        %2450 = vmatpush.msra.mxu0 0.0
        %2451 = vmatpush.msra.mxu0 0.0
        %2452 = vmatpush.msra.mxu0 0.0
        %2453 = vmatpush.msra.mxu0 0.0
        %2454 = vmatpush.msra.mxu0 0.0
        %2455 = vmatpush.msra.mxu0 0.0
        %2456 = vmatpush.msra.mxu0 %v2442
        %2457 = vmatpush.msra.mxu0 %v2432
        %2458 = vmatpush.msra.mxu0 %v2431
        %2459 = vmatpush.msra.mxu0 %v2430
        %2460 = vmatmul.f32.gmra.mxu0 %v2436
        %v2461 = vpop.f32.mrf.mxu0
        %v2462 = vadd.f32 0.0, %v2461
        %2463 = vmatmul.f32.gmra.mxu0 %v2439
        %v2464 = vpop.f32.mrf.mxu0
        %v2465 = vadd.f32 0.0, %v2464
        %2466 = vdwg.mxu0
        %v2468 = vsel %vm2434, %v191, 0
        %v2471 = vsel %vm2434, %v192, 0
        %2473 = vmatpush.msra.mxu0 0.0
        %2474 = vmatpush.msra.mxu0 0.0
        %2475 = vmatpush.msra.mxu0 0.0
        %2476 = vmatpush.msra.mxu0 0.0
        %2477 = vmatpush.msra.mxu0 0.0
        %2478 = vmatpush.msra.mxu0 0.0
        %2479 = vmatpush.msra.mxu0 0.0
        %2480 = vmatpush.msra.mxu0 0.0
        %2481 = vmatpush.msra.mxu0 0.0
        %2482 = vmatpush.msra.mxu0 0.0
        %2483 = vmatpush.msra.mxu0 0.0
        %2484 = vmatpush.msra.mxu0 0.0
        %2485 = vmatpush.msra.mxu0 %v2442
        %2486 = vmatpush.msra.mxu0 %v2432
        %2487 = vmatpush.msra.mxu0 %v2431
        %2488 = vmatpush.msra.mxu0 %v2430
        %2489 = vmatmul.f32.gmra.mxu0 %v2468
        %v2490 = vpop.f32.mrf.mxu0
        %v2491 = vadd.f32 0.0, %v2490
        %2492 = vmatmul.f32.gmra.mxu0 %v2471
        %v2493 = vpop.f32.mrf.mxu0
        %v2494 = vadd.f32 0.0, %v2493
        %2495 = vdwg.mxu0
        %v2496 = vmax.f32 %v2462, %v2491
        %v2497 = vmax.f32 %v2465, %v2494
        %s2498 = smul.u32 %s194, 16
        %s2499 = scalar_lea.vmem %s170, %s2498
        %2500 = vst [vmem:[%s2499] sm:$0xff] %v2496
        %2501 = vst [vmem:[%s2499 + $0x8] sm:$0x3f] %v2497
      $region37: #{lenet_forward.3} parent=31 // loop_footer
        %s198 = sadd.s32 1, %s194
      $region38: #{lenet_forward.3} parent=31 // loop_footer_branch
        %193 = sbr.rel target = $region34
      $region39: #{lenet_forward.3} parent=31 // loop_exit
        _
      %p2502 = scmp.lt.s32.totalorder %s14, 1
      %s2503 = scalar_select %p2502, %s14, 1
      %s2504 = smul.addr %s2503, 28
      %s2505 = smul.addr %s2504, 8
      %s2506 = scalar_lea.vmem %s3, %s2505
      // Predicated region
      $region40: #{lenet_forward.3} parent=31 // pred_check
        %p2507 = pneg %p100
      $region41: #{lenet_forward.3} parent=31 // pred_check_branch
        %2509 = sbr.rel (%p2507) target = $region43
      $region42: #{lenet_forward.3} parent=31 // pred_region
        _
      $region43: #{lenet_forward.3} parent=31 // pred_fallthru
        _
    $region32: #{lenet_forward.3} parent=5 // pred_fallthru
      _
    %p2510 = scmp.le.s32.totalorder 2, %s9
    // Predicated region
    $region44: #{lenet_forward.3} parent=5 // pred_check
      %p2511 = pneg %p2510
    $region45: #{lenet_forward.3} parent=5 // pred_check_branch
      %2513 = sbr.rel (%p2511) target = $region47
    $region46: #{lenet_forward.3} parent=5 // pred_region
      %s2514 = ssub.s32 %s9, 2
      // Predicated region
      $region48: #{lenet_forward.3} parent=46 // pred_check
        %p2515 = pneg %p106
      $region49: #{lenet_forward.3} parent=46 // pred_check_branch
        %2517 = sbr.rel (%p2515) target = $region51
      $region50: #{lenet_forward.3} parent=46 // pred_region
        %p2518 = scmp.lt.s32.totalorder %s15, 1
        %s2519 = scalar_select %p2518, %s15, 1
        %s2520 = smul.addr %s2519, 28
        %s2521 = smul.addr %s2520, 8
        %s2522 = scalar_lea.vmem %s3, %s2521
      $region51: #{lenet_forward.3} parent=46 // pred_fallthru
        _
    $region47: #{lenet_forward.3} parent=5 // pred_fallthru
      _
  $region6: #{lenet_forward.3} parent=0 // loop_footer
    %s13 = sadd.s32 1, %s9
  $region7: #{lenet_forward.3} parent=0 // loop_footer_branch
    %8 = sbr.rel target = $region3
  $region8: #{lenet_forward.3} parent=0 // loop_exit
    _

// kernel: lenet_forward.5
$region0: #{lenet_forward.5}
  #allocation0 [shape = 'u32[]', space=smem, size = 0x4, offset = 0x4, fixed_abs, tag = 'smem constant byte address 0x4 - core index']
  #allocation1 [shape = 'u32[72,128]{1,0:T(1,128)}', space=vmem, size = 0x9000, scoped, tag = 'internal scratch']
  %s0 = inlined_call_operand.vmem [shape: f32[2,3200], index: 0, kind: input, shape index: {}]
  %s1 = inlined_call_operand.vmem [shape: f32[3200,128], index: 1, kind: input, shape index: {}]
  %s2 = inlined_call_operand.vmem [shape: f32[1,128], index: 2, kind: input, shape index: {}]
  %s3 = inlined_call_operand.vmem [shape: f32[128,128], index: 3, kind: input, shape index: {}]
  %s4 = inlined_call_operand.vmem [shape: f32[1,128], index: 4, kind: input, shape index: {}]
  %s5 = inlined_call_operand.vmem [shape: f32[128,128], index: 5, kind: input, shape index: {}]
  %s6 = inlined_call_operand.vmem [shape: f32[1,128], index: 6, kind: input, shape index: {}]
  %s7 = inlined_call_operand.hbm [shape: f32[2,128], index: 7, kind: output, shape index: {}]
  %s8 = sld [smem:[#allocation0]]
  $region38: #{lenet_forward.5} parent=0
    _
  %s10 = ssub.s32 1, %s8
  %s11 = scalar_select 0, %s10, %s8
  $region1: #{lenet_forward.5} parent=0
    #allocation2 [shape = 'u8[1024]{0}', space=vmem, size = 0x400, scoped, tag = 'output window, operand 0, single buffered']
    #allocation3 [shape = 's32[1]{0}', space=sflag, size = 0x4, scoped, tag = 'scoped memory for lenet_forward.5']
    %12 = vsyncpa [#allocation3], 0
    // Predicated region
    $region2: #{lenet_forward.5} parent=1 // pred_check
      _
    $region3: #{lenet_forward.5} parent=1 // pred_check_branch
      %14 = sbr.rel (0) target = $region5
    $region4: #{lenet_forward.5} parent=1 // pred_region
      _
    $region5: #{lenet_forward.5} parent=1 // pred_fallthru
      _
    // Predicated region
    $region6: #{lenet_forward.5} parent=1 // pred_check
      _
    $region7: #{lenet_forward.5} parent=1 // pred_check_branch
      %16 = sbr.rel (0) target = $region9
    $region8: #{lenet_forward.5} parent=1 // pred_region
      _
    $region9: #{lenet_forward.5} parent=1 // pred_fallthru
      _
    // Predicated region
    $region10: #{lenet_forward.5} parent=1 // pred_check
      _
    $region11: #{lenet_forward.5} parent=1 // pred_check_branch
      %18 = sbr.rel (0) target = $region13
    $region12: #{lenet_forward.5} parent=1 // pred_region
      _
    $region13: #{lenet_forward.5} parent=1 // pred_fallthru
      _
    // Predicated region
    $region14: #{lenet_forward.5} parent=1 // pred_check
      _
    $region15: #{lenet_forward.5} parent=1 // pred_check_branch
      %20 = sbr.rel (0) target = $region17
    $region16: #{lenet_forward.5} parent=1 // pred_region
      _
    $region17: #{lenet_forward.5} parent=1 // pred_fallthru
      _
    // Predicated region
    $region18: #{lenet_forward.5} parent=1 // pred_check
      _
    $region19: #{lenet_forward.5} parent=1 // pred_check_branch
      %22 = sbr.rel (0) target = $region21
    $region20: #{lenet_forward.5} parent=1 // pred_region
      _
    $region21: #{lenet_forward.5} parent=1 // pred_fallthru
      _
    // Predicated region
    $region22: #{lenet_forward.5} parent=1 // pred_check
      _
    $region23: #{lenet_forward.5} parent=1 // pred_check_branch
      %24 = sbr.rel (0) target = $region25
    $region24: #{lenet_forward.5} parent=1 // pred_region
      _
    $region25: #{lenet_forward.5} parent=1 // pred_fallthru
      _
    // Predicated region
    $region26: #{lenet_forward.5} parent=1 // pred_check
      _
    $region27: #{lenet_forward.5} parent=1 // pred_check_branch
      %26 = sbr.rel (0) target = $region29
    $region28: #{lenet_forward.5} parent=1 // pred_region
      _
    $region29: #{lenet_forward.5} parent=1 // pred_fallthru
      _
    %v27 = vld [vmem:[%s0] sm:$0xff]
    %v28 = vld [vmem:[%s0 + $0x8] sm:$0xff]
    %v29 = vld [vmem:[%s0 + $0x10] sm:$0xff]
    %v30 = vld [vmem:[%s0 + $0x18] sm:$0xff]
    %v31 = vld [vmem:[%s0 + $0x20] sm:$0xff]
    %v32 = vld [vmem:[%s0 + $0x28] sm:$0xff]
    %v33 = vld [vmem:[%s0 + $0x30] sm:$0x3]
    %v34 = vld [vmem:[%s1] sm:$0xff]
    %v35 = vld [vmem:[%s1 + $0x8] sm:$0xff]
    %v36 = vld [vmem:[%s1 + $0x10] sm:$0xff]
    %v37 = vld [vmem:[%s1 + $0x18] sm:$0xff]
    %v38 = vld [vmem:[%s1 + $0x20] sm:$0xff]
    %v39 = vld [vmem:[%s1 + $0x28] sm:$0xff]
    %v40 = vld [vmem:[%s1 + $0x30] sm:$0xff]
    %v41 = vld [vmem:[%s1 + $0x38] sm:$0xff]
    %v42 = vld [vmem:[%s1 + $0x40] sm:$0xff]
    %v43 = vld [vmem:[%s1 + $0x48] sm:$0xff]
    %v44 = vld [vmem:[%s1 + $0x50] sm:$0xff]
    %v45 = vld [vmem:[%s1 + $0x58] sm:$0xff]
    %v46 = vld [vmem:[%s1 + $0x60] sm:$0xff]
    %v47 = vld [vmem:[%s1 + $0x68] sm:$0xff]
    %v48 = vld [vmem:[%s1 + $0x70] sm:$0xff]
    %v49 = vld [vmem:[%s1 + $0x78] sm:$0xff]
    %v50 = vld [vmem:[%s1 + $0x80] sm:$0xff]
    %v51 = vld [vmem:[%s1 + $0x88] sm:$0xff]
    %v52 = vld [vmem:[%s1 + $0x90] sm:$0xff]
    %v53 = vld [vmem:[%s1 + $0x98] sm:$0xff]
    %v54 = vld [vmem:[%s1 + $0xa0] sm:$0xff]
    %v55 = vld [vmem:[%s1 + $0xa8] sm:$0xff]
    %v56 = vld [vmem:[%s1 + $0xb0] sm:$0xff]
    %v57 = vld [vmem:[%s1 + $0xb8] sm:$0xff]
    %v58 = vld [vmem:[%s1 + $0xc0] sm:$0xff]
    %v59 = vld [vmem:[%s1 + $0xc8] sm:$0xff]
    %v60 = vld [vmem:[%s1 + $0xd0] sm:$0xff]
    %v61 = vld [vmem:[%s1 + $0xd8] sm:$0xff]
    %v62 = vld [vmem:[%s1 + $0xe0] sm:$0xff]
    %v63 = vld [vmem:[%s1 + $0xe8] sm:$0xff]
    %v64 = vld [vmem:[%s1 + $0xf0] sm:$0xff]
    %v65 = vld [vmem:[%s1 + $0xf8] sm:$0xff]
    %v66 = vld [vmem:[%s1 + $0x100] sm:$0xff]
    %v67 = vld [vmem:[%s1 + $0x108] sm:$0xff]
    %v68 = vld [vmem:[%s1 + $0x110] sm:$0xff]
    %v69 = vld [vmem:[%s1 + $0x118] sm:$0xff]
    %v70 = vld [vmem:[%s1 + $0x120] sm:$0xff]
    %v71 = vld [vmem:[%s1 + $0x128] sm:$0xff]
    %v72 = vld [vmem:[%s1 + $0x130] sm:$0xff]
    %v73 = vld [vmem:[%s1 + $0x138] sm:$0xff]
    %v74 = vld [vmem:[%s1 + $0x140] sm:$0xff]
    %v75 = vld [vmem:[%s1 + $0x148] sm:$0xff]
    %v76 = vld [vmem:[%s1 + $0x150] sm:$0xff]
    %v77 = vld [vmem:[%s1 + $0x158] sm:$0xff]
    %v78 = vld [vmem:[%s1 + $0x160] sm:$0xff]
    %v79 = vld [vmem:[%s1 + $0x168] sm:$0xff]
    %v80 = vld [vmem:[%s1 + $0x170] sm:$0xff]
    %v81 = vld [vmem:[%s1 + $0x178] sm:$0xff]
    %v82 = vld [vmem:[%s1 + $0x180] sm:$0xff]
    %v83 = vld [vmem:[%s1 + $0x188] sm:$0xff]
    %v84 = vld [vmem:[%s1 + $0x190] sm:$0xff]
    %v85 = vld [vmem:[%s1 + $0x198] sm:$0xff]
    %v86 = vld [vmem:[%s1 + $0x1a0] sm:$0xff]
    %v87 = vld [vmem:[%s1 + $0x1a8] sm:$0xff]
    %v88 = vld [vmem:[%s1 + $0x1b0] sm:$0xff]
    %v89 = vld [vmem:[%s1 + $0x1b8] sm:$0xff]
    %v90 = vld [vmem:[%s1 + $0x1c0] sm:$0xff]
    %v91 = vld [vmem:[%s1 + $0x1c8] sm:$0xff]
    %v92 = vld [vmem:[%s1 + $0x1d0] sm:$0xff]
    %v93 = vld [vmem:[%s1 + $0x1d8] sm:$0xff]
    %v94 = vld [vmem:[%s1 + $0x1e0] sm:$0xff]
    %v95 = vld [vmem:[%s1 + $0x1e8] sm:$0xff]
    %v96 = vld [vmem:[%s1 + $0x1f0] sm:$0xff]
    %v97 = vld [vmem:[%s1 + $0x1f8] sm:$0xff]
    %v98 = vld [vmem:[%s1 + $0x200] sm:$0xff]
    %v99 = vld [vmem:[%s1 + $0x208] sm:$0xff]
    %v100 = vld [vmem:[%s1 + $0x210] sm:$0xff]
    %v101 = vld [vmem:[%s1 + $0x218] sm:$0xff]
    %v102 = vld [vmem:[%s1 + $0x220] sm:$0xff]
    %v103 = vld [vmem:[%s1 + $0x228] sm:$0xff]
    %v104 = vld [vmem:[%s1 + $0x230] sm:$0xff]
    %v105 = vld [vmem:[%s1 + $0x238] sm:$0xff]
    %v106 = vld [vmem:[%s1 + $0x240] sm:$0xff]
    %v107 = vld [vmem:[%s1 + $0x248] sm:$0xff]
    %v108 = vld [vmem:[%s1 + $0x250] sm:$0xff]
    %v109 = vld [vmem:[%s1 + $0x258] sm:$0xff]
    %v110 = vld [vmem:[%s1 + $0x260] sm:$0xff]
    %v111 = vld [vmem:[%s1 + $0x268] sm:$0xff]
    %v112 = vld [vmem:[%s1 + $0x270] sm:$0xff]
    %v113 = vld [vmem:[%s1 + $0x278] sm:$0xff]
    %v114 = vld [vmem:[%s1 + $0x280] sm:$0xff]
    %v115 = vld [vmem:[%s1 + $0x288] sm:$0xff]
    %v116 = vld [vmem:[%s1 + $0x290] sm:$0xff]
    %v117 = vld [vmem:[%s1 + $0x298] sm:$0xff]
    %v118 = vld [vmem:[%s1 + $0x2a0] sm:$0xff]
    %v119 = vld [vmem:[%s1 + $0x2a8] sm:$0xff]
    %v120 = vld [vmem:[%s1 + $0x2b0] sm:$0xff]
    %v121 = vld [vmem:[%s1 + $0x2b8] sm:$0xff]
    %v122 = vld [vmem:[%s1 + $0x2c0] sm:$0xff]
    %v123 = vld [vmem:[%s1 + $0x2c8] sm:$0xff]
    %v124 = vld [vmem:[%s1 + $0x2d0] sm:$0xff]
    %v125 = vld [vmem:[%s1 + $0x2d8] sm:$0xff]
    %v126 = vld [vmem:[%s1 + $0x2e0] sm:$0xff]
    %v127 = vld [vmem:[%s1 + $0x2e8] sm:$0xff]
    %v128 = vld [vmem:[%s1 + $0x2f0] sm:$0xff]
    %v129 = vld [vmem:[%s1 + $0x2f8] sm:$0xff]
    %v130 = vld [vmem:[%s1 + $0x300] sm:$0xff]
    %v131 = vld [vmem:[%s1 + $0x308] sm:$0xff]
    %v132 = vld [vmem:[%s1 + $0x310] sm:$0xff]
    %v133 = vld [vmem:[%s1 + $0x318] sm:$0xff]
    %v134 = vld [vmem:[%s1 + $0x320] sm:$0xff]
    %v135 = vld [vmem:[%s1 + $0x328] sm:$0xff]
    %v136 = vld [vmem:[%s1 + $0x330] sm:$0xff]
    %v137 = vld [vmem:[%s1 + $0x338] sm:$0xff]
    %v138 = vld [vmem:[%s1 + $0x340] sm:$0xff]
    %v139 = vld [vmem:[%s1 + $0x348] sm:$0xff]
    %v140 = vld [vmem:[%s1 + $0x350] sm:$0xff]
    %v141 = vld [vmem:[%s1 + $0x358] sm:$0xff]
    %v142 = vld [vmem:[%s1 + $0x360] sm:$0xff]
    %v143 = vld [vmem:[%s1 + $0x368] sm:$0xff]
    %v144 = vld [vmem:[%s1 + $0x370] sm:$0xff]
    %v145 = vld [vmem:[%s1 + $0x378] sm:$0xff]
    %v146 = vld [vmem:[%s1 + $0x380] sm:$0xff]
    %v147 = vld [vmem:[%s1 + $0x388] sm:$0xff]
    %v148 = vld [vmem:[%s1 + $0x390] sm:$0xff]
    %v149 = vld [vmem:[%s1 + $0x398] sm:$0xff]
    %v150 = vld [vmem:[%s1 + $0x3a0] sm:$0xff]
    %v151 = vld [vmem:[%s1 + $0x3a8] sm:$0xff]
    %v152 = vld [vmem:[%s1 + $0x3b0] sm:$0xff]
    %v153 = vld [vmem:[%s1 + $0x3b8] sm:$0xff]
    %v154 = vld [vmem:[%s1 + $0x3c0] sm:$0xff]
    %v155 = vld [vmem:[%s1 + $0x3c8] sm:$0xff]
    %v156 = vld [vmem:[%s1 + $0x3d0] sm:$0xff]
    %v157 = vld [vmem:[%s1 + $0x3d8] sm:$0xff]
    %v158 = vld [vmem:[%s1 + $0x3e0] sm:$0xff]
    %v159 = vld [vmem:[%s1 + $0x3e8] sm:$0xff]
    %v160 = vld [vmem:[%s1 + $0x3f0] sm:$0xff]
    %v161 = vld [vmem:[%s1 + $0x3f8] sm:$0xff]
    %v162 = vld [vmem:[%s1 + $0x400] sm:$0xff]
    %v163 = vld [vmem:[%s1 + $0x408] sm:$0xff]
    %v164 = vld [vmem:[%s1 + $0x410] sm:$0xff]
    %v165 = vld [vmem:[%s1 + $0x418] sm:$0xff]
    %v166 = vld [vmem:[%s1 + $0x420] sm:$0xff]
    %v167 = vld [vmem:[%s1 + $0x428] sm:$0xff]
    %v168 = vld [vmem:[%s1 + $0x430] sm:$0xff]
    %v169 = vld [vmem:[%s1 + $0x438] sm:$0xff]
    %v170 = vld [vmem:[%s1 + $0x440] sm:$0xff]
    %v171 = vld [vmem:[%s1 + $0x448] sm:$0xff]
    %v172 = vld [vmem:[%s1 + $0x450] sm:$0xff]
    %v173 = vld [vmem:[%s1 + $0x458] sm:$0xff]
    %v174 = vld [vmem:[%s1 + $0x460] sm:$0xff]
    %v175 = vld [vmem:[%s1 + $0x468] sm:$0xff]
    %v176 = vld [vmem:[%s1 + $0x470] sm:$0xff]
    %v177 = vld [vmem:[%s1 + $0x478] sm:$0xff]
    %v178 = vld [vmem:[%s1 + $0x480] sm:$0xff]
    %v179 = vld [vmem:[%s1 + $0x488] sm:$0xff]
    %v180 = vld [vmem:[%s1 + $0x490] sm:$0xff]
    %v181 = vld [vmem:[%s1 + $0x498] sm:$0xff]
    %v182 = vld [vmem:[%s1 + $0x4a0] sm:$0xff]
    %v183 = vld [vmem:[%s1 + $0x4a8] sm:$0xff]
    %v184 = vld [vmem:[%s1 + $0x4b0] sm:$0xff]
    %v185 = vld [vmem:[%s1 + $0x4b8] sm:$0xff]
    %v186 = vld [vmem:[%s1 + $0x4c0] sm:$0xff]
    %v187 = vld [vmem:[%s1 + $0x4c8] sm:$0xff]
    %v188 = vld [vmem:[%s1 + $0x4d0] sm:$0xff]
    %v189 = vld [vmem:[%s1 + $0x4d8] sm:$0xff]
    %v190 = vld [vmem:[%s1 + $0x4e0] sm:$0xff]
    %v191 = vld [vmem:[%s1 + $0x4e8] sm:$0xff]
    %v192 = vld [vmem:[%s1 + $0x4f0] sm:$0xff]
    %v193 = vld [vmem:[%s1 + $0x4f8] sm:$0xff]
    %v194 = vld [vmem:[%s1 + $0x500] sm:$0xff]
    %v195 = vld [vmem:[%s1 + $0x508] sm:$0xff]
    %v196 = vld [vmem:[%s1 + $0x510] sm:$0xff]
    %v197 = vld [vmem:[%s1 + $0x518] sm:$0xff]
    %v198 = vld [vmem:[%s1 + $0x520] sm:$0xff]
    %v199 = vld [vmem:[%s1 + $0x528] sm:$0xff]
    %v200 = vld [vmem:[%s1 + $0x530] sm:$0xff]
    %v201 = vld [vmem:[%s1 + $0x538] sm:$0xff]
    %v202 = vld [vmem:[%s1 + $0x540] sm:$0xff]
    %v203 = vld [vmem:[%s1 + $0x548] sm:$0xff]
    %v204 = vld [vmem:[%s1 + $0x550] sm:$0xff]
    %v205 = vld [vmem:[%s1 + $0x558] sm:$0xff]
    %v206 = vld [vmem:[%s1 + $0x560] sm:$0xff]
    %v207 = vld [vmem:[%s1 + $0x568] sm:$0xff]
    %v208 = vld [vmem:[%s1 + $0x570] sm:$0xff]
    %v209 = vld [vmem:[%s1 + $0x578] sm:$0xff]
    %v210 = vld [vmem:[%s1 + $0x580] sm:$0xff]
    %v211 = vld [vmem:[%s1 + $0x588] sm:$0xff]
    %v212 = vld [vmem:[%s1 + $0x590] sm:$0xff]
    %v213 = vld [vmem:[%s1 + $0x598] sm:$0xff]
    %v214 = vld [vmem:[%s1 + $0x5a0] sm:$0xff]
    %v215 = vld [vmem:[%s1 + $0x5a8] sm:$0xff]
    %v216 = vld [vmem:[%s1 + $0x5b0] sm:$0xff]
    %v217 = vld [vmem:[%s1 + $0x5b8] sm:$0xff]
    %v218 = vld [vmem:[%s1 + $0x5c0] sm:$0xff]
    %v219 = vld [vmem:[%s1 + $0x5c8] sm:$0xff]
    %v220 = vld [vmem:[%s1 + $0x5d0] sm:$0xff]
    %v221 = vld [vmem:[%s1 + $0x5d8] sm:$0xff]
    %v222 = vld [vmem:[%s1 + $0x5e0] sm:$0xff]
    %v223 = vld [vmem:[%s1 + $0x5e8] sm:$0xff]
    %v224 = vld [vmem:[%s1 + $0x5f0] sm:$0xff]
    %v225 = vld [vmem:[%s1 + $0x5f8] sm:$0xff]
    %v226 = vld [vmem:[%s1 + $0x600] sm:$0xff]
    %v227 = vld [vmem:[%s1 + $0x608] sm:$0xff]
    %v228 = vld [vmem:[%s1 + $0x610] sm:$0xff]
    %v229 = vld [vmem:[%s1 + $0x618] sm:$0xff]
    %v230 = vld [vmem:[%s1 + $0x620] sm:$0xff]
    %v231 = vld [vmem:[%s1 + $0x628] sm:$0xff]
    %v232 = vld [vmem:[%s1 + $0x630] sm:$0xff]
    %v233 = vld [vmem:[%s1 + $0x638] sm:$0xff]
    %v234 = vld [vmem:[%s1 + $0x640] sm:$0xff]
    %v235 = vld [vmem:[%s1 + $0x648] sm:$0xff]
    %v236 = vld [vmem:[%s1 + $0x650] sm:$0xff]
    %v237 = vld [vmem:[%s1 + $0x658] sm:$0xff]
    %v238 = vld [vmem:[%s1 + $0x660] sm:$0xff]
    %v239 = vld [vmem:[%s1 + $0x668] sm:$0xff]
    %v240 = vld [vmem:[%s1 + $0x670] sm:$0xff]
    %v241 = vld [vmem:[%s1 + $0x678] sm:$0xff]
    %v242 = vld [vmem:[%s1 + $0x680] sm:$0xff]
    %v243 = vld [vmem:[%s1 + $0x688] sm:$0xff]
    %v244 = vld [vmem:[%s1 + $0x690] sm:$0xff]
    %v245 = vld [vmem:[%s1 + $0x698] sm:$0xff]
    %v246 = vld [vmem:[%s1 + $0x6a0] sm:$0xff]
    %v247 = vld [vmem:[%s1 + $0x6a8] sm:$0xff]
    %v248 = vld [vmem:[%s1 + $0x6b0] sm:$0xff]
    %v249 = vld [vmem:[%s1 + $0x6b8] sm:$0xff]
    %v250 = vld [vmem:[%s1 + $0x6c0] sm:$0xff]
    %v251 = vld [vmem:[%s1 + $0x6c8] sm:$0xff]
    %v252 = vld [vmem:[%s1 + $0x6d0] sm:$0xff]
    %v253 = vld [vmem:[%s1 + $0x6d8] sm:$0xff]
    %v254 = vld [vmem:[%s1 + $0x6e0] sm:$0xff]
    %v255 = vld [vmem:[%s1 + $0x6e8] sm:$0xff]
    %v256 = vld [vmem:[%s1 + $0x6f0] sm:$0xff]
    %v257 = vld [vmem:[%s1 + $0x6f8] sm:$0xff]
    %v258 = vld [vmem:[%s1 + $0x700] sm:$0xff]
    %v259 = vld [vmem:[%s1 + $0x708] sm:$0xff]
    %v260 = vld [vmem:[%s1 + $0x710] sm:$0xff]
    %v261 = vld [vmem:[%s1 + $0x718] sm:$0xff]
    %v262 = vld [vmem:[%s1 + $0x720] sm:$0xff]
    %v263 = vld [vmem:[%s1 + $0x728] sm:$0xff]
    %v264 = vld [vmem:[%s1 + $0x730] sm:$0xff]
    %v265 = vld [vmem:[%s1 + $0x738] sm:$0xff]
    %v266 = vld [vmem:[%s1 + $0x740] sm:$0xff]
    %v267 = vld [vmem:[%s1 + $0x748] sm:$0xff]
    %v268 = vld [vmem:[%s1 + $0x750] sm:$0xff]
    %v269 = vld [vmem:[%s1 + $0x758] sm:$0xff]
    %v270 = vld [vmem:[%s1 + $0x760] sm:$0xff]
    %v271 = vld [vmem:[%s1 + $0x768] sm:$0xff]
    %v272 = vld [vmem:[%s1 + $0x770] sm:$0xff]
    %v273 = vld [vmem:[%s1 + $0x778] sm:$0xff]
    %v274 = vld [vmem:[%s1 + $0x780] sm:$0xff]
    %v275 = vld [vmem:[%s1 + $0x788] sm:$0xff]
    %v276 = vld [vmem:[%s1 + $0x790] sm:$0xff]
    %v277 = vld [vmem:[%s1 + $0x798] sm:$0xff]
    %v278 = vld [vmem:[%s1 + $0x7a0] sm:$0xff]
    %v279 = vld [vmem:[%s1 + $0x7a8] sm:$0xff]
    %v280 = vld [vmem:[%s1 + $0x7b0] sm:$0xff]
    %v281 = vld [vmem:[%s1 + $0x7b8] sm:$0xff]
    %v282 = vld [vmem:[%s1 + $0x7c0] sm:$0xff]
    %v283 = vld [vmem:[%s1 + $0x7c8] sm:$0xff]
    %v284 = vld [vmem:[%s1 + $0x7d0] sm:$0xff]
    %v285 = vld [vmem:[%s1 + $0x7d8] sm:$0xff]
    %v286 = vld [vmem:[%s1 + $0x7e0] sm:$0xff]
    %v287 = vld [vmem:[%s1 + $0x7e8] sm:$0xff]
    %v288 = vld [vmem:[%s1 + $0x7f0] sm:$0xff]
    %v289 = vld [vmem:[%s1 + $0x7f8] sm:$0xff]
    %v290 = vld [vmem:[%s1 + $0x800] sm:$0xff]
    %v291 = vld [vmem:[%s1 + $0x808] sm:$0xff]
    %v292 = vld [vmem:[%s1 + $0x810] sm:$0xff]
    %v293 = vld [vmem:[%s1 + $0x818] sm:$0xff]
    %v294 = vld [vmem:[%s1 + $0x820] sm:$0xff]
    %v295 = vld [vmem:[%s1 + $0x828] sm:$0xff]
    %v296 = vld [vmem:[%s1 + $0x830] sm:$0xff]
    %v297 = vld [vmem:[%s1 + $0x838] sm:$0xff]
    %v298 = vld [vmem:[%s1 + $0x840] sm:$0xff]
    %v299 = vld [vmem:[%s1 + $0x848] sm:$0xff]
    %v300 = vld [vmem:[%s1 + $0x850] sm:$0xff]
    %v301 = vld [vmem:[%s1 + $0x858] sm:$0xff]
    %v302 = vld [vmem:[%s1 + $0x860] sm:$0xff]
    %v303 = vld [vmem:[%s1 + $0x868] sm:$0xff]
    %v304 = vld [vmem:[%s1 + $0x870] sm:$0xff]
    %v305 = vld [vmem:[%s1 + $0x878] sm:$0xff]
    %v306 = vld [vmem:[%s1 + $0x880] sm:$0xff]
    %v307 = vld [vmem:[%s1 + $0x888] sm:$0xff]
    %v308 = vld [vmem:[%s1 + $0x890] sm:$0xff]
    %v309 = vld [vmem:[%s1 + $0x898] sm:$0xff]
    %v310 = vld [vmem:[%s1 + $0x8a0] sm:$0xff]
    %v311 = vld [vmem:[%s1 + $0x8a8] sm:$0xff]
    %v312 = vld [vmem:[%s1 + $0x8b0] sm:$0xff]
    %v313 = vld [vmem:[%s1 + $0x8b8] sm:$0xff]
    %v314 = vld [vmem:[%s1 + $0x8c0] sm:$0xff]
    %v315 = vld [vmem:[%s1 + $0x8c8] sm:$0xff]
    %v316 = vld [vmem:[%s1 + $0x8d0] sm:$0xff]
    %v317 = vld [vmem:[%s1 + $0x8d8] sm:$0xff]
    %v318 = vld [vmem:[%s1 + $0x8e0] sm:$0xff]
    %v319 = vld [vmem:[%s1 + $0x8e8] sm:$0xff]
    %v320 = vld [vmem:[%s1 + $0x8f0] sm:$0xff]
    %v321 = vld [vmem:[%s1 + $0x8f8] sm:$0xff]
    %v322 = vld [vmem:[%s1 + $0x900] sm:$0xff]
    %v323 = vld [vmem:[%s1 + $0x908] sm:$0xff]
    %v324 = vld [vmem:[%s1 + $0x910] sm:$0xff]
    %v325 = vld [vmem:[%s1 + $0x918] sm:$0xff]
    %v326 = vld [vmem:[%s1 + $0x920] sm:$0xff]
    %v327 = vld [vmem:[%s1 + $0x928] sm:$0xff]
    %v328 = vld [vmem:[%s1 + $0x930] sm:$0xff]
    %v329 = vld [vmem:[%s1 + $0x938] sm:$0xff]
    %v330 = vld [vmem:[%s1 + $0x940] sm:$0xff]
    %v331 = vld [vmem:[%s1 + $0x948] sm:$0xff]
    %v332 = vld [vmem:[%s1 + $0x950] sm:$0xff]
    %v333 = vld [vmem:[%s1 + $0x958] sm:$0xff]
    %v334 = vld [vmem:[%s1 + $0x960] sm:$0xff]
    %v335 = vld [vmem:[%s1 + $0x968] sm:$0xff]
    %v336 = vld [vmem:[%s1 + $0x970] sm:$0xff]
    %v337 = vld [vmem:[%s1 + $0x978] sm:$0xff]
    %v338 = vld [vmem:[%s1 + $0x980] sm:$0xff]
    %v339 = vld [vmem:[%s1 + $0x988] sm:$0xff]
    %v340 = vld [vmem:[%s1 + $0x990] sm:$0xff]
    %v341 = vld [vmem:[%s1 + $0x998] sm:$0xff]
    %v342 = vld [vmem:[%s1 + $0x9a0] sm:$0xff]
    %v343 = vld [vmem:[%s1 + $0x9a8] sm:$0xff]
    %v344 = vld [vmem:[%s1 + $0x9b0] sm:$0xff]
    %v345 = vld [vmem:[%s1 + $0x9b8] sm:$0xff]
    %v346 = vld [vmem:[%s1 + $0x9c0] sm:$0xff]
    %v347 = vld [vmem:[%s1 + $0x9c8] sm:$0xff]
    %v348 = vld [vmem:[%s1 + $0x9d0] sm:$0xff]
    %v349 = vld [vmem:[%s1 + $0x9d8] sm:$0xff]
    %v350 = vld [vmem:[%s1 + $0x9e0] sm:$0xff]
    %v351 = vld [vmem:[%s1 + $0x9e8] sm:$0xff]
    %v352 = vld [vmem:[%s1 + $0x9f0] sm:$0xff]
    %v353 = vld [vmem:[%s1 + $0x9f8] sm:$0xff]
    %v354 = vld [vmem:[%s1 + $0xa00] sm:$0xff]
    %v355 = vld [vmem:[%s1 + $0xa08] sm:$0xff]
    %v356 = vld [vmem:[%s1 + $0xa10] sm:$0xff]
    %v357 = vld [vmem:[%s1 + $0xa18] sm:$0xff]
    %v358 = vld [vmem:[%s1 + $0xa20] sm:$0xff]
    %v359 = vld [vmem:[%s1 + $0xa28] sm:$0xff]
    %v360 = vld [vmem:[%s1 + $0xa30] sm:$0xff]
    %v361 = vld [vmem:[%s1 + $0xa38] sm:$0xff]
    %v362 = vld [vmem:[%s1 + $0xa40] sm:$0xff]
    %v363 = vld [vmem:[%s1 + $0xa48] sm:$0xff]
    %v364 = vld [vmem:[%s1 + $0xa50] sm:$0xff]
    %v365 = vld [vmem:[%s1 + $0xa58] sm:$0xff]
    %v366 = vld [vmem:[%s1 + $0xa60] sm:$0xff]
    %v367 = vld [vmem:[%s1 + $0xa68] sm:$0xff]
    %v368 = vld [vmem:[%s1 + $0xa70] sm:$0xff]
    %v369 = vld [vmem:[%s1 + $0xa78] sm:$0xff]
    %v370 = vld [vmem:[%s1 + $0xa80] sm:$0xff]
    %v371 = vld [vmem:[%s1 + $0xa88] sm:$0xff]
    %v372 = vld [vmem:[%s1 + $0xa90] sm:$0xff]
    %v373 = vld [vmem:[%s1 + $0xa98] sm:$0xff]
    %v374 = vld [vmem:[%s1 + $0xaa0] sm:$0xff]
    %v375 = vld [vmem:[%s1 + $0xaa8] sm:$0xff]
    %v376 = vld [vmem:[%s1 + $0xab0] sm:$0xff]
    %v377 = vld [vmem:[%s1 + $0xab8] sm:$0xff]
    %v378 = vld [vmem:[%s1 + $0xac0] sm:$0xff]
    %v379 = vld [vmem:[%s1 + $0xac8] sm:$0xff]
    %v380 = vld [vmem:[%s1 + $0xad0] sm:$0xff]
    %v381 = vld [vmem:[%s1 + $0xad8] sm:$0xff]
    %v382 = vld [vmem:[%s1 + $0xae0] sm:$0xff]
    %v383 = vld [vmem:[%s1 + $0xae8] sm:$0xff]
    %v384 = vld [vmem:[%s1 + $0xaf0] sm:$0xff]
    %v385 = vld [vmem:[%s1 + $0xaf8] sm:$0xff]
    %v386 = vld [vmem:[%s1 + $0xb00] sm:$0xff]
    %v387 = vld [vmem:[%s1 + $0xb08] sm:$0xff]
    %v388 = vld [vmem:[%s1 + $0xb10] sm:$0xff]
    %v389 = vld [vmem:[%s1 + $0xb18] sm:$0xff]
    %v390 = vld [vmem:[%s1 + $0xb20] sm:$0xff]
    %v391 = vld [vmem:[%s1 + $0xb28] sm:$0xff]
    %v392 = vld [vmem:[%s1 + $0xb30] sm:$0xff]
    %v393 = vld [vmem:[%s1 + $0xb38] sm:$0xff]
    %v394 = vld [vmem:[%s1 + $0xb40] sm:$0xff]
    %v395 = vld [vmem:[%s1 + $0xb48] sm:$0xff]
    %v396 = vld [vmem:[%s1 + $0xb50] sm:$0xff]
    %v397 = vld [vmem:[%s1 + $0xb58] sm:$0xff]
    %v398 = vld [vmem:[%s1 + $0xb60] sm:$0xff]
    %v399 = vld [vmem:[%s1 + $0xb68] sm:$0xff]
    %v400 = vld [vmem:[%s1 + $0xb70] sm:$0xff]
    %v401 = vld [vmem:[%s1 + $0xb78] sm:$0xff]
    %v402 = vld [vmem:[%s1 + $0xb80] sm:$0xff]
    %v403 = vld [vmem:[%s1 + $0xb88] sm:$0xff]
    %v404 = vld [vmem:[%s1 + $0xb90] sm:$0xff]
    %v405 = vld [vmem:[%s1 + $0xb98] sm:$0xff]
    %v406 = vld [vmem:[%s1 + $0xba0] sm:$0xff]
    %v407 = vld [vmem:[%s1 + $0xba8] sm:$0xff]
    %v408 = vld [vmem:[%s1 + $0xbb0] sm:$0xff]
    %v409 = vld [vmem:[%s1 + $0xbb8] sm:$0xff]
    %v410 = vld [vmem:[%s1 + $0xbc0] sm:$0xff]
    %v411 = vld [vmem:[%s1 + $0xbc8] sm:$0xff]
    %v412 = vld [vmem:[%s1 + $0xbd0] sm:$0xff]
    %v413 = vld [vmem:[%s1 + $0xbd8] sm:$0xff]
    %v414 = vld [vmem:[%s1 + $0xbe0] sm:$0xff]
    %v415 = vld [vmem:[%s1 + $0xbe8] sm:$0xff]
    %v416 = vld [vmem:[%s1 + $0xbf0] sm:$0xff]
    %v417 = vld [vmem:[%s1 + $0xbf8] sm:$0xff]
    %v418 = vld [vmem:[%s1 + $0xc00] sm:$0xff]
    %v419 = vld [vmem:[%s1 + $0xc08] sm:$0xff]
    %v420 = vld [vmem:[%s1 + $0xc10] sm:$0xff]
    %v421 = vld [vmem:[%s1 + $0xc18] sm:$0xff]
    %v422 = vld [vmem:[%s1 + $0xc20] sm:$0xff]
    %v423 = vld [vmem:[%s1 + $0xc28] sm:$0xff]
    %v424 = vld [vmem:[%s1 + $0xc30] sm:$0xff]
    %v425 = vld [vmem:[%s1 + $0xc38] sm:$0xff]
    %v426 = vld [vmem:[%s1 + $0xc40] sm:$0xff]
    %v427 = vld [vmem:[%s1 + $0xc48] sm:$0xff]
    %v428 = vld [vmem:[%s1 + $0xc50] sm:$0xff]
    %v429 = vld [vmem:[%s1 + $0xc58] sm:$0xff]
    %v430 = vld [vmem:[%s1 + $0xc60] sm:$0xff]
    %v431 = vld [vmem:[%s1 + $0xc68] sm:$0xff]
    %v432 = vld [vmem:[%s1 + $0xc70] sm:$0xff]
    %v433 = vld [vmem:[%s1 + $0xc78] sm:$0xff]
    %v434 = vld [vmem:[%s2] sm:$0x1]
    %v436 = vperm.slane %v434, 0
    %445 = vst [vmem:[#allocation1] ss:$4 sm:$0xff] %v27
    %s446 = scalar_lea.vmem [#allocation1], 32
    %447 = vst [vmem:[%s446] ss:$4 sm:$0xff] %v28
    %v448 = vld.sshfl [vmem:[#allocation1] sm:$0xff pattern:$0x73625140]
    %v449 = vld.sshfl [vmem:[#allocation1 + $0x8] sm:$0xff pattern:$0x73625140]
    %v450 = vld.sshfl [vmem:[#allocation1 + $0x10] sm:$0xff pattern:$0x73625140]
    %v451 = vld.sshfl [vmem:[#allocation1 + $0x18] sm:$0xff pattern:$0x73625140]
    %v452 = vld.sshfl [vmem:[#allocation1 + $0x20] sm:$0xff pattern:$0x73625140]
    %v453 = vld.sshfl [vmem:[#allocation1 + $0x28] sm:$0xff pattern:$0x73625140]
    %v454 = vld.sshfl [vmem:[#allocation1 + $0x30] sm:$0xff pattern:$0x73625140]
    %v455 = vld.sshfl [vmem:[#allocation1 + $0x38] sm:$0xff pattern:$0x73625140]
    %456 = vst [vmem:[#allocation1] ss:$4 sm:$0xff] %v29
    %457 = vst [vmem:[%s446] ss:$4 sm:$0xff] %v30
    %v458 = vld.sshfl [vmem:[#allocation1] sm:$0xff pattern:$0x73625140]
    %v459 = vld.sshfl [vmem:[#allocation1 + $0x8] sm:$0xff pattern:$0x73625140]
    %v460 = vld.sshfl [vmem:[#allocation1 + $0x10] sm:$0xff pattern:$0x73625140]
    %v461 = vld.sshfl [vmem:[#allocation1 + $0x18] sm:$0xff pattern:$0x73625140]
    %v462 = vld.sshfl [vmem:[#allocation1 + $0x20] sm:$0xff pattern:$0x73625140]
    %v463 = vld.sshfl [vmem:[#allocation1 + $0x28] sm:$0xff pattern:$0x73625140]
    %v464 = vld.sshfl [vmem:[#allocation1 + $0x30] sm:$0xff pattern:$0x73625140]
    %v465 = vld.sshfl [vmem:[#allocation1 + $0x38] sm:$0xff pattern:$0x73625140]
    %466 = vst [vmem:[#allocation1] ss:$4 sm:$0xff] %v31
    %467 = vst [vmem:[%s446] ss:$4 sm:$0xff] %v32
    %v468 = vld.sshfl [vmem:[#allocation1] sm:$0xff pattern:$0x73625140]
    %v469 = vld.sshfl [vmem:[#allocation1 + $0x8] sm:$0xff pattern:$0x73625140]
    %v470 = vld.sshfl [vmem:[#allocation1 + $0x10] sm:$0xff pattern:$0x73625140]
    %v471 = vld.sshfl [vmem:[#allocation1 + $0x18] sm:$0xff pattern:$0x73625140]
    %v472 = vld.sshfl [vmem:[#allocation1 + $0x20] sm:$0xff pattern:$0x73625140]
    %v473 = vld.sshfl [vmem:[#allocation1 + $0x28] sm:$0xff pattern:$0x73625140]
    %v474 = vld.sshfl [vmem:[#allocation1 + $0x30] sm:$0xff pattern:$0x73625140]
    %v475 = vld.sshfl [vmem:[#allocation1 + $0x38] sm:$0xff pattern:$0x73625140]
    %476 = vst [vmem:[#allocation1] ss:$4 sm:$0xff] %v33
    %v477 = vld.sshfl [vmem:[#allocation1] sm:$0xff pattern:$0x73625140]
    %503 = vmatpush.msra.mxu0 %v49
    %504 = vmatpush.msra.mxu0 %v48
    %505 = vmatpush.msra.mxu0 %v47
    %506 = vmatpush.msra.mxu0 %v46
    %507 = vmatpush.msra.mxu0 %v45
    %508 = vmatpush.msra.mxu0 %v44
    %509 = vmatpush.msra.mxu0 %v43
    %510 = vmatpush.msra.mxu0 %v42
    %511 = vmatpush.msra.mxu0 %v41
    %512 = vmatpush.msra.mxu0 %v40
    %513 = vmatpush.msra.mxu0 %v39
    %514 = vmatpush.msra.mxu0 %v38
    %515 = vmatpush.msra.mxu0 %v37
    %516 = vmatpush.msra.mxu0 %v36
    %517 = vmatpush.msra.mxu0 %v35
    %518 = vmatpush.msra.mxu0 %v34
    %519 = vmatmul.f32.gmra.mxu0 %v448
    %v520 = vpop.f32.mrf.mxu0
    %v521 = vadd.f32 %v436, %v520
    %522 = vdwg.mxu0
    %523 = vmatpush.msra.mxu0 %v65
    %524 = vmatpush.msra.mxu0 %v64
    %525 = vmatpush.msra.mxu0 %v63
    %526 = vmatpush.msra.mxu0 %v62
    %527 = vmatpush.msra.mxu0 %v61
    %528 = vmatpush.msra.mxu0 %v60
    %529 = vmatpush.msra.mxu0 %v59
    %530 = vmatpush.msra.mxu0 %v58
    %531 = vmatpush.msra.mxu0 %v57
    %532 = vmatpush.msra.mxu0 %v56
    %533 = vmatpush.msra.mxu0 %v55
    %534 = vmatpush.msra.mxu0 %v54
    %535 = vmatpush.msra.mxu0 %v53
    %536 = vmatpush.msra.mxu0 %v52
    %537 = vmatpush.msra.mxu0 %v51
    %538 = vmatpush.msra.mxu0 %v50
    %539 = vmatmul.f32.gmra.mxu0 %v449
    %v540 = vpop.f32.mrf.mxu0
    %v541 = vadd.f32 %v521, %v540
    %542 = vdwg.mxu0
    %543 = vmatpush.msra.mxu0 %v81
    %544 = vmatpush.msra.mxu0 %v80
    %545 = vmatpush.msra.mxu0 %v79
    %546 = vmatpush.msra.mxu0 %v78
    %547 = vmatpush.msra.mxu0 %v77
    %548 = vmatpush.msra.mxu0 %v76
    %549 = vmatpush.msra.mxu0 %v75
    %550 = vmatpush.msra.mxu0 %v74
    %551 = vmatpush.msra.mxu0 %v73
    %552 = vmatpush.msra.mxu0 %v72
    %553 = vmatpush.msra.mxu0 %v71
    %554 = vmatpush.msra.mxu0 %v70
    %555 = vmatpush.msra.mxu0 %v69
    %556 = vmatpush.msra.mxu0 %v68
    %557 = vmatpush.msra.mxu0 %v67
    %558 = vmatpush.msra.mxu0 %v66
    %559 = vmatmul.f32.gmra.mxu0 %v450
    %v560 = vpop.f32.mrf.mxu0
    %v561 = vadd.f32 %v541, %v560
    %562 = vdwg.mxu0
    %563 = vmatpush.msra.mxu0 %v97
    %564 = vmatpush.msra.mxu0 %v96
    %565 = vmatpush.msra.mxu0 %v95
    %566 = vmatpush.msra.mxu0 %v94
    %567 = vmatpush.msra.mxu0 %v93
    %568 = vmatpush.msra.mxu0 %v92
    %569 = vmatpush.msra.mxu0 %v91
    %570 = vmatpush.msra.mxu0 %v90
    %571 = vmatpush.msra.mxu0 %v89
    %572 = vmatpush.msra.mxu0 %v88
    %573 = vmatpush.msra.mxu0 %v87
    %574 = vmatpush.msra.mxu0 %v86
    %575 = vmatpush.msra.mxu0 %v85
    %576 = vmatpush.msra.mxu0 %v84
    %577 = vmatpush.msra.mxu0 %v83
    %578 = vmatpush.msra.mxu0 %v82
    %579 = vmatmul.f32.gmra.mxu0 %v451
    %v580 = vpop.f32.mrf.mxu0
    %v581 = vadd.f32 %v561, %v580
    %582 = vdwg.mxu0
    %583 = vmatpush.msra.mxu0 %v113
    %584 = vmatpush.msra.mxu0 %v112
    %585 = vmatpush.msra.mxu0 %v111
    %586 = vmatpush.msra.mxu0 %v110
    %587 = vmatpush.msra.mxu0 %v109
    %588 = vmatpush.msra.mxu0 %v108
    %589 = vmatpush.msra.mxu0 %v107
    %590 = vmatpush.msra.mxu0 %v106
    %591 = vmatpush.msra.mxu0 %v105
    %592 = vmatpush.msra.mxu0 %v104
    %593 = vmatpush.msra.mxu0 %v103
    %594 = vmatpush.msra.mxu0 %v102
    %595 = vmatpush.msra.mxu0 %v101
    %596 = vmatpush.msra.mxu0 %v100
    %597 = vmatpush.msra.mxu0 %v99
    %598 = vmatpush.msra.mxu0 %v98
    %599 = vmatmul.f32.gmra.mxu0 %v452
    %v600 = vpop.f32.mrf.mxu0
    %v601 = vadd.f32 %v581, %v600
    %602 = vdwg.mxu0
    %603 = vmatpush.msra.mxu0 %v129
    %604 = vmatpush.msra.mxu0 %v128
    %605 = vmatpush.msra.mxu0 %v127
    %606 = vmatpush.msra.mxu0 %v126
    %607 = vmatpush.msra.mxu0 %v125
    %608 = vmatpush.msra.mxu0 %v124
    %609 = vmatpush.msra.mxu0 %v123
    %610 = vmatpush.msra.mxu0 %v122
    %611 = vmatpush.msra.mxu0 %v121
    %612 = vmatpush.msra.mxu0 %v120
    %613 = vmatpush.msra.mxu0 %v119
    %614 = vmatpush.msra.mxu0 %v118
    %615 = vmatpush.msra.mxu0 %v117
    %616 = vmatpush.msra.mxu0 %v116
    %617 = vmatpush.msra.mxu0 %v115
    %618 = vmatpush.msra.mxu0 %v114
    %619 = vmatmul.f32.gmra.mxu0 %v453
    %v620 = vpop.f32.mrf.mxu0
    %v621 = vadd.f32 %v601, %v620
    %622 = vdwg.mxu0
    %623 = vmatpush.msra.mxu0 %v145
    %624 = vmatpush.msra.mxu0 %v144
    %625 = vmatpush.msra.mxu0 %v143
    %626 = vmatpush.msra.mxu0 %v142
    %627 = vmatpush.msra.mxu0 %v141
    %628 = vmatpush.msra.mxu0 %v140
    %629 = vmatpush.msra.mxu0 %v139
    %630 = vmatpush.msra.mxu0 %v138
    %631 = vmatpush.msra.mxu0 %v137
    %632 = vmatpush.msra.mxu0 %v136
    %633 = vmatpush.msra.mxu0 %v135
    %634 = vmatpush.msra.mxu0 %v134
    %635 = vmatpush.msra.mxu0 %v133
    %636 = vmatpush.msra.mxu0 %v132
    %637 = vmatpush.msra.mxu0 %v131
    %638 = vmatpush.msra.mxu0 %v130
    %639 = vmatmul.f32.gmra.mxu0 %v454
    %v640 = vpop.f32.mrf.mxu0
    %v641 = vadd.f32 %v621, %v640
    %642 = vdwg.mxu0
    %643 = vmatpush.msra.mxu0 %v161
    %644 = vmatpush.msra.mxu0 %v160
    %645 = vmatpush.msra.mxu0 %v159
    %646 = vmatpush.msra.mxu0 %v158
    %647 = vmatpush.msra.mxu0 %v157
    %648 = vmatpush.msra.mxu0 %v156
    %649 = vmatpush.msra.mxu0 %v155
    %650 = vmatpush.msra.mxu0 %v154
    %651 = vmatpush.msra.mxu0 %v153
    %652 = vmatpush.msra.mxu0 %v152
    %653 = vmatpush.msra.mxu0 %v151
    %654 = vmatpush.msra.mxu0 %v150
    %655 = vmatpush.msra.mxu0 %v149
    %656 = vmatpush.msra.mxu0 %v148
    %657 = vmatpush.msra.mxu0 %v147
    %658 = vmatpush.msra.mxu0 %v146
    %659 = vmatmul.f32.gmra.mxu0 %v455
    %v660 = vpop.f32.mrf.mxu0
    %v661 = vadd.f32 %v641, %v660
    %662 = vdwg.mxu0
    %663 = vmatpush.msra.mxu0 %v177
    %664 = vmatpush.msra.mxu0 %v176
    %665 = vmatpush.msra.mxu0 %v175
    %666 = vmatpush.msra.mxu0 %v174
    %667 = vmatpush.msra.mxu0 %v173
    %668 = vmatpush.msra.mxu0 %v172
    %669 = vmatpush.msra.mxu0 %v171
    %670 = vmatpush.msra.mxu0 %v170
    %671 = vmatpush.msra.mxu0 %v169
    %672 = vmatpush.msra.mxu0 %v168
    %673 = vmatpush.msra.mxu0 %v167
    %674 = vmatpush.msra.mxu0 %v166
    %675 = vmatpush.msra.mxu0 %v165
    %676 = vmatpush.msra.mxu0 %v164
    %677 = vmatpush.msra.mxu0 %v163
    %678 = vmatpush.msra.mxu0 %v162
    %679 = vmatmul.f32.gmra.mxu0 %v458
    %v680 = vpop.f32.mrf.mxu0
    %v681 = vadd.f32 %v661, %v680
    %682 = vdwg.mxu0
    %683 = vmatpush.msra.mxu0 %v193
    %684 = vmatpush.msra.mxu0 %v192
    %685 = vmatpush.msra.mxu0 %v191
    %686 = vmatpush.msra.mxu0 %v190
    %687 = vmatpush.msra.mxu0 %v189
    %688 = vmatpush.msra.mxu0 %v188
    %689 = vmatpush.msra.mxu0 %v187
    %690 = vmatpush.msra.mxu0 %v186
    %691 = vmatpush.msra.mxu0 %v185
    %692 = vmatpush.msra.mxu0 %v184
    %693 = vmatpush.msra.mxu0 %v183
    %694 = vmatpush.msra.mxu0 %v182
    %695 = vmatpush.msra.mxu0 %v181
    %696 = vmatpush.msra.mxu0 %v180
    %697 = vmatpush.msra.mxu0 %v179
    %698 = vmatpush.msra.mxu0 %v178
    %699 = vmatmul.f32.gmra.mxu0 %v459
    %v700 = vpop.f32.mrf.mxu0
    %v701 = vadd.f32 %v681, %v700
    %702 = vdwg.mxu0
    %703 = vmatpush.msra.mxu0 %v209
    %704 = vmatpush.msra.mxu0 %v208
    %705 = vmatpush.msra.mxu0 %v207
    %706 = vmatpush.msra.mxu0 %v206
    %707 = vmatpush.msra.mxu0 %v205
    %708 = vmatpush.msra.mxu0 %v204
    %709 = vmatpush.msra.mxu0 %v203
    %710 = vmatpush.msra.mxu0 %v202
    %711 = vmatpush.msra.mxu0 %v201
    %712 = vmatpush.msra.mxu0 %v200
    %713 = vmatpush.msra.mxu0 %v199
    %714 = vmatpush.msra.mxu0 %v198
    %715 = vmatpush.msra.mxu0 %v197
    %716 = vmatpush.msra.mxu0 %v196
    %717 = vmatpush.msra.mxu0 %v195
    %718 = vmatpush.msra.mxu0 %v194
    %719 = vmatmul.f32.gmra.mxu0 %v460
    %v720 = vpop.f32.mrf.mxu0
    %v721 = vadd.f32 %v701, %v720
    %722 = vdwg.mxu0
    %723 = vmatpush.msra.mxu0 %v225
    %724 = vmatpush.msra.mxu0 %v224
    %725 = vmatpush.msra.mxu0 %v223
    %726 = vmatpush.msra.mxu0 %v222
    %727 = vmatpush.msra.mxu0 %v221
    %728 = vmatpush.msra.mxu0 %v220
    %729 = vmatpush.msra.mxu0 %v219
    %730 = vmatpush.msra.mxu0 %v218
    %731 = vmatpush.msra.mxu0 %v217
    %732 = vmatpush.msra.mxu0 %v216
    %733 = vmatpush.msra.mxu0 %v215
    %734 = vmatpush.msra.mxu0 %v214
    %735 = vmatpush.msra.mxu0 %v213
    %736 = vmatpush.msra.mxu0 %v212
    %737 = vmatpush.msra.mxu0 %v211
    %738 = vmatpush.msra.mxu0 %v210
    %739 = vmatmul.f32.gmra.mxu0 %v461
    %v740 = vpop.f32.mrf.mxu0
    %v741 = vadd.f32 %v721, %v740
    %742 = vdwg.mxu0
    %743 = vmatpush.msra.mxu0 %v241
    %744 = vmatpush.msra.mxu0 %v240
    %745 = vmatpush.msra.mxu0 %v239
    %746 = vmatpush.msra.mxu0 %v238
    %747 = vmatpush.msra.mxu0 %v237
    %748 = vmatpush.msra.mxu0 %v236
    %749 = vmatpush.msra.mxu0 %v235
    %750 = vmatpush.msra.mxu0 %v234
    %751 = vmatpush.msra.mxu0 %v233
    %752 = vmatpush.msra.mxu0 %v232
    %753 = vmatpush.msra.mxu0 %v231
    %754 = vmatpush.msra.mxu0 %v230
    %755 = vmatpush.msra.mxu0 %v229
    %756 = vmatpush.msra.mxu0 %v228
    %757 = vmatpush.msra.mxu0 %v227
    %758 = vmatpush.msra.mxu0 %v226
    %759 = vmatmul.f32.gmra.mxu0 %v462
    %v760 = vpop.f32.mrf.mxu0
    %v761 = vadd.f32 %v741, %v760
    %762 = vdwg.mxu0
    %763 = vmatpush.msra.mxu0 %v257
    %764 = vmatpush.msra.mxu0 %v256
    %765 = vmatpush.msra.mxu0 %v255
    %766 = vmatpush.msra.mxu0 %v254
    %767 = vmatpush.msra.mxu0 %v253
    %768 = vmatpush.msra.mxu0 %v252
    %769 = vmatpush.msra.mxu0 %v251
    %770 = vmatpush.msra.mxu0 %v250
    %771 = vmatpush.msra.mxu0 %v249
    %772 = vmatpush.msra.mxu0 %v248
    %773 = vmatpush.msra.mxu0 %v247
    %774 = vmatpush.msra.mxu0 %v246
    %775 = vmatpush.msra.mxu0 %v245
    %776 = vmatpush.msra.mxu0 %v244
    %777 = vmatpush.msra.mxu0 %v243
    %778 = vmatpush.msra.mxu0 %v242
    %779 = vmatmul.f32.gmra.mxu0 %v463
    %v780 = vpop.f32.mrf.mxu0
    %v781 = vadd.f32 %v761, %v780
    %782 = vdwg.mxu0
    %783 = vmatpush.msra.mxu0 %v273
    %784 = vmatpush.msra.mxu0 %v272
    %785 = vmatpush.msra.mxu0 %v271
    %786 = vmatpush.msra.mxu0 %v270
    %787 = vmatpush.msra.mxu0 %v269
    %788 = vmatpush.msra.mxu0 %v268
    %789 = vmatpush.msra.mxu0 %v267
    %790 = vmatpush.msra.mxu0 %v266
    %791 = vmatpush.msra.mxu0 %v265
    %792 = vmatpush.msra.mxu0 %v264
    %793 = vmatpush.msra.mxu0 %v263
    %794 = vmatpush.msra.mxu0 %v262
    %795 = vmatpush.msra.mxu0 %v261
    %796 = vmatpush.msra.mxu0 %v260
    %797 = vmatpush.msra.mxu0 %v259
    %798 = vmatpush.msra.mxu0 %v258
    %799 = vmatmul.f32.gmra.mxu0 %v464
    %v800 = vpop.f32.mrf.mxu0
    %v801 = vadd.f32 %v781, %v800
    %802 = vdwg.mxu0
    %803 = vmatpush.msra.mxu0 %v289
    %804 = vmatpush.msra.mxu0 %v288
    %805 = vmatpush.msra.mxu0 %v287
    %806 = vmatpush.msra.mxu0 %v286
    %807 = vmatpush.msra.mxu0 %v285
    %808 = vmatpush.msra.mxu0 %v284
    %809 = vmatpush.msra.mxu0 %v283
    %810 = vmatpush.msra.mxu0 %v282
    %811 = vmatpush.msra.mxu0 %v281
    %812 = vmatpush.msra.mxu0 %v280
    %813 = vmatpush.msra.mxu0 %v279
    %814 = vmatpush.msra.mxu0 %v278
    %815 = vmatpush.msra.mxu0 %v277
    %816 = vmatpush.msra.mxu0 %v276
    %817 = vmatpush.msra.mxu0 %v275
    %818 = vmatpush.msra.mxu0 %v274
    %819 = vmatmul.f32.gmra.mxu0 %v465
    %v820 = vpop.f32.mrf.mxu0
    %v821 = vadd.f32 %v801, %v820
    %822 = vdwg.mxu0
    %823 = vmatpush.msra.mxu0 %v305
    %824 = vmatpush.msra.mxu0 %v304
    %825 = vmatpush.msra.mxu0 %v303
    %826 = vmatpush.msra.mxu0 %v302
    %827 = vmatpush.msra.mxu0 %v301
    %828 = vmatpush.msra.mxu0 %v300
    %829 = vmatpush.msra.mxu0 %v299
    %830 = vmatpush.msra.mxu0 %v298
    %831 = vmatpush.msra.mxu0 %v297
    %832 = vmatpush.msra.mxu0 %v296
    %833 = vmatpush.msra.mxu0 %v295
    %834 = vmatpush.msra.mxu0 %v294
    %835 = vmatpush.msra.mxu0 %v293
    %836 = vmatpush.msra.mxu0 %v292
    %837 = vmatpush.msra.mxu0 %v291
    %838 = vmatpush.msra.mxu0 %v290
    %839 = vmatmul.f32.gmra.mxu0 %v468
    %v840 = vpop.f32.mrf.mxu0
    %v841 = vadd.f32 %v821, %v840
    %842 = vdwg.mxu0
    %843 = vmatpush.msra.mxu0 %v321
    %844 = vmatpush.msra.mxu0 %v320
    %845 = vmatpush.msra.mxu0 %v319
    %846 = vmatpush.msra.mxu0 %v318
    %847 = vmatpush.msra.mxu0 %v317
    %848 = vmatpush.msra.mxu0 %v316
    %849 = vmatpush.msra.mxu0 %v315
    %850 = vmatpush.msra.mxu0 %v314
    %851 = vmatpush.msra.mxu0 %v313
    %852 = vmatpush.msra.mxu0 %v312
    %853 = vmatpush.msra.mxu0 %v311
    %854 = vmatpush.msra.mxu0 %v310
    %855 = vmatpush.msra.mxu0 %v309
    %856 = vmatpush.msra.mxu0 %v308
    %857 = vmatpush.msra.mxu0 %v307
    %858 = vmatpush.msra.mxu0 %v306
    %859 = vmatmul.f32.gmra.mxu0 %v469
    %v860 = vpop.f32.mrf.mxu0
    %v861 = vadd.f32 %v841, %v860
    %862 = vdwg.mxu0
    %863 = vmatpush.msra.mxu0 %v337
    %864 = vmatpush.msra.mxu0 %v336
    %865 = vmatpush.msra.mxu0 %v335
    %866 = vmatpush.msra.mxu0 %v334
    %867 = vmatpush.msra.mxu0 %v333
    %868 = vmatpush.msra.mxu0 %v332
    %869 = vmatpush.msra.mxu0 %v331
    %870 = vmatpush.msra.mxu0 %v330
    %871 = vmatpush.msra.mxu0 %v329
    %872 = vmatpush.msra.mxu0 %v328
    %873 = vmatpush.msra.mxu0 %v327
    %874 = vmatpush.msra.mxu0 %v326
    %875 = vmatpush.msra.mxu0 %v325
    %876 = vmatpush.msra.mxu0 %v324
    %877 = vmatpush.msra.mxu0 %v323
    %878 = vmatpush.msra.mxu0 %v322
    %879 = vmatmul.f32.gmra.mxu0 %v470
    %v880 = vpop.f32.mrf.mxu0
    %v881 = vadd.f32 %v861, %v880
    %882 = vdwg.mxu0
    %883 = vmatpush.msra.mxu0 %v353
    %884 = vmatpush.msra.mxu0 %v352
    %885 = vmatpush.msra.mxu0 %v351
    %886 = vmatpush.msra.mxu0 %v350
    %887 = vmatpush.msra.mxu0 %v349
    %888 = vmatpush.msra.mxu0 %v348
    %889 = vmatpush.msra.mxu0 %v347
    %890 = vmatpush.msra.mxu0 %v346
    %891 = vmatpush.msra.mxu0 %v345
    %892 = vmatpush.msra.mxu0 %v344
    %893 = vmatpush.msra.mxu0 %v343
    %894 = vmatpush.msra.mxu0 %v342
    %895 = vmatpush.msra.mxu0 %v341
    %896 = vmatpush.msra.mxu0 %v340
    %897 = vmatpush.msra.mxu0 %v339
    %898 = vmatpush.msra.mxu0 %v338
    %899 = vmatmul.f32.gmra.mxu0 %v471
    %v900 = vpop.f32.mrf.mxu0
    %v901 = vadd.f32 %v881, %v900
    %902 = vdwg.mxu0
    %903 = vmatpush.msra.mxu0 %v369
    %904 = vmatpush.msra.mxu0 %v368
    %905 = vmatpush.msra.mxu0 %v367
    %906 = vmatpush.msra.mxu0 %v366
    %907 = vmatpush.msra.mxu0 %v365
    %908 = vmatpush.msra.mxu0 %v364
    %909 = vmatpush.msra.mxu0 %v363
    %910 = vmatpush.msra.mxu0 %v362
    %911 = vmatpush.msra.mxu0 %v361
    %912 = vmatpush.msra.mxu0 %v360
    %913 = vmatpush.msra.mxu0 %v359
    %914 = vmatpush.msra.mxu0 %v358
    %915 = vmatpush.msra.mxu0 %v357
    %916 = vmatpush.msra.mxu0 %v356
    %917 = vmatpush.msra.mxu0 %v355
    %918 = vmatpush.msra.mxu0 %v354
    %919 = vmatmul.f32.gmra.mxu0 %v472
    %v920 = vpop.f32.mrf.mxu0
    %v921 = vadd.f32 %v901, %v920
    %922 = vdwg.mxu0
    %923 = vmatpush.msra.mxu0 %v385
    %924 = vmatpush.msra.mxu0 %v384
    %925 = vmatpush.msra.mxu0 %v383
    %926 = vmatpush.msra.mxu0 %v382
    %927 = vmatpush.msra.mxu0 %v381
    %928 = vmatpush.msra.mxu0 %v380
    %929 = vmatpush.msra.mxu0 %v379
    %930 = vmatpush.msra.mxu0 %v378
    %931 = vmatpush.msra.mxu0 %v377
    %932 = vmatpush.msra.mxu0 %v376
    %933 = vmatpush.msra.mxu0 %v375
    %934 = vmatpush.msra.mxu0 %v374
    %935 = vmatpush.msra.mxu0 %v373
    %936 = vmatpush.msra.mxu0 %v372
    %937 = vmatpush.msra.mxu0 %v371
    %938 = vmatpush.msra.mxu0 %v370
    %939 = vmatmul.f32.gmra.mxu0 %v473
    %v940 = vpop.f32.mrf.mxu0
    %v941 = vadd.f32 %v921, %v940
    %942 = vdwg.mxu0
    %943 = vmatpush.msra.mxu0 %v401
    %944 = vmatpush.msra.mxu0 %v400
    %945 = vmatpush.msra.mxu0 %v399
    %946 = vmatpush.msra.mxu0 %v398
    %947 = vmatpush.msra.mxu0 %v397
    %948 = vmatpush.msra.mxu0 %v396
    %949 = vmatpush.msra.mxu0 %v395
    %950 = vmatpush.msra.mxu0 %v394
    %951 = vmatpush.msra.mxu0 %v393
    %952 = vmatpush.msra.mxu0 %v392
    %953 = vmatpush.msra.mxu0 %v391
    %954 = vmatpush.msra.mxu0 %v390
    %955 = vmatpush.msra.mxu0 %v389
    %956 = vmatpush.msra.mxu0 %v388
    %957 = vmatpush.msra.mxu0 %v387
    %958 = vmatpush.msra.mxu0 %v386
    %959 = vmatmul.f32.gmra.mxu0 %v474
    %v960 = vpop.f32.mrf.mxu0
    %v961 = vadd.f32 %v941, %v960
    %962 = vdwg.mxu0
    %963 = vmatpush.msra.mxu0 %v417
    %964 = vmatpush.msra.mxu0 %v416
    %965 = vmatpush.msra.mxu0 %v415
    %966 = vmatpush.msra.mxu0 %v414
    %967 = vmatpush.msra.mxu0 %v413
    %968 = vmatpush.msra.mxu0 %v412
    %969 = vmatpush.msra.mxu0 %v411
    %970 = vmatpush.msra.mxu0 %v410
    %971 = vmatpush.msra.mxu0 %v409
    %972 = vmatpush.msra.mxu0 %v408
    %973 = vmatpush.msra.mxu0 %v407
    %974 = vmatpush.msra.mxu0 %v406
    %975 = vmatpush.msra.mxu0 %v405
    %976 = vmatpush.msra.mxu0 %v404
    %977 = vmatpush.msra.mxu0 %v403
    %978 = vmatpush.msra.mxu0 %v402
    %979 = vmatmul.f32.gmra.mxu0 %v475
    %v980 = vpop.f32.mrf.mxu0
    %v981 = vadd.f32 %v961, %v980
    %982 = vdwg.mxu0
    %983 = vmatpush.msra.mxu0 %v433
    %984 = vmatpush.msra.mxu0 %v432
    %985 = vmatpush.msra.mxu0 %v431
    %986 = vmatpush.msra.mxu0 %v430
    %987 = vmatpush.msra.mxu0 %v429
    %988 = vmatpush.msra.mxu0 %v428
    %989 = vmatpush.msra.mxu0 %v427
    %990 = vmatpush.msra.mxu0 %v426
    %991 = vmatpush.msra.mxu0 %v425
    %992 = vmatpush.msra.mxu0 %v424
    %993 = vmatpush.msra.mxu0 %v423
    %994 = vmatpush.msra.mxu0 %v422
    %995 = vmatpush.msra.mxu0 %v421
    %996 = vmatpush.msra.mxu0 %v420
    %997 = vmatpush.msra.mxu0 %v419
    %998 = vmatpush.msra.mxu0 %v418
    %999 = vmatmul.f32.gmra.mxu0 %v477
    %v1000 = vpop.f32.mrf.mxu0
    %v1001 = vadd.f32 %v981, %v1000
    %1002 = vdwg.mxu0
    %v1003 = vmax.f32 %v1001, 0.0
    %v1004 = vld [vmem:[%s3] sm:$0xff]
    %v1005 = vld [vmem:[%s3 + $0x8] sm:$0xff]
    %v1006 = vld [vmem:[%s3 + $0x10] sm:$0xff]
    %v1007 = vld [vmem:[%s3 + $0x18] sm:$0xff]
    %v1008 = vld [vmem:[%s3 + $0x20] sm:$0xff]
    %v1009 = vld [vmem:[%s3 + $0x28] sm:$0xff]
    %v1010 = vld [vmem:[%s3 + $0x30] sm:$0xff]
    %v1011 = vld [vmem:[%s3 + $0x38] sm:$0xff]
    %v1012 = vld [vmem:[%s3 + $0x40] sm:$0xff]
    %v1013 = vld [vmem:[%s3 + $0x48] sm:$0xff]
    %v1014 = vld [vmem:[%s3 + $0x50] sm:$0xff]
    %v1015 = vld [vmem:[%s3 + $0x58] sm:$0xff]
    %v1016 = vld [vmem:[%s3 + $0x60] sm:$0xff]
    %v1017 = vld [vmem:[%s3 + $0x68] sm:$0xff]
    %v1018 = vld [vmem:[%s3 + $0x70] sm:$0xff]
    %v1019 = vld [vmem:[%s3 + $0x78] sm:$0xff]
    %v1020 = vld [vmem:[%s4] sm:$0x1]
    %v1022 = vperm.slane %v1020, 0
    %1024 = vmatpush.msra.mxu0 %v1019
    %1025 = vmatpush.msra.mxu0 %v1018
    %1026 = vmatpush.msra.mxu0 %v1017
    %1027 = vmatpush.msra.mxu0 %v1016
    %1028 = vmatpush.msra.mxu0 %v1015
    %1029 = vmatpush.msra.mxu0 %v1014
    %1030 = vmatpush.msra.mxu0 %v1013
    %1031 = vmatpush.msra.mxu0 %v1012
    %1032 = vmatpush.msra.mxu0 %v1011
    %1033 = vmatpush.msra.mxu0 %v1010
    %1034 = vmatpush.msra.mxu0 %v1009
    %1035 = vmatpush.msra.mxu0 %v1008
    %1036 = vmatpush.msra.mxu0 %v1007
    %1037 = vmatpush.msra.mxu0 %v1006
    %1038 = vmatpush.msra.mxu0 %v1005
    %1039 = vmatpush.msra.mxu0 %v1004
    %1040 = vmatmul.f32.gmra.mxu0 %v1003
    %v1041 = vpop.f32.mrf.mxu0
    %v1042 = vadd.f32 %v1022, %v1041
    %1043 = vdwg.mxu0
    %v1044 = vmax.f32 %v1042, 0.0
    %v1045 = vld [vmem:[%s5] sm:$0xff]
    %v1046 = vld [vmem:[%s5 + $0x8] sm:$0xff]
    %v1047 = vld [vmem:[%s5 + $0x10] sm:$0xff]
    %v1048 = vld [vmem:[%s5 + $0x18] sm:$0xff]
    %v1049 = vld [vmem:[%s5 + $0x20] sm:$0xff]
    %v1050 = vld [vmem:[%s5 + $0x28] sm:$0xff]
    %v1051 = vld [vmem:[%s5 + $0x30] sm:$0xff]
    %v1052 = vld [vmem:[%s5 + $0x38] sm:$0xff]
    %v1053 = vld [vmem:[%s5 + $0x40] sm:$0xff]
    %v1054 = vld [vmem:[%s5 + $0x48] sm:$0xff]
    %v1055 = vld [vmem:[%s5 + $0x50] sm:$0xff]
    %v1056 = vld [vmem:[%s5 + $0x58] sm:$0xff]
    %v1057 = vld [vmem:[%s5 + $0x60] sm:$0xff]
    %v1058 = vld [vmem:[%s5 + $0x68] sm:$0xff]
    %v1059 = vld [vmem:[%s5 + $0x70] sm:$0xff]
    %v1060 = vld [vmem:[%s5 + $0x78] sm:$0xff]
    %v1061 = vld [vmem:[%s6] sm:$0x1]
    %v1063 = vperm.slane %v1061, 0
    %1065 = vmatpush.msra.mxu0 %v1060
    %1066 = vmatpush.msra.mxu0 %v1059
    %1067 = vmatpush.msra.mxu0 %v1058
    %1068 = vmatpush.msra.mxu0 %v1057
    %1069 = vmatpush.msra.mxu0 %v1056
    %1070 = vmatpush.msra.mxu0 %v1055
    %1071 = vmatpush.msra.mxu0 %v1054
    %1072 = vmatpush.msra.mxu0 %v1053
    %1073 = vmatpush.msra.mxu0 %v1052
    %1074 = vmatpush.msra.mxu0 %v1051
    %1075 = vmatpush.msra.mxu0 %v1050
    %1076 = vmatpush.msra.mxu0 %v1049
    %1077 = vmatpush.msra.mxu0 %v1048
    %1078 = vmatpush.msra.mxu0 %v1047
    %1079 = vmatpush.msra.mxu0 %v1046
    %1080 = vmatpush.msra.mxu0 %v1045
    %1081 = vmatmul.f32.gmra.mxu0 %v1044
    %v1082 = vpop.f32.mrf.mxu0
    %v1083 = vadd.f32 %v1063, %v1082
    %1084 = vdwg.mxu0
    %1085 = vst [vmem:[#allocation2] sm:$0x3] %v1083
    // Predicated region
    $region30: #{lenet_forward.5} parent=1 // pred_check
      _
    $region31: #{lenet_forward.5} parent=1 // pred_check_branch
      %1087 = sbr.rel (0) target = $region33
    $region32: #{lenet_forward.5} parent=1 // pred_region
      %1089 = vsyncadd [#allocation3], 0
      %s1091 = sshll.u32 [#allocation2], 4
      %s1092 = int_to_ptr.vmem [resolvable:$true] %s1091
      %s1093 = sshll.u32 %s7, 4
      %s1094 = int_to_ptr.hbm [resolvable:$true] %s1093
      %1096 = dma.vmem_to_hbm [thread:$0]  %s1092, 32, %s1094, [#allocation3]
    $region33: #{lenet_forward.5} parent=1 // pred_fallthru
      _
    // Predicated region
    $region34: #{lenet_forward.5} parent=1 // pred_check
      _
    $region35: #{lenet_forward.5} parent=1 // pred_check_branch
      %1098 = sbr.rel (0) target = $region37
    $region36: #{lenet_forward.5} parent=1 // pred_region
      %1100 = dma.done [#allocation3], 32
    $region37: #{lenet_forward.5} parent=1 // pred_fallthru
      _
    %1101 = vsyncpa [#allocation3], 1

</llo_original>
